<compile_context>
chip_gen: v7x
topology: tpu7x:2x2x1
jax: 0.10.0
libtpu: 0.0.40
codegen_flags: <defaults>
</compile_context>

<pallas_src>
import math

import jax
import jax.numpy as jnp
from jax.experimental import pallas as pl
from jax.experimental.pallas import tpu as pltpu  # noqa: F401

# --------------------------- model hyper-parameters ----------------------------
B = 2            # batch
S = 8            # target sequence length
S_MEM = 8        # encoder-memory sequence length
D_MODEL = 32
NUM_HEADS = 4
D_K = D_MODEL // NUM_HEADS
D_FF = 64
LN_EPS = 1e-5


# ------------------------------ kernel helpers ---------------------------------
def _layer_norm(x, gamma, beta):
    mu = jnp.mean(x, axis=-1, keepdims=True)
    var = jnp.mean((x - mu) * (x - mu), axis=-1, keepdims=True)
    return (x - mu) * jax.lax.rsqrt(var + LN_EPS) * gamma + beta


def _mha(xq, xkv, s_q, s_kv, wq, bq, wk, bk, wv, bv, wo, bo):
    """Head-batched multi-head attention on flattened-row activations.

    xq : (B*s_q,  D)       query-side rows
    xkv: (B*s_kv, D)       key/value-side rows
    wq/wk/wv: (H, D, D_K)  per-head projection weights   bq/bk/bv: (H, 1, D_K)
    wo: (H, D_K, D)        per-head slice of out-proj    bo: (1, D)
    returns (B*s_q, D)
    """
    n = NUM_HEADS * B

    def rep_act(a, s):
        # (B*s, D) -> (H*B, s, D): replicate each batch's rows once per head.
        a4 = jnp.broadcast_to(a.reshape(B, s, D_MODEL)[None],
                              (NUM_HEADS, B, s, D_MODEL))
        return a4.reshape(n, s, D_MODEL)

    def rep_w(w):
        # (H, ...) -> (H*B, ...): replicate each head's weights once per batch.
        w4 = jnp.broadcast_to(w[:, None], (NUM_HEADS, B) + w.shape[1:])
        return w4.reshape((n,) + w.shape[1:])

    xq_n, xkv_n = rep_act(xq, s_q), rep_act(xkv, s_kv)

    q = jnp.einsum('nsd,ndk->nsk', xq_n, rep_w(wq),
                   preferred_element_type=jnp.float32) + rep_w(bq)
    k = jnp.einsum('nsd,ndk->nsk', xkv_n, rep_w(wk),
                   preferred_element_type=jnp.float32) + rep_w(bk)
    v = jnp.einsum('nsd,ndk->nsk', xkv_n, rep_w(wv),
                   preferred_element_type=jnp.float32) + rep_w(bv)

    # scaled dot-product attention, batched over (head, batch)
    scores = jnp.einsum('nqc,nkc->nqk', q, k,
                        preferred_element_type=jnp.float32) * (1.0 / math.sqrt(D_K))
    # TODO(synk): optional tgt_mask / memory_mask (masked_fill with -1e9) not
    # implemented; the module's default mask=None path is what is computed here.
    scores = scores - jnp.max(scores, axis=-1, keepdims=True)
    p = jnp.exp(scores)
    p = p * pl.reciprocal(jnp.sum(p, axis=-1, keepdims=True), approx=True)
    attn = jnp.einsum('nqk,nkc->nqc', p, v, preferred_element_type=jnp.float32)

    # per-head slice of the output projection, then sum over heads
    # (identical to concat-over-heads followed by the full (D,D) matmul)
    po = jnp.einsum('nqc,nco->nqo', attn, rep_w(wo),
                    preferred_element_type=jnp.float32)
    po = po.reshape(NUM_HEADS, B, s_q, D_MODEL)
    out = po[0]
    for h in range(1, NUM_HEADS):
        out = out + po[h]
    return out.reshape(B * s_q, D_MODEL) + bo


# ------------------------------- the kernel ------------------------------------
def decoder_layer_kernel(tgt_ref, mem_ref,
                         sqw_ref, sqb_ref, skw_ref, skb_ref, svw_ref, svb_ref,
                         sow_ref, sob_ref,
                         cqw_ref, cqb_ref, ckw_ref, ckb_ref, cvw_ref, cvb_ref,
                         cow_ref, cob_ref,
                         w1_ref, b1_ref, w2_ref, b2_ref,
                         g1_ref, be1_ref, g2_ref, be2_ref, g3_ref, be3_ref,
                         o_ref):
    x = tgt_ref[...]     # (B*S, D)
    mem = mem_ref[...]   # (B*S_MEM, D)

    # --- sublayer 1: self-attention + residual + LayerNorm (dropout = id) ---
    sa = _mha(x, x, S, S,
              sqw_ref[...], sqb_ref[...], skw_ref[...], skb_ref[...],
              svw_ref[...], svb_ref[...], sow_ref[...], sob_ref[...])
    x = _layer_norm(x + sa, g1_ref[...], be1_ref[...])

    # --- sublayer 2: encoder-decoder attention + residual + LayerNorm ---
    ca = _mha(x, mem, S, S_MEM,
              cqw_ref[...], cqb_ref[...], ckw_ref[...], ckb_ref[...],
              cvw_ref[...], cvb_ref[...], cow_ref[...], cob_ref[...])
    x = _layer_norm(x + ca, g2_ref[...], be2_ref[...])

    # --- sublayer 3: position-wise feed-forward + residual + LayerNorm ---
    h1 = jnp.maximum(
        jnp.dot(x, w1_ref[...], preferred_element_type=jnp.float32) + b1_ref[...], 0.0)
    ff = jnp.dot(h1, w2_ref[...], preferred_element_type=jnp.float32) + b2_ref[...]
    x = _layer_norm(x + ff, g3_ref[...], be3_ref[...])

    o_ref[...] = x


# ------------------------------- wrapper ----------------------------------------
def _split_qkv_w(w):   # (D, D) -> (H, D, D_K); output features are head-major
    return w.reshape(D_MODEL, NUM_HEADS, D_K).transpose(1, 0, 2)


def _split_qkv_b(b):   # (1, D) -> (H, 1, D_K)
    return b.reshape(NUM_HEADS, 1, D_K)


def _split_out_w(w):   # (D, D) -> (H, D_K, D); input features are head-major
    return w.reshape(NUM_HEADS, D_K, D_MODEL)


@jax.jit
def decoder_layer_forward(tgt, memory, p):
    tgt2 = tgt.reshape(B * S, D_MODEL)
    mem2 = memory.reshape(B * S_MEM, D_MODEL)
    args = (
        tgt2, mem2,
        _split_qkv_w(p['sa_wq']), _split_qkv_b(p['sa_bq']),
        _split_qkv_w(p['sa_wk']), _split_qkv_b(p['sa_bk']),
        _split_qkv_w(p['sa_wv']), _split_qkv_b(p['sa_bv']),
        _split_out_w(p['sa_wo']), p['sa_bo'],
        _split_qkv_w(p['ca_wq']), _split_qkv_b(p['ca_bq']),
        _split_qkv_w(p['ca_wk']), _split_qkv_b(p['ca_bk']),
        _split_qkv_w(p['ca_wv']), _split_qkv_b(p['ca_bv']),
        _split_out_w(p['ca_wo']), p['ca_bo'],
        p['w1'], p['b1'], p['w2'], p['b2'],
        p['g1'], p['be1'], p['g2'], p['be2'], p['g3'], p['be3'],
    )
    # single fused call, no grid: everything resident in VMEM for the whole layer
    out2 = pl.pallas_call(
        decoder_layer_kernel,
        out_shape=jax.ShapeDtypeStruct((B * S, D_MODEL), jnp.float32),
    )(*args)
    return out2.reshape(B, S, D_MODEL)


# --------------------------- pure-JAX reference ----------------------------------
def ref_forward(tgt, memory, p):
    def ln(v, g, b):
        mu = jnp.mean(v, axis=-1, keepdims=True)
        var = jnp.mean((v - mu) ** 2, axis=-1, keepdims=True)
        return (v - mu) / jnp.sqrt(var + LN_EPS) * g + b

    def mha(q_in, kv_in, wq, bq, wk, bk, wv, bv, wo, bo):
        bsz, s_q, _ = q_in.shape
        s_kv = kv_in.shape[1]
        q = (q_in @ wq + bq).reshape(bsz, s_q, NUM_HEADS, D_K).transpose(0, 2, 1, 3)
        k = (kv_in @ wk + bk).reshape(bsz, s_kv, NUM_HEADS, D_K).transpose(0, 2, 1, 3)
        v = (kv_in @ wv + bv).reshape(bsz, s_kv, NUM_HEADS, D_K).transpose(0, 2, 1, 3)
        scores = jnp.einsum('bhqd,bhkd->bhqk', q, k) / math.sqrt(D_K)
        pa = jax.nn.softmax(scores, axis=-1)
        o = jnp.einsum('bhqk,bhkd->bhqd', pa, v)
        o = o.transpose(0, 2, 1, 3).reshape(bsz, s_q, D_MODEL)
        return o @ wo + bo

    x = ln(tgt + mha(tgt, tgt, p['sa_wq'], p['sa_bq'], p['sa_wk'], p['sa_bk'],
                     p['sa_wv'], p['sa_bv'], p['sa_wo'], p['sa_bo']),
           p['g1'], p['be1'])
    x = ln(x + mha(x, memory, p['ca_wq'], p['ca_bq'], p['ca_wk'], p['ca_bk'],
                   p['ca_wv'], p['ca_bv'], p['ca_wo'], p['ca_bo']),
           p['g2'], p['be2'])
    ff = jnp.maximum(x @ p['w1'] + p['b1'], 0.0) @ p['w2'] + p['b2']
    return ln(x + ff, p['g3'], p['be3'])


# ----------------------------- parameter init ------------------------------------
def init_params(key):
    def lin(k, fin, fout):
        k1, k2 = jax.random.split(k)
        bound = 1.0 / math.sqrt(fin)
        w = jax.random.uniform(k1, (fin, fout), jnp.float32, -bound, bound)
        b = jax.random.uniform(k2, (1, fout), jnp.float32, -bound, bound)
        return w, b

    ks = jax.random.split(key, 10)
    p = {}
    p['sa_wq'], p['sa_bq'] = lin(ks[0], D_MODEL, D_MODEL)
    p['sa_wk'], p['sa_bk'] = lin(ks[1], D_MODEL, D_MODEL)
    p['sa_wv'], p['sa_bv'] = lin(ks[2], D_MODEL, D_MODEL)
    p['sa_wo'], p['sa_bo'] = lin(ks[3], D_MODEL, D_MODEL)
    p['ca_wq'], p['ca_bq'] = lin(ks[4], D_MODEL, D_MODEL)
    p['ca_wk'], p['ca_bk'] = lin(ks[5], D_MODEL, D_MODEL)
    p['ca_wv'], p['ca_bv'] = lin(ks[6], D_MODEL, D_MODEL)
    p['ca_wo'], p['ca_bo'] = lin(ks[7], D_MODEL, D_MODEL)
    p['w1'], p['b1'] = lin(ks[8], D_MODEL, D_FF)
    p['w2'], p['b2'] = lin(ks[9], D_FF, D_MODEL)
    for i in (1, 2, 3):
        p[f'g{i}'] = jnp.ones((1, D_MODEL), jnp.float32)
        p[f'be{i}'] = jnp.zeros((1, D_MODEL), jnp.float32)
    return p


# ----------------------------------- main -----------------------------------------
if __name__ == "__main__":
    key = jax.random.PRNGKey(0)
    k_tgt, k_mem, k_p = jax.random.split(key, 3)
    tgt = jax.random.normal(k_tgt, (B, S, D_MODEL), jnp.float32)
    memory = jax.random.normal(k_mem, (B, S_MEM, D_MODEL), jnp.float32)
    params = init_params(k_p)

    out = decoder_layer_forward(tgt, memory, params)
    out = jax.block_until_ready(out)

    ref = ref_forward(tgt, memory, params)
    assert out.shape == (B, S, D_MODEL)
    # tolerance relaxed slightly vs pure fp32 because the softmax denominator
    # uses the EUP approximate reciprocal (pl.reciprocal(..., approx=True)).
    err = jnp.max(jnp.abs(out - ref))
    assert jnp.allclose(out, ref, atol=1e-3, rtol=1e-3), f"mismatch vs reference, max abs err={err}"

    print("KERNEL_OK")
</pallas_src>

<mosaic_0001>
module attributes {stable_mosaic.version = 11 : i64} {
  func.func @decoder_layer_kernel(%arg0: memref<16x32xf32, #tpu.memory_space<vmem>>, %arg1: memref<16x32xf32, #tpu.memory_space<vmem>>, %arg2: memref<4x32x8xf32, #tpu.memory_space<vmem>>, %arg3: memref<4x1x8xf32, #tpu.memory_space<vmem>>, %arg4: memref<4x32x8xf32, #tpu.memory_space<vmem>>, %arg5: memref<4x1x8xf32, #tpu.memory_space<vmem>>, %arg6: memref<4x32x8xf32, #tpu.memory_space<vmem>>, %arg7: memref<4x1x8xf32, #tpu.memory_space<vmem>>, %arg8: memref<4x8x32xf32, #tpu.memory_space<vmem>>, %arg9: memref<1x32xf32, #tpu.memory_space<vmem>>, %arg10: memref<4x32x8xf32, #tpu.memory_space<vmem>>, %arg11: memref<4x1x8xf32, #tpu.memory_space<vmem>>, %arg12: memref<4x32x8xf32, #tpu.memory_space<vmem>>, %arg13: memref<4x1x8xf32, #tpu.memory_space<vmem>>, %arg14: memref<4x32x8xf32, #tpu.memory_space<vmem>>, %arg15: memref<4x1x8xf32, #tpu.memory_space<vmem>>, %arg16: memref<4x8x32xf32, #tpu.memory_space<vmem>>, %arg17: memref<1x32xf32, #tpu.memory_space<vmem>>, %arg18: memref<32x64xf32, #tpu.memory_space<vmem>>, %arg19: memref<1x64xf32, #tpu.memory_space<vmem>>, %arg20: memref<64x32xf32, #tpu.memory_space<vmem>>, %arg21: memref<1x32xf32, #tpu.memory_space<vmem>>, %arg22: memref<1x32xf32, #tpu.memory_space<vmem>>, %arg23: memref<1x32xf32, #tpu.memory_space<vmem>>, %arg24: memref<1x32xf32, #tpu.memory_space<vmem>>, %arg25: memref<1x32xf32, #tpu.memory_space<vmem>>, %arg26: memref<1x32xf32, #tpu.memory_space<vmem>>, %arg27: memref<1x32xf32, #tpu.memory_space<vmem>>, %arg28: memref<16x32xf32, #tpu.memory_space<vmem>>) attributes {dimension_semantics = [], scalar_prefetch = 0 : i64, scratch_operands = 0 : i64, tpu.core_type = #tpu.core_type<tc>} {
    %c0 = arith.constant 0 : index
    %c0_0 = arith.constant 0 : index
    %0 = vector.load %arg0[%c0, %c0_0] : memref<16x32xf32, #tpu.memory_space<vmem>>, vector<16x32xf32>
    %c0_1 = arith.constant 0 : index
    %c0_2 = arith.constant 0 : index
    %1 = vector.load %arg1[%c0_1, %c0_2] : memref<16x32xf32, #tpu.memory_space<vmem>>, vector<16x32xf32>
    %c0_3 = arith.constant 0 : index
    %c0_4 = arith.constant 0 : index
    %c0_5 = arith.constant 0 : index
    %2 = vector.load %arg2[%c0_3, %c0_4, %c0_5] : memref<4x32x8xf32, #tpu.memory_space<vmem>>, vector<4x32x8xf32>
    %c0_6 = arith.constant 0 : index
    %c0_7 = arith.constant 0 : index
    %c0_8 = arith.constant 0 : index
    %3 = vector.load %arg3[%c0_6, %c0_7, %c0_8] : memref<4x1x8xf32, #tpu.memory_space<vmem>>, vector<4x1x8xf32>
    %c0_9 = arith.constant 0 : index
    %c0_10 = arith.constant 0 : index
    %c0_11 = arith.constant 0 : index
    %4 = vector.load %arg4[%c0_9, %c0_10, %c0_11] : memref<4x32x8xf32, #tpu.memory_space<vmem>>, vector<4x32x8xf32>
    %c0_12 = arith.constant 0 : index
    %c0_13 = arith.constant 0 : index
    %c0_14 = arith.constant 0 : index
    %5 = vector.load %arg5[%c0_12, %c0_13, %c0_14] : memref<4x1x8xf32, #tpu.memory_space<vmem>>, vector<4x1x8xf32>
    %c0_15 = arith.constant 0 : index
    %c0_16 = arith.constant 0 : index
    %c0_17 = arith.constant 0 : index
    %6 = vector.load %arg6[%c0_15, %c0_16, %c0_17] : memref<4x32x8xf32, #tpu.memory_space<vmem>>, vector<4x32x8xf32>
    %c0_18 = arith.constant 0 : index
    %c0_19 = arith.constant 0 : index
    %c0_20 = arith.constant 0 : index
    %7 = vector.load %arg7[%c0_18, %c0_19, %c0_20] : memref<4x1x8xf32, #tpu.memory_space<vmem>>, vector<4x1x8xf32>
    %c0_21 = arith.constant 0 : index
    %c0_22 = arith.constant 0 : index
    %c0_23 = arith.constant 0 : index
    %8 = vector.load %arg8[%c0_21, %c0_22, %c0_23] : memref<4x8x32xf32, #tpu.memory_space<vmem>>, vector<4x8x32xf32>
    %c0_24 = arith.constant 0 : index
    %c0_25 = arith.constant 0 : index
    %9 = vector.load %arg9[%c0_24, %c0_25] : memref<1x32xf32, #tpu.memory_space<vmem>>, vector<1x32xf32>
    %10 = vector.shape_cast %0 : vector<16x32xf32> to vector<2x8x32xf32>
    %11 = vector.shape_cast %10 : vector<2x8x32xf32> to vector<1x2x8x32xf32>
    %12 = vector.shape_cast %11 : vector<1x2x8x32xf32> to vector<1x2x8x32xf32>
    %13 = vector.broadcast %12 : vector<1x2x8x32xf32> to vector<4x2x8x32xf32>
    %14 = vector.shape_cast %13 : vector<4x2x8x32xf32> to vector<8x8x32xf32>
    %15 = vector.shape_cast %0 : vector<16x32xf32> to vector<2x8x32xf32>
    %16 = vector.shape_cast %15 : vector<2x8x32xf32> to vector<1x2x8x32xf32>
    %17 = vector.shape_cast %16 : vector<1x2x8x32xf32> to vector<1x2x8x32xf32>
    %18 = vector.broadcast %17 : vector<1x2x8x32xf32> to vector<4x2x8x32xf32>
    %19 = vector.shape_cast %18 : vector<4x2x8x32xf32> to vector<8x8x32xf32>
    %20 = vector.shape_cast %2 : vector<4x32x8xf32> to vector<4x1x32x8xf32>
    %21 = vector.shape_cast %20 : vector<4x1x32x8xf32> to vector<4x1x32x8xf32>
    %22 = vector.broadcast %21 : vector<4x1x32x8xf32> to vector<4x2x32x8xf32>
    %23 = vector.shape_cast %22 : vector<4x2x32x8xf32> to vector<8x32x8xf32>
    "tpu.trace_start"() <{level = 10 : i32, message = "nsd,ndk->nsk"}> : () -> ()
    %cst = arith.constant dense<0.000000e+00> : vector<8x8x8xf32>
    %24 = tpu.matmul %14, %23, %cst {dimension_numbers = #tpu.dot_dimension_numbers<[2], [1], [1], [2], [0, 0, 0, 1, 1, 2], [0], [0]>} : vector<8x8x32xf32>, vector<8x32x8xf32>, vector<8x8x8xf32> -> vector<8x8x8xf32>
    "tpu.trace_stop"() : () -> ()
    %25 = vector.shape_cast %3 : vector<4x1x8xf32> to vector<4x1x1x8xf32>
    %26 = vector.shape_cast %25 : vector<4x1x1x8xf32> to vector<4x1x1x8xf32>
    %27 = vector.broadcast %26 : vector<4x1x1x8xf32> to vector<4x2x1x8xf32>
    %28 = vector.shape_cast %27 : vector<4x2x1x8xf32> to vector<8x1x8xf32>
    %29 = vector.broadcast %28 : vector<8x1x8xf32> to vector<8x8x8xf32>
    %30 = arith.addf %24, %29 : vector<8x8x8xf32>
    %31 = vector.shape_cast %4 : vector<4x32x8xf32> to vector<4x1x32x8xf32>
    %32 = vector.shape_cast %31 : vector<4x1x32x8xf32> to vector<4x1x32x8xf32>
    %33 = vector.broadcast %32 : vector<4x1x32x8xf32> to vector<4x2x32x8xf32>
    %34 = vector.shape_cast %33 : vector<4x2x32x8xf32> to vector<8x32x8xf32>
    "tpu.trace_start"() <{level = 10 : i32, message = "nsd,ndk->nsk"}> : () -> ()
    %cst_26 = arith.constant dense<0.000000e+00> : vector<8x8x8xf32>
    %35 = tpu.matmul %19, %34, %cst_26 {dimension_numbers = #tpu.dot_dimension_numbers<[2], [1], [1], [2], [0, 0, 0, 1, 1, 2], [0], [0]>} : vector<8x8x32xf32>, vector<8x32x8xf32>, vector<8x8x8xf32> -> vector<8x8x8xf32>
    "tpu.trace_stop"() : () -> ()
    %36 = vector.shape_cast %5 : vector<4x1x8xf32> to vector<4x1x1x8xf32>
    %37 = vector.shape_cast %36 : vector<4x1x1x8xf32> to vector<4x1x1x8xf32>
    %38 = vector.broadcast %37 : vector<4x1x1x8xf32> to vector<4x2x1x8xf32>
    %39 = vector.shape_cast %38 : vector<4x2x1x8xf32> to vector<8x1x8xf32>
    %40 = vector.broadcast %39 : vector<8x1x8xf32> to vector<8x8x8xf32>
    %41 = arith.addf %35, %40 : vector<8x8x8xf32>
    %42 = vector.shape_cast %6 : vector<4x32x8xf32> to vector<4x1x32x8xf32>
    %43 = vector.shape_cast %42 : vector<4x1x32x8xf32> to vector<4x1x32x8xf32>
    %44 = vector.broadcast %43 : vector<4x1x32x8xf32> to vector<4x2x32x8xf32>
    %45 = vector.shape_cast %44 : vector<4x2x32x8xf32> to vector<8x32x8xf32>
    "tpu.trace_start"() <{level = 10 : i32, message = "nsd,ndk->nsk"}> : () -> ()
    %cst_27 = arith.constant dense<0.000000e+00> : vector<8x8x8xf32>
    %46 = tpu.matmul %19, %45, %cst_27 {dimension_numbers = #tpu.dot_dimension_numbers<[2], [1], [1], [2], [0, 0, 0, 1, 1, 2], [0], [0]>} : vector<8x8x32xf32>, vector<8x32x8xf32>, vector<8x8x8xf32> -> vector<8x8x8xf32>
    "tpu.trace_stop"() : () -> ()
    %47 = vector.shape_cast %7 : vector<4x1x8xf32> to vector<4x1x1x8xf32>
    %48 = vector.shape_cast %47 : vector<4x1x1x8xf32> to vector<4x1x1x8xf32>
    %49 = vector.broadcast %48 : vector<4x1x1x8xf32> to vector<4x2x1x8xf32>
    %50 = vector.shape_cast %49 : vector<4x2x1x8xf32> to vector<8x1x8xf32>
    %51 = vector.broadcast %50 : vector<8x1x8xf32> to vector<8x8x8xf32>
    %52 = arith.addf %46, %51 : vector<8x8x8xf32>
    "tpu.trace_start"() <{level = 10 : i32, message = "nqc,nkc->nqk"}> : () -> ()
    %cst_28 = arith.constant dense<0.000000e+00> : vector<8x8x8xf32>
    %53 = tpu.matmul %30, %41, %cst_28 {dimension_numbers = #tpu.dot_dimension_numbers<[2], [2], [1], [1], [0, 0, 0, 1, 1, 1], [0], [0]>} : vector<8x8x8xf32>, vector<8x8x8xf32>, vector<8x8x8xf32> -> vector<8x8x8xf32>
    "tpu.trace_stop"() : () -> ()
    %cst_29 = arith.constant 0.353553385 : f32
    %54 = vector.broadcast %cst_29 : f32 to vector<8x8x8xf32>
    %55 = arith.mulf %53, %54 : vector<8x8x8xf32>
    %cst_30 = arith.constant dense<0xFF800000> : vector<8x8xf32>
    %56 = vector.multi_reduction <maximumf>, %55, %cst_30 [2] : vector<8x8x8xf32> to vector<8x8xf32>
    %57 = vector.shape_cast %56 : vector<8x8xf32> to vector<8x8x1xf32>
    %58 = vector.broadcast %57 : vector<8x8x1xf32> to vector<8x8x8xf32>
    %59 = arith.subf %55, %58 : vector<8x8x8xf32>
    %60 = math.exp %59 : vector<8x8x8xf32>
    %cst_31 = arith.constant dense<0.000000e+00> : vector<8x8xf32>
    %61 = vector.multi_reduction <add>, %60, %cst_31 [2] : vector<8x8x8xf32> to vector<8x8xf32>
    %62 = vector.shape_cast %61 : vector<8x8xf32> to vector<8x8x1xf32>
    %63 = tpu.reciprocal %62 {approx = true} : vector<8x8x1xf32> -> vector<8x8x1xf32>
    %64 = vector.broadcast %63 : vector<8x8x1xf32> to vector<8x8x8xf32>
    %65 = arith.mulf %60, %64 : vector<8x8x8xf32>
    "tpu.trace_start"() <{level = 10 : i32, message = "nqk,nkc->nqc"}> : () -> ()
    %cst_32 = arith.constant dense<0.000000e+00> : vector<8x8x8xf32>
    %66 = tpu.matmul %65, %52, %cst_32 {dimension_numbers = #tpu.dot_dimension_numbers<[2], [1], [1], [2], [0, 0, 0, 1, 1, 2], [0], [0]>} : vector<8x8x8xf32>, vector<8x8x8xf32>, vector<8x8x8xf32> -> vector<8x8x8xf32>
    "tpu.trace_stop"() : () -> ()
    %67 = vector.shape_cast %8 : vector<4x8x32xf32> to vector<4x1x8x32xf32>
    %68 = vector.shape_cast %67 : vector<4x1x8x32xf32> to vector<4x1x8x32xf32>
    %69 = vector.broadcast %68 : vector<4x1x8x32xf32> to vector<4x2x8x32xf32>
    %70 = vector.shape_cast %69 : vector<4x2x8x32xf32> to vector<8x8x32xf32>
    "tpu.trace_start"() <{level = 10 : i32, message = "nqc,nco->nqo"}> : () -> ()
    %cst_33 = arith.constant dense<0.000000e+00> : vector<8x8x32xf32>
    %71 = tpu.matmul %66, %70, %cst_33 {dimension_numbers = #tpu.dot_dimension_numbers<[2], [1], [1], [2], [0, 0, 0, 1, 1, 2], [0], [0]>} : vector<8x8x8xf32>, vector<8x8x32xf32>, vector<8x8x32xf32> -> vector<8x8x32xf32>
    "tpu.trace_stop"() : () -> ()
    %72 = vector.shape_cast %71 : vector<8x8x32xf32> to vector<4x2x8x32xf32>
    %73 = vector.extract_strided_slice %72 {offsets = [0, 0, 0, 0], sizes = [1, 2, 8, 32], strides = [1, 1, 1, 1]} : vector<4x2x8x32xf32> to vector<1x2x8x32xf32>
    %74 = vector.shape_cast %73 : vector<1x2x8x32xf32> to vector<2x8x32xf32>
    %75 = vector.extract_strided_slice %72 {offsets = [1, 0, 0, 0], sizes = [1, 2, 8, 32], strides = [1, 1, 1, 1]} : vector<4x2x8x32xf32> to vector<1x2x8x32xf32>
    %76 = vector.shape_cast %75 : vector<1x2x8x32xf32> to vector<2x8x32xf32>
    %77 = arith.addf %74, %76 : vector<2x8x32xf32>
    %78 = vector.extract_strided_slice %72 {offsets = [2, 0, 0, 0], sizes = [1, 2, 8, 32], strides = [1, 1, 1, 1]} : vector<4x2x8x32xf32> to vector<1x2x8x32xf32>
    %79 = vector.shape_cast %78 : vector<1x2x8x32xf32> to vector<2x8x32xf32>
    %80 = arith.addf %77, %79 : vector<2x8x32xf32>
    %81 = vector.extract_strided_slice %72 {offsets = [3, 0, 0, 0], sizes = [1, 2, 8, 32], strides = [1, 1, 1, 1]} : vector<4x2x8x32xf32> to vector<1x2x8x32xf32>
    %82 = vector.shape_cast %81 : vector<1x2x8x32xf32> to vector<2x8x32xf32>
    %83 = arith.addf %80, %82 : vector<2x8x32xf32>
    %84 = vector.shape_cast %83 : vector<2x8x32xf32> to vector<16x32xf32>
    %85 = vector.broadcast %9 : vector<1x32xf32> to vector<16x32xf32>
    %86 = arith.addf %84, %85 : vector<16x32xf32>
    %87 = arith.addf %0, %86 : vector<16x32xf32>
    %c0_34 = arith.constant 0 : index
    %c0_35 = arith.constant 0 : index
    %88 = vector.load %arg22[%c0_34, %c0_35] : memref<1x32xf32, #tpu.memory_space<vmem>>, vector<1x32xf32>
    %c0_36 = arith.constant 0 : index
    %c0_37 = arith.constant 0 : index
    %89 = vector.load %arg23[%c0_36, %c0_37] : memref<1x32xf32, #tpu.memory_space<vmem>>, vector<1x32xf32>
    %cst_38 = arith.constant dense<0.000000e+00> : vector<16xf32>
    %90 = vector.multi_reduction <add>, %87, %cst_38 [1] : vector<16x32xf32> to vector<16xf32>
    %91 = vector.shape_cast %90 : vector<16xf32> to vector<16x1xf32>
    %cst_39 = arith.constant 3.200000e+01 : f32
    %92 = vector.broadcast %cst_39 : f32 to vector<16x1xf32>
    %93 = arith.divf %91, %92 : vector<16x1xf32>
    %94 = vector.broadcast %93 : vector<16x1xf32> to vector<16x32xf32>
    %95 = arith.subf %87, %94 : vector<16x32xf32>
    %96 = vector.broadcast %93 : vector<16x1xf32> to vector<16x32xf32>
    %97 = arith.subf %87, %96 : vector<16x32xf32>
    %98 = arith.mulf %95, %97 : vector<16x32xf32>
    %cst_40 = arith.constant dense<0.000000e+00> : vector<16xf32>
    %99 = vector.multi_reduction <add>, %98, %cst_40 [1] : vector<16x32xf32> to vector<16xf32>
    %100 = vector.shape_cast %99 : vector<16xf32> to vector<16x1xf32>
    %cst_41 = arith.constant 3.200000e+01 : f32
    %101 = vector.broadcast %cst_41 : f32 to vector<16x1xf32>
    %102 = arith.divf %100, %101 : vector<16x1xf32>
    %103 = vector.broadcast %93 : vector<16x1xf32> to vector<16x32xf32>
    %104 = arith.subf %87, %103 : vector<16x32xf32>
    %cst_42 = arith.constant 9.99999974E-6 : f32
    %105 = vector.broadcast %cst_42 : f32 to vector<16x1xf32>
    %106 = arith.addf %102, %105 : vector<16x1xf32>
    %107 = math.rsqrt %106 : vector<16x1xf32>
    %108 = vector.broadcast %107 : vector<16x1xf32> to vector<16x32xf32>
    %109 = arith.mulf %104, %108 : vector<16x32xf32>
    %110 = vector.broadcast %88 : vector<1x32xf32> to vector<16x32xf32>
    %111 = arith.mulf %109, %110 : vector<16x32xf32>
    %112 = vector.broadcast %89 : vector<1x32xf32> to vector<16x32xf32>
    %113 = arith.addf %111, %112 : vector<16x32xf32>
    %c0_43 = arith.constant 0 : index
    %c0_44 = arith.constant 0 : index
    %c0_45 = arith.constant 0 : index
    %114 = vector.load %arg10[%c0_43, %c0_44, %c0_45] : memref<4x32x8xf32, #tpu.memory_space<vmem>>, vector<4x32x8xf32>
    %c0_46 = arith.constant 0 : index
    %c0_47 = arith.constant 0 : index
    %c0_48 = arith.constant 0 : index
    %115 = vector.load %arg11[%c0_46, %c0_47, %c0_48] : memref<4x1x8xf32, #tpu.memory_space<vmem>>, vector<4x1x8xf32>
    %c0_49 = arith.constant 0 : index
    %c0_50 = arith.constant 0 : index
    %c0_51 = arith.constant 0 : index
    %116 = vector.load %arg12[%c0_49, %c0_50, %c0_51] : memref<4x32x8xf32, #tpu.memory_space<vmem>>, vector<4x32x8xf32>
    %c0_52 = arith.constant 0 : index
    %c0_53 = arith.constant 0 : index
    %c0_54 = arith.constant 0 : index
    %117 = vector.load %arg13[%c0_52, %c0_53, %c0_54] : memref<4x1x8xf32, #tpu.memory_space<vmem>>, vector<4x1x8xf32>
    %c0_55 = arith.constant 0 : index
    %c0_56 = arith.constant 0 : index
    %c0_57 = arith.constant 0 : index
    %118 = vector.load %arg14[%c0_55, %c0_56, %c0_57] : memref<4x32x8xf32, #tpu.memory_space<vmem>>, vector<4x32x8xf32>
    %c0_58 = arith.constant 0 : index
    %c0_59 = arith.constant 0 : index
    %c0_60 = arith.constant 0 : index
    %119 = vector.load %arg15[%c0_58, %c0_59, %c0_60] : memref<4x1x8xf32, #tpu.memory_space<vmem>>, vector<4x1x8xf32>
    %c0_61 = arith.constant 0 : index
    %c0_62 = arith.constant 0 : index
    %c0_63 = arith.constant 0 : index
    %120 = vector.load %arg16[%c0_61, %c0_62, %c0_63] : memref<4x8x32xf32, #tpu.memory_space<vmem>>, vector<4x8x32xf32>
    %c0_64 = arith.constant 0 : index
    %c0_65 = arith.constant 0 : index
    %121 = vector.load %arg17[%c0_64, %c0_65] : memref<1x32xf32, #tpu.memory_space<vmem>>, vector<1x32xf32>
    %122 = vector.shape_cast %113 : vector<16x32xf32> to vector<2x8x32xf32>
    %123 = vector.shape_cast %122 : vector<2x8x32xf32> to vector<1x2x8x32xf32>
    %124 = vector.shape_cast %123 : vector<1x2x8x32xf32> to vector<1x2x8x32xf32>
    %125 = vector.broadcast %124 : vector<1x2x8x32xf32> to vector<4x2x8x32xf32>
    %126 = vector.shape_cast %125 : vector<4x2x8x32xf32> to vector<8x8x32xf32>
    %127 = vector.shape_cast %1 : vector<16x32xf32> to vector<2x8x32xf32>
    %128 = vector.shape_cast %127 : vector<2x8x32xf32> to vector<1x2x8x32xf32>
    %129 = vector.shape_cast %128 : vector<1x2x8x32xf32> to vector<1x2x8x32xf32>
    %130 = vector.broadcast %129 : vector<1x2x8x32xf32> to vector<4x2x8x32xf32>
    %131 = vector.shape_cast %130 : vector<4x2x8x32xf32> to vector<8x8x32xf32>
    %132 = vector.shape_cast %114 : vector<4x32x8xf32> to vector<4x1x32x8xf32>
    %133 = vector.shape_cast %132 : vector<4x1x32x8xf32> to vector<4x1x32x8xf32>
    %134 = vector.broadcast %133 : vector<4x1x32x8xf32> to vector<4x2x32x8xf32>
    %135 = vector.shape_cast %134 : vector<4x2x32x8xf32> to vector<8x32x8xf32>
    "tpu.trace_start"() <{level = 10 : i32, message = "nsd,ndk->nsk"}> : () -> ()
    %cst_66 = arith.constant dense<0.000000e+00> : vector<8x8x8xf32>
    %136 = tpu.matmul %126, %135, %cst_66 {dimension_numbers = #tpu.dot_dimension_numbers<[2], [1], [1], [2], [0, 0, 0, 1, 1, 2], [0], [0]>} : vector<8x8x32xf32>, vector<8x32x8xf32>, vector<8x8x8xf32> -> vector<8x8x8xf32>
    "tpu.trace_stop"() : () -> ()
    %137 = vector.shape_cast %115 : vector<4x1x8xf32> to vector<4x1x1x8xf32>
    %138 = vector.shape_cast %137 : vector<4x1x1x8xf32> to vector<4x1x1x8xf32>
    %139 = vector.broadcast %138 : vector<4x1x1x8xf32> to vector<4x2x1x8xf32>
    %140 = vector.shape_cast %139 : vector<4x2x1x8xf32> to vector<8x1x8xf32>
    %141 = vector.broadcast %140 : vector<8x1x8xf32> to vector<8x8x8xf32>
    %142 = arith.addf %136, %141 : vector<8x8x8xf32>
    %143 = vector.shape_cast %116 : vector<4x32x8xf32> to vector<4x1x32x8xf32>
    %144 = vector.shape_cast %143 : vector<4x1x32x8xf32> to vector<4x1x32x8xf32>
    %145 = vector.broadcast %144 : vector<4x1x32x8xf32> to vector<4x2x32x8xf32>
    %146 = vector.shape_cast %145 : vector<4x2x32x8xf32> to vector<8x32x8xf32>
    "tpu.trace_start"() <{level = 10 : i32, message = "nsd,ndk->nsk"}> : () -> ()
    %cst_67 = arith.constant dense<0.000000e+00> : vector<8x8x8xf32>
    %147 = tpu.matmul %131, %146, %cst_67 {dimension_numbers = #tpu.dot_dimension_numbers<[2], [1], [1], [2], [0, 0, 0, 1, 1, 2], [0], [0]>} : vector<8x8x32xf32>, vector<8x32x8xf32>, vector<8x8x8xf32> -> vector<8x8x8xf32>
    "tpu.trace_stop"() : () -> ()
    %148 = vector.shape_cast %117 : vector<4x1x8xf32> to vector<4x1x1x8xf32>
    %149 = vector.shape_cast %148 : vector<4x1x1x8xf32> to vector<4x1x1x8xf32>
    %150 = vector.broadcast %149 : vector<4x1x1x8xf32> to vector<4x2x1x8xf32>
    %151 = vector.shape_cast %150 : vector<4x2x1x8xf32> to vector<8x1x8xf32>
    %152 = vector.broadcast %151 : vector<8x1x8xf32> to vector<8x8x8xf32>
    %153 = arith.addf %147, %152 : vector<8x8x8xf32>
    %154 = vector.shape_cast %118 : vector<4x32x8xf32> to vector<4x1x32x8xf32>
    %155 = vector.shape_cast %154 : vector<4x1x32x8xf32> to vector<4x1x32x8xf32>
    %156 = vector.broadcast %155 : vector<4x1x32x8xf32> to vector<4x2x32x8xf32>
    %157 = vector.shape_cast %156 : vector<4x2x32x8xf32> to vector<8x32x8xf32>
    "tpu.trace_start"() <{level = 10 : i32, message = "nsd,ndk->nsk"}> : () -> ()
    %cst_68 = arith.constant dense<0.000000e+00> : vector<8x8x8xf32>
    %158 = tpu.matmul %131, %157, %cst_68 {dimension_numbers = #tpu.dot_dimension_numbers<[2], [1], [1], [2], [0, 0, 0, 1, 1, 2], [0], [0]>} : vector<8x8x32xf32>, vector<8x32x8xf32>, vector<8x8x8xf32> -> vector<8x8x8xf32>
    "tpu.trace_stop"() : () -> ()
    %159 = vector.shape_cast %119 : vector<4x1x8xf32> to vector<4x1x1x8xf32>
    %160 = vector.shape_cast %159 : vector<4x1x1x8xf32> to vector<4x1x1x8xf32>
    %161 = vector.broadcast %160 : vector<4x1x1x8xf32> to vector<4x2x1x8xf32>
    %162 = vector.shape_cast %161 : vector<4x2x1x8xf32> to vector<8x1x8xf32>
    %163 = vector.broadcast %162 : vector<8x1x8xf32> to vector<8x8x8xf32>
    %164 = arith.addf %158, %163 : vector<8x8x8xf32>
    "tpu.trace_start"() <{level = 10 : i32, message = "nqc,nkc->nqk"}> : () -> ()
    %cst_69 = arith.constant dense<0.000000e+00> : vector<8x8x8xf32>
    %165 = tpu.matmul %142, %153, %cst_69 {dimension_numbers = #tpu.dot_dimension_numbers<[2], [2], [1], [1], [0, 0, 0, 1, 1, 1], [0], [0]>} : vector<8x8x8xf32>, vector<8x8x8xf32>, vector<8x8x8xf32> -> vector<8x8x8xf32>
    "tpu.trace_stop"() : () -> ()
    %cst_70 = arith.constant 0.353553385 : f32
    %166 = vector.broadcast %cst_70 : f32 to vector<8x8x8xf32>
    %167 = arith.mulf %165, %166 : vector<8x8x8xf32>
    %cst_71 = arith.constant dense<0xFF800000> : vector<8x8xf32>
    %168 = vector.multi_reduction <maximumf>, %167, %cst_71 [2] : vector<8x8x8xf32> to vector<8x8xf32>
    %169 = vector.shape_cast %168 : vector<8x8xf32> to vector<8x8x1xf32>
    %170 = vector.broadcast %169 : vector<8x8x1xf32> to vector<8x8x8xf32>
    %171 = arith.subf %167, %170 : vector<8x8x8xf32>
    %172 = math.exp %171 : vector<8x8x8xf32>
    %cst_72 = arith.constant dense<0.000000e+00> : vector<8x8xf32>
    %173 = vector.multi_reduction <add>, %172, %cst_72 [2] : vector<8x8x8xf32> to vector<8x8xf32>
    %174 = vector.shape_cast %173 : vector<8x8xf32> to vector<8x8x1xf32>
    %175 = tpu.reciprocal %174 {approx = true} : vector<8x8x1xf32> -> vector<8x8x1xf32>
    %176 = vector.broadcast %175 : vector<8x8x1xf32> to vector<8x8x8xf32>
    %177 = arith.mulf %172, %176 : vector<8x8x8xf32>
    "tpu.trace_start"() <{level = 10 : i32, message = "nqk,nkc->nqc"}> : () -> ()
    %cst_73 = arith.constant dense<0.000000e+00> : vector<8x8x8xf32>
    %178 = tpu.matmul %177, %164, %cst_73 {dimension_numbers = #tpu.dot_dimension_numbers<[2], [1], [1], [2], [0, 0, 0, 1, 1, 2], [0], [0]>} : vector<8x8x8xf32>, vector<8x8x8xf32>, vector<8x8x8xf32> -> vector<8x8x8xf32>
    "tpu.trace_stop"() : () -> ()
    %179 = vector.shape_cast %120 : vector<4x8x32xf32> to vector<4x1x8x32xf32>
    %180 = vector.shape_cast %179 : vector<4x1x8x32xf32> to vector<4x1x8x32xf32>
    %181 = vector.broadcast %180 : vector<4x1x8x32xf32> to vector<4x2x8x32xf32>
    %182 = vector.shape_cast %181 : vector<4x2x8x32xf32> to vector<8x8x32xf32>
    "tpu.trace_start"() <{level = 10 : i32, message = "nqc,nco->nqo"}> : () -> ()
    %cst_74 = arith.constant dense<0.000000e+00> : vector<8x8x32xf32>
    %183 = tpu.matmul %178, %182, %cst_74 {dimension_numbers = #tpu.dot_dimension_numbers<[2], [1], [1], [2], [0, 0, 0, 1, 1, 2], [0], [0]>} : vector<8x8x8xf32>, vector<8x8x32xf32>, vector<8x8x32xf32> -> vector<8x8x32xf32>
    "tpu.trace_stop"() : () -> ()
    %184 = vector.shape_cast %183 : vector<8x8x32xf32> to vector<4x2x8x32xf32>
    %185 = vector.extract_strided_slice %184 {offsets = [0, 0, 0, 0], sizes = [1, 2, 8, 32], strides = [1, 1, 1, 1]} : vector<4x2x8x32xf32> to vector<1x2x8x32xf32>
    %186 = vector.shape_cast %185 : vector<1x2x8x32xf32> to vector<2x8x32xf32>
    %187 = vector.extract_strided_slice %184 {offsets = [1, 0, 0, 0], sizes = [1, 2, 8, 32], strides = [1, 1, 1, 1]} : vector<4x2x8x32xf32> to vector<1x2x8x32xf32>
    %188 = vector.shape_cast %187 : vector<1x2x8x32xf32> to vector<2x8x32xf32>
    %189 = arith.addf %186, %188 : vector<2x8x32xf32>
    %190 = vector.extract_strided_slice %184 {offsets = [2, 0, 0, 0], sizes = [1, 2, 8, 32], strides = [1, 1, 1, 1]} : vector<4x2x8x32xf32> to vector<1x2x8x32xf32>
    %191 = vector.shape_cast %190 : vector<1x2x8x32xf32> to vector<2x8x32xf32>
    %192 = arith.addf %189, %191 : vector<2x8x32xf32>
    %193 = vector.extract_strided_slice %184 {offsets = [3, 0, 0, 0], sizes = [1, 2, 8, 32], strides = [1, 1, 1, 1]} : vector<4x2x8x32xf32> to vector<1x2x8x32xf32>
    %194 = vector.shape_cast %193 : vector<1x2x8x32xf32> to vector<2x8x32xf32>
    %195 = arith.addf %192, %194 : vector<2x8x32xf32>
    %196 = vector.shape_cast %195 : vector<2x8x32xf32> to vector<16x32xf32>
    %197 = vector.broadcast %121 : vector<1x32xf32> to vector<16x32xf32>
    %198 = arith.addf %196, %197 : vector<16x32xf32>
    %199 = arith.addf %113, %198 : vector<16x32xf32>
    %c0_75 = arith.constant 0 : index
    %c0_76 = arith.constant 0 : index
    %200 = vector.load %arg24[%c0_75, %c0_76] : memref<1x32xf32, #tpu.memory_space<vmem>>, vector<1x32xf32>
    %c0_77 = arith.constant 0 : index
    %c0_78 = arith.constant 0 : index
    %201 = vector.load %arg25[%c0_77, %c0_78] : memref<1x32xf32, #tpu.memory_space<vmem>>, vector<1x32xf32>
    %cst_79 = arith.constant dense<0.000000e+00> : vector<16xf32>
    %202 = vector.multi_reduction <add>, %199, %cst_79 [1] : vector<16x32xf32> to vector<16xf32>
    %203 = vector.shape_cast %202 : vector<16xf32> to vector<16x1xf32>
    %cst_80 = arith.constant 3.200000e+01 : f32
    %204 = vector.broadcast %cst_80 : f32 to vector<16x1xf32>
    %205 = arith.divf %203, %204 : vector<16x1xf32>
    %206 = vector.broadcast %205 : vector<16x1xf32> to vector<16x32xf32>
    %207 = arith.subf %199, %206 : vector<16x32xf32>
    %208 = vector.broadcast %205 : vector<16x1xf32> to vector<16x32xf32>
    %209 = arith.subf %199, %208 : vector<16x32xf32>
    %210 = arith.mulf %207, %209 : vector<16x32xf32>
    %cst_81 = arith.constant dense<0.000000e+00> : vector<16xf32>
    %211 = vector.multi_reduction <add>, %210, %cst_81 [1] : vector<16x32xf32> to vector<16xf32>
    %212 = vector.shape_cast %211 : vector<16xf32> to vector<16x1xf32>
    %cst_82 = arith.constant 3.200000e+01 : f32
    %213 = vector.broadcast %cst_82 : f32 to vector<16x1xf32>
    %214 = arith.divf %212, %213 : vector<16x1xf32>
    %215 = vector.broadcast %205 : vector<16x1xf32> to vector<16x32xf32>
    %216 = arith.subf %199, %215 : vector<16x32xf32>
    %cst_83 = arith.constant 9.99999974E-6 : f32
    %217 = vector.broadcast %cst_83 : f32 to vector<16x1xf32>
    %218 = arith.addf %214, %217 : vector<16x1xf32>
    %219 = math.rsqrt %218 : vector<16x1xf32>
    %220 = vector.broadcast %219 : vector<16x1xf32> to vector<16x32xf32>
    %221 = arith.mulf %216, %220 : vector<16x32xf32>
    %222 = vector.broadcast %200 : vector<1x32xf32> to vector<16x32xf32>
    %223 = arith.mulf %221, %222 : vector<16x32xf32>
    %224 = vector.broadcast %201 : vector<1x32xf32> to vector<16x32xf32>
    %225 = arith.addf %223, %224 : vector<16x32xf32>
    %c0_84 = arith.constant 0 : index
    %c0_85 = arith.constant 0 : index
    %226 = vector.load %arg18[%c0_84, %c0_85] : memref<32x64xf32, #tpu.memory_space<vmem>>, vector<32x64xf32>
    %cst_86 = arith.constant dense<0.000000e+00> : vector<16x64xf32>
    %227 = tpu.matmul %225, %226, %cst_86 {dimension_numbers = #tpu.dot_dimension_numbers<[1], [0], [0], [1], [0, 0, 1, 1], [], []>} : vector<16x32xf32>, vector<32x64xf32>, vector<16x64xf32> -> vector<16x64xf32>
    %c0_87 = arith.constant 0 : index
    %c0_88 = arith.constant 0 : index
    %228 = vector.load %arg19[%c0_87, %c0_88] : memref<1x64xf32, #tpu.memory_space<vmem>>, vector<1x64xf32>
    %229 = vector.broadcast %228 : vector<1x64xf32> to vector<16x64xf32>
    %230 = arith.addf %227, %229 : vector<16x64xf32>
    %cst_89 = arith.constant 0.000000e+00 : f32
    %231 = vector.broadcast %cst_89 : f32 to vector<16x64xf32>
    %232 = arith.maximumf %230, %231 : vector<16x64xf32>
    %c0_90 = arith.constant 0 : index
    %c0_91 = arith.constant 0 : index
    %233 = vector.load %arg20[%c0_90, %c0_91] : memref<64x32xf32, #tpu.memory_space<vmem>>, vector<64x32xf32>
    %cst_92 = arith.constant dense<0.000000e+00> : vector<16x32xf32>
    %234 = tpu.matmul %232, %233, %cst_92 {dimension_numbers = #tpu.dot_dimension_numbers<[1], [0], [0], [1], [0, 0, 1, 1], [], []>} : vector<16x64xf32>, vector<64x32xf32>, vector<16x32xf32> -> vector<16x32xf32>
    %c0_93 = arith.constant 0 : index
    %c0_94 = arith.constant 0 : index
    %235 = vector.load %arg21[%c0_93, %c0_94] : memref<1x32xf32, #tpu.memory_space<vmem>>, vector<1x32xf32>
    %236 = vector.broadcast %235 : vector<1x32xf32> to vector<16x32xf32>
    %237 = arith.addf %234, %236 : vector<16x32xf32>
    %238 = arith.addf %225, %237 : vector<16x32xf32>
    %c0_95 = arith.constant 0 : index
    %c0_96 = arith.constant 0 : index
    %239 = vector.load %arg26[%c0_95, %c0_96] : memref<1x32xf32, #tpu.memory_space<vmem>>, vector<1x32xf32>
    %c0_97 = arith.constant 0 : index
    %c0_98 = arith.constant 0 : index
    %240 = vector.load %arg27[%c0_97, %c0_98] : memref<1x32xf32, #tpu.memory_space<vmem>>, vector<1x32xf32>
    %cst_99 = arith.constant dense<0.000000e+00> : vector<16xf32>
    %241 = vector.multi_reduction <add>, %238, %cst_99 [1] : vector<16x32xf32> to vector<16xf32>
    %242 = vector.shape_cast %241 : vector<16xf32> to vector<16x1xf32>
    %cst_100 = arith.constant 3.200000e+01 : f32
    %243 = vector.broadcast %cst_100 : f32 to vector<16x1xf32>
    %244 = arith.divf %242, %243 : vector<16x1xf32>
    %245 = vector.broadcast %244 : vector<16x1xf32> to vector<16x32xf32>
    %246 = arith.subf %238, %245 : vector<16x32xf32>
    %247 = vector.broadcast %244 : vector<16x1xf32> to vector<16x32xf32>
    %248 = arith.subf %238, %247 : vector<16x32xf32>
    %249 = arith.mulf %246, %248 : vector<16x32xf32>
    %cst_101 = arith.constant dense<0.000000e+00> : vector<16xf32>
    %250 = vector.multi_reduction <add>, %249, %cst_101 [1] : vector<16x32xf32> to vector<16xf32>
    %251 = vector.shape_cast %250 : vector<16xf32> to vector<16x1xf32>
    %cst_102 = arith.constant 3.200000e+01 : f32
    %252 = vector.broadcast %cst_102 : f32 to vector<16x1xf32>
    %253 = arith.divf %251, %252 : vector<16x1xf32>
    %254 = vector.broadcast %244 : vector<16x1xf32> to vector<16x32xf32>
    %255 = arith.subf %238, %254 : vector<16x32xf32>
    %cst_103 = arith.constant 9.99999974E-6 : f32
    %256 = vector.broadcast %cst_103 : f32 to vector<16x1xf32>
    %257 = arith.addf %253, %256 : vector<16x1xf32>
    %258 = math.rsqrt %257 : vector<16x1xf32>
    %259 = vector.broadcast %258 : vector<16x1xf32> to vector<16x32xf32>
    %260 = arith.mulf %255, %259 : vector<16x32xf32>
    %261 = vector.broadcast %239 : vector<1x32xf32> to vector<16x32xf32>
    %262 = arith.mulf %260, %261 : vector<16x32xf32>
    %263 = vector.broadcast %240 : vector<1x32xf32> to vector<16x32xf32>
    %264 = arith.addf %262, %263 : vector<16x32xf32>
    %c0_104 = arith.constant 0 : index
    %c0_105 = arith.constant 0 : index
    %265 = vector.load %arg28[%c0_104, %c0_105] : memref<16x32xf32, #tpu.memory_space<vmem>>, vector<16x32xf32>
    tpu.vector_store %arg28[%c0_104, %c0_105], %264 {strides = array<i32>} : memref<16x32xf32, #tpu.memory_space<vmem>>, vector<16x32xf32>,
    return
  }
}

</mosaic_0001>

<llo_original>
// kernel: decoder_layer_forward.1
$region0: #{decoder_layer_forward.1}
  #allocation0 [shape = 'u32[]', space=smem, size = 0x4, offset = 0x4, fixed_abs, tag = 'smem constant byte address 0x4 - core index']
  #allocation1 [shape = 'u32[144,128]{1,0:T(1,128)}', space=vmem, size = 0x12000, scoped, tag = 'internal scratch']
  %s0 = inlined_call_operand.vmem [shape: f32[16,32], index: 0, kind: input, shape index: {}]
  %s1 = inlined_call_operand.vmem [shape: f32[16,32], index: 1, kind: input, shape index: {}]
  %s2 = inlined_call_operand.vmem [shape: f32[4,32,8], index: 2, kind: input, shape index: {}]
  %s3 = inlined_call_operand.vmem [shape: f32[4,1,8], index: 3, kind: input, shape index: {}]
  %s4 = inlined_call_operand.vmem [shape: f32[4,32,8], index: 4, kind: input, shape index: {}]
  %s5 = inlined_call_operand.vmem [shape: f32[4,1,8], index: 5, kind: input, shape index: {}]
  %s6 = inlined_call_operand.vmem [shape: f32[4,32,8], index: 6, kind: input, shape index: {}]
  %s7 = inlined_call_operand.vmem [shape: f32[4,1,8], index: 7, kind: input, shape index: {}]
  %s8 = inlined_call_operand.vmem [shape: f32[4,8,32], index: 8, kind: input, shape index: {}]
  %s9 = inlined_call_operand.vmem [shape: f32[1,32], index: 9, kind: input, shape index: {}]
  %s10 = inlined_call_operand.vmem [shape: f32[4,32,8], index: 10, kind: input, shape index: {}]
  %s11 = inlined_call_operand.vmem [shape: f32[4,1,8], index: 11, kind: input, shape index: {}]
  %s12 = inlined_call_operand.vmem [shape: f32[4,32,8], index: 12, kind: input, shape index: {}]
  %s13 = inlined_call_operand.vmem [shape: f32[4,1,8], index: 13, kind: input, shape index: {}]
  %s14 = inlined_call_operand.vmem [shape: f32[4,32,8], index: 14, kind: input, shape index: {}]
  %s15 = inlined_call_operand.vmem [shape: f32[4,1,8], index: 15, kind: input, shape index: {}]
  %s16 = inlined_call_operand.vmem [shape: f32[4,8,32], index: 16, kind: input, shape index: {}]
  %s17 = inlined_call_operand.vmem [shape: f32[1,32], index: 17, kind: input, shape index: {}]
  %s18 = inlined_call_operand.vmem [shape: f32[32,64], index: 18, kind: input, shape index: {}]
  %s19 = inlined_call_operand.vmem [shape: f32[1,64], index: 19, kind: input, shape index: {}]
  %s20 = inlined_call_operand.vmem [shape: f32[64,32], index: 20, kind: input, shape index: {}]
  %s21 = inlined_call_operand.vmem [shape: f32[1,32], index: 21, kind: input, shape index: {}]
  %s22 = inlined_call_operand.vmem [shape: f32[1,32], index: 22, kind: input, shape index: {}]
  %s23 = inlined_call_operand.vmem [shape: f32[1,32], index: 23, kind: input, shape index: {}]
  %s24 = inlined_call_operand.vmem [shape: f32[1,32], index: 24, kind: input, shape index: {}]
  %s25 = inlined_call_operand.vmem [shape: f32[1,32], index: 25, kind: input, shape index: {}]
  %s26 = inlined_call_operand.vmem [shape: f32[1,32], index: 26, kind: input, shape index: {}]
  %s27 = inlined_call_operand.vmem [shape: f32[1,32], index: 27, kind: input, shape index: {}]
  %s28 = inlined_call_operand.hbm [shape: f32[16,32], index: 28, kind: output, shape index: {}]
  %s29 = sld [smem:[#allocation0]]
  $region122: #{decoder_layer_forward.1} parent=0
    _
  %s31 = ssub.s32 1, %s29
  %s32 = scalar_select 0, %s31, %s29
  $region1: #{decoder_layer_forward.1} parent=0
    #allocation2 [shape = 'u8[8192]{0}', space=vmem, size = 0x2000, scoped, tag = 'output window, operand 0, single buffered']
    #allocation3 [shape = 's32[1]{0}', space=sflag, size = 0x4, scoped, tag = 'scoped memory for decoder_layer_forward.1']
    %33 = vsyncpa [#allocation3], 0
    // Predicated region
    $region2: #{decoder_layer_forward.1} parent=1 // pred_check
      _
    $region3: #{decoder_layer_forward.1} parent=1 // pred_check_branch
      %35 = sbr.rel (0) target = $region5
    $region4: #{decoder_layer_forward.1} parent=1 // pred_region
      _
    $region5: #{decoder_layer_forward.1} parent=1 // pred_fallthru
      _
    // Predicated region
    $region6: #{decoder_layer_forward.1} parent=1 // pred_check
      _
    $region7: #{decoder_layer_forward.1} parent=1 // pred_check_branch
      %37 = sbr.rel (0) target = $region9
    $region8: #{decoder_layer_forward.1} parent=1 // pred_region
      _
    $region9: #{decoder_layer_forward.1} parent=1 // pred_fallthru
      _
    // Predicated region
    $region10: #{decoder_layer_forward.1} parent=1 // pred_check
      _
    $region11: #{decoder_layer_forward.1} parent=1 // pred_check_branch
      %39 = sbr.rel (0) target = $region13
    $region12: #{decoder_layer_forward.1} parent=1 // pred_region
      _
    $region13: #{decoder_layer_forward.1} parent=1 // pred_fallthru
      _
    // Predicated region
    $region14: #{decoder_layer_forward.1} parent=1 // pred_check
      _
    $region15: #{decoder_layer_forward.1} parent=1 // pred_check_branch
      %41 = sbr.rel (0) target = $region17
    $region16: #{decoder_layer_forward.1} parent=1 // pred_region
      _
    $region17: #{decoder_layer_forward.1} parent=1 // pred_fallthru
      _
    // Predicated region
    $region18: #{decoder_layer_forward.1} parent=1 // pred_check
      _
    $region19: #{decoder_layer_forward.1} parent=1 // pred_check_branch
      %43 = sbr.rel (0) target = $region21
    $region20: #{decoder_layer_forward.1} parent=1 // pred_region
      _
    $region21: #{decoder_layer_forward.1} parent=1 // pred_fallthru
      _
    // Predicated region
    $region22: #{decoder_layer_forward.1} parent=1 // pred_check
      _
    $region23: #{decoder_layer_forward.1} parent=1 // pred_check_branch
      %45 = sbr.rel (0) target = $region25
    $region24: #{decoder_layer_forward.1} parent=1 // pred_region
      _
    $region25: #{decoder_layer_forward.1} parent=1 // pred_fallthru
      _
    // Predicated region
    $region26: #{decoder_layer_forward.1} parent=1 // pred_check
      _
    $region27: #{decoder_layer_forward.1} parent=1 // pred_check_branch
      %47 = sbr.rel (0) target = $region29
    $region28: #{decoder_layer_forward.1} parent=1 // pred_region
      _
    $region29: #{decoder_layer_forward.1} parent=1 // pred_fallthru
      _
    // Predicated region
    $region30: #{decoder_layer_forward.1} parent=1 // pred_check
      _
    $region31: #{decoder_layer_forward.1} parent=1 // pred_check_branch
      %49 = sbr.rel (0) target = $region33
    $region32: #{decoder_layer_forward.1} parent=1 // pred_region
      _
    $region33: #{decoder_layer_forward.1} parent=1 // pred_fallthru
      _
    // Predicated region
    $region34: #{decoder_layer_forward.1} parent=1 // pred_check
      _
    $region35: #{decoder_layer_forward.1} parent=1 // pred_check_branch
      %51 = sbr.rel (0) target = $region37
    $region36: #{decoder_layer_forward.1} parent=1 // pred_region
      _
    $region37: #{decoder_layer_forward.1} parent=1 // pred_fallthru
      _
    // Predicated region
    $region38: #{decoder_layer_forward.1} parent=1 // pred_check
      _
    $region39: #{decoder_layer_forward.1} parent=1 // pred_check_branch
      %53 = sbr.rel (0) target = $region41
    $region40: #{decoder_layer_forward.1} parent=1 // pred_region
      _
    $region41: #{decoder_layer_forward.1} parent=1 // pred_fallthru
      _
    // Predicated region
    $region42: #{decoder_layer_forward.1} parent=1 // pred_check
      _
    $region43: #{decoder_layer_forward.1} parent=1 // pred_check_branch
      %55 = sbr.rel (0) target = $region45
    $region44: #{decoder_layer_forward.1} parent=1 // pred_region
      _
    $region45: #{decoder_layer_forward.1} parent=1 // pred_fallthru
      _
    // Predicated region
    $region46: #{decoder_layer_forward.1} parent=1 // pred_check
      _
    $region47: #{decoder_layer_forward.1} parent=1 // pred_check_branch
      %57 = sbr.rel (0) target = $region49
    $region48: #{decoder_layer_forward.1} parent=1 // pred_region
      _
    $region49: #{decoder_layer_forward.1} parent=1 // pred_fallthru
      _
    // Predicated region
    $region50: #{decoder_layer_forward.1} parent=1 // pred_check
      _
    $region51: #{decoder_layer_forward.1} parent=1 // pred_check_branch
      %59 = sbr.rel (0) target = $region53
    $region52: #{decoder_layer_forward.1} parent=1 // pred_region
      _
    $region53: #{decoder_layer_forward.1} parent=1 // pred_fallthru
      _
    // Predicated region
    $region54: #{decoder_layer_forward.1} parent=1 // pred_check
      _
    $region55: #{decoder_layer_forward.1} parent=1 // pred_check_branch
      %61 = sbr.rel (0) target = $region57
    $region56: #{decoder_layer_forward.1} parent=1 // pred_region
      _
    $region57: #{decoder_layer_forward.1} parent=1 // pred_fallthru
      _
    // Predicated region
    $region58: #{decoder_layer_forward.1} parent=1 // pred_check
      _
    $region59: #{decoder_layer_forward.1} parent=1 // pred_check_branch
      %63 = sbr.rel (0) target = $region61
    $region60: #{decoder_layer_forward.1} parent=1 // pred_region
      _
    $region61: #{decoder_layer_forward.1} parent=1 // pred_fallthru
      _
    // Predicated region
    $region62: #{decoder_layer_forward.1} parent=1 // pred_check
      _
    $region63: #{decoder_layer_forward.1} parent=1 // pred_check_branch
      %65 = sbr.rel (0) target = $region65
    $region64: #{decoder_layer_forward.1} parent=1 // pred_region
      _
    $region65: #{decoder_layer_forward.1} parent=1 // pred_fallthru
      _
    // Predicated region
    $region66: #{decoder_layer_forward.1} parent=1 // pred_check
      _
    $region67: #{decoder_layer_forward.1} parent=1 // pred_check_branch
      %67 = sbr.rel (0) target = $region69
    $region68: #{decoder_layer_forward.1} parent=1 // pred_region
      _
    $region69: #{decoder_layer_forward.1} parent=1 // pred_fallthru
      _
    // Predicated region
    $region70: #{decoder_layer_forward.1} parent=1 // pred_check
      _
    $region71: #{decoder_layer_forward.1} parent=1 // pred_check_branch
      %69 = sbr.rel (0) target = $region73
    $region72: #{decoder_layer_forward.1} parent=1 // pred_region
      _
    $region73: #{decoder_layer_forward.1} parent=1 // pred_fallthru
      _
    // Predicated region
    $region74: #{decoder_layer_forward.1} parent=1 // pred_check
      _
    $region75: #{decoder_layer_forward.1} parent=1 // pred_check_branch
      %71 = sbr.rel (0) target = $region77
    $region76: #{decoder_layer_forward.1} parent=1 // pred_region
      _
    $region77: #{decoder_layer_forward.1} parent=1 // pred_fallthru
      _
    // Predicated region
    $region78: #{decoder_layer_forward.1} parent=1 // pred_check
      _
    $region79: #{decoder_layer_forward.1} parent=1 // pred_check_branch
      %73 = sbr.rel (0) target = $region81
    $region80: #{decoder_layer_forward.1} parent=1 // pred_region
      _
    $region81: #{decoder_layer_forward.1} parent=1 // pred_fallthru
      _
    // Predicated region
    $region82: #{decoder_layer_forward.1} parent=1 // pred_check
      _
    $region83: #{decoder_layer_forward.1} parent=1 // pred_check_branch
      %75 = sbr.rel (0) target = $region85
    $region84: #{decoder_layer_forward.1} parent=1 // pred_region
      _
    $region85: #{decoder_layer_forward.1} parent=1 // pred_fallthru
      _
    // Predicated region
    $region86: #{decoder_layer_forward.1} parent=1 // pred_check
      _
    $region87: #{decoder_layer_forward.1} parent=1 // pred_check_branch
      %77 = sbr.rel (0) target = $region89
    $region88: #{decoder_layer_forward.1} parent=1 // pred_region
      _
    $region89: #{decoder_layer_forward.1} parent=1 // pred_fallthru
      _
    // Predicated region
    $region90: #{decoder_layer_forward.1} parent=1 // pred_check
      _
    $region91: #{decoder_layer_forward.1} parent=1 // pred_check_branch
      %79 = sbr.rel (0) target = $region93
    $region92: #{decoder_layer_forward.1} parent=1 // pred_region
      _
    $region93: #{decoder_layer_forward.1} parent=1 // pred_fallthru
      _
    // Predicated region
    $region94: #{decoder_layer_forward.1} parent=1 // pred_check
      _
    $region95: #{decoder_layer_forward.1} parent=1 // pred_check_branch
      %81 = sbr.rel (0) target = $region97
    $region96: #{decoder_layer_forward.1} parent=1 // pred_region
      _
    $region97: #{decoder_layer_forward.1} parent=1 // pred_fallthru
      _
    // Predicated region
    $region98: #{decoder_layer_forward.1} parent=1 // pred_check
      _
    $region99: #{decoder_layer_forward.1} parent=1 // pred_check_branch
      %83 = sbr.rel (0) target = $region101
    $region100: #{decoder_layer_forward.1} parent=1 // pred_region
      _
    $region101: #{decoder_layer_forward.1} parent=1 // pred_fallthru
      _
    // Predicated region
    $region102: #{decoder_layer_forward.1} parent=1 // pred_check
      _
    $region103: #{decoder_layer_forward.1} parent=1 // pred_check_branch
      %85 = sbr.rel (0) target = $region105
    $region104: #{decoder_layer_forward.1} parent=1 // pred_region
      _
    $region105: #{decoder_layer_forward.1} parent=1 // pred_fallthru
      _
    // Predicated region
    $region106: #{decoder_layer_forward.1} parent=1 // pred_check
      _
    $region107: #{decoder_layer_forward.1} parent=1 // pred_check_branch
      %87 = sbr.rel (0) target = $region109
    $region108: #{decoder_layer_forward.1} parent=1 // pred_region
      _
    $region109: #{decoder_layer_forward.1} parent=1 // pred_fallthru
      _
    // Predicated region
    $region110: #{decoder_layer_forward.1} parent=1 // pred_check
      _
    $region111: #{decoder_layer_forward.1} parent=1 // pred_check_branch
      %89 = sbr.rel (0) target = $region113
    $region112: #{decoder_layer_forward.1} parent=1 // pred_region
      _
    $region113: #{decoder_layer_forward.1} parent=1 // pred_fallthru
      _
    %v90 = vld [vmem:[%s0] sm:$0xff]
    %v91 = vld [vmem:[%s0 + $0x8] sm:$0xff]
    %v92 = vld [vmem:[%s1] sm:$0xff]
    %v93 = vld [vmem:[%s1 + $0x8] sm:$0xff]
    %v94 = vld [vmem:[%s2] sm:$0xff]
    %v95 = vld [vmem:[%s2 + $0x8] sm:$0xff]
    %v96 = vld [vmem:[%s2 + $0x10] sm:$0xff]
    %v97 = vld [vmem:[%s2 + $0x18] sm:$0xff]
    %v98 = vld [vmem:[%s2 + $0x20] sm:$0xff]
    %v99 = vld [vmem:[%s2 + $0x28] sm:$0xff]
    %v100 = vld [vmem:[%s2 + $0x30] sm:$0xff]
    %v101 = vld [vmem:[%s2 + $0x38] sm:$0xff]
    %v102 = vld [vmem:[%s2 + $0x40] sm:$0xff]
    %v103 = vld [vmem:[%s2 + $0x48] sm:$0xff]
    %v104 = vld [vmem:[%s2 + $0x50] sm:$0xff]
    %v105 = vld [vmem:[%s2 + $0x58] sm:$0xff]
    %v106 = vld [vmem:[%s2 + $0x60] sm:$0xff]
    %v107 = vld [vmem:[%s2 + $0x68] sm:$0xff]
    %v108 = vld [vmem:[%s2 + $0x70] sm:$0xff]
    %v109 = vld [vmem:[%s2 + $0x78] sm:$0xff]
    %v110 = vld [vmem:[%s3] sm:$0x1]
    %v111 = vld [vmem:[%s3 + $0x1] sm:$0x1]
    %v112 = vld [vmem:[%s3 + $0x2] sm:$0x1]
    %v113 = vld [vmem:[%s3 + $0x3] sm:$0x1]
    %v114 = vld [vmem:[%s4] sm:$0xff]
    %v115 = vld [vmem:[%s4 + $0x8] sm:$0xff]
    %v116 = vld [vmem:[%s4 + $0x10] sm:$0xff]
    %v117 = vld [vmem:[%s4 + $0x18] sm:$0xff]
    %v118 = vld [vmem:[%s4 + $0x20] sm:$0xff]
    %v119 = vld [vmem:[%s4 + $0x28] sm:$0xff]
    %v120 = vld [vmem:[%s4 + $0x30] sm:$0xff]
    %v121 = vld [vmem:[%s4 + $0x38] sm:$0xff]
    %v122 = vld [vmem:[%s4 + $0x40] sm:$0xff]
    %v123 = vld [vmem:[%s4 + $0x48] sm:$0xff]
    %v124 = vld [vmem:[%s4 + $0x50] sm:$0xff]
    %v125 = vld [vmem:[%s4 + $0x58] sm:$0xff]
    %v126 = vld [vmem:[%s4 + $0x60] sm:$0xff]
    %v127 = vld [vmem:[%s4 + $0x68] sm:$0xff]
    %v128 = vld [vmem:[%s4 + $0x70] sm:$0xff]
    %v129 = vld [vmem:[%s4 + $0x78] sm:$0xff]
    %v130 = vld [vmem:[%s5] sm:$0x1]
    %v131 = vld [vmem:[%s5 + $0x1] sm:$0x1]
    %v132 = vld [vmem:[%s5 + $0x2] sm:$0x1]
    %v133 = vld [vmem:[%s5 + $0x3] sm:$0x1]
    %v134 = vld [vmem:[%s6] sm:$0xff]
    %v135 = vld [vmem:[%s6 + $0x8] sm:$0xff]
    %v136 = vld [vmem:[%s6 + $0x10] sm:$0xff]
    %v137 = vld [vmem:[%s6 + $0x18] sm:$0xff]
    %v138 = vld [vmem:[%s6 + $0x20] sm:$0xff]
    %v139 = vld [vmem:[%s6 + $0x28] sm:$0xff]
    %v140 = vld [vmem:[%s6 + $0x30] sm:$0xff]
    %v141 = vld [vmem:[%s6 + $0x38] sm:$0xff]
    %v142 = vld [vmem:[%s6 + $0x40] sm:$0xff]
    %v143 = vld [vmem:[%s6 + $0x48] sm:$0xff]
    %v144 = vld [vmem:[%s6 + $0x50] sm:$0xff]
    %v145 = vld [vmem:[%s6 + $0x58] sm:$0xff]
    %v146 = vld [vmem:[%s6 + $0x60] sm:$0xff]
    %v147 = vld [vmem:[%s6 + $0x68] sm:$0xff]
    %v148 = vld [vmem:[%s6 + $0x70] sm:$0xff]
    %v149 = vld [vmem:[%s6 + $0x78] sm:$0xff]
    %v150 = vld [vmem:[%s7] sm:$0x1]
    %v151 = vld [vmem:[%s7 + $0x1] sm:$0x1]
    %v152 = vld [vmem:[%s7 + $0x2] sm:$0x1]
    %v153 = vld [vmem:[%s7 + $0x3] sm:$0x1]
    %v154 = vld [vmem:[%s8] sm:$0xff]
    %v155 = vld [vmem:[%s8 + $0x8] sm:$0xff]
    %v156 = vld [vmem:[%s8 + $0x10] sm:$0xff]
    %v157 = vld [vmem:[%s8 + $0x18] sm:$0xff]
    %v158 = vld [vmem:[%s9] sm:$0x1]
    %v163 = vlaneseq
    %v164 = vshrl.u32 %v163, 7
    %v165 = vsub.s32 0, %v164
    %v166 = vrot.slane %v110, %v165
    %v167 = vlaneseq
    %v168 = vshrl.u32 %v167, 7
    %v169 = vsub.s32 0, %v168
    %v170 = vrot.slane %v111, %v169
    %v171 = vlaneseq
    %v172 = vshrl.u32 %v171, 7
    %v173 = vsub.s32 0, %v172
    %v174 = vrot.slane %v112, %v173
    %v175 = vlaneseq
    %v176 = vshrl.u32 %v175, 7
    %v177 = vsub.s32 0, %v176
    %v178 = vrot.slane %v113, %v177
    %vm183 = vcmask 261120
    %v185 = vsel %vm183, %v90, 0
    %187 = vmatprep.subr.mxu0 0.0
    %188 = vmatpush1.msra.mxu0 %v94
    %189 = vmatprep.subr.mxu0 0.0
    %190 = vmatpush1.msra.mxu0 %v95
    %191 = vmatprep.subr.mxu0 0.0
    %192 = vmatpush1.msra.mxu0 %v96
    %193 = vmatprep.subr.mxu0 0.0
    %194 = vmatpush1.msra.mxu0 %v97
    %195 = vmatprep.subr.mxu0 0.0
    %196 = vmatpush1.msra.mxu0 0.0
    %197 = vmatprep.subr.mxu0 0.0
    %198 = vmatpush1.msra.mxu0 0.0
    %199 = vmatprep.subr.mxu0 0.0
    %200 = vmatpush1.msra.mxu0 0.0
    %201 = vmatprep.subr.mxu0 0.0
    %202 = vmatpush1.msra.mxu0 0.0
    %203 = vmatprep.subr.mxu0 0.0
    %204 = vmatpush1.msra.mxu0 0.0
    %205 = vmatprep.subr.mxu0 0.0
    %206 = vmatpush1.msra.mxu0 0.0
    %207 = vmatprep.subr.mxu0 0.0
    %208 = vmatpush1.msra.mxu0 0.0
    %209 = vmatprep.subr.mxu0 0.0
    %210 = vmatpush1.msra.mxu0 0.0
    %211 = vmatprep.subr.mxu0 0.0
    %212 = vmatpush1.msra.mxu0 0.0
    %213 = vmatprep.subr.mxu0 0.0
    %214 = vmatpush1.msra.mxu0 0.0
    %215 = vmatprep.subr.mxu0 0.0
    %216 = vmatpush1.msra.mxu0 0.0
    %217 = vmatprep.subr.mxu0 0.0
    %218 = vmatpush1.msra.mxu0 0.0
    %219 = vmatprep.subr.mxu0 0.0
    %220 = vmatpush1.msra.mxu0 0.0
    %221 = vmatprep.subr.mxu0 0.0
    %222 = vmatpush1.msra.mxu0 0.0
    %223 = vmatprep.subr.mxu0 0.0
    %224 = vmatpush1.msra.mxu0 0.0
    %225 = vmatprep.subr.mxu0 0.0
    %226 = vmatpush1.msra.mxu0 0.0
    %227 = vmatprep.subr.mxu0 0.0
    %228 = vmatpush1.msra.mxu0 0.0
    %229 = vmatprep.subr.mxu0 0.0
    %230 = vmatpush1.msra.mxu0 0.0
    %231 = vmatprep.subr.mxu0 0.0
    %232 = vmatpush1.msra.mxu0 0.0
    %233 = vmatprep.subr.mxu0 0.0
    %234 = vmatpush1.msra.mxu0 0.0
    %235 = vmatprep.subr.mxu0 0.0
    %236 = vmatpush1.msra.mxu0 0.0
    %237 = vmatprep.subr.mxu0 0.0
    %238 = vmatpush1.msra.mxu0 0.0
    %239 = vmatprep.subr.mxu0 0.0
    %240 = vmatpush1.msra.mxu0 0.0
    %241 = vmatprep.subr.mxu0 0.0
    %242 = vmatpush1.msra.mxu0 0.0
    %243 = vmatprep.subr.mxu0 0.0
    %244 = vmatpush1.msra.mxu0 0.0
    %245 = vmatprep.subr.mxu0 0.0
    %246 = vmatpush1.msra.mxu0 0.0
    %247 = vmatprep.subr.mxu0 0.0
    %248 = vmatpush1.msra.mxu0 0.0
    %249 = vmatprep.subr.mxu0 0.0
    %250 = vmatpush1.msra.mxu0 0.0
    %251 = vmatprep.mubr.f32.mxu0 0.0
    %252 = vmatmul.mubr.f32.gmra.mrb[0].mxu0 %v185
    %v253 = vpop.f32.mrb[0].mxu0
    %v254 = vadd.f32 %v166, %v253
    %v255 = vpop.f32.mrb[0].mxu0
    %256 = vdwg.mxu0
    %v258 = vsel %vm183, %v91, 0
    %260 = vmatprep.subr.mxu0 0.0
    %261 = vmatpush1.msra.mxu0 %v94
    %262 = vmatprep.subr.mxu0 0.0
    %263 = vmatpush1.msra.mxu0 %v95
    %264 = vmatprep.subr.mxu0 0.0
    %265 = vmatpush1.msra.mxu0 %v96
    %266 = vmatprep.subr.mxu0 0.0
    %267 = vmatpush1.msra.mxu0 %v97
    %268 = vmatprep.subr.mxu0 0.0
    %269 = vmatpush1.msra.mxu0 0.0
    %270 = vmatprep.subr.mxu0 0.0
    %271 = vmatpush1.msra.mxu0 0.0
    %272 = vmatprep.subr.mxu0 0.0
    %273 = vmatpush1.msra.mxu0 0.0
    %274 = vmatprep.subr.mxu0 0.0
    %275 = vmatpush1.msra.mxu0 0.0
    %276 = vmatprep.subr.mxu0 0.0
    %277 = vmatpush1.msra.mxu0 0.0
    %278 = vmatprep.subr.mxu0 0.0
    %279 = vmatpush1.msra.mxu0 0.0
    %280 = vmatprep.subr.mxu0 0.0
    %281 = vmatpush1.msra.mxu0 0.0
    %282 = vmatprep.subr.mxu0 0.0
    %283 = vmatpush1.msra.mxu0 0.0
    %284 = vmatprep.subr.mxu0 0.0
    %285 = vmatpush1.msra.mxu0 0.0
    %286 = vmatprep.subr.mxu0 0.0
    %287 = vmatpush1.msra.mxu0 0.0
    %288 = vmatprep.subr.mxu0 0.0
    %289 = vmatpush1.msra.mxu0 0.0
    %290 = vmatprep.subr.mxu0 0.0
    %291 = vmatpush1.msra.mxu0 0.0
    %292 = vmatprep.subr.mxu0 0.0
    %293 = vmatpush1.msra.mxu0 0.0
    %294 = vmatprep.subr.mxu0 0.0
    %295 = vmatpush1.msra.mxu0 0.0
    %296 = vmatprep.subr.mxu0 0.0
    %297 = vmatpush1.msra.mxu0 0.0
    %298 = vmatprep.subr.mxu0 0.0
    %299 = vmatpush1.msra.mxu0 0.0
    %300 = vmatprep.subr.mxu0 0.0
    %301 = vmatpush1.msra.mxu0 0.0
    %302 = vmatprep.subr.mxu0 0.0
    %303 = vmatpush1.msra.mxu0 0.0
    %304 = vmatprep.subr.mxu0 0.0
    %305 = vmatpush1.msra.mxu0 0.0
    %306 = vmatprep.subr.mxu0 0.0
    %307 = vmatpush1.msra.mxu0 0.0
    %308 = vmatprep.subr.mxu0 0.0
    %309 = vmatpush1.msra.mxu0 0.0
    %310 = vmatprep.subr.mxu0 0.0
    %311 = vmatpush1.msra.mxu0 0.0
    %312 = vmatprep.subr.mxu0 0.0
    %313 = vmatpush1.msra.mxu0 0.0
    %314 = vmatprep.subr.mxu0 0.0
    %315 = vmatpush1.msra.mxu0 0.0
    %316 = vmatprep.subr.mxu0 0.0
    %317 = vmatpush1.msra.mxu0 0.0
    %318 = vmatprep.subr.mxu0 0.0
    %319 = vmatpush1.msra.mxu0 0.0
    %320 = vmatprep.subr.mxu0 0.0
    %321 = vmatpush1.msra.mxu0 0.0
    %322 = vmatprep.subr.mxu0 0.0
    %323 = vmatpush1.msra.mxu0 0.0
    %324 = vmatprep.mubr.f32.mxu0 0.0
    %325 = vmatmul.mubr.f32.gmra.mrb[0].mxu0 %v258
    %v326 = vpop.f32.mrb[0].mxu0
    %v327 = vadd.f32 %v166, %v326
    %v328 = vpop.f32.mrb[0].mxu0
    %329 = vdwg.mxu0
    %330 = vmatprep.subr.mxu0 0.0
    %331 = vmatpush1.msra.mxu0 %v98
    %332 = vmatprep.subr.mxu0 0.0
    %333 = vmatpush1.msra.mxu0 %v99
    %334 = vmatprep.subr.mxu0 0.0
    %335 = vmatpush1.msra.mxu0 %v100
    %336 = vmatprep.subr.mxu0 0.0
    %337 = vmatpush1.msra.mxu0 %v101
    %338 = vmatprep.subr.mxu0 0.0
    %339 = vmatpush1.msra.mxu0 0.0
    %340 = vmatprep.subr.mxu0 0.0
    %341 = vmatpush1.msra.mxu0 0.0
    %342 = vmatprep.subr.mxu0 0.0
    %343 = vmatpush1.msra.mxu0 0.0
    %344 = vmatprep.subr.mxu0 0.0
    %345 = vmatpush1.msra.mxu0 0.0
    %346 = vmatprep.subr.mxu0 0.0
    %347 = vmatpush1.msra.mxu0 0.0
    %348 = vmatprep.subr.mxu0 0.0
    %349 = vmatpush1.msra.mxu0 0.0
    %350 = vmatprep.subr.mxu0 0.0
    %351 = vmatpush1.msra.mxu0 0.0
    %352 = vmatprep.subr.mxu0 0.0
    %353 = vmatpush1.msra.mxu0 0.0
    %354 = vmatprep.subr.mxu0 0.0
    %355 = vmatpush1.msra.mxu0 0.0
    %356 = vmatprep.subr.mxu0 0.0
    %357 = vmatpush1.msra.mxu0 0.0
    %358 = vmatprep.subr.mxu0 0.0
    %359 = vmatpush1.msra.mxu0 0.0
    %360 = vmatprep.subr.mxu0 0.0
    %361 = vmatpush1.msra.mxu0 0.0
    %362 = vmatprep.subr.mxu0 0.0
    %363 = vmatpush1.msra.mxu0 0.0
    %364 = vmatprep.subr.mxu0 0.0
    %365 = vmatpush1.msra.mxu0 0.0
    %366 = vmatprep.subr.mxu0 0.0
    %367 = vmatpush1.msra.mxu0 0.0
    %368 = vmatprep.subr.mxu0 0.0
    %369 = vmatpush1.msra.mxu0 0.0
    %370 = vmatprep.subr.mxu0 0.0
    %371 = vmatpush1.msra.mxu0 0.0
    %372 = vmatprep.subr.mxu0 0.0
    %373 = vmatpush1.msra.mxu0 0.0
    %374 = vmatprep.subr.mxu0 0.0
    %375 = vmatpush1.msra.mxu0 0.0
    %376 = vmatprep.subr.mxu0 0.0
    %377 = vmatpush1.msra.mxu0 0.0
    %378 = vmatprep.subr.mxu0 0.0
    %379 = vmatpush1.msra.mxu0 0.0
    %380 = vmatprep.subr.mxu0 0.0
    %381 = vmatpush1.msra.mxu0 0.0
    %382 = vmatprep.subr.mxu0 0.0
    %383 = vmatpush1.msra.mxu0 0.0
    %384 = vmatprep.subr.mxu0 0.0
    %385 = vmatpush1.msra.mxu0 0.0
    %386 = vmatprep.subr.mxu0 0.0
    %387 = vmatpush1.msra.mxu0 0.0
    %388 = vmatprep.subr.mxu0 0.0
    %389 = vmatpush1.msra.mxu0 0.0
    %390 = vmatprep.subr.mxu0 0.0
    %391 = vmatpush1.msra.mxu0 0.0
    %392 = vmatprep.subr.mxu0 0.0
    %393 = vmatpush1.msra.mxu0 0.0
    %394 = vmatprep.mubr.f32.mxu0 0.0
    %395 = vmatmul.mubr.f32.gmra.mrb[0].mxu0 %v185
    %v396 = vpop.f32.mrb[0].mxu0
    %v397 = vadd.f32 %v170, %v396
    %v398 = vpop.f32.mrb[0].mxu0
    %399 = vdwg.mxu0
    %400 = vmatprep.subr.mxu0 0.0
    %401 = vmatpush1.msra.mxu0 %v98
    %402 = vmatprep.subr.mxu0 0.0
    %403 = vmatpush1.msra.mxu0 %v99
    %404 = vmatprep.subr.mxu0 0.0
    %405 = vmatpush1.msra.mxu0 %v100
    %406 = vmatprep.subr.mxu0 0.0
    %407 = vmatpush1.msra.mxu0 %v101
    %408 = vmatprep.subr.mxu0 0.0
    %409 = vmatpush1.msra.mxu0 0.0
    %410 = vmatprep.subr.mxu0 0.0
    %411 = vmatpush1.msra.mxu0 0.0
    %412 = vmatprep.subr.mxu0 0.0
    %413 = vmatpush1.msra.mxu0 0.0
    %414 = vmatprep.subr.mxu0 0.0
    %415 = vmatpush1.msra.mxu0 0.0
    %416 = vmatprep.subr.mxu0 0.0
    %417 = vmatpush1.msra.mxu0 0.0
    %418 = vmatprep.subr.mxu0 0.0
    %419 = vmatpush1.msra.mxu0 0.0
    %420 = vmatprep.subr.mxu0 0.0
    %421 = vmatpush1.msra.mxu0 0.0
    %422 = vmatprep.subr.mxu0 0.0
    %423 = vmatpush1.msra.mxu0 0.0
    %424 = vmatprep.subr.mxu0 0.0
    %425 = vmatpush1.msra.mxu0 0.0
    %426 = vmatprep.subr.mxu0 0.0
    %427 = vmatpush1.msra.mxu0 0.0
    %428 = vmatprep.subr.mxu0 0.0
    %429 = vmatpush1.msra.mxu0 0.0
    %430 = vmatprep.subr.mxu0 0.0
    %431 = vmatpush1.msra.mxu0 0.0
    %432 = vmatprep.subr.mxu0 0.0
    %433 = vmatpush1.msra.mxu0 0.0
    %434 = vmatprep.subr.mxu0 0.0
    %435 = vmatpush1.msra.mxu0 0.0
    %436 = vmatprep.subr.mxu0 0.0
    %437 = vmatpush1.msra.mxu0 0.0
    %438 = vmatprep.subr.mxu0 0.0
    %439 = vmatpush1.msra.mxu0 0.0
    %440 = vmatprep.subr.mxu0 0.0
    %441 = vmatpush1.msra.mxu0 0.0
    %442 = vmatprep.subr.mxu0 0.0
    %443 = vmatpush1.msra.mxu0 0.0
    %444 = vmatprep.subr.mxu0 0.0
    %445 = vmatpush1.msra.mxu0 0.0
    %446 = vmatprep.subr.mxu0 0.0
    %447 = vmatpush1.msra.mxu0 0.0
    %448 = vmatprep.subr.mxu0 0.0
    %449 = vmatpush1.msra.mxu0 0.0
    %450 = vmatprep.subr.mxu0 0.0
    %451 = vmatpush1.msra.mxu0 0.0
    %452 = vmatprep.subr.mxu0 0.0
    %453 = vmatpush1.msra.mxu0 0.0
    %454 = vmatprep.subr.mxu0 0.0
    %455 = vmatpush1.msra.mxu0 0.0
    %456 = vmatprep.subr.mxu0 0.0
    %457 = vmatpush1.msra.mxu0 0.0
    %458 = vmatprep.subr.mxu0 0.0
    %459 = vmatpush1.msra.mxu0 0.0
    %460 = vmatprep.subr.mxu0 0.0
    %461 = vmatpush1.msra.mxu0 0.0
    %462 = vmatprep.subr.mxu0 0.0
    %463 = vmatpush1.msra.mxu0 0.0
    %464 = vmatprep.mubr.f32.mxu0 0.0
    %465 = vmatmul.mubr.f32.gmra.mrb[0].mxu0 %v258
    %v466 = vpop.f32.mrb[0].mxu0
    %v467 = vadd.f32 %v170, %v466
    %v468 = vpop.f32.mrb[0].mxu0
    %469 = vdwg.mxu0
    %470 = vmatprep.subr.mxu0 0.0
    %471 = vmatpush1.msra.mxu0 %v102
    %472 = vmatprep.subr.mxu0 0.0
    %473 = vmatpush1.msra.mxu0 %v103
    %474 = vmatprep.subr.mxu0 0.0
    %475 = vmatpush1.msra.mxu0 %v104
    %476 = vmatprep.subr.mxu0 0.0
    %477 = vmatpush1.msra.mxu0 %v105
    %478 = vmatprep.subr.mxu0 0.0
    %479 = vmatpush1.msra.mxu0 0.0
    %480 = vmatprep.subr.mxu0 0.0
    %481 = vmatpush1.msra.mxu0 0.0
    %482 = vmatprep.subr.mxu0 0.0
    %483 = vmatpush1.msra.mxu0 0.0
    %484 = vmatprep.subr.mxu0 0.0
    %485 = vmatpush1.msra.mxu0 0.0
    %486 = vmatprep.subr.mxu0 0.0
    %487 = vmatpush1.msra.mxu0 0.0
    %488 = vmatprep.subr.mxu0 0.0
    %489 = vmatpush1.msra.mxu0 0.0
    %490 = vmatprep.subr.mxu0 0.0
    %491 = vmatpush1.msra.mxu0 0.0
    %492 = vmatprep.subr.mxu0 0.0
    %493 = vmatpush1.msra.mxu0 0.0
    %494 = vmatprep.subr.mxu0 0.0
    %495 = vmatpush1.msra.mxu0 0.0
    %496 = vmatprep.subr.mxu0 0.0
    %497 = vmatpush1.msra.mxu0 0.0
    %498 = vmatprep.subr.mxu0 0.0
    %499 = vmatpush1.msra.mxu0 0.0
    %500 = vmatprep.subr.mxu0 0.0
    %501 = vmatpush1.msra.mxu0 0.0
    %502 = vmatprep.subr.mxu0 0.0
    %503 = vmatpush1.msra.mxu0 0.0
    %504 = vmatprep.subr.mxu0 0.0
    %505 = vmatpush1.msra.mxu0 0.0
    %506 = vmatprep.subr.mxu0 0.0
    %507 = vmatpush1.msra.mxu0 0.0
    %508 = vmatprep.subr.mxu0 0.0
    %509 = vmatpush1.msra.mxu0 0.0
    %510 = vmatprep.subr.mxu0 0.0
    %511 = vmatpush1.msra.mxu0 0.0
    %512 = vmatprep.subr.mxu0 0.0
    %513 = vmatpush1.msra.mxu0 0.0
    %514 = vmatprep.subr.mxu0 0.0
    %515 = vmatpush1.msra.mxu0 0.0
    %516 = vmatprep.subr.mxu0 0.0
    %517 = vmatpush1.msra.mxu0 0.0
    %518 = vmatprep.subr.mxu0 0.0
    %519 = vmatpush1.msra.mxu0 0.0
    %520 = vmatprep.subr.mxu0 0.0
    %521 = vmatpush1.msra.mxu0 0.0
    %522 = vmatprep.subr.mxu0 0.0
    %523 = vmatpush1.msra.mxu0 0.0
    %524 = vmatprep.subr.mxu0 0.0
    %525 = vmatpush1.msra.mxu0 0.0
    %526 = vmatprep.subr.mxu0 0.0
    %527 = vmatpush1.msra.mxu0 0.0
    %528 = vmatprep.subr.mxu0 0.0
    %529 = vmatpush1.msra.mxu0 0.0
    %530 = vmatprep.subr.mxu0 0.0
    %531 = vmatpush1.msra.mxu0 0.0
    %532 = vmatprep.subr.mxu0 0.0
    %533 = vmatpush1.msra.mxu0 0.0
    %534 = vmatprep.mubr.f32.mxu0 0.0
    %535 = vmatmul.mubr.f32.gmra.mrb[0].mxu0 %v185
    %v536 = vpop.f32.mrb[0].mxu0
    %v537 = vadd.f32 %v174, %v536
    %v538 = vpop.f32.mrb[0].mxu0
    %539 = vdwg.mxu0
    %540 = vmatprep.subr.mxu0 0.0
    %541 = vmatpush1.msra.mxu0 %v102
    %542 = vmatprep.subr.mxu0 0.0
    %543 = vmatpush1.msra.mxu0 %v103
    %544 = vmatprep.subr.mxu0 0.0
    %545 = vmatpush1.msra.mxu0 %v104
    %546 = vmatprep.subr.mxu0 0.0
    %547 = vmatpush1.msra.mxu0 %v105
    %548 = vmatprep.subr.mxu0 0.0
    %549 = vmatpush1.msra.mxu0 0.0
    %550 = vmatprep.subr.mxu0 0.0
    %551 = vmatpush1.msra.mxu0 0.0
    %552 = vmatprep.subr.mxu0 0.0
    %553 = vmatpush1.msra.mxu0 0.0
    %554 = vmatprep.subr.mxu0 0.0
    %555 = vmatpush1.msra.mxu0 0.0
    %556 = vmatprep.subr.mxu0 0.0
    %557 = vmatpush1.msra.mxu0 0.0
    %558 = vmatprep.subr.mxu0 0.0
    %559 = vmatpush1.msra.mxu0 0.0
    %560 = vmatprep.subr.mxu0 0.0
    %561 = vmatpush1.msra.mxu0 0.0
    %562 = vmatprep.subr.mxu0 0.0
    %563 = vmatpush1.msra.mxu0 0.0
    %564 = vmatprep.subr.mxu0 0.0
    %565 = vmatpush1.msra.mxu0 0.0
    %566 = vmatprep.subr.mxu0 0.0
    %567 = vmatpush1.msra.mxu0 0.0
    %568 = vmatprep.subr.mxu0 0.0
    %569 = vmatpush1.msra.mxu0 0.0
    %570 = vmatprep.subr.mxu0 0.0
    %571 = vmatpush1.msra.mxu0 0.0
    %572 = vmatprep.subr.mxu0 0.0
    %573 = vmatpush1.msra.mxu0 0.0
    %574 = vmatprep.subr.mxu0 0.0
    %575 = vmatpush1.msra.mxu0 0.0
    %576 = vmatprep.subr.mxu0 0.0
    %577 = vmatpush1.msra.mxu0 0.0
    %578 = vmatprep.subr.mxu0 0.0
    %579 = vmatpush1.msra.mxu0 0.0
    %580 = vmatprep.subr.mxu0 0.0
    %581 = vmatpush1.msra.mxu0 0.0
    %582 = vmatprep.subr.mxu0 0.0
    %583 = vmatpush1.msra.mxu0 0.0
    %584 = vmatprep.subr.mxu0 0.0
    %585 = vmatpush1.msra.mxu0 0.0
    %586 = vmatprep.subr.mxu0 0.0
    %587 = vmatpush1.msra.mxu0 0.0
    %588 = vmatprep.subr.mxu0 0.0
    %589 = vmatpush1.msra.mxu0 0.0
    %590 = vmatprep.subr.mxu0 0.0
    %591 = vmatpush1.msra.mxu0 0.0
    %592 = vmatprep.subr.mxu0 0.0
    %593 = vmatpush1.msra.mxu0 0.0
    %594 = vmatprep.subr.mxu0 0.0
    %595 = vmatpush1.msra.mxu0 0.0
    %596 = vmatprep.subr.mxu0 0.0
    %597 = vmatpush1.msra.mxu0 0.0
    %598 = vmatprep.subr.mxu0 0.0
    %599 = vmatpush1.msra.mxu0 0.0
    %600 = vmatprep.subr.mxu0 0.0
    %601 = vmatpush1.msra.mxu0 0.0
    %602 = vmatprep.subr.mxu0 0.0
    %603 = vmatpush1.msra.mxu0 0.0
    %604 = vmatprep.mubr.f32.mxu0 0.0
    %605 = vmatmul.mubr.f32.gmra.mrb[0].mxu0 %v258
    %v606 = vpop.f32.mrb[0].mxu0
    %v607 = vadd.f32 %v174, %v606
    %v608 = vpop.f32.mrb[0].mxu0
    %609 = vdwg.mxu0
    %610 = vmatprep.subr.mxu0 0.0
    %611 = vmatpush1.msra.mxu0 %v106
    %612 = vmatprep.subr.mxu0 0.0
    %613 = vmatpush1.msra.mxu0 %v107
    %614 = vmatprep.subr.mxu0 0.0
    %615 = vmatpush1.msra.mxu0 %v108
    %616 = vmatprep.subr.mxu0 0.0
    %617 = vmatpush1.msra.mxu0 %v109
    %618 = vmatprep.subr.mxu0 0.0
    %619 = vmatpush1.msra.mxu0 0.0
    %620 = vmatprep.subr.mxu0 0.0
    %621 = vmatpush1.msra.mxu0 0.0
    %622 = vmatprep.subr.mxu0 0.0
    %623 = vmatpush1.msra.mxu0 0.0
    %624 = vmatprep.subr.mxu0 0.0
    %625 = vmatpush1.msra.mxu0 0.0
    %626 = vmatprep.subr.mxu0 0.0
    %627 = vmatpush1.msra.mxu0 0.0
    %628 = vmatprep.subr.mxu0 0.0
    %629 = vmatpush1.msra.mxu0 0.0
    %630 = vmatprep.subr.mxu0 0.0
    %631 = vmatpush1.msra.mxu0 0.0
    %632 = vmatprep.subr.mxu0 0.0
    %633 = vmatpush1.msra.mxu0 0.0
    %634 = vmatprep.subr.mxu0 0.0
    %635 = vmatpush1.msra.mxu0 0.0
    %636 = vmatprep.subr.mxu0 0.0
    %637 = vmatpush1.msra.mxu0 0.0
    %638 = vmatprep.subr.mxu0 0.0
    %639 = vmatpush1.msra.mxu0 0.0
    %640 = vmatprep.subr.mxu0 0.0
    %641 = vmatpush1.msra.mxu0 0.0
    %642 = vmatprep.subr.mxu0 0.0
    %643 = vmatpush1.msra.mxu0 0.0
    %644 = vmatprep.subr.mxu0 0.0
    %645 = vmatpush1.msra.mxu0 0.0
    %646 = vmatprep.subr.mxu0 0.0
    %647 = vmatpush1.msra.mxu0 0.0
    %648 = vmatprep.subr.mxu0 0.0
    %649 = vmatpush1.msra.mxu0 0.0
    %650 = vmatprep.subr.mxu0 0.0
    %651 = vmatpush1.msra.mxu0 0.0
    %652 = vmatprep.subr.mxu0 0.0
    %653 = vmatpush1.msra.mxu0 0.0
    %654 = vmatprep.subr.mxu0 0.0
    %655 = vmatpush1.msra.mxu0 0.0
    %656 = vmatprep.subr.mxu0 0.0
    %657 = vmatpush1.msra.mxu0 0.0
    %658 = vmatprep.subr.mxu0 0.0
    %659 = vmatpush1.msra.mxu0 0.0
    %660 = vmatprep.subr.mxu0 0.0
    %661 = vmatpush1.msra.mxu0 0.0
    %662 = vmatprep.subr.mxu0 0.0
    %663 = vmatpush1.msra.mxu0 0.0
    %664 = vmatprep.subr.mxu0 0.0
    %665 = vmatpush1.msra.mxu0 0.0
    %666 = vmatprep.subr.mxu0 0.0
    %667 = vmatpush1.msra.mxu0 0.0
    %668 = vmatprep.subr.mxu0 0.0
    %669 = vmatpush1.msra.mxu0 0.0
    %670 = vmatprep.subr.mxu0 0.0
    %671 = vmatpush1.msra.mxu0 0.0
    %672 = vmatprep.subr.mxu0 0.0
    %673 = vmatpush1.msra.mxu0 0.0
    %674 = vmatprep.mubr.f32.mxu0 0.0
    %675 = vmatmul.mubr.f32.gmra.mrb[0].mxu0 %v185
    %v676 = vpop.f32.mrb[0].mxu0
    %v677 = vadd.f32 %v178, %v676
    %v678 = vpop.f32.mrb[0].mxu0
    %679 = vdwg.mxu0
    %680 = vmatprep.subr.mxu0 0.0
    %681 = vmatpush1.msra.mxu0 %v106
    %682 = vmatprep.subr.mxu0 0.0
    %683 = vmatpush1.msra.mxu0 %v107
    %684 = vmatprep.subr.mxu0 0.0
    %685 = vmatpush1.msra.mxu0 %v108
    %686 = vmatprep.subr.mxu0 0.0
    %687 = vmatpush1.msra.mxu0 %v109
    %688 = vmatprep.subr.mxu0 0.0
    %689 = vmatpush1.msra.mxu0 0.0
    %690 = vmatprep.subr.mxu0 0.0
    %691 = vmatpush1.msra.mxu0 0.0
    %692 = vmatprep.subr.mxu0 0.0
    %693 = vmatpush1.msra.mxu0 0.0
    %694 = vmatprep.subr.mxu0 0.0
    %695 = vmatpush1.msra.mxu0 0.0
    %696 = vmatprep.subr.mxu0 0.0
    %697 = vmatpush1.msra.mxu0 0.0
    %698 = vmatprep.subr.mxu0 0.0
    %699 = vmatpush1.msra.mxu0 0.0
    %700 = vmatprep.subr.mxu0 0.0
    %701 = vmatpush1.msra.mxu0 0.0
    %702 = vmatprep.subr.mxu0 0.0
    %703 = vmatpush1.msra.mxu0 0.0
    %704 = vmatprep.subr.mxu0 0.0
    %705 = vmatpush1.msra.mxu0 0.0
    %706 = vmatprep.subr.mxu0 0.0
    %707 = vmatpush1.msra.mxu0 0.0
    %708 = vmatprep.subr.mxu0 0.0
    %709 = vmatpush1.msra.mxu0 0.0
    %710 = vmatprep.subr.mxu0 0.0
    %711 = vmatpush1.msra.mxu0 0.0
    %712 = vmatprep.subr.mxu0 0.0
    %713 = vmatpush1.msra.mxu0 0.0
    %714 = vmatprep.subr.mxu0 0.0
    %715 = vmatpush1.msra.mxu0 0.0
    %716 = vmatprep.subr.mxu0 0.0
    %717 = vmatpush1.msra.mxu0 0.0
    %718 = vmatprep.subr.mxu0 0.0
    %719 = vmatpush1.msra.mxu0 0.0
    %720 = vmatprep.subr.mxu0 0.0
    %721 = vmatpush1.msra.mxu0 0.0
    %722 = vmatprep.subr.mxu0 0.0
    %723 = vmatpush1.msra.mxu0 0.0
    %724 = vmatprep.subr.mxu0 0.0
    %725 = vmatpush1.msra.mxu0 0.0
    %726 = vmatprep.subr.mxu0 0.0
    %727 = vmatpush1.msra.mxu0 0.0
    %728 = vmatprep.subr.mxu0 0.0
    %729 = vmatpush1.msra.mxu0 0.0
    %730 = vmatprep.subr.mxu0 0.0
    %731 = vmatpush1.msra.mxu0 0.0
    %732 = vmatprep.subr.mxu0 0.0
    %733 = vmatpush1.msra.mxu0 0.0
    %734 = vmatprep.subr.mxu0 0.0
    %735 = vmatpush1.msra.mxu0 0.0
    %736 = vmatprep.subr.mxu0 0.0
    %737 = vmatpush1.msra.mxu0 0.0
    %738 = vmatprep.subr.mxu0 0.0
    %739 = vmatpush1.msra.mxu0 0.0
    %740 = vmatprep.subr.mxu0 0.0
    %741 = vmatpush1.msra.mxu0 0.0
    %742 = vmatprep.subr.mxu0 0.0
    %743 = vmatpush1.msra.mxu0 0.0
    %744 = vmatprep.mubr.f32.mxu0 0.0
    %745 = vmatmul.mubr.f32.gmra.mrb[0].mxu0 %v258
    %v746 = vpop.f32.mrb[0].mxu0
    %v747 = vadd.f32 %v178, %v746
    %v748 = vpop.f32.mrb[0].mxu0
    %749 = vdwg.mxu0
    %v754 = vlaneseq
    %v755 = vshrl.u32 %v754, 7
    %v756 = vsub.s32 0, %v755
    %v757 = vrot.slane %v130, %v756
    %v758 = vlaneseq
    %v759 = vshrl.u32 %v758, 7
    %v760 = vsub.s32 0, %v759
    %v761 = vrot.slane %v131, %v760
    %v762 = vlaneseq
    %v763 = vshrl.u32 %v762, 7
    %v764 = vsub.s32 0, %v763
    %v765 = vrot.slane %v132, %v764
    %v766 = vlaneseq
    %v767 = vshrl.u32 %v766, 7
    %v768 = vsub.s32 0, %v767
    %v769 = vrot.slane %v133, %v768
    %774 = vmatprep.subr.mxu0 0.0
    %775 = vmatpush1.msra.mxu0 %v114
    %776 = vmatprep.subr.mxu0 0.0
    %777 = vmatpush1.msra.mxu0 %v115
    %778 = vmatprep.subr.mxu0 0.0
    %779 = vmatpush1.msra.mxu0 %v116
    %780 = vmatprep.subr.mxu0 0.0
    %781 = vmatpush1.msra.mxu0 %v117
    %782 = vmatprep.subr.mxu0 0.0
    %783 = vmatpush1.msra.mxu0 0.0
    %784 = vmatprep.subr.mxu0 0.0
    %785 = vmatpush1.msra.mxu0 0.0
    %786 = vmatprep.subr.mxu0 0.0
    %787 = vmatpush1.msra.mxu0 0.0
    %788 = vmatprep.subr.mxu0 0.0
    %789 = vmatpush1.msra.mxu0 0.0
    %790 = vmatprep.subr.mxu0 0.0
    %791 = vmatpush1.msra.mxu0 0.0
    %792 = vmatprep.subr.mxu0 0.0
    %793 = vmatpush1.msra.mxu0 0.0
    %794 = vmatprep.subr.mxu0 0.0
    %795 = vmatpush1.msra.mxu0 0.0
    %796 = vmatprep.subr.mxu0 0.0
    %797 = vmatpush1.msra.mxu0 0.0
    %798 = vmatprep.subr.mxu0 0.0
    %799 = vmatpush1.msra.mxu0 0.0
    %800 = vmatprep.subr.mxu0 0.0
    %801 = vmatpush1.msra.mxu0 0.0
    %802 = vmatprep.subr.mxu0 0.0
    %803 = vmatpush1.msra.mxu0 0.0
    %804 = vmatprep.subr.mxu0 0.0
    %805 = vmatpush1.msra.mxu0 0.0
    %806 = vmatprep.subr.mxu0 0.0
    %807 = vmatpush1.msra.mxu0 0.0
    %808 = vmatprep.subr.mxu0 0.0
    %809 = vmatpush1.msra.mxu0 0.0
    %810 = vmatprep.subr.mxu0 0.0
    %811 = vmatpush1.msra.mxu0 0.0
    %812 = vmatprep.subr.mxu0 0.0
    %813 = vmatpush1.msra.mxu0 0.0
    %814 = vmatprep.subr.mxu0 0.0
    %815 = vmatpush1.msra.mxu0 0.0
    %816 = vmatprep.subr.mxu0 0.0
    %817 = vmatpush1.msra.mxu0 0.0
    %818 = vmatprep.subr.mxu0 0.0
    %819 = vmatpush1.msra.mxu0 0.0
    %820 = vmatprep.subr.mxu0 0.0
    %821 = vmatpush1.msra.mxu0 0.0
    %822 = vmatprep.subr.mxu0 0.0
    %823 = vmatpush1.msra.mxu0 0.0
    %824 = vmatprep.subr.mxu0 0.0
    %825 = vmatpush1.msra.mxu0 0.0
    %826 = vmatprep.subr.mxu0 0.0
    %827 = vmatpush1.msra.mxu0 0.0
    %828 = vmatprep.subr.mxu0 0.0
    %829 = vmatpush1.msra.mxu0 0.0
    %830 = vmatprep.subr.mxu0 0.0
    %831 = vmatpush1.msra.mxu0 0.0
    %832 = vmatprep.subr.mxu0 0.0
    %833 = vmatpush1.msra.mxu0 0.0
    %834 = vmatprep.subr.mxu0 0.0
    %835 = vmatpush1.msra.mxu0 0.0
    %836 = vmatprep.subr.mxu0 0.0
    %837 = vmatpush1.msra.mxu0 0.0
    %838 = vmatprep.mubr.f32.mxu0 0.0
    %839 = vmatmul.mubr.f32.gmra.mrb[0].mxu0 %v185
    %v840 = vpop.f32.mrb[0].mxu0
    %v841 = vadd.f32 %v757, %v840
    %v842 = vpop.f32.mrb[0].mxu0
    %843 = vdwg.mxu0
    %844 = vmatprep.subr.mxu0 0.0
    %845 = vmatpush1.msra.mxu0 %v114
    %846 = vmatprep.subr.mxu0 0.0
    %847 = vmatpush1.msra.mxu0 %v115
    %848 = vmatprep.subr.mxu0 0.0
    %849 = vmatpush1.msra.mxu0 %v116
    %850 = vmatprep.subr.mxu0 0.0
    %851 = vmatpush1.msra.mxu0 %v117
    %852 = vmatprep.subr.mxu0 0.0
    %853 = vmatpush1.msra.mxu0 0.0
    %854 = vmatprep.subr.mxu0 0.0
    %855 = vmatpush1.msra.mxu0 0.0
    %856 = vmatprep.subr.mxu0 0.0
    %857 = vmatpush1.msra.mxu0 0.0
    %858 = vmatprep.subr.mxu0 0.0
    %859 = vmatpush1.msra.mxu0 0.0
    %860 = vmatprep.subr.mxu0 0.0
    %861 = vmatpush1.msra.mxu0 0.0
    %862 = vmatprep.subr.mxu0 0.0
    %863 = vmatpush1.msra.mxu0 0.0
    %864 = vmatprep.subr.mxu0 0.0
    %865 = vmatpush1.msra.mxu0 0.0
    %866 = vmatprep.subr.mxu0 0.0
    %867 = vmatpush1.msra.mxu0 0.0
    %868 = vmatprep.subr.mxu0 0.0
    %869 = vmatpush1.msra.mxu0 0.0
    %870 = vmatprep.subr.mxu0 0.0
    %871 = vmatpush1.msra.mxu0 0.0
    %872 = vmatprep.subr.mxu0 0.0
    %873 = vmatpush1.msra.mxu0 0.0
    %874 = vmatprep.subr.mxu0 0.0
    %875 = vmatpush1.msra.mxu0 0.0
    %876 = vmatprep.subr.mxu0 0.0
    %877 = vmatpush1.msra.mxu0 0.0
    %878 = vmatprep.subr.mxu0 0.0
    %879 = vmatpush1.msra.mxu0 0.0
    %880 = vmatprep.subr.mxu0 0.0
    %881 = vmatpush1.msra.mxu0 0.0
    %882 = vmatprep.subr.mxu0 0.0
    %883 = vmatpush1.msra.mxu0 0.0
    %884 = vmatprep.subr.mxu0 0.0
    %885 = vmatpush1.msra.mxu0 0.0
    %886 = vmatprep.subr.mxu0 0.0
    %887 = vmatpush1.msra.mxu0 0.0
    %888 = vmatprep.subr.mxu0 0.0
    %889 = vmatpush1.msra.mxu0 0.0
    %890 = vmatprep.subr.mxu0 0.0
    %891 = vmatpush1.msra.mxu0 0.0
    %892 = vmatprep.subr.mxu0 0.0
    %893 = vmatpush1.msra.mxu0 0.0
    %894 = vmatprep.subr.mxu0 0.0
    %895 = vmatpush1.msra.mxu0 0.0
    %896 = vmatprep.subr.mxu0 0.0
    %897 = vmatpush1.msra.mxu0 0.0
    %898 = vmatprep.subr.mxu0 0.0
    %899 = vmatpush1.msra.mxu0 0.0
    %900 = vmatprep.subr.mxu0 0.0
    %901 = vmatpush1.msra.mxu0 0.0
    %902 = vmatprep.subr.mxu0 0.0
    %903 = vmatpush1.msra.mxu0 0.0
    %904 = vmatprep.subr.mxu0 0.0
    %905 = vmatpush1.msra.mxu0 0.0
    %906 = vmatprep.subr.mxu0 0.0
    %907 = vmatpush1.msra.mxu0 0.0
    %908 = vmatprep.mubr.f32.mxu0 0.0
    %909 = vmatmul.mubr.f32.gmra.mrb[0].mxu0 %v258
    %v910 = vpop.f32.mrb[0].mxu0
    %v911 = vadd.f32 %v757, %v910
    %v912 = vpop.f32.mrb[0].mxu0
    %913 = vdwg.mxu0
    %914 = vmatprep.subr.mxu0 0.0
    %915 = vmatpush1.msra.mxu0 %v118
    %916 = vmatprep.subr.mxu0 0.0
    %917 = vmatpush1.msra.mxu0 %v119
    %918 = vmatprep.subr.mxu0 0.0
    %919 = vmatpush1.msra.mxu0 %v120
    %920 = vmatprep.subr.mxu0 0.0
    %921 = vmatpush1.msra.mxu0 %v121
    %922 = vmatprep.subr.mxu0 0.0
    %923 = vmatpush1.msra.mxu0 0.0
    %924 = vmatprep.subr.mxu0 0.0
    %925 = vmatpush1.msra.mxu0 0.0
    %926 = vmatprep.subr.mxu0 0.0
    %927 = vmatpush1.msra.mxu0 0.0
    %928 = vmatprep.subr.mxu0 0.0
    %929 = vmatpush1.msra.mxu0 0.0
    %930 = vmatprep.subr.mxu0 0.0
    %931 = vmatpush1.msra.mxu0 0.0
    %932 = vmatprep.subr.mxu0 0.0
    %933 = vmatpush1.msra.mxu0 0.0
    %934 = vmatprep.subr.mxu0 0.0
    %935 = vmatpush1.msra.mxu0 0.0
    %936 = vmatprep.subr.mxu0 0.0
    %937 = vmatpush1.msra.mxu0 0.0
    %938 = vmatprep.subr.mxu0 0.0
    %939 = vmatpush1.msra.mxu0 0.0
    %940 = vmatprep.subr.mxu0 0.0
    %941 = vmatpush1.msra.mxu0 0.0
    %942 = vmatprep.subr.mxu0 0.0
    %943 = vmatpush1.msra.mxu0 0.0
    %944 = vmatprep.subr.mxu0 0.0
    %945 = vmatpush1.msra.mxu0 0.0
    %946 = vmatprep.subr.mxu0 0.0
    %947 = vmatpush1.msra.mxu0 0.0
    %948 = vmatprep.subr.mxu0 0.0
    %949 = vmatpush1.msra.mxu0 0.0
    %950 = vmatprep.subr.mxu0 0.0
    %951 = vmatpush1.msra.mxu0 0.0
    %952 = vmatprep.subr.mxu0 0.0
    %953 = vmatpush1.msra.mxu0 0.0
    %954 = vmatprep.subr.mxu0 0.0
    %955 = vmatpush1.msra.mxu0 0.0
    %956 = vmatprep.subr.mxu0 0.0
    %957 = vmatpush1.msra.mxu0 0.0
    %958 = vmatprep.subr.mxu0 0.0
    %959 = vmatpush1.msra.mxu0 0.0
    %960 = vmatprep.subr.mxu0 0.0
    %961 = vmatpush1.msra.mxu0 0.0
    %962 = vmatprep.subr.mxu0 0.0
    %963 = vmatpush1.msra.mxu0 0.0
    %964 = vmatprep.subr.mxu0 0.0
    %965 = vmatpush1.msra.mxu0 0.0
    %966 = vmatprep.subr.mxu0 0.0
    %967 = vmatpush1.msra.mxu0 0.0
    %968 = vmatprep.subr.mxu0 0.0
    %969 = vmatpush1.msra.mxu0 0.0
    %970 = vmatprep.subr.mxu0 0.0
    %971 = vmatpush1.msra.mxu0 0.0
    %972 = vmatprep.subr.mxu0 0.0
    %973 = vmatpush1.msra.mxu0 0.0
    %974 = vmatprep.subr.mxu0 0.0
    %975 = vmatpush1.msra.mxu0 0.0
    %976 = vmatprep.subr.mxu0 0.0
    %977 = vmatpush1.msra.mxu0 0.0
    %978 = vmatprep.mubr.f32.mxu0 0.0
    %979 = vmatmul.mubr.f32.gmra.mrb[0].mxu0 %v185
    %v980 = vpop.f32.mrb[0].mxu0
    %v981 = vadd.f32 %v761, %v980
    %v982 = vpop.f32.mrb[0].mxu0
    %983 = vdwg.mxu0
    %984 = vmatprep.subr.mxu0 0.0
    %985 = vmatpush1.msra.mxu0 %v118
    %986 = vmatprep.subr.mxu0 0.0
    %987 = vmatpush1.msra.mxu0 %v119
    %988 = vmatprep.subr.mxu0 0.0
    %989 = vmatpush1.msra.mxu0 %v120
    %990 = vmatprep.subr.mxu0 0.0
    %991 = vmatpush1.msra.mxu0 %v121
    %992 = vmatprep.subr.mxu0 0.0
    %993 = vmatpush1.msra.mxu0 0.0
    %994 = vmatprep.subr.mxu0 0.0
    %995 = vmatpush1.msra.mxu0 0.0
    %996 = vmatprep.subr.mxu0 0.0
    %997 = vmatpush1.msra.mxu0 0.0
    %998 = vmatprep.subr.mxu0 0.0
    %999 = vmatpush1.msra.mxu0 0.0
    %1000 = vmatprep.subr.mxu0 0.0
    %1001 = vmatpush1.msra.mxu0 0.0
    %1002 = vmatprep.subr.mxu0 0.0
    %1003 = vmatpush1.msra.mxu0 0.0
    %1004 = vmatprep.subr.mxu0 0.0
    %1005 = vmatpush1.msra.mxu0 0.0
    %1006 = vmatprep.subr.mxu0 0.0
    %1007 = vmatpush1.msra.mxu0 0.0
    %1008 = vmatprep.subr.mxu0 0.0
    %1009 = vmatpush1.msra.mxu0 0.0
    %1010 = vmatprep.subr.mxu0 0.0
    %1011 = vmatpush1.msra.mxu0 0.0
    %1012 = vmatprep.subr.mxu0 0.0
    %1013 = vmatpush1.msra.mxu0 0.0
    %1014 = vmatprep.subr.mxu0 0.0
    %1015 = vmatpush1.msra.mxu0 0.0
    %1016 = vmatprep.subr.mxu0 0.0
    %1017 = vmatpush1.msra.mxu0 0.0
    %1018 = vmatprep.subr.mxu0 0.0
    %1019 = vmatpush1.msra.mxu0 0.0
    %1020 = vmatprep.subr.mxu0 0.0
    %1021 = vmatpush1.msra.mxu0 0.0
    %1022 = vmatprep.subr.mxu0 0.0
    %1023 = vmatpush1.msra.mxu0 0.0
    %1024 = vmatprep.subr.mxu0 0.0
    %1025 = vmatpush1.msra.mxu0 0.0
    %1026 = vmatprep.subr.mxu0 0.0
    %1027 = vmatpush1.msra.mxu0 0.0
    %1028 = vmatprep.subr.mxu0 0.0
    %1029 = vmatpush1.msra.mxu0 0.0
    %1030 = vmatprep.subr.mxu0 0.0
    %1031 = vmatpush1.msra.mxu0 0.0
    %1032 = vmatprep.subr.mxu0 0.0
    %1033 = vmatpush1.msra.mxu0 0.0
    %1034 = vmatprep.subr.mxu0 0.0
    %1035 = vmatpush1.msra.mxu0 0.0
    %1036 = vmatprep.subr.mxu0 0.0
    %1037 = vmatpush1.msra.mxu0 0.0
    %1038 = vmatprep.subr.mxu0 0.0
    %1039 = vmatpush1.msra.mxu0 0.0
    %1040 = vmatprep.subr.mxu0 0.0
    %1041 = vmatpush1.msra.mxu0 0.0
    %1042 = vmatprep.subr.mxu0 0.0
    %1043 = vmatpush1.msra.mxu0 0.0
    %1044 = vmatprep.subr.mxu0 0.0
    %1045 = vmatpush1.msra.mxu0 0.0
    %1046 = vmatprep.subr.mxu0 0.0
    %1047 = vmatpush1.msra.mxu0 0.0
    %1048 = vmatprep.mubr.f32.mxu0 0.0
    %1049 = vmatmul.mubr.f32.gmra.mrb[0].mxu0 %v258
    %v1050 = vpop.f32.mrb[0].mxu0
    %v1051 = vadd.f32 %v761, %v1050
    %v1052 = vpop.f32.mrb[0].mxu0
    %1053 = vdwg.mxu0
    %1054 = vmatprep.subr.mxu0 0.0
    %1055 = vmatpush1.msra.mxu0 %v122
    %1056 = vmatprep.subr.mxu0 0.0
    %1057 = vmatpush1.msra.mxu0 %v123
    %1058 = vmatprep.subr.mxu0 0.0
    %1059 = vmatpush1.msra.mxu0 %v124
    %1060 = vmatprep.subr.mxu0 0.0
    %1061 = vmatpush1.msra.mxu0 %v125
    %1062 = vmatprep.subr.mxu0 0.0
    %1063 = vmatpush1.msra.mxu0 0.0
    %1064 = vmatprep.subr.mxu0 0.0
    %1065 = vmatpush1.msra.mxu0 0.0
    %1066 = vmatprep.subr.mxu0 0.0
    %1067 = vmatpush1.msra.mxu0 0.0
    %1068 = vmatprep.subr.mxu0 0.0
    %1069 = vmatpush1.msra.mxu0 0.0
    %1070 = vmatprep.subr.mxu0 0.0
    %1071 = vmatpush1.msra.mxu0 0.0
    %1072 = vmatprep.subr.mxu0 0.0
    %1073 = vmatpush1.msra.mxu0 0.0
    %1074 = vmatprep.subr.mxu0 0.0
    %1075 = vmatpush1.msra.mxu0 0.0
    %1076 = vmatprep.subr.mxu0 0.0
    %1077 = vmatpush1.msra.mxu0 0.0
    %1078 = vmatprep.subr.mxu0 0.0
    %1079 = vmatpush1.msra.mxu0 0.0
    %1080 = vmatprep.subr.mxu0 0.0
    %1081 = vmatpush1.msra.mxu0 0.0
    %1082 = vmatprep.subr.mxu0 0.0
    %1083 = vmatpush1.msra.mxu0 0.0
    %1084 = vmatprep.subr.mxu0 0.0
    %1085 = vmatpush1.msra.mxu0 0.0
    %1086 = vmatprep.subr.mxu0 0.0
    %1087 = vmatpush1.msra.mxu0 0.0
    %1088 = vmatprep.subr.mxu0 0.0
    %1089 = vmatpush1.msra.mxu0 0.0
    %1090 = vmatprep.subr.mxu0 0.0
    %1091 = vmatpush1.msra.mxu0 0.0
    %1092 = vmatprep.subr.mxu0 0.0
    %1093 = vmatpush1.msra.mxu0 0.0
    %1094 = vmatprep.subr.mxu0 0.0
    %1095 = vmatpush1.msra.mxu0 0.0
    %1096 = vmatprep.subr.mxu0 0.0
    %1097 = vmatpush1.msra.mxu0 0.0
    %1098 = vmatprep.subr.mxu0 0.0
    %1099 = vmatpush1.msra.mxu0 0.0
    %1100 = vmatprep.subr.mxu0 0.0
    %1101 = vmatpush1.msra.mxu0 0.0
    %1102 = vmatprep.subr.mxu0 0.0
    %1103 = vmatpush1.msra.mxu0 0.0
    %1104 = vmatprep.subr.mxu0 0.0
    %1105 = vmatpush1.msra.mxu0 0.0
    %1106 = vmatprep.subr.mxu0 0.0
    %1107 = vmatpush1.msra.mxu0 0.0
    %1108 = vmatprep.subr.mxu0 0.0
    %1109 = vmatpush1.msra.mxu0 0.0
    %1110 = vmatprep.subr.mxu0 0.0
    %1111 = vmatpush1.msra.mxu0 0.0
    %1112 = vmatprep.subr.mxu0 0.0
    %1113 = vmatpush1.msra.mxu0 0.0
    %1114 = vmatprep.subr.mxu0 0.0
    %1115 = vmatpush1.msra.mxu0 0.0
    %1116 = vmatprep.subr.mxu0 0.0
    %1117 = vmatpush1.msra.mxu0 0.0
    %1118 = vmatprep.mubr.f32.mxu0 0.0
    %1119 = vmatmul.mubr.f32.gmra.mrb[0].mxu0 %v185
    %v1120 = vpop.f32.mrb[0].mxu0
    %v1121 = vadd.f32 %v765, %v1120
    %v1122 = vpop.f32.mrb[0].mxu0
    %1123 = vdwg.mxu0
    %1124 = vmatprep.subr.mxu0 0.0
    %1125 = vmatpush1.msra.mxu0 %v122
    %1126 = vmatprep.subr.mxu0 0.0
    %1127 = vmatpush1.msra.mxu0 %v123
    %1128 = vmatprep.subr.mxu0 0.0
    %1129 = vmatpush1.msra.mxu0 %v124
    %1130 = vmatprep.subr.mxu0 0.0
    %1131 = vmatpush1.msra.mxu0 %v125
    %1132 = vmatprep.subr.mxu0 0.0
    %1133 = vmatpush1.msra.mxu0 0.0
    %1134 = vmatprep.subr.mxu0 0.0
    %1135 = vmatpush1.msra.mxu0 0.0
    %1136 = vmatprep.subr.mxu0 0.0
    %1137 = vmatpush1.msra.mxu0 0.0
    %1138 = vmatprep.subr.mxu0 0.0
    %1139 = vmatpush1.msra.mxu0 0.0
    %1140 = vmatprep.subr.mxu0 0.0
    %1141 = vmatpush1.msra.mxu0 0.0
    %1142 = vmatprep.subr.mxu0 0.0
    %1143 = vmatpush1.msra.mxu0 0.0
    %1144 = vmatprep.subr.mxu0 0.0
    %1145 = vmatpush1.msra.mxu0 0.0
    %1146 = vmatprep.subr.mxu0 0.0
    %1147 = vmatpush1.msra.mxu0 0.0
    %1148 = vmatprep.subr.mxu0 0.0
    %1149 = vmatpush1.msra.mxu0 0.0
    %1150 = vmatprep.subr.mxu0 0.0
    %1151 = vmatpush1.msra.mxu0 0.0
    %1152 = vmatprep.subr.mxu0 0.0
    %1153 = vmatpush1.msra.mxu0 0.0
    %1154 = vmatprep.subr.mxu0 0.0
    %1155 = vmatpush1.msra.mxu0 0.0
    %1156 = vmatprep.subr.mxu0 0.0
    %1157 = vmatpush1.msra.mxu0 0.0
    %1158 = vmatprep.subr.mxu0 0.0
    %1159 = vmatpush1.msra.mxu0 0.0
    %1160 = vmatprep.subr.mxu0 0.0
    %1161 = vmatpush1.msra.mxu0 0.0
    %1162 = vmatprep.subr.mxu0 0.0
    %1163 = vmatpush1.msra.mxu0 0.0
    %1164 = vmatprep.subr.mxu0 0.0
    %1165 = vmatpush1.msra.mxu0 0.0
    %1166 = vmatprep.subr.mxu0 0.0
    %1167 = vmatpush1.msra.mxu0 0.0
    %1168 = vmatprep.subr.mxu0 0.0
    %1169 = vmatpush1.msra.mxu0 0.0
    %1170 = vmatprep.subr.mxu0 0.0
    %1171 = vmatpush1.msra.mxu0 0.0
    %1172 = vmatprep.subr.mxu0 0.0
    %1173 = vmatpush1.msra.mxu0 0.0
    %1174 = vmatprep.subr.mxu0 0.0
    %1175 = vmatpush1.msra.mxu0 0.0
    %1176 = vmatprep.subr.mxu0 0.0
    %1177 = vmatpush1.msra.mxu0 0.0
    %1178 = vmatprep.subr.mxu0 0.0
    %1179 = vmatpush1.msra.mxu0 0.0
    %1180 = vmatprep.subr.mxu0 0.0
    %1181 = vmatpush1.msra.mxu0 0.0
    %1182 = vmatprep.subr.mxu0 0.0
    %1183 = vmatpush1.msra.mxu0 0.0
    %1184 = vmatprep.subr.mxu0 0.0
    %1185 = vmatpush1.msra.mxu0 0.0
    %1186 = vmatprep.subr.mxu0 0.0
    %1187 = vmatpush1.msra.mxu0 0.0
    %1188 = vmatprep.mubr.f32.mxu0 0.0
    %1189 = vmatmul.mubr.f32.gmra.mrb[0].mxu0 %v258
    %v1190 = vpop.f32.mrb[0].mxu0
    %v1191 = vadd.f32 %v765, %v1190
    %v1192 = vpop.f32.mrb[0].mxu0
    %1193 = vdwg.mxu0
    %1194 = vmatprep.subr.mxu0 0.0
    %1195 = vmatpush1.msra.mxu0 %v126
    %1196 = vmatprep.subr.mxu0 0.0
    %1197 = vmatpush1.msra.mxu0 %v127
    %1198 = vmatprep.subr.mxu0 0.0
    %1199 = vmatpush1.msra.mxu0 %v128
    %1200 = vmatprep.subr.mxu0 0.0
    %1201 = vmatpush1.msra.mxu0 %v129
    %1202 = vmatprep.subr.mxu0 0.0
    %1203 = vmatpush1.msra.mxu0 0.0
    %1204 = vmatprep.subr.mxu0 0.0
    %1205 = vmatpush1.msra.mxu0 0.0
    %1206 = vmatprep.subr.mxu0 0.0
    %1207 = vmatpush1.msra.mxu0 0.0
    %1208 = vmatprep.subr.mxu0 0.0
    %1209 = vmatpush1.msra.mxu0 0.0
    %1210 = vmatprep.subr.mxu0 0.0
    %1211 = vmatpush1.msra.mxu0 0.0
    %1212 = vmatprep.subr.mxu0 0.0
    %1213 = vmatpush1.msra.mxu0 0.0
    %1214 = vmatprep.subr.mxu0 0.0
    %1215 = vmatpush1.msra.mxu0 0.0
    %1216 = vmatprep.subr.mxu0 0.0
    %1217 = vmatpush1.msra.mxu0 0.0
    %1218 = vmatprep.subr.mxu0 0.0
    %1219 = vmatpush1.msra.mxu0 0.0
    %1220 = vmatprep.subr.mxu0 0.0
    %1221 = vmatpush1.msra.mxu0 0.0
    %1222 = vmatprep.subr.mxu0 0.0
    %1223 = vmatpush1.msra.mxu0 0.0
    %1224 = vmatprep.subr.mxu0 0.0
    %1225 = vmatpush1.msra.mxu0 0.0
    %1226 = vmatprep.subr.mxu0 0.0
    %1227 = vmatpush1.msra.mxu0 0.0
    %1228 = vmatprep.subr.mxu0 0.0
    %1229 = vmatpush1.msra.mxu0 0.0
    %1230 = vmatprep.subr.mxu0 0.0
    %1231 = vmatpush1.msra.mxu0 0.0
    %1232 = vmatprep.subr.mxu0 0.0
    %1233 = vmatpush1.msra.mxu0 0.0
    %1234 = vmatprep.subr.mxu0 0.0
    %1235 = vmatpush1.msra.mxu0 0.0
    %1236 = vmatprep.subr.mxu0 0.0
    %1237 = vmatpush1.msra.mxu0 0.0
    %1238 = vmatprep.subr.mxu0 0.0
    %1239 = vmatpush1.msra.mxu0 0.0
    %1240 = vmatprep.subr.mxu0 0.0
    %1241 = vmatpush1.msra.mxu0 0.0
    %1242 = vmatprep.subr.mxu0 0.0
    %1243 = vmatpush1.msra.mxu0 0.0
    %1244 = vmatprep.subr.mxu0 0.0
    %1245 = vmatpush1.msra.mxu0 0.0
    %1246 = vmatprep.subr.mxu0 0.0
    %1247 = vmatpush1.msra.mxu0 0.0
    %1248 = vmatprep.subr.mxu0 0.0
    %1249 = vmatpush1.msra.mxu0 0.0
    %1250 = vmatprep.subr.mxu0 0.0
    %1251 = vmatpush1.msra.mxu0 0.0
    %1252 = vmatprep.subr.mxu0 0.0
    %1253 = vmatpush1.msra.mxu0 0.0
    %1254 = vmatprep.subr.mxu0 0.0
    %1255 = vmatpush1.msra.mxu0 0.0
    %1256 = vmatprep.subr.mxu0 0.0
    %1257 = vmatpush1.msra.mxu0 0.0
    %1258 = vmatprep.mubr.f32.mxu0 0.0
    %1259 = vmatmul.mubr.f32.gmra.mrb[0].mxu0 %v185
    %v1260 = vpop.f32.mrb[0].mxu0
    %v1261 = vadd.f32 %v769, %v1260
    %v1262 = vpop.f32.mrb[0].mxu0
    %1263 = vdwg.mxu0
    %1264 = vmatprep.subr.mxu0 0.0
    %1265 = vmatpush1.msra.mxu0 %v126
    %1266 = vmatprep.subr.mxu0 0.0
    %1267 = vmatpush1.msra.mxu0 %v127
    %1268 = vmatprep.subr.mxu0 0.0
    %1269 = vmatpush1.msra.mxu0 %v128
    %1270 = vmatprep.subr.mxu0 0.0
    %1271 = vmatpush1.msra.mxu0 %v129
    %1272 = vmatprep.subr.mxu0 0.0
    %1273 = vmatpush1.msra.mxu0 0.0
    %1274 = vmatprep.subr.mxu0 0.0
    %1275 = vmatpush1.msra.mxu0 0.0
    %1276 = vmatprep.subr.mxu0 0.0
    %1277 = vmatpush1.msra.mxu0 0.0
    %1278 = vmatprep.subr.mxu0 0.0
    %1279 = vmatpush1.msra.mxu0 0.0
    %1280 = vmatprep.subr.mxu0 0.0
    %1281 = vmatpush1.msra.mxu0 0.0
    %1282 = vmatprep.subr.mxu0 0.0
    %1283 = vmatpush1.msra.mxu0 0.0
    %1284 = vmatprep.subr.mxu0 0.0
    %1285 = vmatpush1.msra.mxu0 0.0
    %1286 = vmatprep.subr.mxu0 0.0
    %1287 = vmatpush1.msra.mxu0 0.0
    %1288 = vmatprep.subr.mxu0 0.0
    %1289 = vmatpush1.msra.mxu0 0.0
    %1290 = vmatprep.subr.mxu0 0.0
    %1291 = vmatpush1.msra.mxu0 0.0
    %1292 = vmatprep.subr.mxu0 0.0
    %1293 = vmatpush1.msra.mxu0 0.0
    %1294 = vmatprep.subr.mxu0 0.0
    %1295 = vmatpush1.msra.mxu0 0.0
    %1296 = vmatprep.subr.mxu0 0.0
    %1297 = vmatpush1.msra.mxu0 0.0
    %1298 = vmatprep.subr.mxu0 0.0
    %1299 = vmatpush1.msra.mxu0 0.0
    %1300 = vmatprep.subr.mxu0 0.0
    %1301 = vmatpush1.msra.mxu0 0.0
    %1302 = vmatprep.subr.mxu0 0.0
    %1303 = vmatpush1.msra.mxu0 0.0
    %1304 = vmatprep.subr.mxu0 0.0
    %1305 = vmatpush1.msra.mxu0 0.0
    %1306 = vmatprep.subr.mxu0 0.0
    %1307 = vmatpush1.msra.mxu0 0.0
    %1308 = vmatprep.subr.mxu0 0.0
    %1309 = vmatpush1.msra.mxu0 0.0
    %1310 = vmatprep.subr.mxu0 0.0
    %1311 = vmatpush1.msra.mxu0 0.0
    %1312 = vmatprep.subr.mxu0 0.0
    %1313 = vmatpush1.msra.mxu0 0.0
    %1314 = vmatprep.subr.mxu0 0.0
    %1315 = vmatpush1.msra.mxu0 0.0
    %1316 = vmatprep.subr.mxu0 0.0
    %1317 = vmatpush1.msra.mxu0 0.0
    %1318 = vmatprep.subr.mxu0 0.0
    %1319 = vmatpush1.msra.mxu0 0.0
    %1320 = vmatprep.subr.mxu0 0.0
    %1321 = vmatpush1.msra.mxu0 0.0
    %1322 = vmatprep.subr.mxu0 0.0
    %1323 = vmatpush1.msra.mxu0 0.0
    %1324 = vmatprep.subr.mxu0 0.0
    %1325 = vmatpush1.msra.mxu0 0.0
    %1326 = vmatprep.subr.mxu0 0.0
    %1327 = vmatpush1.msra.mxu0 0.0
    %1328 = vmatprep.mubr.f32.mxu0 0.0
    %1329 = vmatmul.mubr.f32.gmra.mrb[0].mxu0 %v258
    %v1330 = vpop.f32.mrb[0].mxu0
    %v1331 = vadd.f32 %v769, %v1330
    %v1332 = vpop.f32.mrb[0].mxu0
    %1333 = vdwg.mxu0
    %v1338 = vlaneseq
    %v1339 = vshrl.u32 %v1338, 7
    %v1340 = vsub.s32 0, %v1339
    %v1341 = vrot.slane %v150, %v1340
    %v1342 = vlaneseq
    %v1343 = vshrl.u32 %v1342, 7
    %v1344 = vsub.s32 0, %v1343
    %v1345 = vrot.slane %v151, %v1344
    %v1346 = vlaneseq
    %v1347 = vshrl.u32 %v1346, 7
    %v1348 = vsub.s32 0, %v1347
    %v1349 = vrot.slane %v152, %v1348
    %v1350 = vlaneseq
    %v1351 = vshrl.u32 %v1350, 7
    %v1352 = vsub.s32 0, %v1351
    %v1353 = vrot.slane %v153, %v1352
    %1358 = vmatprep.subr.mxu0 0.0
    %1359 = vmatpush1.msra.mxu0 %v134
    %1360 = vmatprep.subr.mxu0 0.0
    %1361 = vmatpush1.msra.mxu0 %v135
    %1362 = vmatprep.subr.mxu0 0.0
    %1363 = vmatpush1.msra.mxu0 %v136
    %1364 = vmatprep.subr.mxu0 0.0
    %1365 = vmatpush1.msra.mxu0 %v137
    %1366 = vmatprep.subr.mxu0 0.0
    %1367 = vmatpush1.msra.mxu0 0.0
    %1368 = vmatprep.subr.mxu0 0.0
    %1369 = vmatpush1.msra.mxu0 0.0
    %1370 = vmatprep.subr.mxu0 0.0
    %1371 = vmatpush1.msra.mxu0 0.0
    %1372 = vmatprep.subr.mxu0 0.0
    %1373 = vmatpush1.msra.mxu0 0.0
    %1374 = vmatprep.subr.mxu0 0.0
    %1375 = vmatpush1.msra.mxu0 0.0
    %1376 = vmatprep.subr.mxu0 0.0
    %1377 = vmatpush1.msra.mxu0 0.0
    %1378 = vmatprep.subr.mxu0 0.0
    %1379 = vmatpush1.msra.mxu0 0.0
    %1380 = vmatprep.subr.mxu0 0.0
    %1381 = vmatpush1.msra.mxu0 0.0
    %1382 = vmatprep.subr.mxu0 0.0
    %1383 = vmatpush1.msra.mxu0 0.0
    %1384 = vmatprep.subr.mxu0 0.0
    %1385 = vmatpush1.msra.mxu0 0.0
    %1386 = vmatprep.subr.mxu0 0.0
    %1387 = vmatpush1.msra.mxu0 0.0
    %1388 = vmatprep.subr.mxu0 0.0
    %1389 = vmatpush1.msra.mxu0 0.0
    %1390 = vmatprep.subr.mxu0 0.0
    %1391 = vmatpush1.msra.mxu0 0.0
    %1392 = vmatprep.subr.mxu0 0.0
    %1393 = vmatpush1.msra.mxu0 0.0
    %1394 = vmatprep.subr.mxu0 0.0
    %1395 = vmatpush1.msra.mxu0 0.0
    %1396 = vmatprep.subr.mxu0 0.0
    %1397 = vmatpush1.msra.mxu0 0.0
    %1398 = vmatprep.subr.mxu0 0.0
    %1399 = vmatpush1.msra.mxu0 0.0
    %1400 = vmatprep.subr.mxu0 0.0
    %1401 = vmatpush1.msra.mxu0 0.0
    %1402 = vmatprep.subr.mxu0 0.0
    %1403 = vmatpush1.msra.mxu0 0.0
    %1404 = vmatprep.subr.mxu0 0.0
    %1405 = vmatpush1.msra.mxu0 0.0
    %1406 = vmatprep.subr.mxu0 0.0
    %1407 = vmatpush1.msra.mxu0 0.0
    %1408 = vmatprep.subr.mxu0 0.0
    %1409 = vmatpush1.msra.mxu0 0.0
    %1410 = vmatprep.subr.mxu0 0.0
    %1411 = vmatpush1.msra.mxu0 0.0
    %1412 = vmatprep.subr.mxu0 0.0
    %1413 = vmatpush1.msra.mxu0 0.0
    %1414 = vmatprep.subr.mxu0 0.0
    %1415 = vmatpush1.msra.mxu0 0.0
    %1416 = vmatprep.subr.mxu0 0.0
    %1417 = vmatpush1.msra.mxu0 0.0
    %1418 = vmatprep.subr.mxu0 0.0
    %1419 = vmatpush1.msra.mxu0 0.0
    %1420 = vmatprep.subr.mxu0 0.0
    %1421 = vmatpush1.msra.mxu0 0.0
    %1422 = vmatprep.mubr.f32.mxu0 0.0
    %1423 = vmatmul.mubr.f32.gmra.mrb[0].mxu0 %v185
    %v1424 = vpop.f32.mrb[0].mxu0
    %v1425 = vadd.f32 %v1341, %v1424
    %v1426 = vpop.f32.mrb[0].mxu0
    %1427 = vdwg.mxu0
    %1428 = vmatprep.subr.mxu0 0.0
    %1429 = vmatpush1.msra.mxu0 %v134
    %1430 = vmatprep.subr.mxu0 0.0
    %1431 = vmatpush1.msra.mxu0 %v135
    %1432 = vmatprep.subr.mxu0 0.0
    %1433 = vmatpush1.msra.mxu0 %v136
    %1434 = vmatprep.subr.mxu0 0.0
    %1435 = vmatpush1.msra.mxu0 %v137
    %1436 = vmatprep.subr.mxu0 0.0
    %1437 = vmatpush1.msra.mxu0 0.0
    %1438 = vmatprep.subr.mxu0 0.0
    %1439 = vmatpush1.msra.mxu0 0.0
    %1440 = vmatprep.subr.mxu0 0.0
    %1441 = vmatpush1.msra.mxu0 0.0
    %1442 = vmatprep.subr.mxu0 0.0
    %1443 = vmatpush1.msra.mxu0 0.0
    %1444 = vmatprep.subr.mxu0 0.0
    %1445 = vmatpush1.msra.mxu0 0.0
    %1446 = vmatprep.subr.mxu0 0.0
    %1447 = vmatpush1.msra.mxu0 0.0
    %1448 = vmatprep.subr.mxu0 0.0
    %1449 = vmatpush1.msra.mxu0 0.0
    %1450 = vmatprep.subr.mxu0 0.0
    %1451 = vmatpush1.msra.mxu0 0.0
    %1452 = vmatprep.subr.mxu0 0.0
    %1453 = vmatpush1.msra.mxu0 0.0
    %1454 = vmatprep.subr.mxu0 0.0
    %1455 = vmatpush1.msra.mxu0 0.0
    %1456 = vmatprep.subr.mxu0 0.0
    %1457 = vmatpush1.msra.mxu0 0.0
    %1458 = vmatprep.subr.mxu0 0.0
    %1459 = vmatpush1.msra.mxu0 0.0
    %1460 = vmatprep.subr.mxu0 0.0
    %1461 = vmatpush1.msra.mxu0 0.0
    %1462 = vmatprep.subr.mxu0 0.0
    %1463 = vmatpush1.msra.mxu0 0.0
    %1464 = vmatprep.subr.mxu0 0.0
    %1465 = vmatpush1.msra.mxu0 0.0
    %1466 = vmatprep.subr.mxu0 0.0
    %1467 = vmatpush1.msra.mxu0 0.0
    %1468 = vmatprep.subr.mxu0 0.0
    %1469 = vmatpush1.msra.mxu0 0.0
    %1470 = vmatprep.subr.mxu0 0.0
    %1471 = vmatpush1.msra.mxu0 0.0
    %1472 = vmatprep.subr.mxu0 0.0
    %1473 = vmatpush1.msra.mxu0 0.0
    %1474 = vmatprep.subr.mxu0 0.0
    %1475 = vmatpush1.msra.mxu0 0.0
    %1476 = vmatprep.subr.mxu0 0.0
    %1477 = vmatpush1.msra.mxu0 0.0
    %1478 = vmatprep.subr.mxu0 0.0
    %1479 = vmatpush1.msra.mxu0 0.0
    %1480 = vmatprep.subr.mxu0 0.0
    %1481 = vmatpush1.msra.mxu0 0.0
    %1482 = vmatprep.subr.mxu0 0.0
    %1483 = vmatpush1.msra.mxu0 0.0
    %1484 = vmatprep.subr.mxu0 0.0
    %1485 = vmatpush1.msra.mxu0 0.0
    %1486 = vmatprep.subr.mxu0 0.0
    %1487 = vmatpush1.msra.mxu0 0.0
    %1488 = vmatprep.subr.mxu0 0.0
    %1489 = vmatpush1.msra.mxu0 0.0
    %1490 = vmatprep.subr.mxu0 0.0
    %1491 = vmatpush1.msra.mxu0 0.0
    %1492 = vmatprep.mubr.f32.mxu0 0.0
    %1493 = vmatmul.mubr.f32.gmra.mrb[0].mxu0 %v258
    %v1494 = vpop.f32.mrb[0].mxu0
    %v1495 = vadd.f32 %v1341, %v1494
    %v1496 = vpop.f32.mrb[0].mxu0
    %1497 = vdwg.mxu0
    %1498 = vmatprep.subr.mxu0 0.0
    %1499 = vmatpush1.msra.mxu0 %v138
    %1500 = vmatprep.subr.mxu0 0.0
    %1501 = vmatpush1.msra.mxu0 %v139
    %1502 = vmatprep.subr.mxu0 0.0
    %1503 = vmatpush1.msra.mxu0 %v140
    %1504 = vmatprep.subr.mxu0 0.0
    %1505 = vmatpush1.msra.mxu0 %v141
    %1506 = vmatprep.subr.mxu0 0.0
    %1507 = vmatpush1.msra.mxu0 0.0
    %1508 = vmatprep.subr.mxu0 0.0
    %1509 = vmatpush1.msra.mxu0 0.0
    %1510 = vmatprep.subr.mxu0 0.0
    %1511 = vmatpush1.msra.mxu0 0.0
    %1512 = vmatprep.subr.mxu0 0.0
    %1513 = vmatpush1.msra.mxu0 0.0
    %1514 = vmatprep.subr.mxu0 0.0
    %1515 = vmatpush1.msra.mxu0 0.0
    %1516 = vmatprep.subr.mxu0 0.0
    %1517 = vmatpush1.msra.mxu0 0.0
    %1518 = vmatprep.subr.mxu0 0.0
    %1519 = vmatpush1.msra.mxu0 0.0
    %1520 = vmatprep.subr.mxu0 0.0
    %1521 = vmatpush1.msra.mxu0 0.0
    %1522 = vmatprep.subr.mxu0 0.0
    %1523 = vmatpush1.msra.mxu0 0.0
    %1524 = vmatprep.subr.mxu0 0.0
    %1525 = vmatpush1.msra.mxu0 0.0
    %1526 = vmatprep.subr.mxu0 0.0
    %1527 = vmatpush1.msra.mxu0 0.0
    %1528 = vmatprep.subr.mxu0 0.0
    %1529 = vmatpush1.msra.mxu0 0.0
    %1530 = vmatprep.subr.mxu0 0.0
    %1531 = vmatpush1.msra.mxu0 0.0
    %1532 = vmatprep.subr.mxu0 0.0
    %1533 = vmatpush1.msra.mxu0 0.0
    %1534 = vmatprep.subr.mxu0 0.0
    %1535 = vmatpush1.msra.mxu0 0.0
    %1536 = vmatprep.subr.mxu0 0.0
    %1537 = vmatpush1.msra.mxu0 0.0
    %1538 = vmatprep.subr.mxu0 0.0
    %1539 = vmatpush1.msra.mxu0 0.0
    %1540 = vmatprep.subr.mxu0 0.0
    %1541 = vmatpush1.msra.mxu0 0.0
    %1542 = vmatprep.subr.mxu0 0.0
    %1543 = vmatpush1.msra.mxu0 0.0
    %1544 = vmatprep.subr.mxu0 0.0
    %1545 = vmatpush1.msra.mxu0 0.0
    %1546 = vmatprep.subr.mxu0 0.0
    %1547 = vmatpush1.msra.mxu0 0.0
    %1548 = vmatprep.subr.mxu0 0.0
    %1549 = vmatpush1.msra.mxu0 0.0
    %1550 = vmatprep.subr.mxu0 0.0
    %1551 = vmatpush1.msra.mxu0 0.0
    %1552 = vmatprep.subr.mxu0 0.0
    %1553 = vmatpush1.msra.mxu0 0.0
    %1554 = vmatprep.subr.mxu0 0.0
    %1555 = vmatpush1.msra.mxu0 0.0
    %1556 = vmatprep.subr.mxu0 0.0
    %1557 = vmatpush1.msra.mxu0 0.0
    %1558 = vmatprep.subr.mxu0 0.0
    %1559 = vmatpush1.msra.mxu0 0.0
    %1560 = vmatprep.subr.mxu0 0.0
    %1561 = vmatpush1.msra.mxu0 0.0
    %1562 = vmatprep.mubr.f32.mxu0 0.0
    %1563 = vmatmul.mubr.f32.gmra.mrb[0].mxu0 %v185
    %v1564 = vpop.f32.mrb[0].mxu0
    %v1565 = vadd.f32 %v1345, %v1564
    %v1566 = vpop.f32.mrb[0].mxu0
    %1567 = vdwg.mxu0
    %1568 = vmatprep.subr.mxu0 0.0
    %1569 = vmatpush1.msra.mxu0 %v138
    %1570 = vmatprep.subr.mxu0 0.0
    %1571 = vmatpush1.msra.mxu0 %v139
    %1572 = vmatprep.subr.mxu0 0.0
    %1573 = vmatpush1.msra.mxu0 %v140
    %1574 = vmatprep.subr.mxu0 0.0
    %1575 = vmatpush1.msra.mxu0 %v141
    %1576 = vmatprep.subr.mxu0 0.0
    %1577 = vmatpush1.msra.mxu0 0.0
    %1578 = vmatprep.subr.mxu0 0.0
    %1579 = vmatpush1.msra.mxu0 0.0
    %1580 = vmatprep.subr.mxu0 0.0
    %1581 = vmatpush1.msra.mxu0 0.0
    %1582 = vmatprep.subr.mxu0 0.0
    %1583 = vmatpush1.msra.mxu0 0.0
    %1584 = vmatprep.subr.mxu0 0.0
    %1585 = vmatpush1.msra.mxu0 0.0
    %1586 = vmatprep.subr.mxu0 0.0
    %1587 = vmatpush1.msra.mxu0 0.0
    %1588 = vmatprep.subr.mxu0 0.0
    %1589 = vmatpush1.msra.mxu0 0.0
    %1590 = vmatprep.subr.mxu0 0.0
    %1591 = vmatpush1.msra.mxu0 0.0
    %1592 = vmatprep.subr.mxu0 0.0
    %1593 = vmatpush1.msra.mxu0 0.0
    %1594 = vmatprep.subr.mxu0 0.0
    %1595 = vmatpush1.msra.mxu0 0.0
    %1596 = vmatprep.subr.mxu0 0.0
    %1597 = vmatpush1.msra.mxu0 0.0
    %1598 = vmatprep.subr.mxu0 0.0
    %1599 = vmatpush1.msra.mxu0 0.0
    %1600 = vmatprep.subr.mxu0 0.0
    %1601 = vmatpush1.msra.mxu0 0.0
    %1602 = vmatprep.subr.mxu0 0.0
    %1603 = vmatpush1.msra.mxu0 0.0
    %1604 = vmatprep.subr.mxu0 0.0
    %1605 = vmatpush1.msra.mxu0 0.0
    %1606 = vmatprep.subr.mxu0 0.0
    %1607 = vmatpush1.msra.mxu0 0.0
    %1608 = vmatprep.subr.mxu0 0.0
    %1609 = vmatpush1.msra.mxu0 0.0
    %1610 = vmatprep.subr.mxu0 0.0
    %1611 = vmatpush1.msra.mxu0 0.0
    %1612 = vmatprep.subr.mxu0 0.0
    %1613 = vmatpush1.msra.mxu0 0.0
    %1614 = vmatprep.subr.mxu0 0.0
    %1615 = vmatpush1.msra.mxu0 0.0
    %1616 = vmatprep.subr.mxu0 0.0
    %1617 = vmatpush1.msra.mxu0 0.0
    %1618 = vmatprep.subr.mxu0 0.0
    %1619 = vmatpush1.msra.mxu0 0.0
    %1620 = vmatprep.subr.mxu0 0.0
    %1621 = vmatpush1.msra.mxu0 0.0
    %1622 = vmatprep.subr.mxu0 0.0
    %1623 = vmatpush1.msra.mxu0 0.0
    %1624 = vmatprep.subr.mxu0 0.0
    %1625 = vmatpush1.msra.mxu0 0.0
    %1626 = vmatprep.subr.mxu0 0.0
    %1627 = vmatpush1.msra.mxu0 0.0
    %1628 = vmatprep.subr.mxu0 0.0
    %1629 = vmatpush1.msra.mxu0 0.0
    %1630 = vmatprep.subr.mxu0 0.0
    %1631 = vmatpush1.msra.mxu0 0.0
    %1632 = vmatprep.mubr.f32.mxu0 0.0
    %1633 = vmatmul.mubr.f32.gmra.mrb[0].mxu0 %v258
    %v1634 = vpop.f32.mrb[0].mxu0
    %v1635 = vadd.f32 %v1345, %v1634
    %v1636 = vpop.f32.mrb[0].mxu0
    %1637 = vdwg.mxu0
    %1638 = vmatprep.subr.mxu0 0.0
    %1639 = vmatpush1.msra.mxu0 %v142
    %1640 = vmatprep.subr.mxu0 0.0
    %1641 = vmatpush1.msra.mxu0 %v143
    %1642 = vmatprep.subr.mxu0 0.0
    %1643 = vmatpush1.msra.mxu0 %v144
    %1644 = vmatprep.subr.mxu0 0.0
    %1645 = vmatpush1.msra.mxu0 %v145
    %1646 = vmatprep.subr.mxu0 0.0
    %1647 = vmatpush1.msra.mxu0 0.0
    %1648 = vmatprep.subr.mxu0 0.0
    %1649 = vmatpush1.msra.mxu0 0.0
    %1650 = vmatprep.subr.mxu0 0.0
    %1651 = vmatpush1.msra.mxu0 0.0
    %1652 = vmatprep.subr.mxu0 0.0
    %1653 = vmatpush1.msra.mxu0 0.0
    %1654 = vmatprep.subr.mxu0 0.0
    %1655 = vmatpush1.msra.mxu0 0.0
    %1656 = vmatprep.subr.mxu0 0.0
    %1657 = vmatpush1.msra.mxu0 0.0
    %1658 = vmatprep.subr.mxu0 0.0
    %1659 = vmatpush1.msra.mxu0 0.0
    %1660 = vmatprep.subr.mxu0 0.0
    %1661 = vmatpush1.msra.mxu0 0.0
    %1662 = vmatprep.subr.mxu0 0.0
    %1663 = vmatpush1.msra.mxu0 0.0
    %1664 = vmatprep.subr.mxu0 0.0
    %1665 = vmatpush1.msra.mxu0 0.0
    %1666 = vmatprep.subr.mxu0 0.0
    %1667 = vmatpush1.msra.mxu0 0.0
    %1668 = vmatprep.subr.mxu0 0.0
    %1669 = vmatpush1.msra.mxu0 0.0
    %1670 = vmatprep.subr.mxu0 0.0
    %1671 = vmatpush1.msra.mxu0 0.0
    %1672 = vmatprep.subr.mxu0 0.0
    %1673 = vmatpush1.msra.mxu0 0.0
    %1674 = vmatprep.subr.mxu0 0.0
    %1675 = vmatpush1.msra.mxu0 0.0
    %1676 = vmatprep.subr.mxu0 0.0
    %1677 = vmatpush1.msra.mxu0 0.0
    %1678 = vmatprep.subr.mxu0 0.0
    %1679 = vmatpush1.msra.mxu0 0.0
    %1680 = vmatprep.subr.mxu0 0.0
    %1681 = vmatpush1.msra.mxu0 0.0
    %1682 = vmatprep.subr.mxu0 0.0
    %1683 = vmatpush1.msra.mxu0 0.0
    %1684 = vmatprep.subr.mxu0 0.0
    %1685 = vmatpush1.msra.mxu0 0.0
    %1686 = vmatprep.subr.mxu0 0.0
    %1687 = vmatpush1.msra.mxu0 0.0
    %1688 = vmatprep.subr.mxu0 0.0
    %1689 = vmatpush1.msra.mxu0 0.0
    %1690 = vmatprep.subr.mxu0 0.0
    %1691 = vmatpush1.msra.mxu0 0.0
    %1692 = vmatprep.subr.mxu0 0.0
    %1693 = vmatpush1.msra.mxu0 0.0
    %1694 = vmatprep.subr.mxu0 0.0
    %1695 = vmatpush1.msra.mxu0 0.0
    %1696 = vmatprep.subr.mxu0 0.0
    %1697 = vmatpush1.msra.mxu0 0.0
    %1698 = vmatprep.subr.mxu0 0.0
    %1699 = vmatpush1.msra.mxu0 0.0
    %1700 = vmatprep.subr.mxu0 0.0
    %1701 = vmatpush1.msra.mxu0 0.0
    %1702 = vmatprep.mubr.f32.mxu0 0.0
    %1703 = vmatmul.mubr.f32.gmra.mrb[0].mxu0 %v185
    %v1704 = vpop.f32.mrb[0].mxu0
    %v1705 = vadd.f32 %v1349, %v1704
    %v1706 = vpop.f32.mrb[0].mxu0
    %1707 = vdwg.mxu0
    %1708 = vmatprep.subr.mxu0 0.0
    %1709 = vmatpush1.msra.mxu0 %v142
    %1710 = vmatprep.subr.mxu0 0.0
    %1711 = vmatpush1.msra.mxu0 %v143
    %1712 = vmatprep.subr.mxu0 0.0
    %1713 = vmatpush1.msra.mxu0 %v144
    %1714 = vmatprep.subr.mxu0 0.0
    %1715 = vmatpush1.msra.mxu0 %v145
    %1716 = vmatprep.subr.mxu0 0.0
    %1717 = vmatpush1.msra.mxu0 0.0
    %1718 = vmatprep.subr.mxu0 0.0
    %1719 = vmatpush1.msra.mxu0 0.0
    %1720 = vmatprep.subr.mxu0 0.0
    %1721 = vmatpush1.msra.mxu0 0.0
    %1722 = vmatprep.subr.mxu0 0.0
    %1723 = vmatpush1.msra.mxu0 0.0
    %1724 = vmatprep.subr.mxu0 0.0
    %1725 = vmatpush1.msra.mxu0 0.0
    %1726 = vmatprep.subr.mxu0 0.0
    %1727 = vmatpush1.msra.mxu0 0.0
    %1728 = vmatprep.subr.mxu0 0.0
    %1729 = vmatpush1.msra.mxu0 0.0
    %1730 = vmatprep.subr.mxu0 0.0
    %1731 = vmatpush1.msra.mxu0 0.0
    %1732 = vmatprep.subr.mxu0 0.0
    %1733 = vmatpush1.msra.mxu0 0.0
    %1734 = vmatprep.subr.mxu0 0.0
    %1735 = vmatpush1.msra.mxu0 0.0
    %1736 = vmatprep.subr.mxu0 0.0
    %1737 = vmatpush1.msra.mxu0 0.0
    %1738 = vmatprep.subr.mxu0 0.0
    %1739 = vmatpush1.msra.mxu0 0.0
    %1740 = vmatprep.subr.mxu0 0.0
    %1741 = vmatpush1.msra.mxu0 0.0
    %1742 = vmatprep.subr.mxu0 0.0
    %1743 = vmatpush1.msra.mxu0 0.0
    %1744 = vmatprep.subr.mxu0 0.0
    %1745 = vmatpush1.msra.mxu0 0.0
    %1746 = vmatprep.subr.mxu0 0.0
    %1747 = vmatpush1.msra.mxu0 0.0
    %1748 = vmatprep.subr.mxu0 0.0
    %1749 = vmatpush1.msra.mxu0 0.0
    %1750 = vmatprep.subr.mxu0 0.0
    %1751 = vmatpush1.msra.mxu0 0.0
    %1752 = vmatprep.subr.mxu0 0.0
    %1753 = vmatpush1.msra.mxu0 0.0
    %1754 = vmatprep.subr.mxu0 0.0
    %1755 = vmatpush1.msra.mxu0 0.0
    %1756 = vmatprep.subr.mxu0 0.0
    %1757 = vmatpush1.msra.mxu0 0.0
    %1758 = vmatprep.subr.mxu0 0.0
    %1759 = vmatpush1.msra.mxu0 0.0
    %1760 = vmatprep.subr.mxu0 0.0
    %1761 = vmatpush1.msra.mxu0 0.0
    %1762 = vmatprep.subr.mxu0 0.0
    %1763 = vmatpush1.msra.mxu0 0.0
    %1764 = vmatprep.subr.mxu0 0.0
    %1765 = vmatpush1.msra.mxu0 0.0
    %1766 = vmatprep.subr.mxu0 0.0
    %1767 = vmatpush1.msra.mxu0 0.0
    %1768 = vmatprep.subr.mxu0 0.0
    %1769 = vmatpush1.msra.mxu0 0.0
    %1770 = vmatprep.subr.mxu0 0.0
    %1771 = vmatpush1.msra.mxu0 0.0
    %1772 = vmatprep.mubr.f32.mxu0 0.0
    %1773 = vmatmul.mubr.f32.gmra.mrb[0].mxu0 %v258
    %v1774 = vpop.f32.mrb[0].mxu0
    %v1775 = vadd.f32 %v1349, %v1774
    %v1776 = vpop.f32.mrb[0].mxu0
    %1777 = vdwg.mxu0
    %1778 = vmatprep.subr.mxu0 0.0
    %1779 = vmatpush1.msra.mxu0 %v146
    %1780 = vmatprep.subr.mxu0 0.0
    %1781 = vmatpush1.msra.mxu0 %v147
    %1782 = vmatprep.subr.mxu0 0.0
    %1783 = vmatpush1.msra.mxu0 %v148
    %1784 = vmatprep.subr.mxu0 0.0
    %1785 = vmatpush1.msra.mxu0 %v149
    %1786 = vmatprep.subr.mxu0 0.0
    %1787 = vmatpush1.msra.mxu0 0.0
    %1788 = vmatprep.subr.mxu0 0.0
    %1789 = vmatpush1.msra.mxu0 0.0
    %1790 = vmatprep.subr.mxu0 0.0
    %1791 = vmatpush1.msra.mxu0 0.0
    %1792 = vmatprep.subr.mxu0 0.0
    %1793 = vmatpush1.msra.mxu0 0.0
    %1794 = vmatprep.subr.mxu0 0.0
    %1795 = vmatpush1.msra.mxu0 0.0
    %1796 = vmatprep.subr.mxu0 0.0
    %1797 = vmatpush1.msra.mxu0 0.0
    %1798 = vmatprep.subr.mxu0 0.0
    %1799 = vmatpush1.msra.mxu0 0.0
    %1800 = vmatprep.subr.mxu0 0.0
    %1801 = vmatpush1.msra.mxu0 0.0
    %1802 = vmatprep.subr.mxu0 0.0
    %1803 = vmatpush1.msra.mxu0 0.0
    %1804 = vmatprep.subr.mxu0 0.0
    %1805 = vmatpush1.msra.mxu0 0.0
    %1806 = vmatprep.subr.mxu0 0.0
    %1807 = vmatpush1.msra.mxu0 0.0
    %1808 = vmatprep.subr.mxu0 0.0
    %1809 = vmatpush1.msra.mxu0 0.0
    %1810 = vmatprep.subr.mxu0 0.0
    %1811 = vmatpush1.msra.mxu0 0.0
    %1812 = vmatprep.subr.mxu0 0.0
    %1813 = vmatpush1.msra.mxu0 0.0
    %1814 = vmatprep.subr.mxu0 0.0
    %1815 = vmatpush1.msra.mxu0 0.0
    %1816 = vmatprep.subr.mxu0 0.0
    %1817 = vmatpush1.msra.mxu0 0.0
    %1818 = vmatprep.subr.mxu0 0.0
    %1819 = vmatpush1.msra.mxu0 0.0
    %1820 = vmatprep.subr.mxu0 0.0
    %1821 = vmatpush1.msra.mxu0 0.0
    %1822 = vmatprep.subr.mxu0 0.0
    %1823 = vmatpush1.msra.mxu0 0.0
    %1824 = vmatprep.subr.mxu0 0.0
    %1825 = vmatpush1.msra.mxu0 0.0
    %1826 = vmatprep.subr.mxu0 0.0
    %1827 = vmatpush1.msra.mxu0 0.0
    %1828 = vmatprep.subr.mxu0 0.0
    %1829 = vmatpush1.msra.mxu0 0.0
    %1830 = vmatprep.subr.mxu0 0.0
    %1831 = vmatpush1.msra.mxu0 0.0
    %1832 = vmatprep.subr.mxu0 0.0
    %1833 = vmatpush1.msra.mxu0 0.0
    %1834 = vmatprep.subr.mxu0 0.0
    %1835 = vmatpush1.msra.mxu0 0.0
    %1836 = vmatprep.subr.mxu0 0.0
    %1837 = vmatpush1.msra.mxu0 0.0
    %1838 = vmatprep.subr.mxu0 0.0
    %1839 = vmatpush1.msra.mxu0 0.0
    %1840 = vmatprep.subr.mxu0 0.0
    %1841 = vmatpush1.msra.mxu0 0.0
    %1842 = vmatprep.mubr.f32.mxu0 0.0
    %1843 = vmatmul.mubr.f32.gmra.mrb[0].mxu0 %v185
    %v1844 = vpop.f32.mrb[0].mxu0
    %v1845 = vadd.f32 %v1353, %v1844
    %v1846 = vpop.f32.mrb[0].mxu0
    %1847 = vdwg.mxu0
    %1848 = vmatprep.subr.mxu0 0.0
    %1849 = vmatpush1.msra.mxu0 %v146
    %1850 = vmatprep.subr.mxu0 0.0
    %1851 = vmatpush1.msra.mxu0 %v147
    %1852 = vmatprep.subr.mxu0 0.0
    %1853 = vmatpush1.msra.mxu0 %v148
    %1854 = vmatprep.subr.mxu0 0.0
    %1855 = vmatpush1.msra.mxu0 %v149
    %1856 = vmatprep.subr.mxu0 0.0
    %1857 = vmatpush1.msra.mxu0 0.0
    %1858 = vmatprep.subr.mxu0 0.0
    %1859 = vmatpush1.msra.mxu0 0.0
    %1860 = vmatprep.subr.mxu0 0.0
    %1861 = vmatpush1.msra.mxu0 0.0
    %1862 = vmatprep.subr.mxu0 0.0
    %1863 = vmatpush1.msra.mxu0 0.0
    %1864 = vmatprep.subr.mxu0 0.0
    %1865 = vmatpush1.msra.mxu0 0.0
    %1866 = vmatprep.subr.mxu0 0.0
    %1867 = vmatpush1.msra.mxu0 0.0
    %1868 = vmatprep.subr.mxu0 0.0
    %1869 = vmatpush1.msra.mxu0 0.0
    %1870 = vmatprep.subr.mxu0 0.0
    %1871 = vmatpush1.msra.mxu0 0.0
    %1872 = vmatprep.subr.mxu0 0.0
    %1873 = vmatpush1.msra.mxu0 0.0
    %1874 = vmatprep.subr.mxu0 0.0
    %1875 = vmatpush1.msra.mxu0 0.0
    %1876 = vmatprep.subr.mxu0 0.0
    %1877 = vmatpush1.msra.mxu0 0.0
    %1878 = vmatprep.subr.mxu0 0.0
    %1879 = vmatpush1.msra.mxu0 0.0
    %1880 = vmatprep.subr.mxu0 0.0
    %1881 = vmatpush1.msra.mxu0 0.0
    %1882 = vmatprep.subr.mxu0 0.0
    %1883 = vmatpush1.msra.mxu0 0.0
    %1884 = vmatprep.subr.mxu0 0.0
    %1885 = vmatpush1.msra.mxu0 0.0
    %1886 = vmatprep.subr.mxu0 0.0
    %1887 = vmatpush1.msra.mxu0 0.0
    %1888 = vmatprep.subr.mxu0 0.0
    %1889 = vmatpush1.msra.mxu0 0.0
    %1890 = vmatprep.subr.mxu0 0.0
    %1891 = vmatpush1.msra.mxu0 0.0
    %1892 = vmatprep.subr.mxu0 0.0
    %1893 = vmatpush1.msra.mxu0 0.0
    %1894 = vmatprep.subr.mxu0 0.0
    %1895 = vmatpush1.msra.mxu0 0.0
    %1896 = vmatprep.subr.mxu0 0.0
    %1897 = vmatpush1.msra.mxu0 0.0
    %1898 = vmatprep.subr.mxu0 0.0
    %1899 = vmatpush1.msra.mxu0 0.0
    %1900 = vmatprep.subr.mxu0 0.0
    %1901 = vmatpush1.msra.mxu0 0.0
    %1902 = vmatprep.subr.mxu0 0.0
    %1903 = vmatpush1.msra.mxu0 0.0
    %1904 = vmatprep.subr.mxu0 0.0
    %1905 = vmatpush1.msra.mxu0 0.0
    %1906 = vmatprep.subr.mxu0 0.0
    %1907 = vmatpush1.msra.mxu0 0.0
    %1908 = vmatprep.subr.mxu0 0.0
    %1909 = vmatpush1.msra.mxu0 0.0
    %1910 = vmatprep.subr.mxu0 0.0
    %1911 = vmatpush1.msra.mxu0 0.0
    %1912 = vmatprep.mubr.f32.mxu0 0.0
    %1913 = vmatmul.mubr.f32.gmra.mrb[0].mxu0 %v258
    %v1914 = vpop.f32.mrb[0].mxu0
    %v1915 = vadd.f32 %v1353, %v1914
    %v1916 = vpop.f32.mrb[0].mxu0
    %1917 = vdwg.mxu0
    %vm1918 = vcmask 64512
    %v1920 = vsel %vm1918, %v254, 0
    %v1923 = vsel %vm1918, %v841, 0
    %1925 = vmatprep.subr.mxu0 0.0
    %1926 = vmatpush1.xpose.msra.mxu0 %v1923
    %1927 = vmatprep.subr.mxu0 0.0
    %1928 = vmatpush1.xpose.msra.mxu0 0.0
    %1929 = vmatprep.subr.mxu0 0.0
    %1930 = vmatpush1.xpose.msra.mxu0 0.0
    %1931 = vmatprep.subr.mxu0 0.0
    %1932 = vmatpush1.xpose.msra.mxu0 0.0
    %1933 = vmatprep.subr.mxu0 0.0
    %1934 = vmatpush1.xpose.msra.mxu0 0.0
    %1935 = vmatprep.subr.mxu0 0.0
    %1936 = vmatpush1.xpose.msra.mxu0 0.0
    %1937 = vmatprep.subr.mxu0 0.0
    %1938 = vmatpush1.xpose.msra.mxu0 0.0
    %1939 = vmatprep.subr.mxu0 0.0
    %1940 = vmatpush1.xpose.msra.mxu0 0.0
    %1941 = vmatprep.subr.mxu0 0.0
    %1942 = vmatpush1.xpose.msra.mxu0 0.0
    %1943 = vmatprep.subr.mxu0 0.0
    %1944 = vmatpush1.xpose.msra.mxu0 0.0
    %1945 = vmatprep.subr.mxu0 0.0
    %1946 = vmatpush1.xpose.msra.mxu0 0.0
    %1947 = vmatprep.subr.mxu0 0.0
    %1948 = vmatpush1.xpose.msra.mxu0 0.0
    %1949 = vmatprep.subr.mxu0 0.0
    %1950 = vmatpush1.xpose.msra.mxu0 0.0
    %1951 = vmatprep.subr.mxu0 0.0
    %1952 = vmatpush1.xpose.msra.mxu0 0.0
    %1953 = vmatprep.subr.mxu0 0.0
    %1954 = vmatpush1.xpose.msra.mxu0 0.0
    %1955 = vmatprep.subr.mxu0 0.0
    %1956 = vmatpush1.xpose.msra.mxu0 0.0
    %1957 = vmatprep.subr.mxu0 0.0
    %1958 = vmatpush1.xpose.msra.mxu0 0.0
    %1959 = vmatprep.subr.mxu0 0.0
    %1960 = vmatpush1.xpose.msra.mxu0 0.0
    %1961 = vmatprep.subr.mxu0 0.0
    %1962 = vmatpush1.xpose.msra.mxu0 0.0
    %1963 = vmatprep.subr.mxu0 0.0
    %1964 = vmatpush1.xpose.msra.mxu0 0.0
    %1965 = vmatprep.subr.mxu0 0.0
    %1966 = vmatpush1.xpose.msra.mxu0 0.0
    %1967 = vmatprep.subr.mxu0 0.0
    %1968 = vmatpush1.xpose.msra.mxu0 0.0
    %1969 = vmatprep.subr.mxu0 0.0
    %1970 = vmatpush1.xpose.msra.mxu0 0.0
    %1971 = vmatprep.subr.mxu0 0.0
    %1972 = vmatpush1.xpose.msra.mxu0 0.0
    %1973 = vmatprep.subr.mxu0 0.0
    %1974 = vmatpush1.xpose.msra.mxu0 0.0
    %1975 = vmatprep.subr.mxu0 0.0
    %1976 = vmatpush1.xpose.msra.mxu0 0.0
    %1977 = vmatprep.subr.mxu0 0.0
    %1978 = vmatpush1.xpose.msra.mxu0 0.0
    %1979 = vmatprep.subr.mxu0 0.0
    %1980 = vmatpush1.xpose.msra.mxu0 0.0
    %1981 = vmatprep.subr.mxu0 0.0
    %1982 = vmatpush1.xpose.msra.mxu0 0.0
    %1983 = vmatprep.subr.mxu0 0.0
    %1984 = vmatpush1.xpose.msra.mxu0 0.0
    %1985 = vmatprep.subr.mxu0 0.0
    %1986 = vmatpush1.xpose.msra.mxu0 0.0
    %1987 = vmatprep.subr.mxu0 0.0
    %1988 = vmatpush1.xpose.msra.mxu0 0.0
    %1989 = vmatprep.mubr.f32.mxu0 0.0
    %1990 = vmatmul.mubr.f32.gmra.mrb[0].mxu0 %v1920
    %v1991 = vpop.f32.mrb[0].mxu0
    %v1992 = vadd.f32 0.0, %v1991
    %v1993 = vpop.f32.mrb[0].mxu0
    %1994 = vdwg.mxu0
    %v1996 = vsel %vm1918, %v327, 0
    %v1999 = vsel %vm1918, %v911, 0
    %2001 = vmatprep.subr.mxu0 0.0
    %2002 = vmatpush1.xpose.msra.mxu0 %v1999
    %2003 = vmatprep.subr.mxu0 0.0
    %2004 = vmatpush1.xpose.msra.mxu0 0.0
    %2005 = vmatprep.subr.mxu0 0.0
    %2006 = vmatpush1.xpose.msra.mxu0 0.0
    %2007 = vmatprep.subr.mxu0 0.0
    %2008 = vmatpush1.xpose.msra.mxu0 0.0
    %2009 = vmatprep.subr.mxu0 0.0
    %2010 = vmatpush1.xpose.msra.mxu0 0.0
    %2011 = vmatprep.subr.mxu0 0.0
    %2012 = vmatpush1.xpose.msra.mxu0 0.0
    %2013 = vmatprep.subr.mxu0 0.0
    %2014 = vmatpush1.xpose.msra.mxu0 0.0
    %2015 = vmatprep.subr.mxu0 0.0
    %2016 = vmatpush1.xpose.msra.mxu0 0.0
    %2017 = vmatprep.subr.mxu0 0.0
    %2018 = vmatpush1.xpose.msra.mxu0 0.0
    %2019 = vmatprep.subr.mxu0 0.0
    %2020 = vmatpush1.xpose.msra.mxu0 0.0
    %2021 = vmatprep.subr.mxu0 0.0
    %2022 = vmatpush1.xpose.msra.mxu0 0.0
    %2023 = vmatprep.subr.mxu0 0.0
    %2024 = vmatpush1.xpose.msra.mxu0 0.0
    %2025 = vmatprep.subr.mxu0 0.0
    %2026 = vmatpush1.xpose.msra.mxu0 0.0
    %2027 = vmatprep.subr.mxu0 0.0
    %2028 = vmatpush1.xpose.msra.mxu0 0.0
    %2029 = vmatprep.subr.mxu0 0.0
    %2030 = vmatpush1.xpose.msra.mxu0 0.0
    %2031 = vmatprep.subr.mxu0 0.0
    %2032 = vmatpush1.xpose.msra.mxu0 0.0
    %2033 = vmatprep.subr.mxu0 0.0
    %2034 = vmatpush1.xpose.msra.mxu0 0.0
    %2035 = vmatprep.subr.mxu0 0.0
    %2036 = vmatpush1.xpose.msra.mxu0 0.0
    %2037 = vmatprep.subr.mxu0 0.0
    %2038 = vmatpush1.xpose.msra.mxu0 0.0
    %2039 = vmatprep.subr.mxu0 0.0
    %2040 = vmatpush1.xpose.msra.mxu0 0.0
    %2041 = vmatprep.subr.mxu0 0.0
    %2042 = vmatpush1.xpose.msra.mxu0 0.0
    %2043 = vmatprep.subr.mxu0 0.0
    %2044 = vmatpush1.xpose.msra.mxu0 0.0
    %2045 = vmatprep.subr.mxu0 0.0
    %2046 = vmatpush1.xpose.msra.mxu0 0.0
    %2047 = vmatprep.subr.mxu0 0.0
    %2048 = vmatpush1.xpose.msra.mxu0 0.0
    %2049 = vmatprep.subr.mxu0 0.0
    %2050 = vmatpush1.xpose.msra.mxu0 0.0
    %2051 = vmatprep.subr.mxu0 0.0
    %2052 = vmatpush1.xpose.msra.mxu0 0.0
    %2053 = vmatprep.subr.mxu0 0.0
    %2054 = vmatpush1.xpose.msra.mxu0 0.0
    %2055 = vmatprep.subr.mxu0 0.0
    %2056 = vmatpush1.xpose.msra.mxu0 0.0
    %2057 = vmatprep.subr.mxu0 0.0
    %2058 = vmatpush1.xpose.msra.mxu0 0.0
    %2059 = vmatprep.subr.mxu0 0.0
    %2060 = vmatpush1.xpose.msra.mxu0 0.0
    %2061 = vmatprep.subr.mxu0 0.0
    %2062 = vmatpush1.xpose.msra.mxu0 0.0
    %2063 = vmatprep.subr.mxu0 0.0
    %2064 = vmatpush1.xpose.msra.mxu0 0.0
    %2065 = vmatprep.mubr.f32.mxu0 0.0
    %2066 = vmatmul.mubr.f32.gmra.mrb[0].mxu0 %v1996
    %v2067 = vpop.f32.mrb[0].mxu0
    %v2068 = vadd.f32 0.0, %v2067
    %v2069 = vpop.f32.mrb[0].mxu0
    %2070 = vdwg.mxu0
    %v2072 = vsel %vm1918, %v397, 0
    %v2075 = vsel %vm1918, %v981, 0
    %2077 = vmatprep.subr.mxu0 0.0
    %2078 = vmatpush1.xpose.msra.mxu0 %v2075
    %2079 = vmatprep.subr.mxu0 0.0
    %2080 = vmatpush1.xpose.msra.mxu0 0.0
    %2081 = vmatprep.subr.mxu0 0.0
    %2082 = vmatpush1.xpose.msra.mxu0 0.0
    %2083 = vmatprep.subr.mxu0 0.0
    %2084 = vmatpush1.xpose.msra.mxu0 0.0
    %2085 = vmatprep.subr.mxu0 0.0
    %2086 = vmatpush1.xpose.msra.mxu0 0.0
    %2087 = vmatprep.subr.mxu0 0.0
    %2088 = vmatpush1.xpose.msra.mxu0 0.0
    %2089 = vmatprep.subr.mxu0 0.0
    %2090 = vmatpush1.xpose.msra.mxu0 0.0
    %2091 = vmatprep.subr.mxu0 0.0
    %2092 = vmatpush1.xpose.msra.mxu0 0.0
    %2093 = vmatprep.subr.mxu0 0.0
    %2094 = vmatpush1.xpose.msra.mxu0 0.0
    %2095 = vmatprep.subr.mxu0 0.0
    %2096 = vmatpush1.xpose.msra.mxu0 0.0
    %2097 = vmatprep.subr.mxu0 0.0
    %2098 = vmatpush1.xpose.msra.mxu0 0.0
    %2099 = vmatprep.subr.mxu0 0.0
    %2100 = vmatpush1.xpose.msra.mxu0 0.0
    %2101 = vmatprep.subr.mxu0 0.0
    %2102 = vmatpush1.xpose.msra.mxu0 0.0
    %2103 = vmatprep.subr.mxu0 0.0
    %2104 = vmatpush1.xpose.msra.mxu0 0.0
    %2105 = vmatprep.subr.mxu0 0.0
    %2106 = vmatpush1.xpose.msra.mxu0 0.0
    %2107 = vmatprep.subr.mxu0 0.0
    %2108 = vmatpush1.xpose.msra.mxu0 0.0
    %2109 = vmatprep.subr.mxu0 0.0
    %2110 = vmatpush1.xpose.msra.mxu0 0.0
    %2111 = vmatprep.subr.mxu0 0.0
    %2112 = vmatpush1.xpose.msra.mxu0 0.0
    %2113 = vmatprep.subr.mxu0 0.0
    %2114 = vmatpush1.xpose.msra.mxu0 0.0
    %2115 = vmatprep.subr.mxu0 0.0
    %2116 = vmatpush1.xpose.msra.mxu0 0.0
    %2117 = vmatprep.subr.mxu0 0.0
    %2118 = vmatpush1.xpose.msra.mxu0 0.0
    %2119 = vmatprep.subr.mxu0 0.0
    %2120 = vmatpush1.xpose.msra.mxu0 0.0
    %2121 = vmatprep.subr.mxu0 0.0
    %2122 = vmatpush1.xpose.msra.mxu0 0.0
    %2123 = vmatprep.subr.mxu0 0.0
    %2124 = vmatpush1.xpose.msra.mxu0 0.0
    %2125 = vmatprep.subr.mxu0 0.0
    %2126 = vmatpush1.xpose.msra.mxu0 0.0
    %2127 = vmatprep.subr.mxu0 0.0
    %2128 = vmatpush1.xpose.msra.mxu0 0.0
    %2129 = vmatprep.subr.mxu0 0.0
    %2130 = vmatpush1.xpose.msra.mxu0 0.0
    %2131 = vmatprep.subr.mxu0 0.0
    %2132 = vmatpush1.xpose.msra.mxu0 0.0
    %2133 = vmatprep.subr.mxu0 0.0
    %2134 = vmatpush1.xpose.msra.mxu0 0.0
    %2135 = vmatprep.subr.mxu0 0.0
    %2136 = vmatpush1.xpose.msra.mxu0 0.0
    %2137 = vmatprep.subr.mxu0 0.0
    %2138 = vmatpush1.xpose.msra.mxu0 0.0
    %2139 = vmatprep.subr.mxu0 0.0
    %2140 = vmatpush1.xpose.msra.mxu0 0.0
    %2141 = vmatprep.mubr.f32.mxu0 0.0
    %2142 = vmatmul.mubr.f32.gmra.mrb[0].mxu0 %v2072
    %v2143 = vpop.f32.mrb[0].mxu0
    %v2144 = vadd.f32 0.0, %v2143
    %v2145 = vpop.f32.mrb[0].mxu0
    %2146 = vdwg.mxu0
    %v2148 = vsel %vm1918, %v467, 0
    %v2151 = vsel %vm1918, %v1051, 0
    %2153 = vmatprep.subr.mxu0 0.0
    %2154 = vmatpush1.xpose.msra.mxu0 %v2151
    %2155 = vmatprep.subr.mxu0 0.0
    %2156 = vmatpush1.xpose.msra.mxu0 0.0
    %2157 = vmatprep.subr.mxu0 0.0
    %2158 = vmatpush1.xpose.msra.mxu0 0.0
    %2159 = vmatprep.subr.mxu0 0.0
    %2160 = vmatpush1.xpose.msra.mxu0 0.0
    %2161 = vmatprep.subr.mxu0 0.0
    %2162 = vmatpush1.xpose.msra.mxu0 0.0
    %2163 = vmatprep.subr.mxu0 0.0
    %2164 = vmatpush1.xpose.msra.mxu0 0.0
    %2165 = vmatprep.subr.mxu0 0.0
    %2166 = vmatpush1.xpose.msra.mxu0 0.0
    %2167 = vmatprep.subr.mxu0 0.0
    %2168 = vmatpush1.xpose.msra.mxu0 0.0
    %2169 = vmatprep.subr.mxu0 0.0
    %2170 = vmatpush1.xpose.msra.mxu0 0.0
    %2171 = vmatprep.subr.mxu0 0.0
    %2172 = vmatpush1.xpose.msra.mxu0 0.0
    %2173 = vmatprep.subr.mxu0 0.0
    %2174 = vmatpush1.xpose.msra.mxu0 0.0
    %2175 = vmatprep.subr.mxu0 0.0
    %2176 = vmatpush1.xpose.msra.mxu0 0.0
    %2177 = vmatprep.subr.mxu0 0.0
    %2178 = vmatpush1.xpose.msra.mxu0 0.0
    %2179 = vmatprep.subr.mxu0 0.0
    %2180 = vmatpush1.xpose.msra.mxu0 0.0
    %2181 = vmatprep.subr.mxu0 0.0
    %2182 = vmatpush1.xpose.msra.mxu0 0.0
    %2183 = vmatprep.subr.mxu0 0.0
    %2184 = vmatpush1.xpose.msra.mxu0 0.0
    %2185 = vmatprep.subr.mxu0 0.0
    %2186 = vmatpush1.xpose.msra.mxu0 0.0
    %2187 = vmatprep.subr.mxu0 0.0
    %2188 = vmatpush1.xpose.msra.mxu0 0.0
    %2189 = vmatprep.subr.mxu0 0.0
    %2190 = vmatpush1.xpose.msra.mxu0 0.0
    %2191 = vmatprep.subr.mxu0 0.0
    %2192 = vmatpush1.xpose.msra.mxu0 0.0
    %2193 = vmatprep.subr.mxu0 0.0
    %2194 = vmatpush1.xpose.msra.mxu0 0.0
    %2195 = vmatprep.subr.mxu0 0.0
    %2196 = vmatpush1.xpose.msra.mxu0 0.0
    %2197 = vmatprep.subr.mxu0 0.0
    %2198 = vmatpush1.xpose.msra.mxu0 0.0
    %2199 = vmatprep.subr.mxu0 0.0
    %2200 = vmatpush1.xpose.msra.mxu0 0.0
    %2201 = vmatprep.subr.mxu0 0.0
    %2202 = vmatpush1.xpose.msra.mxu0 0.0
    %2203 = vmatprep.subr.mxu0 0.0
    %2204 = vmatpush1.xpose.msra.mxu0 0.0
    %2205 = vmatprep.subr.mxu0 0.0
    %2206 = vmatpush1.xpose.msra.mxu0 0.0
    %2207 = vmatprep.subr.mxu0 0.0
    %2208 = vmatpush1.xpose.msra.mxu0 0.0
    %2209 = vmatprep.subr.mxu0 0.0
    %2210 = vmatpush1.xpose.msra.mxu0 0.0
    %2211 = vmatprep.subr.mxu0 0.0
    %2212 = vmatpush1.xpose.msra.mxu0 0.0
    %2213 = vmatprep.subr.mxu0 0.0
    %2214 = vmatpush1.xpose.msra.mxu0 0.0
    %2215 = vmatprep.subr.mxu0 0.0
    %2216 = vmatpush1.xpose.msra.mxu0 0.0
    %2217 = vmatprep.mubr.f32.mxu0 0.0
    %2218 = vmatmul.mubr.f32.gmra.mrb[0].mxu0 %v2148
    %v2219 = vpop.f32.mrb[0].mxu0
    %v2220 = vadd.f32 0.0, %v2219
    %v2221 = vpop.f32.mrb[0].mxu0
    %2222 = vdwg.mxu0
    %v2224 = vsel %vm1918, %v537, 0
    %v2227 = vsel %vm1918, %v1121, 0
    %2229 = vmatprep.subr.mxu0 0.0
    %2230 = vmatpush1.xpose.msra.mxu0 %v2227
    %2231 = vmatprep.subr.mxu0 0.0
    %2232 = vmatpush1.xpose.msra.mxu0 0.0
    %2233 = vmatprep.subr.mxu0 0.0
    %2234 = vmatpush1.xpose.msra.mxu0 0.0
    %2235 = vmatprep.subr.mxu0 0.0
    %2236 = vmatpush1.xpose.msra.mxu0 0.0
    %2237 = vmatprep.subr.mxu0 0.0
    %2238 = vmatpush1.xpose.msra.mxu0 0.0
    %2239 = vmatprep.subr.mxu0 0.0
    %2240 = vmatpush1.xpose.msra.mxu0 0.0
    %2241 = vmatprep.subr.mxu0 0.0
    %2242 = vmatpush1.xpose.msra.mxu0 0.0
    %2243 = vmatprep.subr.mxu0 0.0
    %2244 = vmatpush1.xpose.msra.mxu0 0.0
    %2245 = vmatprep.subr.mxu0 0.0
    %2246 = vmatpush1.xpose.msra.mxu0 0.0
    %2247 = vmatprep.subr.mxu0 0.0
    %2248 = vmatpush1.xpose.msra.mxu0 0.0
    %2249 = vmatprep.subr.mxu0 0.0
    %2250 = vmatpush1.xpose.msra.mxu0 0.0
    %2251 = vmatprep.subr.mxu0 0.0
    %2252 = vmatpush1.xpose.msra.mxu0 0.0
    %2253 = vmatprep.subr.mxu0 0.0
    %2254 = vmatpush1.xpose.msra.mxu0 0.0
    %2255 = vmatprep.subr.mxu0 0.0
    %2256 = vmatpush1.xpose.msra.mxu0 0.0
    %2257 = vmatprep.subr.mxu0 0.0
    %2258 = vmatpush1.xpose.msra.mxu0 0.0
    %2259 = vmatprep.subr.mxu0 0.0
    %2260 = vmatpush1.xpose.msra.mxu0 0.0
    %2261 = vmatprep.subr.mxu0 0.0
    %2262 = vmatpush1.xpose.msra.mxu0 0.0
    %2263 = vmatprep.subr.mxu0 0.0
    %2264 = vmatpush1.xpose.msra.mxu0 0.0
    %2265 = vmatprep.subr.mxu0 0.0
    %2266 = vmatpush1.xpose.msra.mxu0 0.0
    %2267 = vmatprep.subr.mxu0 0.0
    %2268 = vmatpush1.xpose.msra.mxu0 0.0
    %2269 = vmatprep.subr.mxu0 0.0
    %2270 = vmatpush1.xpose.msra.mxu0 0.0
    %2271 = vmatprep.subr.mxu0 0.0
    %2272 = vmatpush1.xpose.msra.mxu0 0.0
    %2273 = vmatprep.subr.mxu0 0.0
    %2274 = vmatpush1.xpose.msra.mxu0 0.0
    %2275 = vmatprep.subr.mxu0 0.0
    %2276 = vmatpush1.xpose.msra.mxu0 0.0
    %2277 = vmatprep.subr.mxu0 0.0
    %2278 = vmatpush1.xpose.msra.mxu0 0.0
    %2279 = vmatprep.subr.mxu0 0.0
    %2280 = vmatpush1.xpose.msra.mxu0 0.0
    %2281 = vmatprep.subr.mxu0 0.0
    %2282 = vmatpush1.xpose.msra.mxu0 0.0
    %2283 = vmatprep.subr.mxu0 0.0
    %2284 = vmatpush1.xpose.msra.mxu0 0.0
    %2285 = vmatprep.subr.mxu0 0.0
    %2286 = vmatpush1.xpose.msra.mxu0 0.0
    %2287 = vmatprep.subr.mxu0 0.0
    %2288 = vmatpush1.xpose.msra.mxu0 0.0
    %2289 = vmatprep.subr.mxu0 0.0
    %2290 = vmatpush1.xpose.msra.mxu0 0.0
    %2291 = vmatprep.subr.mxu0 0.0
    %2292 = vmatpush1.xpose.msra.mxu0 0.0
    %2293 = vmatprep.mubr.f32.mxu0 0.0
    %2294 = vmatmul.mubr.f32.gmra.mrb[0].mxu0 %v2224
    %v2295 = vpop.f32.mrb[0].mxu0
    %v2296 = vadd.f32 0.0, %v2295
    %v2297 = vpop.f32.mrb[0].mxu0
    %2298 = vdwg.mxu0
    %v2300 = vsel %vm1918, %v607, 0
    %v2303 = vsel %vm1918, %v1191, 0
    %2305 = vmatprep.subr.mxu0 0.0
    %2306 = vmatpush1.xpose.msra.mxu0 %v2303
    %2307 = vmatprep.subr.mxu0 0.0
    %2308 = vmatpush1.xpose.msra.mxu0 0.0
    %2309 = vmatprep.subr.mxu0 0.0
    %2310 = vmatpush1.xpose.msra.mxu0 0.0
    %2311 = vmatprep.subr.mxu0 0.0
    %2312 = vmatpush1.xpose.msra.mxu0 0.0
    %2313 = vmatprep.subr.mxu0 0.0
    %2314 = vmatpush1.xpose.msra.mxu0 0.0
    %2315 = vmatprep.subr.mxu0 0.0
    %2316 = vmatpush1.xpose.msra.mxu0 0.0
    %2317 = vmatprep.subr.mxu0 0.0
    %2318 = vmatpush1.xpose.msra.mxu0 0.0
    %2319 = vmatprep.subr.mxu0 0.0
    %2320 = vmatpush1.xpose.msra.mxu0 0.0
    %2321 = vmatprep.subr.mxu0 0.0
    %2322 = vmatpush1.xpose.msra.mxu0 0.0
    %2323 = vmatprep.subr.mxu0 0.0
    %2324 = vmatpush1.xpose.msra.mxu0 0.0
    %2325 = vmatprep.subr.mxu0 0.0
    %2326 = vmatpush1.xpose.msra.mxu0 0.0
    %2327 = vmatprep.subr.mxu0 0.0
    %2328 = vmatpush1.xpose.msra.mxu0 0.0
    %2329 = vmatprep.subr.mxu0 0.0
    %2330 = vmatpush1.xpose.msra.mxu0 0.0
    %2331 = vmatprep.subr.mxu0 0.0
    %2332 = vmatpush1.xpose.msra.mxu0 0.0
    %2333 = vmatprep.subr.mxu0 0.0
    %2334 = vmatpush1.xpose.msra.mxu0 0.0
    %2335 = vmatprep.subr.mxu0 0.0
    %2336 = vmatpush1.xpose.msra.mxu0 0.0
    %2337 = vmatprep.subr.mxu0 0.0
    %2338 = vmatpush1.xpose.msra.mxu0 0.0
    %2339 = vmatprep.subr.mxu0 0.0
    %2340 = vmatpush1.xpose.msra.mxu0 0.0
    %2341 = vmatprep.subr.mxu0 0.0
    %2342 = vmatpush1.xpose.msra.mxu0 0.0
    %2343 = vmatprep.subr.mxu0 0.0
    %2344 = vmatpush1.xpose.msra.mxu0 0.0
    %2345 = vmatprep.subr.mxu0 0.0
    %2346 = vmatpush1.xpose.msra.mxu0 0.0
    %2347 = vmatprep.subr.mxu0 0.0
    %2348 = vmatpush1.xpose.msra.mxu0 0.0
    %2349 = vmatprep.subr.mxu0 0.0
    %2350 = vmatpush1.xpose.msra.mxu0 0.0
    %2351 = vmatprep.subr.mxu0 0.0
    %2352 = vmatpush1.xpose.msra.mxu0 0.0
    %2353 = vmatprep.subr.mxu0 0.0
    %2354 = vmatpush1.xpose.msra.mxu0 0.0
    %2355 = vmatprep.subr.mxu0 0.0
    %2356 = vmatpush1.xpose.msra.mxu0 0.0
    %2357 = vmatprep.subr.mxu0 0.0
    %2358 = vmatpush1.xpose.msra.mxu0 0.0
    %2359 = vmatprep.subr.mxu0 0.0
    %2360 = vmatpush1.xpose.msra.mxu0 0.0
    %2361 = vmatprep.subr.mxu0 0.0
    %2362 = vmatpush1.xpose.msra.mxu0 0.0
    %2363 = vmatprep.subr.mxu0 0.0
    %2364 = vmatpush1.xpose.msra.mxu0 0.0
    %2365 = vmatprep.subr.mxu0 0.0
    %2366 = vmatpush1.xpose.msra.mxu0 0.0
    %2367 = vmatprep.subr.mxu0 0.0
    %2368 = vmatpush1.xpose.msra.mxu0 0.0
    %2369 = vmatprep.mubr.f32.mxu0 0.0
    %2370 = vmatmul.mubr.f32.gmra.mrb[0].mxu0 %v2300
    %v2371 = vpop.f32.mrb[0].mxu0
    %v2372 = vadd.f32 0.0, %v2371
    %v2373 = vpop.f32.mrb[0].mxu0
    %2374 = vdwg.mxu0
    %v2376 = vsel %vm1918, %v677, 0
    %v2379 = vsel %vm1918, %v1261, 0
    %2381 = vmatprep.subr.mxu0 0.0
    %2382 = vmatpush1.xpose.msra.mxu0 %v2379
    %2383 = vmatprep.subr.mxu0 0.0
    %2384 = vmatpush1.xpose.msra.mxu0 0.0
    %2385 = vmatprep.subr.mxu0 0.0
    %2386 = vmatpush1.xpose.msra.mxu0 0.0
    %2387 = vmatprep.subr.mxu0 0.0
    %2388 = vmatpush1.xpose.msra.mxu0 0.0
    %2389 = vmatprep.subr.mxu0 0.0
    %2390 = vmatpush1.xpose.msra.mxu0 0.0
    %2391 = vmatprep.subr.mxu0 0.0
    %2392 = vmatpush1.xpose.msra.mxu0 0.0
    %2393 = vmatprep.subr.mxu0 0.0
    %2394 = vmatpush1.xpose.msra.mxu0 0.0
    %2395 = vmatprep.subr.mxu0 0.0
    %2396 = vmatpush1.xpose.msra.mxu0 0.0
    %2397 = vmatprep.subr.mxu0 0.0
    %2398 = vmatpush1.xpose.msra.mxu0 0.0
    %2399 = vmatprep.subr.mxu0 0.0
    %2400 = vmatpush1.xpose.msra.mxu0 0.0
    %2401 = vmatprep.subr.mxu0 0.0
    %2402 = vmatpush1.xpose.msra.mxu0 0.0
    %2403 = vmatprep.subr.mxu0 0.0
    %2404 = vmatpush1.xpose.msra.mxu0 0.0
    %2405 = vmatprep.subr.mxu0 0.0
    %2406 = vmatpush1.xpose.msra.mxu0 0.0
    %2407 = vmatprep.subr.mxu0 0.0
    %2408 = vmatpush1.xpose.msra.mxu0 0.0
    %2409 = vmatprep.subr.mxu0 0.0
    %2410 = vmatpush1.xpose.msra.mxu0 0.0
    %2411 = vmatprep.subr.mxu0 0.0
    %2412 = vmatpush1.xpose.msra.mxu0 0.0
    %2413 = vmatprep.subr.mxu0 0.0
    %2414 = vmatpush1.xpose.msra.mxu0 0.0
    %2415 = vmatprep.subr.mxu0 0.0
    %2416 = vmatpush1.xpose.msra.mxu0 0.0
    %2417 = vmatprep.subr.mxu0 0.0
    %2418 = vmatpush1.xpose.msra.mxu0 0.0
    %2419 = vmatprep.subr.mxu0 0.0
    %2420 = vmatpush1.xpose.msra.mxu0 0.0
    %2421 = vmatprep.subr.mxu0 0.0
    %2422 = vmatpush1.xpose.msra.mxu0 0.0
    %2423 = vmatprep.subr.mxu0 0.0
    %2424 = vmatpush1.xpose.msra.mxu0 0.0
    %2425 = vmatprep.subr.mxu0 0.0
    %2426 = vmatpush1.xpose.msra.mxu0 0.0
    %2427 = vmatprep.subr.mxu0 0.0
    %2428 = vmatpush1.xpose.msra.mxu0 0.0
    %2429 = vmatprep.subr.mxu0 0.0
    %2430 = vmatpush1.xpose.msra.mxu0 0.0
    %2431 = vmatprep.subr.mxu0 0.0
    %2432 = vmatpush1.xpose.msra.mxu0 0.0
    %2433 = vmatprep.subr.mxu0 0.0
    %2434 = vmatpush1.xpose.msra.mxu0 0.0
    %2435 = vmatprep.subr.mxu0 0.0
    %2436 = vmatpush1.xpose.msra.mxu0 0.0
    %2437 = vmatprep.subr.mxu0 0.0
    %2438 = vmatpush1.xpose.msra.mxu0 0.0
    %2439 = vmatprep.subr.mxu0 0.0
    %2440 = vmatpush1.xpose.msra.mxu0 0.0
    %2441 = vmatprep.subr.mxu0 0.0
    %2442 = vmatpush1.xpose.msra.mxu0 0.0
    %2443 = vmatprep.subr.mxu0 0.0
    %2444 = vmatpush1.xpose.msra.mxu0 0.0
    %2445 = vmatprep.mubr.f32.mxu0 0.0
    %2446 = vmatmul.mubr.f32.gmra.mrb[0].mxu0 %v2376
    %v2447 = vpop.f32.mrb[0].mxu0
    %v2448 = vadd.f32 0.0, %v2447
    %v2449 = vpop.f32.mrb[0].mxu0
    %2450 = vdwg.mxu0
    %v2452 = vsel %vm1918, %v747, 0
    %v2455 = vsel %vm1918, %v1331, 0
    %2457 = vmatprep.subr.mxu0 0.0
    %2458 = vmatpush1.xpose.msra.mxu0 %v2455
    %2459 = vmatprep.subr.mxu0 0.0
    %2460 = vmatpush1.xpose.msra.mxu0 0.0
    %2461 = vmatprep.subr.mxu0 0.0
    %2462 = vmatpush1.xpose.msra.mxu0 0.0
    %2463 = vmatprep.subr.mxu0 0.0
    %2464 = vmatpush1.xpose.msra.mxu0 0.0
    %2465 = vmatprep.subr.mxu0 0.0
    %2466 = vmatpush1.xpose.msra.mxu0 0.0
    %2467 = vmatprep.subr.mxu0 0.0
    %2468 = vmatpush1.xpose.msra.mxu0 0.0
    %2469 = vmatprep.subr.mxu0 0.0
    %2470 = vmatpush1.xpose.msra.mxu0 0.0
    %2471 = vmatprep.subr.mxu0 0.0
    %2472 = vmatpush1.xpose.msra.mxu0 0.0
    %2473 = vmatprep.subr.mxu0 0.0
    %2474 = vmatpush1.xpose.msra.mxu0 0.0
    %2475 = vmatprep.subr.mxu0 0.0
    %2476 = vmatpush1.xpose.msra.mxu0 0.0
    %2477 = vmatprep.subr.mxu0 0.0
    %2478 = vmatpush1.xpose.msra.mxu0 0.0
    %2479 = vmatprep.subr.mxu0 0.0
    %2480 = vmatpush1.xpose.msra.mxu0 0.0
    %2481 = vmatprep.subr.mxu0 0.0
    %2482 = vmatpush1.xpose.msra.mxu0 0.0
    %2483 = vmatprep.subr.mxu0 0.0
    %2484 = vmatpush1.xpose.msra.mxu0 0.0
    %2485 = vmatprep.subr.mxu0 0.0
    %2486 = vmatpush1.xpose.msra.mxu0 0.0
    %2487 = vmatprep.subr.mxu0 0.0
    %2488 = vmatpush1.xpose.msra.mxu0 0.0
    %2489 = vmatprep.subr.mxu0 0.0
    %2490 = vmatpush1.xpose.msra.mxu0 0.0
    %2491 = vmatprep.subr.mxu0 0.0
    %2492 = vmatpush1.xpose.msra.mxu0 0.0
    %2493 = vmatprep.subr.mxu0 0.0
    %2494 = vmatpush1.xpose.msra.mxu0 0.0
    %2495 = vmatprep.subr.mxu0 0.0
    %2496 = vmatpush1.xpose.msra.mxu0 0.0
    %2497 = vmatprep.subr.mxu0 0.0
    %2498 = vmatpush1.xpose.msra.mxu0 0.0
    %2499 = vmatprep.subr.mxu0 0.0
    %2500 = vmatpush1.xpose.msra.mxu0 0.0
    %2501 = vmatprep.subr.mxu0 0.0
    %2502 = vmatpush1.xpose.msra.mxu0 0.0
    %2503 = vmatprep.subr.mxu0 0.0
    %2504 = vmatpush1.xpose.msra.mxu0 0.0
    %2505 = vmatprep.subr.mxu0 0.0
    %2506 = vmatpush1.xpose.msra.mxu0 0.0
    %2507 = vmatprep.subr.mxu0 0.0
    %2508 = vmatpush1.xpose.msra.mxu0 0.0
    %2509 = vmatprep.subr.mxu0 0.0
    %2510 = vmatpush1.xpose.msra.mxu0 0.0
    %2511 = vmatprep.subr.mxu0 0.0
    %2512 = vmatpush1.xpose.msra.mxu0 0.0
    %2513 = vmatprep.subr.mxu0 0.0
    %2514 = vmatpush1.xpose.msra.mxu0 0.0
    %2515 = vmatprep.subr.mxu0 0.0
    %2516 = vmatpush1.xpose.msra.mxu0 0.0
    %2517 = vmatprep.subr.mxu0 0.0
    %2518 = vmatpush1.xpose.msra.mxu0 0.0
    %2519 = vmatprep.subr.mxu0 0.0
    %2520 = vmatpush1.xpose.msra.mxu0 0.0
    %2521 = vmatprep.mubr.f32.mxu0 0.0
    %2522 = vmatmul.mubr.f32.gmra.mrb[0].mxu0 %v2452
    %v2523 = vpop.f32.mrb[0].mxu0
    %v2524 = vadd.f32 0.0, %v2523
    %v2525 = vpop.f32.mrb[0].mxu0
    %2526 = vdwg.mxu0
    %v2527 = vmul.f32 %v1992, 0.35355338
    %v2528 = vmul.f32 %v2068, 0.35355338
    %v2529 = vmul.f32 %v2144, 0.35355338
    %v2530 = vmul.f32 %v2220, 0.35355338
    %v2531 = vmul.f32 %v2296, 0.35355338
    %v2532 = vmul.f32 %v2372, 0.35355338
    %v2533 = vmul.f32 %v2448, 0.35355338
    %v2534 = vmul.f32 %v2524, 0.35355338
    %v2535 = vsel %vm1918, %v2527, -inf
    %2536 = vmax.xlane.f32.xlu0 %v2535
    %v2537 = vpop.xlane.xlu0 %2536
    %v2538 = vsel %vm1918, %v2528, -inf
    %2539 = vmax.xlane.f32.xlu0 %v2538
    %v2540 = vpop.xlane.xlu0 %2539
    %v2541 = vsel %vm1918, %v2529, -inf
    %2542 = vmax.xlane.f32.xlu0 %v2541
    %v2543 = vpop.xlane.xlu0 %2542
    %v2544 = vsel %vm1918, %v2530, -inf
    %2545 = vmax.xlane.f32.xlu0 %v2544
    %v2546 = vpop.xlane.xlu0 %2545
    %v2547 = vsel %vm1918, %v2531, -inf
    %2548 = vmax.xlane.f32.xlu0 %v2547
    %v2549 = vpop.xlane.xlu0 %2548
    %v2550 = vsel %vm1918, %v2532, -inf
    %2551 = vmax.xlane.f32.xlu0 %v2550
    %v2552 = vpop.xlane.xlu0 %2551
    %v2553 = vsel %vm1918, %v2533, -inf
    %2554 = vmax.xlane.f32.xlu0 %v2553
    %v2555 = vpop.xlane.xlu0 %2554
    %v2556 = vsel %vm1918, %v2534, -inf
    %2557 = vmax.xlane.f32.xlu0 %v2556
    %v2558 = vpop.xlane.xlu0 %2557
    %v2559 = vsub.f32 %v2527, %v2537
    %v2560 = vsub.f32 %v2528, %v2540
    %v2561 = vsub.f32 %v2529, %v2543
    %v2562 = vsub.f32 %v2530, %v2546
    %v2563 = vsub.f32 %v2531, %v2549
    %v2564 = vsub.f32 %v2532, %v2552
    %v2565 = vsub.f32 %v2533, %v2555
    %v2566 = vsub.f32 %v2534, %v2558
    %v2567 = vmul.f32 %v2559, 1.442695
    %v2568 = vpow.pop %v2567
    %v2569 = vmul.f32 %v2560, 1.442695
    %v2570 = vpow.pop %v2569
    %v2571 = vmul.f32 %v2561, 1.442695
    %v2572 = vpow.pop %v2571
    %v2573 = vmul.f32 %v2562, 1.442695
    %v2574 = vpow.pop %v2573
    %v2575 = vmul.f32 %v2563, 1.442695
    %v2576 = vpow.pop %v2575
    %v2577 = vmul.f32 %v2564, 1.442695
    %v2578 = vpow.pop %v2577
    %v2579 = vmul.f32 %v2565, 1.442695
    %v2580 = vpow.pop %v2579
    %v2581 = vmul.f32 %v2566, 1.442695
    %v2582 = vpow.pop %v2581
    %v2583 = vsel %vm1918, %v2568, 0.0
    %2584 = vadd.xlane.f32.xlu0 %v2583
    %v2585 = vpop.xlane.xlu0 %2584
    %v2586 = vsel %vm1918, %v2570, 0.0
    %2587 = vadd.xlane.f32.xlu0 %v2586
    %v2588 = vpop.xlane.xlu0 %2587
    %v2589 = vsel %vm1918, %v2572, 0.0
    %2590 = vadd.xlane.f32.xlu0 %v2589
    %v2591 = vpop.xlane.xlu0 %2590
    %v2592 = vsel %vm1918, %v2574, 0.0
    %2593 = vadd.xlane.f32.xlu0 %v2592
    %v2594 = vpop.xlane.xlu0 %2593
    %v2595 = vsel %vm1918, %v2576, 0.0
    %2596 = vadd.xlane.f32.xlu0 %v2595
    %v2597 = vpop.xlane.xlu0 %2596
    %v2598 = vsel %vm1918, %v2578, 0.0
    %2599 = vadd.xlane.f32.xlu0 %v2598
    %v2600 = vpop.xlane.xlu0 %2599
    %v2601 = vsel %vm1918, %v2580, 0.0
    %2602 = vadd.xlane.f32.xlu0 %v2601
    %v2603 = vpop.xlane.xlu0 %2602
    %v2604 = vsel %vm1918, %v2582, 0.0
    %2605 = vadd.xlane.f32.xlu0 %v2604
    %v2606 = vpop.xlane.xlu0 %2605
    %v2607 = vrcp.pop %v2585
    %v2608 = vrcp.pop %v2588
    %v2609 = vrcp.pop %v2591
    %v2610 = vrcp.pop %v2594
    %v2611 = vrcp.pop %v2597
    %v2612 = vrcp.pop %v2600
    %v2613 = vrcp.pop %v2603
    %v2614 = vrcp.pop %v2606
    %v2615 = vmul.f32 %v2568, %v2607
    %v2616 = vmul.f32 %v2570, %v2608
    %v2617 = vmul.f32 %v2572, %v2609
    %v2618 = vmul.f32 %v2574, %v2610
    %v2619 = vmul.f32 %v2576, %v2611
    %v2620 = vmul.f32 %v2578, %v2612
    %v2621 = vmul.f32 %v2580, %v2613
    %v2622 = vmul.f32 %v2582, %v2614
    %v2624 = vsel %vm1918, %v2615, 0
    %2626 = vmatprep.subr.mxu0 0.0
    %2627 = vmatpush1.msra.mxu0 %v1425
    %2628 = vmatprep.subr.mxu0 0.0
    %2629 = vmatpush1.msra.mxu0 0.0
    %2630 = vmatprep.subr.mxu0 0.0
    %2631 = vmatpush1.msra.mxu0 0.0
    %2632 = vmatprep.subr.mxu0 0.0
    %2633 = vmatpush1.msra.mxu0 0.0
    %2634 = vmatprep.subr.mxu0 0.0
    %2635 = vmatpush1.msra.mxu0 0.0
    %2636 = vmatprep.subr.mxu0 0.0
    %2637 = vmatpush1.msra.mxu0 0.0
    %2638 = vmatprep.subr.mxu0 0.0
    %2639 = vmatpush1.msra.mxu0 0.0
    %2640 = vmatprep.subr.mxu0 0.0
    %2641 = vmatpush1.msra.mxu0 0.0
    %2642 = vmatprep.subr.mxu0 0.0
    %2643 = vmatpush1.msra.mxu0 0.0
    %2644 = vmatprep.subr.mxu0 0.0
    %2645 = vmatpush1.msra.mxu0 0.0
    %2646 = vmatprep.subr.mxu0 0.0
    %2647 = vmatpush1.msra.mxu0 0.0
    %2648 = vmatprep.subr.mxu0 0.0
    %2649 = vmatpush1.msra.mxu0 0.0
    %2650 = vmatprep.subr.mxu0 0.0
    %2651 = vmatpush1.msra.mxu0 0.0
    %2652 = vmatprep.subr.mxu0 0.0
    %2653 = vmatpush1.msra.mxu0 0.0
    %2654 = vmatprep.subr.mxu0 0.0
    %2655 = vmatpush1.msra.mxu0 0.0
    %2656 = vmatprep.subr.mxu0 0.0
    %2657 = vmatpush1.msra.mxu0 0.0
    %2658 = vmatprep.subr.mxu0 0.0
    %2659 = vmatpush1.msra.mxu0 0.0
    %2660 = vmatprep.subr.mxu0 0.0
    %2661 = vmatpush1.msra.mxu0 0.0
    %2662 = vmatprep.subr.mxu0 0.0
    %2663 = vmatpush1.msra.mxu0 0.0
    %2664 = vmatprep.subr.mxu0 0.0
    %2665 = vmatpush1.msra.mxu0 0.0
    %2666 = vmatprep.subr.mxu0 0.0
    %2667 = vmatpush1.msra.mxu0 0.0
    %2668 = vmatprep.subr.mxu0 0.0
    %2669 = vmatpush1.msra.mxu0 0.0
    %2670 = vmatprep.subr.mxu0 0.0
    %2671 = vmatpush1.msra.mxu0 0.0
    %2672 = vmatprep.subr.mxu0 0.0
    %2673 = vmatpush1.msra.mxu0 0.0
    %2674 = vmatprep.subr.mxu0 0.0
    %2675 = vmatpush1.msra.mxu0 0.0
    %2676 = vmatprep.subr.mxu0 0.0
    %2677 = vmatpush1.msra.mxu0 0.0
    %2678 = vmatprep.subr.mxu0 0.0
    %2679 = vmatpush1.msra.mxu0 0.0
    %2680 = vmatprep.subr.mxu0 0.0
    %2681 = vmatpush1.msra.mxu0 0.0
    %2682 = vmatprep.subr.mxu0 0.0
    %2683 = vmatpush1.msra.mxu0 0.0
    %2684 = vmatprep.subr.mxu0 0.0
    %2685 = vmatpush1.msra.mxu0 0.0
    %2686 = vmatprep.subr.mxu0 0.0
    %2687 = vmatpush1.msra.mxu0 0.0
    %2688 = vmatprep.subr.mxu0 0.0
    %2689 = vmatpush1.msra.mxu0 0.0
    %2690 = vmatprep.mubr.f32.mxu0 0.0
    %2691 = vmatmul.mubr.f32.gmra.mrb[0].mxu0 %v2624
    %v2692 = vpop.f32.mrb[0].mxu0
    %v2693 = vadd.f32 0.0, %v2692
    %v2694 = vpop.f32.mrb[0].mxu0
    %2695 = vdwg.mxu0
    %v2697 = vsel %vm1918, %v2616, 0
    %2699 = vmatprep.subr.mxu0 0.0
    %2700 = vmatpush1.msra.mxu0 %v1495
    %2701 = vmatprep.subr.mxu0 0.0
    %2702 = vmatpush1.msra.mxu0 0.0
    %2703 = vmatprep.subr.mxu0 0.0
    %2704 = vmatpush1.msra.mxu0 0.0
    %2705 = vmatprep.subr.mxu0 0.0
    %2706 = vmatpush1.msra.mxu0 0.0
    %2707 = vmatprep.subr.mxu0 0.0
    %2708 = vmatpush1.msra.mxu0 0.0
    %2709 = vmatprep.subr.mxu0 0.0
    %2710 = vmatpush1.msra.mxu0 0.0
    %2711 = vmatprep.subr.mxu0 0.0
    %2712 = vmatpush1.msra.mxu0 0.0
    %2713 = vmatprep.subr.mxu0 0.0
    %2714 = vmatpush1.msra.mxu0 0.0
    %2715 = vmatprep.subr.mxu0 0.0
    %2716 = vmatpush1.msra.mxu0 0.0
    %2717 = vmatprep.subr.mxu0 0.0
    %2718 = vmatpush1.msra.mxu0 0.0
    %2719 = vmatprep.subr.mxu0 0.0
    %2720 = vmatpush1.msra.mxu0 0.0
    %2721 = vmatprep.subr.mxu0 0.0
    %2722 = vmatpush1.msra.mxu0 0.0
    %2723 = vmatprep.subr.mxu0 0.0
    %2724 = vmatpush1.msra.mxu0 0.0
    %2725 = vmatprep.subr.mxu0 0.0
    %2726 = vmatpush1.msra.mxu0 0.0
    %2727 = vmatprep.subr.mxu0 0.0
    %2728 = vmatpush1.msra.mxu0 0.0
    %2729 = vmatprep.subr.mxu0 0.0
    %2730 = vmatpush1.msra.mxu0 0.0
    %2731 = vmatprep.subr.mxu0 0.0
    %2732 = vmatpush1.msra.mxu0 0.0
    %2733 = vmatprep.subr.mxu0 0.0
    %2734 = vmatpush1.msra.mxu0 0.0
    %2735 = vmatprep.subr.mxu0 0.0
    %2736 = vmatpush1.msra.mxu0 0.0
    %2737 = vmatprep.subr.mxu0 0.0
    %2738 = vmatpush1.msra.mxu0 0.0
    %2739 = vmatprep.subr.mxu0 0.0
    %2740 = vmatpush1.msra.mxu0 0.0
    %2741 = vmatprep.subr.mxu0 0.0
    %2742 = vmatpush1.msra.mxu0 0.0
    %2743 = vmatprep.subr.mxu0 0.0
    %2744 = vmatpush1.msra.mxu0 0.0
    %2745 = vmatprep.subr.mxu0 0.0
    %2746 = vmatpush1.msra.mxu0 0.0
    %2747 = vmatprep.subr.mxu0 0.0
    %2748 = vmatpush1.msra.mxu0 0.0
    %2749 = vmatprep.subr.mxu0 0.0
    %2750 = vmatpush1.msra.mxu0 0.0
    %2751 = vmatprep.subr.mxu0 0.0
    %2752 = vmatpush1.msra.mxu0 0.0
    %2753 = vmatprep.subr.mxu0 0.0
    %2754 = vmatpush1.msra.mxu0 0.0
    %2755 = vmatprep.subr.mxu0 0.0
    %2756 = vmatpush1.msra.mxu0 0.0
    %2757 = vmatprep.subr.mxu0 0.0
    %2758 = vmatpush1.msra.mxu0 0.0
    %2759 = vmatprep.subr.mxu0 0.0
    %2760 = vmatpush1.msra.mxu0 0.0
    %2761 = vmatprep.subr.mxu0 0.0
    %2762 = vmatpush1.msra.mxu0 0.0
    %2763 = vmatprep.mubr.f32.mxu0 0.0
    %2764 = vmatmul.mubr.f32.gmra.mrb[0].mxu0 %v2697
    %v2765 = vpop.f32.mrb[0].mxu0
    %v2766 = vadd.f32 0.0, %v2765
    %v2767 = vpop.f32.mrb[0].mxu0
    %2768 = vdwg.mxu0
    %v2770 = vsel %vm1918, %v2617, 0
    %2772 = vmatprep.subr.mxu0 0.0
    %2773 = vmatpush1.msra.mxu0 %v1565
    %2774 = vmatprep.subr.mxu0 0.0
    %2775 = vmatpush1.msra.mxu0 0.0
    %2776 = vmatprep.subr.mxu0 0.0
    %2777 = vmatpush1.msra.mxu0 0.0
    %2778 = vmatprep.subr.mxu0 0.0
    %2779 = vmatpush1.msra.mxu0 0.0
    %2780 = vmatprep.subr.mxu0 0.0
    %2781 = vmatpush1.msra.mxu0 0.0
    %2782 = vmatprep.subr.mxu0 0.0
    %2783 = vmatpush1.msra.mxu0 0.0
    %2784 = vmatprep.subr.mxu0 0.0
    %2785 = vmatpush1.msra.mxu0 0.0
    %2786 = vmatprep.subr.mxu0 0.0
    %2787 = vmatpush1.msra.mxu0 0.0
    %2788 = vmatprep.subr.mxu0 0.0
    %2789 = vmatpush1.msra.mxu0 0.0
    %2790 = vmatprep.subr.mxu0 0.0
    %2791 = vmatpush1.msra.mxu0 0.0
    %2792 = vmatprep.subr.mxu0 0.0
    %2793 = vmatpush1.msra.mxu0 0.0
    %2794 = vmatprep.subr.mxu0 0.0
    %2795 = vmatpush1.msra.mxu0 0.0
    %2796 = vmatprep.subr.mxu0 0.0
    %2797 = vmatpush1.msra.mxu0 0.0
    %2798 = vmatprep.subr.mxu0 0.0
    %2799 = vmatpush1.msra.mxu0 0.0
    %2800 = vmatprep.subr.mxu0 0.0
    %2801 = vmatpush1.msra.mxu0 0.0
    %2802 = vmatprep.subr.mxu0 0.0
    %2803 = vmatpush1.msra.mxu0 0.0
    %2804 = vmatprep.subr.mxu0 0.0
    %2805 = vmatpush1.msra.mxu0 0.0
    %2806 = vmatprep.subr.mxu0 0.0
    %2807 = vmatpush1.msra.mxu0 0.0
    %2808 = vmatprep.subr.mxu0 0.0
    %2809 = vmatpush1.msra.mxu0 0.0
    %2810 = vmatprep.subr.mxu0 0.0
    %2811 = vmatpush1.msra.mxu0 0.0
    %2812 = vmatprep.subr.mxu0 0.0
    %2813 = vmatpush1.msra.mxu0 0.0
    %2814 = vmatprep.subr.mxu0 0.0
    %2815 = vmatpush1.msra.mxu0 0.0
    %2816 = vmatprep.subr.mxu0 0.0
    %2817 = vmatpush1.msra.mxu0 0.0
    %2818 = vmatprep.subr.mxu0 0.0
    %2819 = vmatpush1.msra.mxu0 0.0
    %2820 = vmatprep.subr.mxu0 0.0
    %2821 = vmatpush1.msra.mxu0 0.0
    %2822 = vmatprep.subr.mxu0 0.0
    %2823 = vmatpush1.msra.mxu0 0.0
    %2824 = vmatprep.subr.mxu0 0.0
    %2825 = vmatpush1.msra.mxu0 0.0
    %2826 = vmatprep.subr.mxu0 0.0
    %2827 = vmatpush1.msra.mxu0 0.0
    %2828 = vmatprep.subr.mxu0 0.0
    %2829 = vmatpush1.msra.mxu0 0.0
    %2830 = vmatprep.subr.mxu0 0.0
    %2831 = vmatpush1.msra.mxu0 0.0
    %2832 = vmatprep.subr.mxu0 0.0
    %2833 = vmatpush1.msra.mxu0 0.0
    %2834 = vmatprep.subr.mxu0 0.0
    %2835 = vmatpush1.msra.mxu0 0.0
    %2836 = vmatprep.mubr.f32.mxu0 0.0
    %2837 = vmatmul.mubr.f32.gmra.mrb[0].mxu0 %v2770
    %v2838 = vpop.f32.mrb[0].mxu0
    %v2839 = vadd.f32 0.0, %v2838
    %v2840 = vpop.f32.mrb[0].mxu0
    %2841 = vdwg.mxu0
    %v2843 = vsel %vm1918, %v2618, 0
    %2845 = vmatprep.subr.mxu0 0.0
    %2846 = vmatpush1.msra.mxu0 %v1635
    %2847 = vmatprep.subr.mxu0 0.0
    %2848 = vmatpush1.msra.mxu0 0.0
    %2849 = vmatprep.subr.mxu0 0.0
    %2850 = vmatpush1.msra.mxu0 0.0
    %2851 = vmatprep.subr.mxu0 0.0
    %2852 = vmatpush1.msra.mxu0 0.0
    %2853 = vmatprep.subr.mxu0 0.0
    %2854 = vmatpush1.msra.mxu0 0.0
    %2855 = vmatprep.subr.mxu0 0.0
    %2856 = vmatpush1.msra.mxu0 0.0
    %2857 = vmatprep.subr.mxu0 0.0
    %2858 = vmatpush1.msra.mxu0 0.0
    %2859 = vmatprep.subr.mxu0 0.0
    %2860 = vmatpush1.msra.mxu0 0.0
    %2861 = vmatprep.subr.mxu0 0.0
    %2862 = vmatpush1.msra.mxu0 0.0
    %2863 = vmatprep.subr.mxu0 0.0
    %2864 = vmatpush1.msra.mxu0 0.0
    %2865 = vmatprep.subr.mxu0 0.0
    %2866 = vmatpush1.msra.mxu0 0.0
    %2867 = vmatprep.subr.mxu0 0.0
    %2868 = vmatpush1.msra.mxu0 0.0
    %2869 = vmatprep.subr.mxu0 0.0
    %2870 = vmatpush1.msra.mxu0 0.0
    %2871 = vmatprep.subr.mxu0 0.0
    %2872 = vmatpush1.msra.mxu0 0.0
    %2873 = vmatprep.subr.mxu0 0.0
    %2874 = vmatpush1.msra.mxu0 0.0
    %2875 = vmatprep.subr.mxu0 0.0
    %2876 = vmatpush1.msra.mxu0 0.0
    %2877 = vmatprep.subr.mxu0 0.0
    %2878 = vmatpush1.msra.mxu0 0.0
    %2879 = vmatprep.subr.mxu0 0.0
    %2880 = vmatpush1.msra.mxu0 0.0
    %2881 = vmatprep.subr.mxu0 0.0
    %2882 = vmatpush1.msra.mxu0 0.0
    %2883 = vmatprep.subr.mxu0 0.0
    %2884 = vmatpush1.msra.mxu0 0.0
    %2885 = vmatprep.subr.mxu0 0.0
    %2886 = vmatpush1.msra.mxu0 0.0
    %2887 = vmatprep.subr.mxu0 0.0
    %2888 = vmatpush1.msra.mxu0 0.0
    %2889 = vmatprep.subr.mxu0 0.0
    %2890 = vmatpush1.msra.mxu0 0.0
    %2891 = vmatprep.subr.mxu0 0.0
    %2892 = vmatpush1.msra.mxu0 0.0
    %2893 = vmatprep.subr.mxu0 0.0
    %2894 = vmatpush1.msra.mxu0 0.0
    %2895 = vmatprep.subr.mxu0 0.0
    %2896 = vmatpush1.msra.mxu0 0.0
    %2897 = vmatprep.subr.mxu0 0.0
    %2898 = vmatpush1.msra.mxu0 0.0
    %2899 = vmatprep.subr.mxu0 0.0
    %2900 = vmatpush1.msra.mxu0 0.0
    %2901 = vmatprep.subr.mxu0 0.0
    %2902 = vmatpush1.msra.mxu0 0.0
    %2903 = vmatprep.subr.mxu0 0.0
    %2904 = vmatpush1.msra.mxu0 0.0
    %2905 = vmatprep.subr.mxu0 0.0
    %2906 = vmatpush1.msra.mxu0 0.0
    %2907 = vmatprep.subr.mxu0 0.0
    %2908 = vmatpush1.msra.mxu0 0.0
    %2909 = vmatprep.mubr.f32.mxu0 0.0
    %2910 = vmatmul.mubr.f32.gmra.mrb[0].mxu0 %v2843
    %v2911 = vpop.f32.mrb[0].mxu0
    %v2912 = vadd.f32 0.0, %v2911
    %v2913 = vpop.f32.mrb[0].mxu0
    %2914 = vdwg.mxu0
    %v2916 = vsel %vm1918, %v2619, 0
    %2918 = vmatprep.subr.mxu0 0.0
    %2919 = vmatpush1.msra.mxu0 %v1705
    %2920 = vmatprep.subr.mxu0 0.0
    %2921 = vmatpush1.msra.mxu0 0.0
    %2922 = vmatprep.subr.mxu0 0.0
    %2923 = vmatpush1.msra.mxu0 0.0
    %2924 = vmatprep.subr.mxu0 0.0
    %2925 = vmatpush1.msra.mxu0 0.0
    %2926 = vmatprep.subr.mxu0 0.0
    %2927 = vmatpush1.msra.mxu0 0.0
    %2928 = vmatprep.subr.mxu0 0.0
    %2929 = vmatpush1.msra.mxu0 0.0
    %2930 = vmatprep.subr.mxu0 0.0
    %2931 = vmatpush1.msra.mxu0 0.0
    %2932 = vmatprep.subr.mxu0 0.0
    %2933 = vmatpush1.msra.mxu0 0.0
    %2934 = vmatprep.subr.mxu0 0.0
    %2935 = vmatpush1.msra.mxu0 0.0
    %2936 = vmatprep.subr.mxu0 0.0
    %2937 = vmatpush1.msra.mxu0 0.0
    %2938 = vmatprep.subr.mxu0 0.0
    %2939 = vmatpush1.msra.mxu0 0.0
    %2940 = vmatprep.subr.mxu0 0.0
    %2941 = vmatpush1.msra.mxu0 0.0
    %2942 = vmatprep.subr.mxu0 0.0
    %2943 = vmatpush1.msra.mxu0 0.0
    %2944 = vmatprep.subr.mxu0 0.0
    %2945 = vmatpush1.msra.mxu0 0.0
    %2946 = vmatprep.subr.mxu0 0.0
    %2947 = vmatpush1.msra.mxu0 0.0
    %2948 = vmatprep.subr.mxu0 0.0
    %2949 = vmatpush1.msra.mxu0 0.0
    %2950 = vmatprep.subr.mxu0 0.0
    %2951 = vmatpush1.msra.mxu0 0.0
    %2952 = vmatprep.subr.mxu0 0.0
    %2953 = vmatpush1.msra.mxu0 0.0
    %2954 = vmatprep.subr.mxu0 0.0
    %2955 = vmatpush1.msra.mxu0 0.0
    %2956 = vmatprep.subr.mxu0 0.0
    %2957 = vmatpush1.msra.mxu0 0.0
    %2958 = vmatprep.subr.mxu0 0.0
    %2959 = vmatpush1.msra.mxu0 0.0
    %2960 = vmatprep.subr.mxu0 0.0
    %2961 = vmatpush1.msra.mxu0 0.0
    %2962 = vmatprep.subr.mxu0 0.0
    %2963 = vmatpush1.msra.mxu0 0.0
    %2964 = vmatprep.subr.mxu0 0.0
    %2965 = vmatpush1.msra.mxu0 0.0
    %2966 = vmatprep.subr.mxu0 0.0
    %2967 = vmatpush1.msra.mxu0 0.0
    %2968 = vmatprep.subr.mxu0 0.0
    %2969 = vmatpush1.msra.mxu0 0.0
    %2970 = vmatprep.subr.mxu0 0.0
    %2971 = vmatpush1.msra.mxu0 0.0
    %2972 = vmatprep.subr.mxu0 0.0
    %2973 = vmatpush1.msra.mxu0 0.0
    %2974 = vmatprep.subr.mxu0 0.0
    %2975 = vmatpush1.msra.mxu0 0.0
    %2976 = vmatprep.subr.mxu0 0.0
    %2977 = vmatpush1.msra.mxu0 0.0
    %2978 = vmatprep.subr.mxu0 0.0
    %2979 = vmatpush1.msra.mxu0 0.0
    %2980 = vmatprep.subr.mxu0 0.0
    %2981 = vmatpush1.msra.mxu0 0.0
    %2982 = vmatprep.mubr.f32.mxu0 0.0
    %2983 = vmatmul.mubr.f32.gmra.mrb[0].mxu0 %v2916
    %v2984 = vpop.f32.mrb[0].mxu0
    %v2985 = vadd.f32 0.0, %v2984
    %v2986 = vpop.f32.mrb[0].mxu0
    %2987 = vdwg.mxu0
    %v2989 = vsel %vm1918, %v2620, 0
    %2991 = vmatprep.subr.mxu0 0.0
    %2992 = vmatpush1.msra.mxu0 %v1775
    %2993 = vmatprep.subr.mxu0 0.0
    %2994 = vmatpush1.msra.mxu0 0.0
    %2995 = vmatprep.subr.mxu0 0.0
    %2996 = vmatpush1.msra.mxu0 0.0
    %2997 = vmatprep.subr.mxu0 0.0
    %2998 = vmatpush1.msra.mxu0 0.0
    %2999 = vmatprep.subr.mxu0 0.0
    %3000 = vmatpush1.msra.mxu0 0.0
    %3001 = vmatprep.subr.mxu0 0.0
    %3002 = vmatpush1.msra.mxu0 0.0
    %3003 = vmatprep.subr.mxu0 0.0
    %3004 = vmatpush1.msra.mxu0 0.0
    %3005 = vmatprep.subr.mxu0 0.0
    %3006 = vmatpush1.msra.mxu0 0.0
    %3007 = vmatprep.subr.mxu0 0.0
    %3008 = vmatpush1.msra.mxu0 0.0
    %3009 = vmatprep.subr.mxu0 0.0
    %3010 = vmatpush1.msra.mxu0 0.0
    %3011 = vmatprep.subr.mxu0 0.0
    %3012 = vmatpush1.msra.mxu0 0.0
    %3013 = vmatprep.subr.mxu0 0.0
    %3014 = vmatpush1.msra.mxu0 0.0
    %3015 = vmatprep.subr.mxu0 0.0
    %3016 = vmatpush1.msra.mxu0 0.0
    %3017 = vmatprep.subr.mxu0 0.0
    %3018 = vmatpush1.msra.mxu0 0.0
    %3019 = vmatprep.subr.mxu0 0.0
    %3020 = vmatpush1.msra.mxu0 0.0
    %3021 = vmatprep.subr.mxu0 0.0
    %3022 = vmatpush1.msra.mxu0 0.0
    %3023 = vmatprep.subr.mxu0 0.0
    %3024 = vmatpush1.msra.mxu0 0.0
    %3025 = vmatprep.subr.mxu0 0.0
    %3026 = vmatpush1.msra.mxu0 0.0
    %3027 = vmatprep.subr.mxu0 0.0
    %3028 = vmatpush1.msra.mxu0 0.0
    %3029 = vmatprep.subr.mxu0 0.0
    %3030 = vmatpush1.msra.mxu0 0.0
    %3031 = vmatprep.subr.mxu0 0.0
    %3032 = vmatpush1.msra.mxu0 0.0
    %3033 = vmatprep.subr.mxu0 0.0
    %3034 = vmatpush1.msra.mxu0 0.0
    %3035 = vmatprep.subr.mxu0 0.0
    %3036 = vmatpush1.msra.mxu0 0.0
    %3037 = vmatprep.subr.mxu0 0.0
    %3038 = vmatpush1.msra.mxu0 0.0
    %3039 = vmatprep.subr.mxu0 0.0
    %3040 = vmatpush1.msra.mxu0 0.0
    %3041 = vmatprep.subr.mxu0 0.0
    %3042 = vmatpush1.msra.mxu0 0.0
    %3043 = vmatprep.subr.mxu0 0.0
    %3044 = vmatpush1.msra.mxu0 0.0
    %3045 = vmatprep.subr.mxu0 0.0
    %3046 = vmatpush1.msra.mxu0 0.0
    %3047 = vmatprep.subr.mxu0 0.0
    %3048 = vmatpush1.msra.mxu0 0.0
    %3049 = vmatprep.subr.mxu0 0.0
    %3050 = vmatpush1.msra.mxu0 0.0
    %3051 = vmatprep.subr.mxu0 0.0
    %3052 = vmatpush1.msra.mxu0 0.0
    %3053 = vmatprep.subr.mxu0 0.0
    %3054 = vmatpush1.msra.mxu0 0.0
    %3055 = vmatprep.mubr.f32.mxu0 0.0
    %3056 = vmatmul.mubr.f32.gmra.mrb[0].mxu0 %v2989
    %v3057 = vpop.f32.mrb[0].mxu0
    %v3058 = vadd.f32 0.0, %v3057
    %v3059 = vpop.f32.mrb[0].mxu0
    %3060 = vdwg.mxu0
    %v3062 = vsel %vm1918, %v2621, 0
    %3064 = vmatprep.subr.mxu0 0.0
    %3065 = vmatpush1.msra.mxu0 %v1845
    %3066 = vmatprep.subr.mxu0 0.0
    %3067 = vmatpush1.msra.mxu0 0.0
    %3068 = vmatprep.subr.mxu0 0.0
    %3069 = vmatpush1.msra.mxu0 0.0
    %3070 = vmatprep.subr.mxu0 0.0
    %3071 = vmatpush1.msra.mxu0 0.0
    %3072 = vmatprep.subr.mxu0 0.0
    %3073 = vmatpush1.msra.mxu0 0.0
    %3074 = vmatprep.subr.mxu0 0.0
    %3075 = vmatpush1.msra.mxu0 0.0
    %3076 = vmatprep.subr.mxu0 0.0
    %3077 = vmatpush1.msra.mxu0 0.0
    %3078 = vmatprep.subr.mxu0 0.0
    %3079 = vmatpush1.msra.mxu0 0.0
    %3080 = vmatprep.subr.mxu0 0.0
    %3081 = vmatpush1.msra.mxu0 0.0
    %3082 = vmatprep.subr.mxu0 0.0
    %3083 = vmatpush1.msra.mxu0 0.0
    %3084 = vmatprep.subr.mxu0 0.0
    %3085 = vmatpush1.msra.mxu0 0.0
    %3086 = vmatprep.subr.mxu0 0.0
    %3087 = vmatpush1.msra.mxu0 0.0
    %3088 = vmatprep.subr.mxu0 0.0
    %3089 = vmatpush1.msra.mxu0 0.0
    %3090 = vmatprep.subr.mxu0 0.0
    %3091 = vmatpush1.msra.mxu0 0.0
    %3092 = vmatprep.subr.mxu0 0.0
    %3093 = vmatpush1.msra.mxu0 0.0
    %3094 = vmatprep.subr.mxu0 0.0
    %3095 = vmatpush1.msra.mxu0 0.0
    %3096 = vmatprep.subr.mxu0 0.0
    %3097 = vmatpush1.msra.mxu0 0.0
    %3098 = vmatprep.subr.mxu0 0.0
    %3099 = vmatpush1.msra.mxu0 0.0
    %3100 = vmatprep.subr.mxu0 0.0
    %3101 = vmatpush1.msra.mxu0 0.0
    %3102 = vmatprep.subr.mxu0 0.0
    %3103 = vmatpush1.msra.mxu0 0.0
    %3104 = vmatprep.subr.mxu0 0.0
    %3105 = vmatpush1.msra.mxu0 0.0
    %3106 = vmatprep.subr.mxu0 0.0
    %3107 = vmatpush1.msra.mxu0 0.0
    %3108 = vmatprep.subr.mxu0 0.0
    %3109 = vmatpush1.msra.mxu0 0.0
    %3110 = vmatprep.subr.mxu0 0.0
    %3111 = vmatpush1.msra.mxu0 0.0
    %3112 = vmatprep.subr.mxu0 0.0
    %3113 = vmatpush1.msra.mxu0 0.0
    %3114 = vmatprep.subr.mxu0 0.0
    %3115 = vmatpush1.msra.mxu0 0.0
    %3116 = vmatprep.subr.mxu0 0.0
    %3117 = vmatpush1.msra.mxu0 0.0
    %3118 = vmatprep.subr.mxu0 0.0
    %3119 = vmatpush1.msra.mxu0 0.0
    %3120 = vmatprep.subr.mxu0 0.0
    %3121 = vmatpush1.msra.mxu0 0.0
    %3122 = vmatprep.subr.mxu0 0.0
    %3123 = vmatpush1.msra.mxu0 0.0
    %3124 = vmatprep.subr.mxu0 0.0
    %3125 = vmatpush1.msra.mxu0 0.0
    %3126 = vmatprep.subr.mxu0 0.0
    %3127 = vmatpush1.msra.mxu0 0.0
    %3128 = vmatprep.mubr.f32.mxu0 0.0
    %3129 = vmatmul.mubr.f32.gmra.mrb[0].mxu0 %v3062
    %v3130 = vpop.f32.mrb[0].mxu0
    %v3131 = vadd.f32 0.0, %v3130
    %v3132 = vpop.f32.mrb[0].mxu0
    %3133 = vdwg.mxu0
    %v3135 = vsel %vm1918, %v2622, 0
    %3137 = vmatprep.subr.mxu0 0.0
    %3138 = vmatpush1.msra.mxu0 %v1915
    %3139 = vmatprep.subr.mxu0 0.0
    %3140 = vmatpush1.msra.mxu0 0.0
    %3141 = vmatprep.subr.mxu0 0.0
    %3142 = vmatpush1.msra.mxu0 0.0
    %3143 = vmatprep.subr.mxu0 0.0
    %3144 = vmatpush1.msra.mxu0 0.0
    %3145 = vmatprep.subr.mxu0 0.0
    %3146 = vmatpush1.msra.mxu0 0.0
    %3147 = vmatprep.subr.mxu0 0.0
    %3148 = vmatpush1.msra.mxu0 0.0
    %3149 = vmatprep.subr.mxu0 0.0
    %3150 = vmatpush1.msra.mxu0 0.0
    %3151 = vmatprep.subr.mxu0 0.0
    %3152 = vmatpush1.msra.mxu0 0.0
    %3153 = vmatprep.subr.mxu0 0.0
    %3154 = vmatpush1.msra.mxu0 0.0
    %3155 = vmatprep.subr.mxu0 0.0
    %3156 = vmatpush1.msra.mxu0 0.0
    %3157 = vmatprep.subr.mxu0 0.0
    %3158 = vmatpush1.msra.mxu0 0.0
    %3159 = vmatprep.subr.mxu0 0.0
    %3160 = vmatpush1.msra.mxu0 0.0
    %3161 = vmatprep.subr.mxu0 0.0
    %3162 = vmatpush1.msra.mxu0 0.0
    %3163 = vmatprep.subr.mxu0 0.0
    %3164 = vmatpush1.msra.mxu0 0.0
    %3165 = vmatprep.subr.mxu0 0.0
    %3166 = vmatpush1.msra.mxu0 0.0
    %3167 = vmatprep.subr.mxu0 0.0
    %3168 = vmatpush1.msra.mxu0 0.0
    %3169 = vmatprep.subr.mxu0 0.0
    %3170 = vmatpush1.msra.mxu0 0.0
    %3171 = vmatprep.subr.mxu0 0.0
    %3172 = vmatpush1.msra.mxu0 0.0
    %3173 = vmatprep.subr.mxu0 0.0
    %3174 = vmatpush1.msra.mxu0 0.0
    %3175 = vmatprep.subr.mxu0 0.0
    %3176 = vmatpush1.msra.mxu0 0.0
    %3177 = vmatprep.subr.mxu0 0.0
    %3178 = vmatpush1.msra.mxu0 0.0
    %3179 = vmatprep.subr.mxu0 0.0
    %3180 = vmatpush1.msra.mxu0 0.0
    %3181 = vmatprep.subr.mxu0 0.0
    %3182 = vmatpush1.msra.mxu0 0.0
    %3183 = vmatprep.subr.mxu0 0.0
    %3184 = vmatpush1.msra.mxu0 0.0
    %3185 = vmatprep.subr.mxu0 0.0
    %3186 = vmatpush1.msra.mxu0 0.0
    %3187 = vmatprep.subr.mxu0 0.0
    %3188 = vmatpush1.msra.mxu0 0.0
    %3189 = vmatprep.subr.mxu0 0.0
    %3190 = vmatpush1.msra.mxu0 0.0
    %3191 = vmatprep.subr.mxu0 0.0
    %3192 = vmatpush1.msra.mxu0 0.0
    %3193 = vmatprep.subr.mxu0 0.0
    %3194 = vmatpush1.msra.mxu0 0.0
    %3195 = vmatprep.subr.mxu0 0.0
    %3196 = vmatpush1.msra.mxu0 0.0
    %3197 = vmatprep.subr.mxu0 0.0
    %3198 = vmatpush1.msra.mxu0 0.0
    %3199 = vmatprep.subr.mxu0 0.0
    %3200 = vmatpush1.msra.mxu0 0.0
    %3201 = vmatprep.mubr.f32.mxu0 0.0
    %3202 = vmatmul.mubr.f32.gmra.mrb[0].mxu0 %v3135
    %v3203 = vpop.f32.mrb[0].mxu0
    %v3204 = vadd.f32 0.0, %v3203
    %v3205 = vpop.f32.mrb[0].mxu0
    %3206 = vdwg.mxu0
    %v3208 = vsel %vm1918, %v2693, 0
    %3210 = vmatprep.subr.mxu0 0.0
    %3211 = vmatpush1.msra.mxu0 %v154
    %3212 = vmatprep.subr.mxu0 0.0
    %3213 = vmatpush1.msra.mxu0 0.0
    %3214 = vmatprep.subr.mxu0 0.0
    %3215 = vmatpush1.msra.mxu0 0.0
    %3216 = vmatprep.subr.mxu0 0.0
    %3217 = vmatpush1.msra.mxu0 0.0
    %3218 = vmatprep.subr.mxu0 0.0
    %3219 = vmatpush1.msra.mxu0 0.0
    %3220 = vmatprep.subr.mxu0 0.0
    %3221 = vmatpush1.msra.mxu0 0.0
    %3222 = vmatprep.subr.mxu0 0.0
    %3223 = vmatpush1.msra.mxu0 0.0
    %3224 = vmatprep.subr.mxu0 0.0
    %3225 = vmatpush1.msra.mxu0 0.0
    %3226 = vmatprep.subr.mxu0 0.0
    %3227 = vmatpush1.msra.mxu0 0.0
    %3228 = vmatprep.subr.mxu0 0.0
    %3229 = vmatpush1.msra.mxu0 0.0
    %3230 = vmatprep.subr.mxu0 0.0
    %3231 = vmatpush1.msra.mxu0 0.0
    %3232 = vmatprep.subr.mxu0 0.0
    %3233 = vmatpush1.msra.mxu0 0.0
    %3234 = vmatprep.subr.mxu0 0.0
    %3235 = vmatpush1.msra.mxu0 0.0
    %3236 = vmatprep.subr.mxu0 0.0
    %3237 = vmatpush1.msra.mxu0 0.0
    %3238 = vmatprep.subr.mxu0 0.0
    %3239 = vmatpush1.msra.mxu0 0.0
    %3240 = vmatprep.subr.mxu0 0.0
    %3241 = vmatpush1.msra.mxu0 0.0
    %3242 = vmatprep.subr.mxu0 0.0
    %3243 = vmatpush1.msra.mxu0 0.0
    %3244 = vmatprep.subr.mxu0 0.0
    %3245 = vmatpush1.msra.mxu0 0.0
    %3246 = vmatprep.subr.mxu0 0.0
    %3247 = vmatpush1.msra.mxu0 0.0
    %3248 = vmatprep.subr.mxu0 0.0
    %3249 = vmatpush1.msra.mxu0 0.0
    %3250 = vmatprep.subr.mxu0 0.0
    %3251 = vmatpush1.msra.mxu0 0.0
    %3252 = vmatprep.subr.mxu0 0.0
    %3253 = vmatpush1.msra.mxu0 0.0
    %3254 = vmatprep.subr.mxu0 0.0
    %3255 = vmatpush1.msra.mxu0 0.0
    %3256 = vmatprep.subr.mxu0 0.0
    %3257 = vmatpush1.msra.mxu0 0.0
    %3258 = vmatprep.subr.mxu0 0.0
    %3259 = vmatpush1.msra.mxu0 0.0
    %3260 = vmatprep.subr.mxu0 0.0
    %3261 = vmatpush1.msra.mxu0 0.0
    %3262 = vmatprep.subr.mxu0 0.0
    %3263 = vmatpush1.msra.mxu0 0.0
    %3264 = vmatprep.subr.mxu0 0.0
    %3265 = vmatpush1.msra.mxu0 0.0
    %3266 = vmatprep.subr.mxu0 0.0
    %3267 = vmatpush1.msra.mxu0 0.0
    %3268 = vmatprep.subr.mxu0 0.0
    %3269 = vmatpush1.msra.mxu0 0.0
    %3270 = vmatprep.subr.mxu0 0.0
    %3271 = vmatpush1.msra.mxu0 0.0
    %3272 = vmatprep.subr.mxu0 0.0
    %3273 = vmatpush1.msra.mxu0 0.0
    %3274 = vmatprep.mubr.f32.mxu0 0.0
    %3275 = vmatmul.mubr.f32.gmra.mrb[0].mxu0 %v3208
    %v3276 = vpop.f32.mrb[0].mxu0
    %v3277 = vadd.f32 0.0, %v3276
    %v3278 = vpop.f32.mrb[0].mxu0
    %3279 = vdwg.mxu0
    %v3281 = vsel %vm1918, %v2766, 0
    %3283 = vmatprep.subr.mxu0 0.0
    %3284 = vmatpush1.msra.mxu0 %v154
    %3285 = vmatprep.subr.mxu0 0.0
    %3286 = vmatpush1.msra.mxu0 0.0
    %3287 = vmatprep.subr.mxu0 0.0
    %3288 = vmatpush1.msra.mxu0 0.0
    %3289 = vmatprep.subr.mxu0 0.0
    %3290 = vmatpush1.msra.mxu0 0.0
    %3291 = vmatprep.subr.mxu0 0.0
    %3292 = vmatpush1.msra.mxu0 0.0
    %3293 = vmatprep.subr.mxu0 0.0
    %3294 = vmatpush1.msra.mxu0 0.0
    %3295 = vmatprep.subr.mxu0 0.0
    %3296 = vmatpush1.msra.mxu0 0.0
    %3297 = vmatprep.subr.mxu0 0.0
    %3298 = vmatpush1.msra.mxu0 0.0
    %3299 = vmatprep.subr.mxu0 0.0
    %3300 = vmatpush1.msra.mxu0 0.0
    %3301 = vmatprep.subr.mxu0 0.0
    %3302 = vmatpush1.msra.mxu0 0.0
    %3303 = vmatprep.subr.mxu0 0.0
    %3304 = vmatpush1.msra.mxu0 0.0
    %3305 = vmatprep.subr.mxu0 0.0
    %3306 = vmatpush1.msra.mxu0 0.0
    %3307 = vmatprep.subr.mxu0 0.0
    %3308 = vmatpush1.msra.mxu0 0.0
    %3309 = vmatprep.subr.mxu0 0.0
    %3310 = vmatpush1.msra.mxu0 0.0
    %3311 = vmatprep.subr.mxu0 0.0
    %3312 = vmatpush1.msra.mxu0 0.0
    %3313 = vmatprep.subr.mxu0 0.0
    %3314 = vmatpush1.msra.mxu0 0.0
    %3315 = vmatprep.subr.mxu0 0.0
    %3316 = vmatpush1.msra.mxu0 0.0
    %3317 = vmatprep.subr.mxu0 0.0
    %3318 = vmatpush1.msra.mxu0 0.0
    %3319 = vmatprep.subr.mxu0 0.0
    %3320 = vmatpush1.msra.mxu0 0.0
    %3321 = vmatprep.subr.mxu0 0.0
    %3322 = vmatpush1.msra.mxu0 0.0
    %3323 = vmatprep.subr.mxu0 0.0
    %3324 = vmatpush1.msra.mxu0 0.0
    %3325 = vmatprep.subr.mxu0 0.0
    %3326 = vmatpush1.msra.mxu0 0.0
    %3327 = vmatprep.subr.mxu0 0.0
    %3328 = vmatpush1.msra.mxu0 0.0
    %3329 = vmatprep.subr.mxu0 0.0
    %3330 = vmatpush1.msra.mxu0 0.0
    %3331 = vmatprep.subr.mxu0 0.0
    %3332 = vmatpush1.msra.mxu0 0.0
    %3333 = vmatprep.subr.mxu0 0.0
    %3334 = vmatpush1.msra.mxu0 0.0
    %3335 = vmatprep.subr.mxu0 0.0
    %3336 = vmatpush1.msra.mxu0 0.0
    %3337 = vmatprep.subr.mxu0 0.0
    %3338 = vmatpush1.msra.mxu0 0.0
    %3339 = vmatprep.subr.mxu0 0.0
    %3340 = vmatpush1.msra.mxu0 0.0
    %3341 = vmatprep.subr.mxu0 0.0
    %3342 = vmatpush1.msra.mxu0 0.0
    %3343 = vmatprep.subr.mxu0 0.0
    %3344 = vmatpush1.msra.mxu0 0.0
    %3345 = vmatprep.subr.mxu0 0.0
    %3346 = vmatpush1.msra.mxu0 0.0
    %3347 = vmatprep.mubr.f32.mxu0 0.0
    %3348 = vmatmul.mubr.f32.gmra.mrb[0].mxu0 %v3281
    %v3349 = vpop.f32.mrb[0].mxu0
    %v3350 = vadd.f32 0.0, %v3349
    %v3351 = vpop.f32.mrb[0].mxu0
    %3352 = vdwg.mxu0
    %v3354 = vsel %vm1918, %v2839, 0
    %3356 = vmatprep.subr.mxu0 0.0
    %3357 = vmatpush1.msra.mxu0 %v155
    %3358 = vmatprep.subr.mxu0 0.0
    %3359 = vmatpush1.msra.mxu0 0.0
    %3360 = vmatprep.subr.mxu0 0.0
    %3361 = vmatpush1.msra.mxu0 0.0
    %3362 = vmatprep.subr.mxu0 0.0
    %3363 = vmatpush1.msra.mxu0 0.0
    %3364 = vmatprep.subr.mxu0 0.0
    %3365 = vmatpush1.msra.mxu0 0.0
    %3366 = vmatprep.subr.mxu0 0.0
    %3367 = vmatpush1.msra.mxu0 0.0
    %3368 = vmatprep.subr.mxu0 0.0
    %3369 = vmatpush1.msra.mxu0 0.0
    %3370 = vmatprep.subr.mxu0 0.0
    %3371 = vmatpush1.msra.mxu0 0.0
    %3372 = vmatprep.subr.mxu0 0.0
    %3373 = vmatpush1.msra.mxu0 0.0
    %3374 = vmatprep.subr.mxu0 0.0
    %3375 = vmatpush1.msra.mxu0 0.0
    %3376 = vmatprep.subr.mxu0 0.0
    %3377 = vmatpush1.msra.mxu0 0.0
    %3378 = vmatprep.subr.mxu0 0.0
    %3379 = vmatpush1.msra.mxu0 0.0
    %3380 = vmatprep.subr.mxu0 0.0
    %3381 = vmatpush1.msra.mxu0 0.0
    %3382 = vmatprep.subr.mxu0 0.0
    %3383 = vmatpush1.msra.mxu0 0.0
    %3384 = vmatprep.subr.mxu0 0.0
    %3385 = vmatpush1.msra.mxu0 0.0
    %3386 = vmatprep.subr.mxu0 0.0
    %3387 = vmatpush1.msra.mxu0 0.0
    %3388 = vmatprep.subr.mxu0 0.0
    %3389 = vmatpush1.msra.mxu0 0.0
    %3390 = vmatprep.subr.mxu0 0.0
    %3391 = vmatpush1.msra.mxu0 0.0
    %3392 = vmatprep.subr.mxu0 0.0
    %3393 = vmatpush1.msra.mxu0 0.0
    %3394 = vmatprep.subr.mxu0 0.0
    %3395 = vmatpush1.msra.mxu0 0.0
    %3396 = vmatprep.subr.mxu0 0.0
    %3397 = vmatpush1.msra.mxu0 0.0
    %3398 = vmatprep.subr.mxu0 0.0
    %3399 = vmatpush1.msra.mxu0 0.0
    %3400 = vmatprep.subr.mxu0 0.0
    %3401 = vmatpush1.msra.mxu0 0.0
    %3402 = vmatprep.subr.mxu0 0.0
    %3403 = vmatpush1.msra.mxu0 0.0
    %3404 = vmatprep.subr.mxu0 0.0
    %3405 = vmatpush1.msra.mxu0 0.0
    %3406 = vmatprep.subr.mxu0 0.0
    %3407 = vmatpush1.msra.mxu0 0.0
    %3408 = vmatprep.subr.mxu0 0.0
    %3409 = vmatpush1.msra.mxu0 0.0
    %3410 = vmatprep.subr.mxu0 0.0
    %3411 = vmatpush1.msra.mxu0 0.0
    %3412 = vmatprep.subr.mxu0 0.0
    %3413 = vmatpush1.msra.mxu0 0.0
    %3414 = vmatprep.subr.mxu0 0.0
    %3415 = vmatpush1.msra.mxu0 0.0
    %3416 = vmatprep.subr.mxu0 0.0
    %3417 = vmatpush1.msra.mxu0 0.0
    %3418 = vmatprep.subr.mxu0 0.0
    %3419 = vmatpush1.msra.mxu0 0.0
    %3420 = vmatprep.mubr.f32.mxu0 0.0
    %3421 = vmatmul.mubr.f32.gmra.mrb[0].mxu0 %v3354
    %v3422 = vpop.f32.mrb[0].mxu0
    %v3423 = vadd.f32 0.0, %v3422
    %v3424 = vpop.f32.mrb[0].mxu0
    %3425 = vdwg.mxu0
    %v3427 = vsel %vm1918, %v2912, 0
    %3429 = vmatprep.subr.mxu0 0.0
    %3430 = vmatpush1.msra.mxu0 %v155
    %3431 = vmatprep.subr.mxu0 0.0
    %3432 = vmatpush1.msra.mxu0 0.0
    %3433 = vmatprep.subr.mxu0 0.0
    %3434 = vmatpush1.msra.mxu0 0.0
    %3435 = vmatprep.subr.mxu0 0.0
    %3436 = vmatpush1.msra.mxu0 0.0
    %3437 = vmatprep.subr.mxu0 0.0
    %3438 = vmatpush1.msra.mxu0 0.0
    %3439 = vmatprep.subr.mxu0 0.0
    %3440 = vmatpush1.msra.mxu0 0.0
    %3441 = vmatprep.subr.mxu0 0.0
    %3442 = vmatpush1.msra.mxu0 0.0
    %3443 = vmatprep.subr.mxu0 0.0
    %3444 = vmatpush1.msra.mxu0 0.0
    %3445 = vmatprep.subr.mxu0 0.0
    %3446 = vmatpush1.msra.mxu0 0.0
    %3447 = vmatprep.subr.mxu0 0.0
    %3448 = vmatpush1.msra.mxu0 0.0
    %3449 = vmatprep.subr.mxu0 0.0
    %3450 = vmatpush1.msra.mxu0 0.0
    %3451 = vmatprep.subr.mxu0 0.0
    %3452 = vmatpush1.msra.mxu0 0.0
    %3453 = vmatprep.subr.mxu0 0.0
    %3454 = vmatpush1.msra.mxu0 0.0
    %3455 = vmatprep.subr.mxu0 0.0
    %3456 = vmatpush1.msra.mxu0 0.0
    %3457 = vmatprep.subr.mxu0 0.0
    %3458 = vmatpush1.msra.mxu0 0.0
    %3459 = vmatprep.subr.mxu0 0.0
    %3460 = vmatpush1.msra.mxu0 0.0
    %3461 = vmatprep.subr.mxu0 0.0
    %3462 = vmatpush1.msra.mxu0 0.0
    %3463 = vmatprep.subr.mxu0 0.0
    %3464 = vmatpush1.msra.mxu0 0.0
    %3465 = vmatprep.subr.mxu0 0.0
    %3466 = vmatpush1.msra.mxu0 0.0
    %3467 = vmatprep.subr.mxu0 0.0
    %3468 = vmatpush1.msra.mxu0 0.0
    %3469 = vmatprep.subr.mxu0 0.0
    %3470 = vmatpush1.msra.mxu0 0.0
    %3471 = vmatprep.subr.mxu0 0.0
    %3472 = vmatpush1.msra.mxu0 0.0
    %3473 = vmatprep.subr.mxu0 0.0
    %3474 = vmatpush1.msra.mxu0 0.0
    %3475 = vmatprep.subr.mxu0 0.0
    %3476 = vmatpush1.msra.mxu0 0.0
    %3477 = vmatprep.subr.mxu0 0.0
    %3478 = vmatpush1.msra.mxu0 0.0
    %3479 = vmatprep.subr.mxu0 0.0
    %3480 = vmatpush1.msra.mxu0 0.0
    %3481 = vmatprep.subr.mxu0 0.0
    %3482 = vmatpush1.msra.mxu0 0.0
    %3483 = vmatprep.subr.mxu0 0.0
    %3484 = vmatpush1.msra.mxu0 0.0
    %3485 = vmatprep.subr.mxu0 0.0
    %3486 = vmatpush1.msra.mxu0 0.0
    %3487 = vmatprep.subr.mxu0 0.0
    %3488 = vmatpush1.msra.mxu0 0.0
    %3489 = vmatprep.subr.mxu0 0.0
    %3490 = vmatpush1.msra.mxu0 0.0
    %3491 = vmatprep.subr.mxu0 0.0
    %3492 = vmatpush1.msra.mxu0 0.0
    %3493 = vmatprep.mubr.f32.mxu0 0.0
    %3494 = vmatmul.mubr.f32.gmra.mrb[0].mxu0 %v3427
    %v3495 = vpop.f32.mrb[0].mxu0
    %v3496 = vadd.f32 0.0, %v3495
    %v3497 = vpop.f32.mrb[0].mxu0
    %3498 = vdwg.mxu0
    %v3500 = vsel %vm1918, %v2985, 0
    %3502 = vmatprep.subr.mxu0 0.0
    %3503 = vmatpush1.msra.mxu0 %v156
    %3504 = vmatprep.subr.mxu0 0.0
    %3505 = vmatpush1.msra.mxu0 0.0
    %3506 = vmatprep.subr.mxu0 0.0
    %3507 = vmatpush1.msra.mxu0 0.0
    %3508 = vmatprep.subr.mxu0 0.0
    %3509 = vmatpush1.msra.mxu0 0.0
    %3510 = vmatprep.subr.mxu0 0.0
    %3511 = vmatpush1.msra.mxu0 0.0
    %3512 = vmatprep.subr.mxu0 0.0
    %3513 = vmatpush1.msra.mxu0 0.0
    %3514 = vmatprep.subr.mxu0 0.0
    %3515 = vmatpush1.msra.mxu0 0.0
    %3516 = vmatprep.subr.mxu0 0.0
    %3517 = vmatpush1.msra.mxu0 0.0
    %3518 = vmatprep.subr.mxu0 0.0
    %3519 = vmatpush1.msra.mxu0 0.0
    %3520 = vmatprep.subr.mxu0 0.0
    %3521 = vmatpush1.msra.mxu0 0.0
    %3522 = vmatprep.subr.mxu0 0.0
    %3523 = vmatpush1.msra.mxu0 0.0
    %3524 = vmatprep.subr.mxu0 0.0
    %3525 = vmatpush1.msra.mxu0 0.0
    %3526 = vmatprep.subr.mxu0 0.0
    %3527 = vmatpush1.msra.mxu0 0.0
    %3528 = vmatprep.subr.mxu0 0.0
    %3529 = vmatpush1.msra.mxu0 0.0
    %3530 = vmatprep.subr.mxu0 0.0
    %3531 = vmatpush1.msra.mxu0 0.0
    %3532 = vmatprep.subr.mxu0 0.0
    %3533 = vmatpush1.msra.mxu0 0.0
    %3534 = vmatprep.subr.mxu0 0.0
    %3535 = vmatpush1.msra.mxu0 0.0
    %3536 = vmatprep.subr.mxu0 0.0
    %3537 = vmatpush1.msra.mxu0 0.0
    %3538 = vmatprep.subr.mxu0 0.0
    %3539 = vmatpush1.msra.mxu0 0.0
    %3540 = vmatprep.subr.mxu0 0.0
    %3541 = vmatpush1.msra.mxu0 0.0
    %3542 = vmatprep.subr.mxu0 0.0
    %3543 = vmatpush1.msra.mxu0 0.0
    %3544 = vmatprep.subr.mxu0 0.0
    %3545 = vmatpush1.msra.mxu0 0.0
    %3546 = vmatprep.subr.mxu0 0.0
    %3547 = vmatpush1.msra.mxu0 0.0
    %3548 = vmatprep.subr.mxu0 0.0
    %3549 = vmatpush1.msra.mxu0 0.0
    %3550 = vmatprep.subr.mxu0 0.0
    %3551 = vmatpush1.msra.mxu0 0.0
    %3552 = vmatprep.subr.mxu0 0.0
    %3553 = vmatpush1.msra.mxu0 0.0
    %3554 = vmatprep.subr.mxu0 0.0
    %3555 = vmatpush1.msra.mxu0 0.0
    %3556 = vmatprep.subr.mxu0 0.0
    %3557 = vmatpush1.msra.mxu0 0.0
    %3558 = vmatprep.subr.mxu0 0.0
    %3559 = vmatpush1.msra.mxu0 0.0
    %3560 = vmatprep.subr.mxu0 0.0
    %3561 = vmatpush1.msra.mxu0 0.0
    %3562 = vmatprep.subr.mxu0 0.0
    %3563 = vmatpush1.msra.mxu0 0.0
    %3564 = vmatprep.subr.mxu0 0.0
    %3565 = vmatpush1.msra.mxu0 0.0
    %3566 = vmatprep.mubr.f32.mxu0 0.0
    %3567 = vmatmul.mubr.f32.gmra.mrb[0].mxu0 %v3500
    %v3568 = vpop.f32.mrb[0].mxu0
    %v3569 = vadd.f32 0.0, %v3568
    %v3570 = vpop.f32.mrb[0].mxu0
    %3571 = vdwg.mxu0
    %v3573 = vsel %vm1918, %v3058, 0
    %3575 = vmatprep.subr.mxu0 0.0
    %3576 = vmatpush1.msra.mxu0 %v156
    %3577 = vmatprep.subr.mxu0 0.0
    %3578 = vmatpush1.msra.mxu0 0.0
    %3579 = vmatprep.subr.mxu0 0.0
    %3580 = vmatpush1.msra.mxu0 0.0
    %3581 = vmatprep.subr.mxu0 0.0
    %3582 = vmatpush1.msra.mxu0 0.0
    %3583 = vmatprep.subr.mxu0 0.0
    %3584 = vmatpush1.msra.mxu0 0.0
    %3585 = vmatprep.subr.mxu0 0.0
    %3586 = vmatpush1.msra.mxu0 0.0
    %3587 = vmatprep.subr.mxu0 0.0
    %3588 = vmatpush1.msra.mxu0 0.0
    %3589 = vmatprep.subr.mxu0 0.0
    %3590 = vmatpush1.msra.mxu0 0.0
    %3591 = vmatprep.subr.mxu0 0.0
    %3592 = vmatpush1.msra.mxu0 0.0
    %3593 = vmatprep.subr.mxu0 0.0
    %3594 = vmatpush1.msra.mxu0 0.0
    %3595 = vmatprep.subr.mxu0 0.0
    %3596 = vmatpush1.msra.mxu0 0.0
    %3597 = vmatprep.subr.mxu0 0.0
    %3598 = vmatpush1.msra.mxu0 0.0
    %3599 = vmatprep.subr.mxu0 0.0
    %3600 = vmatpush1.msra.mxu0 0.0
    %3601 = vmatprep.subr.mxu0 0.0
    %3602 = vmatpush1.msra.mxu0 0.0
    %3603 = vmatprep.subr.mxu0 0.0
    %3604 = vmatpush1.msra.mxu0 0.0
    %3605 = vmatprep.subr.mxu0 0.0
    %3606 = vmatpush1.msra.mxu0 0.0
    %3607 = vmatprep.subr.mxu0 0.0
    %3608 = vmatpush1.msra.mxu0 0.0
    %3609 = vmatprep.subr.mxu0 0.0
    %3610 = vmatpush1.msra.mxu0 0.0
    %3611 = vmatprep.subr.mxu0 0.0
    %3612 = vmatpush1.msra.mxu0 0.0
    %3613 = vmatprep.subr.mxu0 0.0
    %3614 = vmatpush1.msra.mxu0 0.0
    %3615 = vmatprep.subr.mxu0 0.0
    %3616 = vmatpush1.msra.mxu0 0.0
    %3617 = vmatprep.subr.mxu0 0.0
    %3618 = vmatpush1.msra.mxu0 0.0
    %3619 = vmatprep.subr.mxu0 0.0
    %3620 = vmatpush1.msra.mxu0 0.0
    %3621 = vmatprep.subr.mxu0 0.0
    %3622 = vmatpush1.msra.mxu0 0.0
    %3623 = vmatprep.subr.mxu0 0.0
    %3624 = vmatpush1.msra.mxu0 0.0
    %3625 = vmatprep.subr.mxu0 0.0
    %3626 = vmatpush1.msra.mxu0 0.0
    %3627 = vmatprep.subr.mxu0 0.0
    %3628 = vmatpush1.msra.mxu0 0.0
    %3629 = vmatprep.subr.mxu0 0.0
    %3630 = vmatpush1.msra.mxu0 0.0
    %3631 = vmatprep.subr.mxu0 0.0
    %3632 = vmatpush1.msra.mxu0 0.0
    %3633 = vmatprep.subr.mxu0 0.0
    %3634 = vmatpush1.msra.mxu0 0.0
    %3635 = vmatprep.subr.mxu0 0.0
    %3636 = vmatpush1.msra.mxu0 0.0
    %3637 = vmatprep.subr.mxu0 0.0
    %3638 = vmatpush1.msra.mxu0 0.0
    %3639 = vmatprep.mubr.f32.mxu0 0.0
    %3640 = vmatmul.mubr.f32.gmra.mrb[0].mxu0 %v3573
    %v3641 = vpop.f32.mrb[0].mxu0
    %v3642 = vadd.f32 0.0, %v3641
    %v3643 = vpop.f32.mrb[0].mxu0
    %3644 = vdwg.mxu0
    %v3646 = vsel %vm1918, %v3131, 0
    %3648 = vmatprep.subr.mxu0 0.0
    %3649 = vmatpush1.msra.mxu0 %v157
    %3650 = vmatprep.subr.mxu0 0.0
    %3651 = vmatpush1.msra.mxu0 0.0
    %3652 = vmatprep.subr.mxu0 0.0
    %3653 = vmatpush1.msra.mxu0 0.0
    %3654 = vmatprep.subr.mxu0 0.0
    %3655 = vmatpush1.msra.mxu0 0.0
    %3656 = vmatprep.subr.mxu0 0.0
    %3657 = vmatpush1.msra.mxu0 0.0
    %3658 = vmatprep.subr.mxu0 0.0
    %3659 = vmatpush1.msra.mxu0 0.0
    %3660 = vmatprep.subr.mxu0 0.0
    %3661 = vmatpush1.msra.mxu0 0.0
    %3662 = vmatprep.subr.mxu0 0.0
    %3663 = vmatpush1.msra.mxu0 0.0
    %3664 = vmatprep.subr.mxu0 0.0
    %3665 = vmatpush1.msra.mxu0 0.0
    %3666 = vmatprep.subr.mxu0 0.0
    %3667 = vmatpush1.msra.mxu0 0.0
    %3668 = vmatprep.subr.mxu0 0.0
    %3669 = vmatpush1.msra.mxu0 0.0
    %3670 = vmatprep.subr.mxu0 0.0
    %3671 = vmatpush1.msra.mxu0 0.0
    %3672 = vmatprep.subr.mxu0 0.0
    %3673 = vmatpush1.msra.mxu0 0.0
    %3674 = vmatprep.subr.mxu0 0.0
    %3675 = vmatpush1.msra.mxu0 0.0
    %3676 = vmatprep.subr.mxu0 0.0
    %3677 = vmatpush1.msra.mxu0 0.0
    %3678 = vmatprep.subr.mxu0 0.0
    %3679 = vmatpush1.msra.mxu0 0.0
    %3680 = vmatprep.subr.mxu0 0.0
    %3681 = vmatpush1.msra.mxu0 0.0
    %3682 = vmatprep.subr.mxu0 0.0
    %3683 = vmatpush1.msra.mxu0 0.0
    %3684 = vmatprep.subr.mxu0 0.0
    %3685 = vmatpush1.msra.mxu0 0.0
    %3686 = vmatprep.subr.mxu0 0.0
    %3687 = vmatpush1.msra.mxu0 0.0
    %3688 = vmatprep.subr.mxu0 0.0
    %3689 = vmatpush1.msra.mxu0 0.0
    %3690 = vmatprep.subr.mxu0 0.0
    %3691 = vmatpush1.msra.mxu0 0.0
    %3692 = vmatprep.subr.mxu0 0.0
    %3693 = vmatpush1.msra.mxu0 0.0
    %3694 = vmatprep.subr.mxu0 0.0
    %3695 = vmatpush1.msra.mxu0 0.0
    %3696 = vmatprep.subr.mxu0 0.0
    %3697 = vmatpush1.msra.mxu0 0.0
    %3698 = vmatprep.subr.mxu0 0.0
    %3699 = vmatpush1.msra.mxu0 0.0
    %3700 = vmatprep.subr.mxu0 0.0
    %3701 = vmatpush1.msra.mxu0 0.0
    %3702 = vmatprep.subr.mxu0 0.0
    %3703 = vmatpush1.msra.mxu0 0.0
    %3704 = vmatprep.subr.mxu0 0.0
    %3705 = vmatpush1.msra.mxu0 0.0
    %3706 = vmatprep.subr.mxu0 0.0
    %3707 = vmatpush1.msra.mxu0 0.0
    %3708 = vmatprep.subr.mxu0 0.0
    %3709 = vmatpush1.msra.mxu0 0.0
    %3710 = vmatprep.subr.mxu0 0.0
    %3711 = vmatpush1.msra.mxu0 0.0
    %3712 = vmatprep.mubr.f32.mxu0 0.0
    %3713 = vmatmul.mubr.f32.gmra.mrb[0].mxu0 %v3646
    %v3714 = vpop.f32.mrb[0].mxu0
    %v3715 = vadd.f32 0.0, %v3714
    %v3716 = vpop.f32.mrb[0].mxu0
    %3717 = vdwg.mxu0
    %v3719 = vsel %vm1918, %v3204, 0
    %3721 = vmatprep.subr.mxu0 0.0
    %3722 = vmatpush1.msra.mxu0 %v157
    %3723 = vmatprep.subr.mxu0 0.0
    %3724 = vmatpush1.msra.mxu0 0.0
    %3725 = vmatprep.subr.mxu0 0.0
    %3726 = vmatpush1.msra.mxu0 0.0
    %3727 = vmatprep.subr.mxu0 0.0
    %3728 = vmatpush1.msra.mxu0 0.0
    %3729 = vmatprep.subr.mxu0 0.0
    %3730 = vmatpush1.msra.mxu0 0.0
    %3731 = vmatprep.subr.mxu0 0.0
    %3732 = vmatpush1.msra.mxu0 0.0
    %3733 = vmatprep.subr.mxu0 0.0
    %3734 = vmatpush1.msra.mxu0 0.0
    %3735 = vmatprep.subr.mxu0 0.0
    %3736 = vmatpush1.msra.mxu0 0.0
    %3737 = vmatprep.subr.mxu0 0.0
    %3738 = vmatpush1.msra.mxu0 0.0
    %3739 = vmatprep.subr.mxu0 0.0
    %3740 = vmatpush1.msra.mxu0 0.0
    %3741 = vmatprep.subr.mxu0 0.0
    %3742 = vmatpush1.msra.mxu0 0.0
    %3743 = vmatprep.subr.mxu0 0.0
    %3744 = vmatpush1.msra.mxu0 0.0
    %3745 = vmatprep.subr.mxu0 0.0
    %3746 = vmatpush1.msra.mxu0 0.0
    %3747 = vmatprep.subr.mxu0 0.0
    %3748 = vmatpush1.msra.mxu0 0.0
    %3749 = vmatprep.subr.mxu0 0.0
    %3750 = vmatpush1.msra.mxu0 0.0
    %3751 = vmatprep.subr.mxu0 0.0
    %3752 = vmatpush1.msra.mxu0 0.0
    %3753 = vmatprep.subr.mxu0 0.0
    %3754 = vmatpush1.msra.mxu0 0.0
    %3755 = vmatprep.subr.mxu0 0.0
    %3756 = vmatpush1.msra.mxu0 0.0
    %3757 = vmatprep.subr.mxu0 0.0
    %3758 = vmatpush1.msra.mxu0 0.0
    %3759 = vmatprep.subr.mxu0 0.0
    %3760 = vmatpush1.msra.mxu0 0.0
    %3761 = vmatprep.subr.mxu0 0.0
    %3762 = vmatpush1.msra.mxu0 0.0
    %3763 = vmatprep.subr.mxu0 0.0
    %3764 = vmatpush1.msra.mxu0 0.0
    %3765 = vmatprep.subr.mxu0 0.0
    %3766 = vmatpush1.msra.mxu0 0.0
    %3767 = vmatprep.subr.mxu0 0.0
    %3768 = vmatpush1.msra.mxu0 0.0
    %3769 = vmatprep.subr.mxu0 0.0
    %3770 = vmatpush1.msra.mxu0 0.0
    %3771 = vmatprep.subr.mxu0 0.0
    %3772 = vmatpush1.msra.mxu0 0.0
    %3773 = vmatprep.subr.mxu0 0.0
    %3774 = vmatpush1.msra.mxu0 0.0
    %3775 = vmatprep.subr.mxu0 0.0
    %3776 = vmatpush1.msra.mxu0 0.0
    %3777 = vmatprep.subr.mxu0 0.0
    %3778 = vmatpush1.msra.mxu0 0.0
    %3779 = vmatprep.subr.mxu0 0.0
    %3780 = vmatpush1.msra.mxu0 0.0
    %3781 = vmatprep.subr.mxu0 0.0
    %3782 = vmatpush1.msra.mxu0 0.0
    %3783 = vmatprep.subr.mxu0 0.0
    %3784 = vmatpush1.msra.mxu0 0.0
    %3785 = vmatprep.mubr.f32.mxu0 0.0
    %3786 = vmatmul.mubr.f32.gmra.mrb[0].mxu0 %v3719
    %v3787 = vpop.f32.mrb[0].mxu0
    %v3788 = vadd.f32 0.0, %v3787
    %v3789 = vpop.f32.mrb[0].mxu0
    %3790 = vdwg.mxu0
    %v3791 = vadd.f32 %v3277, %v3423
    %v3792 = vadd.f32 %v3350, %v3496
    %v3793 = vadd.f32 %v3791, %v3569
    %v3794 = vadd.f32 %v3792, %v3642
    %v3795 = vadd.f32 %v3793, %v3715
    %v3796 = vadd.f32 %v3794, %v3788
    %v3798 = vlaneseq
    %v3799 = vshrl.u32 %v3798, 7
    %v3800 = vsub.s32 0, %v3799
    %v3801 = vrot.slane %v158, %v3800
    %v3803 = vadd.f32 %v3795, %v3801
    %v3804 = vadd.f32 %v3796, %v3801
    %v3805 = vadd.f32 %v90, %v3803
    %v3806 = vadd.f32 %v91, %v3804
    %v3807 = vld [vmem:[%s22] sm:$0x1]
    %v3808 = vld [vmem:[%s23] sm:$0x1]
    %v3809 = vsel %vm183, %v3805, 0.0
    %3810 = vadd.xlane.f32.xlu0 %v3809
    %v3811 = vpop.xlane.xlu0 %3810
    %v3812 = vsel %vm183, %v3806, 0.0
    %3813 = vadd.xlane.f32.xlu0 %v3812
    %v3814 = vpop.xlane.xlu0 %3813
    %v3815 = vrcp.pop 32.0
    %v3816 = vmul.f32 %v3811, %v3815
    %v3817 = vmul.f32 %v3814, %v3815
    %v3818 = vsub.f32 %v3805, %v3816
    %v3819 = vsub.f32 %v3806, %v3817
    %v3820 = vmul.f32 %v3818, %v3818
    %v3821 = vmul.f32 %v3819, %v3819
    %v3822 = vsel %vm183, %v3820, 0.0
    %3823 = vadd.xlane.f32.xlu0 %v3822
    %v3824 = vpop.xlane.xlu0 %3823
    %v3825 = vsel %vm183, %v3821, 0.0
    %3826 = vadd.xlane.f32.xlu0 %v3825
    %v3827 = vpop.xlane.xlu0 %3826
    %v3828 = vmul.f32 %v3824, %v3815
    %v3829 = vmul.f32 %v3827, %v3815
    %v3830 = vadd.f32 %v3828, 1e-05
    %v3831 = vadd.f32 %v3829, 1e-05
    %v3832 = vrsqrt.pop %v3830
    %v3833 = vrsqrt.pop %v3831
    %v3834 = vmul.f32 %v3818, %v3832
    %v3835 = vmul.f32 %v3819, %v3833
    %v3837 = vlaneseq
    %v3838 = vshrl.u32 %v3837, 7
    %v3839 = vsub.s32 0, %v3838
    %v3840 = vrot.slane %v3807, %v3839
    %v3842 = vmul.f32 %v3834, %v3840
    %v3843 = vmul.f32 %v3835, %v3840
    %v3845 = vlaneseq
    %v3846 = vshrl.u32 %v3845, 7
    %v3847 = vsub.s32 0, %v3846
    %v3848 = vrot.slane %v3808, %v3847
    %v3850 = vadd.f32 %v3842, %v3848
    %v3851 = vadd.f32 %v3843, %v3848
    %v3852 = vld [vmem:[%s10] sm:$0xff]
    %v3853 = vld [vmem:[%s10 + $0x8] sm:$0xff]
    %v3854 = vld [vmem:[%s10 + $0x10] sm:$0xff]
    %v3855 = vld [vmem:[%s10 + $0x18] sm:$0xff]
    %v3856 = vld [vmem:[%s10 + $0x20] sm:$0xff]
    %v3857 = vld [vmem:[%s10 + $0x28] sm:$0xff]
    %v3858 = vld [vmem:[%s10 + $0x30] sm:$0xff]
    %v3859 = vld [vmem:[%s10 + $0x38] sm:$0xff]
    %v3860 = vld [vmem:[%s10 + $0x40] sm:$0xff]
    %v3861 = vld [vmem:[%s10 + $0x48] sm:$0xff]
    %v3862 = vld [vmem:[%s10 + $0x50] sm:$0xff]
    %v3863 = vld [vmem:[%s10 + $0x58] sm:$0xff]
    %v3864 = vld [vmem:[%s10 + $0x60] sm:$0xff]
    %v3865 = vld [vmem:[%s10 + $0x68] sm:$0xff]
    %v3866 = vld [vmem:[%s10 + $0x70] sm:$0xff]
    %v3867 = vld [vmem:[%s10 + $0x78] sm:$0xff]
    %v3868 = vld [vmem:[%s11] sm:$0x1]
    %v3869 = vld [vmem:[%s11 + $0x1] sm:$0x1]
    %v3870 = vld [vmem:[%s11 + $0x2] sm:$0x1]
    %v3871 = vld [vmem:[%s11 + $0x3] sm:$0x1]
    %v3872 = vld [vmem:[%s12] sm:$0xff]
    %v3873 = vld [vmem:[%s12 + $0x8] sm:$0xff]
    %v3874 = vld [vmem:[%s12 + $0x10] sm:$0xff]
    %v3875 = vld [vmem:[%s12 + $0x18] sm:$0xff]
    %v3876 = vld [vmem:[%s12 + $0x20] sm:$0xff]
    %v3877 = vld [vmem:[%s12 + $0x28] sm:$0xff]
    %v3878 = vld [vmem:[%s12 + $0x30] sm:$0xff]
    %v3879 = vld [vmem:[%s12 + $0x38] sm:$0xff]
    %v3880 = vld [vmem:[%s12 + $0x40] sm:$0xff]
    %v3881 = vld [vmem:[%s12 + $0x48] sm:$0xff]
    %v3882 = vld [vmem:[%s12 + $0x50] sm:$0xff]
    %v3883 = vld [vmem:[%s12 + $0x58] sm:$0xff]
    %v3884 = vld [vmem:[%s12 + $0x60] sm:$0xff]
    %v3885 = vld [vmem:[%s12 + $0x68] sm:$0xff]
    %v3886 = vld [vmem:[%s12 + $0x70] sm:$0xff]
    %v3887 = vld [vmem:[%s12 + $0x78] sm:$0xff]
    %v3888 = vld [vmem:[%s13] sm:$0x1]
    %v3889 = vld [vmem:[%s13 + $0x1] sm:$0x1]
    %v3890 = vld [vmem:[%s13 + $0x2] sm:$0x1]
    %v3891 = vld [vmem:[%s13 + $0x3] sm:$0x1]
    %v3892 = vld [vmem:[%s14] sm:$0xff]
    %v3893 = vld [vmem:[%s14 + $0x8] sm:$0xff]
    %v3894 = vld [vmem:[%s14 + $0x10] sm:$0xff]
    %v3895 = vld [vmem:[%s14 + $0x18] sm:$0xff]
    %v3896 = vld [vmem:[%s14 + $0x20] sm:$0xff]
    %v3897 = vld [vmem:[%s14 + $0x28] sm:$0xff]
    %v3898 = vld [vmem:[%s14 + $0x30] sm:$0xff]
    %v3899 = vld [vmem:[%s14 + $0x38] sm:$0xff]
    %v3900 = vld [vmem:[%s14 + $0x40] sm:$0xff]
    %v3901 = vld [vmem:[%s14 + $0x48] sm:$0xff]
    %v3902 = vld [vmem:[%s14 + $0x50] sm:$0xff]
    %v3903 = vld [vmem:[%s14 + $0x58] sm:$0xff]
    %v3904 = vld [vmem:[%s14 + $0x60] sm:$0xff]
    %v3905 = vld [vmem:[%s14 + $0x68] sm:$0xff]
    %v3906 = vld [vmem:[%s14 + $0x70] sm:$0xff]
    %v3907 = vld [vmem:[%s14 + $0x78] sm:$0xff]
    %v3908 = vld [vmem:[%s15] sm:$0x1]
    %v3909 = vld [vmem:[%s15 + $0x1] sm:$0x1]
    %v3910 = vld [vmem:[%s15 + $0x2] sm:$0x1]
    %v3911 = vld [vmem:[%s15 + $0x3] sm:$0x1]
    %v3912 = vld [vmem:[%s16] sm:$0xff]
    %v3913 = vld [vmem:[%s16 + $0x8] sm:$0xff]
    %v3914 = vld [vmem:[%s16 + $0x10] sm:$0xff]
    %v3915 = vld [vmem:[%s16 + $0x18] sm:$0xff]
    %v3916 = vld [vmem:[%s17] sm:$0x1]
    %v3921 = vlaneseq
    %v3922 = vshrl.u32 %v3921, 7
    %v3923 = vsub.s32 0, %v3922
    %v3924 = vrot.slane %v3868, %v3923
    %v3925 = vlaneseq
    %v3926 = vshrl.u32 %v3925, 7
    %v3927 = vsub.s32 0, %v3926
    %v3928 = vrot.slane %v3869, %v3927
    %v3929 = vlaneseq
    %v3930 = vshrl.u32 %v3929, 7
    %v3931 = vsub.s32 0, %v3930
    %v3932 = vrot.slane %v3870, %v3931
    %v3933 = vlaneseq
    %v3934 = vshrl.u32 %v3933, 7
    %v3935 = vsub.s32 0, %v3934
    %v3936 = vrot.slane %v3871, %v3935
    %v3942 = vsel %vm183, %v3850, 0
    %3944 = vmatprep.subr.mxu0 0.0
    %3945 = vmatpush1.msra.mxu0 %v3852
    %3946 = vmatprep.subr.mxu0 0.0
    %3947 = vmatpush1.msra.mxu0 %v3853
    %3948 = vmatprep.subr.mxu0 0.0
    %3949 = vmatpush1.msra.mxu0 %v3854
    %3950 = vmatprep.subr.mxu0 0.0
    %3951 = vmatpush1.msra.mxu0 %v3855
    %3952 = vmatprep.subr.mxu0 0.0
    %3953 = vmatpush1.msra.mxu0 0.0
    %3954 = vmatprep.subr.mxu0 0.0
    %3955 = vmatpush1.msra.mxu0 0.0
    %3956 = vmatprep.subr.mxu0 0.0
    %3957 = vmatpush1.msra.mxu0 0.0
    %3958 = vmatprep.subr.mxu0 0.0
    %3959 = vmatpush1.msra.mxu0 0.0
    %3960 = vmatprep.subr.mxu0 0.0
    %3961 = vmatpush1.msra.mxu0 0.0
    %3962 = vmatprep.subr.mxu0 0.0
    %3963 = vmatpush1.msra.mxu0 0.0
    %3964 = vmatprep.subr.mxu0 0.0
    %3965 = vmatpush1.msra.mxu0 0.0
    %3966 = vmatprep.subr.mxu0 0.0
    %3967 = vmatpush1.msra.mxu0 0.0
    %3968 = vmatprep.subr.mxu0 0.0
    %3969 = vmatpush1.msra.mxu0 0.0
    %3970 = vmatprep.subr.mxu0 0.0
    %3971 = vmatpush1.msra.mxu0 0.0
    %3972 = vmatprep.subr.mxu0 0.0
    %3973 = vmatpush1.msra.mxu0 0.0
    %3974 = vmatprep.subr.mxu0 0.0
    %3975 = vmatpush1.msra.mxu0 0.0
    %3976 = vmatprep.subr.mxu0 0.0
    %3977 = vmatpush1.msra.mxu0 0.0
    %3978 = vmatprep.subr.mxu0 0.0
    %3979 = vmatpush1.msra.mxu0 0.0
    %3980 = vmatprep.subr.mxu0 0.0
    %3981 = vmatpush1.msra.mxu0 0.0
    %3982 = vmatprep.subr.mxu0 0.0
    %3983 = vmatpush1.msra.mxu0 0.0
    %3984 = vmatprep.subr.mxu0 0.0
    %3985 = vmatpush1.msra.mxu0 0.0
    %3986 = vmatprep.subr.mxu0 0.0
    %3987 = vmatpush1.msra.mxu0 0.0
    %3988 = vmatprep.subr.mxu0 0.0
    %3989 = vmatpush1.msra.mxu0 0.0
    %3990 = vmatprep.subr.mxu0 0.0
    %3991 = vmatpush1.msra.mxu0 0.0
    %3992 = vmatprep.subr.mxu0 0.0
    %3993 = vmatpush1.msra.mxu0 0.0
    %3994 = vmatprep.subr.mxu0 0.0
    %3995 = vmatpush1.msra.mxu0 0.0
    %3996 = vmatprep.subr.mxu0 0.0
    %3997 = vmatpush1.msra.mxu0 0.0
    %3998 = vmatprep.subr.mxu0 0.0
    %3999 = vmatpush1.msra.mxu0 0.0
    %4000 = vmatprep.subr.mxu0 0.0
    %4001 = vmatpush1.msra.mxu0 0.0
    %4002 = vmatprep.subr.mxu0 0.0
    %4003 = vmatpush1.msra.mxu0 0.0
    %4004 = vmatprep.subr.mxu0 0.0
    %4005 = vmatpush1.msra.mxu0 0.0
    %4006 = vmatprep.subr.mxu0 0.0
    %4007 = vmatpush1.msra.mxu0 0.0
    %4008 = vmatprep.mubr.f32.mxu0 0.0
    %4009 = vmatmul.mubr.f32.gmra.mrb[0].mxu0 %v3942
    %v4010 = vpop.f32.mrb[0].mxu0
    %v4011 = vadd.f32 %v3924, %v4010
    %v4012 = vpop.f32.mrb[0].mxu0
    %4013 = vdwg.mxu0
    %v4015 = vsel %vm183, %v3851, 0
    %4017 = vmatprep.subr.mxu0 0.0
    %4018 = vmatpush1.msra.mxu0 %v3852
    %4019 = vmatprep.subr.mxu0 0.0
    %4020 = vmatpush1.msra.mxu0 %v3853
    %4021 = vmatprep.subr.mxu0 0.0
    %4022 = vmatpush1.msra.mxu0 %v3854
    %4023 = vmatprep.subr.mxu0 0.0
    %4024 = vmatpush1.msra.mxu0 %v3855
    %4025 = vmatprep.subr.mxu0 0.0
    %4026 = vmatpush1.msra.mxu0 0.0
    %4027 = vmatprep.subr.mxu0 0.0
    %4028 = vmatpush1.msra.mxu0 0.0
    %4029 = vmatprep.subr.mxu0 0.0
    %4030 = vmatpush1.msra.mxu0 0.0
    %4031 = vmatprep.subr.mxu0 0.0
    %4032 = vmatpush1.msra.mxu0 0.0
    %4033 = vmatprep.subr.mxu0 0.0
    %4034 = vmatpush1.msra.mxu0 0.0
    %4035 = vmatprep.subr.mxu0 0.0
    %4036 = vmatpush1.msra.mxu0 0.0
    %4037 = vmatprep.subr.mxu0 0.0
    %4038 = vmatpush1.msra.mxu0 0.0
    %4039 = vmatprep.subr.mxu0 0.0
    %4040 = vmatpush1.msra.mxu0 0.0
    %4041 = vmatprep.subr.mxu0 0.0
    %4042 = vmatpush1.msra.mxu0 0.0
    %4043 = vmatprep.subr.mxu0 0.0
    %4044 = vmatpush1.msra.mxu0 0.0
    %4045 = vmatprep.subr.mxu0 0.0
    %4046 = vmatpush1.msra.mxu0 0.0
    %4047 = vmatprep.subr.mxu0 0.0
    %4048 = vmatpush1.msra.mxu0 0.0
    %4049 = vmatprep.subr.mxu0 0.0
    %4050 = vmatpush1.msra.mxu0 0.0
    %4051 = vmatprep.subr.mxu0 0.0
    %4052 = vmatpush1.msra.mxu0 0.0
    %4053 = vmatprep.subr.mxu0 0.0
    %4054 = vmatpush1.msra.mxu0 0.0
    %4055 = vmatprep.subr.mxu0 0.0
    %4056 = vmatpush1.msra.mxu0 0.0
    %4057 = vmatprep.subr.mxu0 0.0
    %4058 = vmatpush1.msra.mxu0 0.0
    %4059 = vmatprep.subr.mxu0 0.0
    %4060 = vmatpush1.msra.mxu0 0.0
    %4061 = vmatprep.subr.mxu0 0.0
    %4062 = vmatpush1.msra.mxu0 0.0
    %4063 = vmatprep.subr.mxu0 0.0
    %4064 = vmatpush1.msra.mxu0 0.0
    %4065 = vmatprep.subr.mxu0 0.0
    %4066 = vmatpush1.msra.mxu0 0.0
    %4067 = vmatprep.subr.mxu0 0.0
    %4068 = vmatpush1.msra.mxu0 0.0
    %4069 = vmatprep.subr.mxu0 0.0
    %4070 = vmatpush1.msra.mxu0 0.0
    %4071 = vmatprep.subr.mxu0 0.0
    %4072 = vmatpush1.msra.mxu0 0.0
    %4073 = vmatprep.subr.mxu0 0.0
    %4074 = vmatpush1.msra.mxu0 0.0
    %4075 = vmatprep.subr.mxu0 0.0
    %4076 = vmatpush1.msra.mxu0 0.0
    %4077 = vmatprep.subr.mxu0 0.0
    %4078 = vmatpush1.msra.mxu0 0.0
    %4079 = vmatprep.subr.mxu0 0.0
    %4080 = vmatpush1.msra.mxu0 0.0
    %4081 = vmatprep.mubr.f32.mxu0 0.0
    %4082 = vmatmul.mubr.f32.gmra.mrb[0].mxu0 %v4015
    %v4083 = vpop.f32.mrb[0].mxu0
    %v4084 = vadd.f32 %v3924, %v4083
    %v4085 = vpop.f32.mrb[0].mxu0
    %4086 = vdwg.mxu0
    %4087 = vmatprep.subr.mxu0 0.0
    %4088 = vmatpush1.msra.mxu0 %v3856
    %4089 = vmatprep.subr.mxu0 0.0
    %4090 = vmatpush1.msra.mxu0 %v3857
    %4091 = vmatprep.subr.mxu0 0.0
    %4092 = vmatpush1.msra.mxu0 %v3858
    %4093 = vmatprep.subr.mxu0 0.0
    %4094 = vmatpush1.msra.mxu0 %v3859
    %4095 = vmatprep.subr.mxu0 0.0
    %4096 = vmatpush1.msra.mxu0 0.0
    %4097 = vmatprep.subr.mxu0 0.0
    %4098 = vmatpush1.msra.mxu0 0.0
    %4099 = vmatprep.subr.mxu0 0.0
    %4100 = vmatpush1.msra.mxu0 0.0
    %4101 = vmatprep.subr.mxu0 0.0
    %4102 = vmatpush1.msra.mxu0 0.0
    %4103 = vmatprep.subr.mxu0 0.0
    %4104 = vmatpush1.msra.mxu0 0.0
    %4105 = vmatprep.subr.mxu0 0.0
    %4106 = vmatpush1.msra.mxu0 0.0
    %4107 = vmatprep.subr.mxu0 0.0
    %4108 = vmatpush1.msra.mxu0 0.0
    %4109 = vmatprep.subr.mxu0 0.0
    %4110 = vmatpush1.msra.mxu0 0.0
    %4111 = vmatprep.subr.mxu0 0.0
    %4112 = vmatpush1.msra.mxu0 0.0
    %4113 = vmatprep.subr.mxu0 0.0
    %4114 = vmatpush1.msra.mxu0 0.0
    %4115 = vmatprep.subr.mxu0 0.0
    %4116 = vmatpush1.msra.mxu0 0.0
    %4117 = vmatprep.subr.mxu0 0.0
    %4118 = vmatpush1.msra.mxu0 0.0
    %4119 = vmatprep.subr.mxu0 0.0
    %4120 = vmatpush1.msra.mxu0 0.0
    %4121 = vmatprep.subr.mxu0 0.0
    %4122 = vmatpush1.msra.mxu0 0.0
    %4123 = vmatprep.subr.mxu0 0.0
    %4124 = vmatpush1.msra.mxu0 0.0
    %4125 = vmatprep.subr.mxu0 0.0
    %4126 = vmatpush1.msra.mxu0 0.0
    %4127 = vmatprep.subr.mxu0 0.0
    %4128 = vmatpush1.msra.mxu0 0.0
    %4129 = vmatprep.subr.mxu0 0.0
    %4130 = vmatpush1.msra.mxu0 0.0
    %4131 = vmatprep.subr.mxu0 0.0
    %4132 = vmatpush1.msra.mxu0 0.0
    %4133 = vmatprep.subr.mxu0 0.0
    %4134 = vmatpush1.msra.mxu0 0.0
    %4135 = vmatprep.subr.mxu0 0.0
    %4136 = vmatpush1.msra.mxu0 0.0
    %4137 = vmatprep.subr.mxu0 0.0
    %4138 = vmatpush1.msra.mxu0 0.0
    %4139 = vmatprep.subr.mxu0 0.0
    %4140 = vmatpush1.msra.mxu0 0.0
    %4141 = vmatprep.subr.mxu0 0.0
    %4142 = vmatpush1.msra.mxu0 0.0
    %4143 = vmatprep.subr.mxu0 0.0
    %4144 = vmatpush1.msra.mxu0 0.0
    %4145 = vmatprep.subr.mxu0 0.0
    %4146 = vmatpush1.msra.mxu0 0.0
    %4147 = vmatprep.subr.mxu0 0.0
    %4148 = vmatpush1.msra.mxu0 0.0
    %4149 = vmatprep.subr.mxu0 0.0
    %4150 = vmatpush1.msra.mxu0 0.0
    %4151 = vmatprep.mubr.f32.mxu0 0.0
    %4152 = vmatmul.mubr.f32.gmra.mrb[0].mxu0 %v3942
    %v4153 = vpop.f32.mrb[0].mxu0
    %v4154 = vadd.f32 %v3928, %v4153
    %v4155 = vpop.f32.mrb[0].mxu0
    %4156 = vdwg.mxu0
    %4157 = vmatprep.subr.mxu0 0.0
    %4158 = vmatpush1.msra.mxu0 %v3856
    %4159 = vmatprep.subr.mxu0 0.0
    %4160 = vmatpush1.msra.mxu0 %v3857
    %4161 = vmatprep.subr.mxu0 0.0
    %4162 = vmatpush1.msra.mxu0 %v3858
    %4163 = vmatprep.subr.mxu0 0.0
    %4164 = vmatpush1.msra.mxu0 %v3859
    %4165 = vmatprep.subr.mxu0 0.0
    %4166 = vmatpush1.msra.mxu0 0.0
    %4167 = vmatprep.subr.mxu0 0.0
    %4168 = vmatpush1.msra.mxu0 0.0
    %4169 = vmatprep.subr.mxu0 0.0
    %4170 = vmatpush1.msra.mxu0 0.0
    %4171 = vmatprep.subr.mxu0 0.0
    %4172 = vmatpush1.msra.mxu0 0.0
    %4173 = vmatprep.subr.mxu0 0.0
    %4174 = vmatpush1.msra.mxu0 0.0
    %4175 = vmatprep.subr.mxu0 0.0
    %4176 = vmatpush1.msra.mxu0 0.0
    %4177 = vmatprep.subr.mxu0 0.0
    %4178 = vmatpush1.msra.mxu0 0.0
    %4179 = vmatprep.subr.mxu0 0.0
    %4180 = vmatpush1.msra.mxu0 0.0
    %4181 = vmatprep.subr.mxu0 0.0
    %4182 = vmatpush1.msra.mxu0 0.0
    %4183 = vmatprep.subr.mxu0 0.0
    %4184 = vmatpush1.msra.mxu0 0.0
    %4185 = vmatprep.subr.mxu0 0.0
    %4186 = vmatpush1.msra.mxu0 0.0
    %4187 = vmatprep.subr.mxu0 0.0
    %4188 = vmatpush1.msra.mxu0 0.0
    %4189 = vmatprep.subr.mxu0 0.0
    %4190 = vmatpush1.msra.mxu0 0.0
    %4191 = vmatprep.subr.mxu0 0.0
    %4192 = vmatpush1.msra.mxu0 0.0
    %4193 = vmatprep.subr.mxu0 0.0
    %4194 = vmatpush1.msra.mxu0 0.0
    %4195 = vmatprep.subr.mxu0 0.0
    %4196 = vmatpush1.msra.mxu0 0.0
    %4197 = vmatprep.subr.mxu0 0.0
    %4198 = vmatpush1.msra.mxu0 0.0
    %4199 = vmatprep.subr.mxu0 0.0
    %4200 = vmatpush1.msra.mxu0 0.0
    %4201 = vmatprep.subr.mxu0 0.0
    %4202 = vmatpush1.msra.mxu0 0.0
    %4203 = vmatprep.subr.mxu0 0.0
    %4204 = vmatpush1.msra.mxu0 0.0
    %4205 = vmatprep.subr.mxu0 0.0
    %4206 = vmatpush1.msra.mxu0 0.0
    %4207 = vmatprep.subr.mxu0 0.0
    %4208 = vmatpush1.msra.mxu0 0.0
    %4209 = vmatprep.subr.mxu0 0.0
    %4210 = vmatpush1.msra.mxu0 0.0
    %4211 = vmatprep.subr.mxu0 0.0
    %4212 = vmatpush1.msra.mxu0 0.0
    %4213 = vmatprep.subr.mxu0 0.0
    %4214 = vmatpush1.msra.mxu0 0.0
    %4215 = vmatprep.subr.mxu0 0.0
    %4216 = vmatpush1.msra.mxu0 0.0
    %4217 = vmatprep.subr.mxu0 0.0
    %4218 = vmatpush1.msra.mxu0 0.0
    %4219 = vmatprep.subr.mxu0 0.0
    %4220 = vmatpush1.msra.mxu0 0.0
    %4221 = vmatprep.mubr.f32.mxu0 0.0
    %4222 = vmatmul.mubr.f32.gmra.mrb[0].mxu0 %v4015
    %v4223 = vpop.f32.mrb[0].mxu0
    %v4224 = vadd.f32 %v3928, %v4223
    %v4225 = vpop.f32.mrb[0].mxu0
    %4226 = vdwg.mxu0
    %4227 = vmatprep.subr.mxu0 0.0
    %4228 = vmatpush1.msra.mxu0 %v3860
    %4229 = vmatprep.subr.mxu0 0.0
    %4230 = vmatpush1.msra.mxu0 %v3861
    %4231 = vmatprep.subr.mxu0 0.0
    %4232 = vmatpush1.msra.mxu0 %v3862
    %4233 = vmatprep.subr.mxu0 0.0
    %4234 = vmatpush1.msra.mxu0 %v3863
    %4235 = vmatprep.subr.mxu0 0.0
    %4236 = vmatpush1.msra.mxu0 0.0
    %4237 = vmatprep.subr.mxu0 0.0
    %4238 = vmatpush1.msra.mxu0 0.0
    %4239 = vmatprep.subr.mxu0 0.0
    %4240 = vmatpush1.msra.mxu0 0.0
    %4241 = vmatprep.subr.mxu0 0.0
    %4242 = vmatpush1.msra.mxu0 0.0
    %4243 = vmatprep.subr.mxu0 0.0
    %4244 = vmatpush1.msra.mxu0 0.0
    %4245 = vmatprep.subr.mxu0 0.0
    %4246 = vmatpush1.msra.mxu0 0.0
    %4247 = vmatprep.subr.mxu0 0.0
    %4248 = vmatpush1.msra.mxu0 0.0
    %4249 = vmatprep.subr.mxu0 0.0
    %4250 = vmatpush1.msra.mxu0 0.0
    %4251 = vmatprep.subr.mxu0 0.0
    %4252 = vmatpush1.msra.mxu0 0.0
    %4253 = vmatprep.subr.mxu0 0.0
    %4254 = vmatpush1.msra.mxu0 0.0
    %4255 = vmatprep.subr.mxu0 0.0
    %4256 = vmatpush1.msra.mxu0 0.0
    %4257 = vmatprep.subr.mxu0 0.0
    %4258 = vmatpush1.msra.mxu0 0.0
    %4259 = vmatprep.subr.mxu0 0.0
    %4260 = vmatpush1.msra.mxu0 0.0
    %4261 = vmatprep.subr.mxu0 0.0
    %4262 = vmatpush1.msra.mxu0 0.0
    %4263 = vmatprep.subr.mxu0 0.0
    %4264 = vmatpush1.msra.mxu0 0.0
    %4265 = vmatprep.subr.mxu0 0.0
    %4266 = vmatpush1.msra.mxu0 0.0
    %4267 = vmatprep.subr.mxu0 0.0
    %4268 = vmatpush1.msra.mxu0 0.0
    %4269 = vmatprep.subr.mxu0 0.0
    %4270 = vmatpush1.msra.mxu0 0.0
    %4271 = vmatprep.subr.mxu0 0.0
    %4272 = vmatpush1.msra.mxu0 0.0
    %4273 = vmatprep.subr.mxu0 0.0
    %4274 = vmatpush1.msra.mxu0 0.0
    %4275 = vmatprep.subr.mxu0 0.0
    %4276 = vmatpush1.msra.mxu0 0.0
    %4277 = vmatprep.subr.mxu0 0.0
    %4278 = vmatpush1.msra.mxu0 0.0
    %4279 = vmatprep.subr.mxu0 0.0
    %4280 = vmatpush1.msra.mxu0 0.0
    %4281 = vmatprep.subr.mxu0 0.0
    %4282 = vmatpush1.msra.mxu0 0.0
    %4283 = vmatprep.subr.mxu0 0.0
    %4284 = vmatpush1.msra.mxu0 0.0
    %4285 = vmatprep.subr.mxu0 0.0
    %4286 = vmatpush1.msra.mxu0 0.0
    %4287 = vmatprep.subr.mxu0 0.0
    %4288 = vmatpush1.msra.mxu0 0.0
    %4289 = vmatprep.subr.mxu0 0.0
    %4290 = vmatpush1.msra.mxu0 0.0
    %4291 = vmatprep.mubr.f32.mxu0 0.0
    %4292 = vmatmul.mubr.f32.gmra.mrb[0].mxu0 %v3942
    %v4293 = vpop.f32.mrb[0].mxu0
    %v4294 = vadd.f32 %v3932, %v4293
    %v4295 = vpop.f32.mrb[0].mxu0
    %4296 = vdwg.mxu0
    %4297 = vmatprep.subr.mxu0 0.0
    %4298 = vmatpush1.msra.mxu0 %v3860
    %4299 = vmatprep.subr.mxu0 0.0
    %4300 = vmatpush1.msra.mxu0 %v3861
    %4301 = vmatprep.subr.mxu0 0.0
    %4302 = vmatpush1.msra.mxu0 %v3862
    %4303 = vmatprep.subr.mxu0 0.0
    %4304 = vmatpush1.msra.mxu0 %v3863
    %4305 = vmatprep.subr.mxu0 0.0
    %4306 = vmatpush1.msra.mxu0 0.0
    %4307 = vmatprep.subr.mxu0 0.0
    %4308 = vmatpush1.msra.mxu0 0.0
    %4309 = vmatprep.subr.mxu0 0.0
    %4310 = vmatpush1.msra.mxu0 0.0
    %4311 = vmatprep.subr.mxu0 0.0
    %4312 = vmatpush1.msra.mxu0 0.0
    %4313 = vmatprep.subr.mxu0 0.0
    %4314 = vmatpush1.msra.mxu0 0.0
    %4315 = vmatprep.subr.mxu0 0.0
    %4316 = vmatpush1.msra.mxu0 0.0
    %4317 = vmatprep.subr.mxu0 0.0
    %4318 = vmatpush1.msra.mxu0 0.0
    %4319 = vmatprep.subr.mxu0 0.0
    %4320 = vmatpush1.msra.mxu0 0.0
    %4321 = vmatprep.subr.mxu0 0.0
    %4322 = vmatpush1.msra.mxu0 0.0
    %4323 = vmatprep.subr.mxu0 0.0
    %4324 = vmatpush1.msra.mxu0 0.0
    %4325 = vmatprep.subr.mxu0 0.0
    %4326 = vmatpush1.msra.mxu0 0.0
    %4327 = vmatprep.subr.mxu0 0.0
    %4328 = vmatpush1.msra.mxu0 0.0
    %4329 = vmatprep.subr.mxu0 0.0
    %4330 = vmatpush1.msra.mxu0 0.0
    %4331 = vmatprep.subr.mxu0 0.0
    %4332 = vmatpush1.msra.mxu0 0.0
    %4333 = vmatprep.subr.mxu0 0.0
    %4334 = vmatpush1.msra.mxu0 0.0
    %4335 = vmatprep.subr.mxu0 0.0
    %4336 = vmatpush1.msra.mxu0 0.0
    %4337 = vmatprep.subr.mxu0 0.0
    %4338 = vmatpush1.msra.mxu0 0.0
    %4339 = vmatprep.subr.mxu0 0.0
    %4340 = vmatpush1.msra.mxu0 0.0
    %4341 = vmatprep.subr.mxu0 0.0
    %4342 = vmatpush1.msra.mxu0 0.0
    %4343 = vmatprep.subr.mxu0 0.0
    %4344 = vmatpush1.msra.mxu0 0.0
    %4345 = vmatprep.subr.mxu0 0.0
    %4346 = vmatpush1.msra.mxu0 0.0
    %4347 = vmatprep.subr.mxu0 0.0
    %4348 = vmatpush1.msra.mxu0 0.0
    %4349 = vmatprep.subr.mxu0 0.0
    %4350 = vmatpush1.msra.mxu0 0.0
    %4351 = vmatprep.subr.mxu0 0.0
    %4352 = vmatpush1.msra.mxu0 0.0
    %4353 = vmatprep.subr.mxu0 0.0
    %4354 = vmatpush1.msra.mxu0 0.0
    %4355 = vmatprep.subr.mxu0 0.0
    %4356 = vmatpush1.msra.mxu0 0.0
    %4357 = vmatprep.subr.mxu0 0.0
    %4358 = vmatpush1.msra.mxu0 0.0
    %4359 = vmatprep.subr.mxu0 0.0
    %4360 = vmatpush1.msra.mxu0 0.0
    %4361 = vmatprep.mubr.f32.mxu0 0.0
    %4362 = vmatmul.mubr.f32.gmra.mrb[0].mxu0 %v4015
    %v4363 = vpop.f32.mrb[0].mxu0
    %v4364 = vadd.f32 %v3932, %v4363
    %v4365 = vpop.f32.mrb[0].mxu0
    %4366 = vdwg.mxu0
    %4367 = vmatprep.subr.mxu0 0.0
    %4368 = vmatpush1.msra.mxu0 %v3864
    %4369 = vmatprep.subr.mxu0 0.0
    %4370 = vmatpush1.msra.mxu0 %v3865
    %4371 = vmatprep.subr.mxu0 0.0
    %4372 = vmatpush1.msra.mxu0 %v3866
    %4373 = vmatprep.subr.mxu0 0.0
    %4374 = vmatpush1.msra.mxu0 %v3867
    %4375 = vmatprep.subr.mxu0 0.0
    %4376 = vmatpush1.msra.mxu0 0.0
    %4377 = vmatprep.subr.mxu0 0.0
    %4378 = vmatpush1.msra.mxu0 0.0
    %4379 = vmatprep.subr.mxu0 0.0
    %4380 = vmatpush1.msra.mxu0 0.0
    %4381 = vmatprep.subr.mxu0 0.0
    %4382 = vmatpush1.msra.mxu0 0.0
    %4383 = vmatprep.subr.mxu0 0.0
    %4384 = vmatpush1.msra.mxu0 0.0
    %4385 = vmatprep.subr.mxu0 0.0
    %4386 = vmatpush1.msra.mxu0 0.0
    %4387 = vmatprep.subr.mxu0 0.0
    %4388 = vmatpush1.msra.mxu0 0.0
    %4389 = vmatprep.subr.mxu0 0.0
    %4390 = vmatpush1.msra.mxu0 0.0
    %4391 = vmatprep.subr.mxu0 0.0
    %4392 = vmatpush1.msra.mxu0 0.0
    %4393 = vmatprep.subr.mxu0 0.0
    %4394 = vmatpush1.msra.mxu0 0.0
    %4395 = vmatprep.subr.mxu0 0.0
    %4396 = vmatpush1.msra.mxu0 0.0
    %4397 = vmatprep.subr.mxu0 0.0
    %4398 = vmatpush1.msra.mxu0 0.0
    %4399 = vmatprep.subr.mxu0 0.0
    %4400 = vmatpush1.msra.mxu0 0.0
    %4401 = vmatprep.subr.mxu0 0.0
    %4402 = vmatpush1.msra.mxu0 0.0
    %4403 = vmatprep.subr.mxu0 0.0
    %4404 = vmatpush1.msra.mxu0 0.0
    %4405 = vmatprep.subr.mxu0 0.0
    %4406 = vmatpush1.msra.mxu0 0.0
    %4407 = vmatprep.subr.mxu0 0.0
    %4408 = vmatpush1.msra.mxu0 0.0
    %4409 = vmatprep.subr.mxu0 0.0
    %4410 = vmatpush1.msra.mxu0 0.0
    %4411 = vmatprep.subr.mxu0 0.0
    %4412 = vmatpush1.msra.mxu0 0.0
    %4413 = vmatprep.subr.mxu0 0.0
    %4414 = vmatpush1.msra.mxu0 0.0
    %4415 = vmatprep.subr.mxu0 0.0
    %4416 = vmatpush1.msra.mxu0 0.0
    %4417 = vmatprep.subr.mxu0 0.0
    %4418 = vmatpush1.msra.mxu0 0.0
    %4419 = vmatprep.subr.mxu0 0.0
    %4420 = vmatpush1.msra.mxu0 0.0
    %4421 = vmatprep.subr.mxu0 0.0
    %4422 = vmatpush1.msra.mxu0 0.0
    %4423 = vmatprep.subr.mxu0 0.0
    %4424 = vmatpush1.msra.mxu0 0.0
    %4425 = vmatprep.subr.mxu0 0.0
    %4426 = vmatpush1.msra.mxu0 0.0
    %4427 = vmatprep.subr.mxu0 0.0
    %4428 = vmatpush1.msra.mxu0 0.0
    %4429 = vmatprep.subr.mxu0 0.0
    %4430 = vmatpush1.msra.mxu0 0.0
    %4431 = vmatprep.mubr.f32.mxu0 0.0
    %4432 = vmatmul.mubr.f32.gmra.mrb[0].mxu0 %v3942
    %v4433 = vpop.f32.mrb[0].mxu0
    %v4434 = vadd.f32 %v3936, %v4433
    %v4435 = vpop.f32.mrb[0].mxu0
    %4436 = vdwg.mxu0
    %4437 = vmatprep.subr.mxu0 0.0
    %4438 = vmatpush1.msra.mxu0 %v3864
    %4439 = vmatprep.subr.mxu0 0.0
    %4440 = vmatpush1.msra.mxu0 %v3865
    %4441 = vmatprep.subr.mxu0 0.0
    %4442 = vmatpush1.msra.mxu0 %v3866
    %4443 = vmatprep.subr.mxu0 0.0
    %4444 = vmatpush1.msra.mxu0 %v3867
    %4445 = vmatprep.subr.mxu0 0.0
    %4446 = vmatpush1.msra.mxu0 0.0
    %4447 = vmatprep.subr.mxu0 0.0
    %4448 = vmatpush1.msra.mxu0 0.0
    %4449 = vmatprep.subr.mxu0 0.0
    %4450 = vmatpush1.msra.mxu0 0.0
    %4451 = vmatprep.subr.mxu0 0.0
    %4452 = vmatpush1.msra.mxu0 0.0
    %4453 = vmatprep.subr.mxu0 0.0
    %4454 = vmatpush1.msra.mxu0 0.0
    %4455 = vmatprep.subr.mxu0 0.0
    %4456 = vmatpush1.msra.mxu0 0.0
    %4457 = vmatprep.subr.mxu0 0.0
    %4458 = vmatpush1.msra.mxu0 0.0
    %4459 = vmatprep.subr.mxu0 0.0
    %4460 = vmatpush1.msra.mxu0 0.0
    %4461 = vmatprep.subr.mxu0 0.0
    %4462 = vmatpush1.msra.mxu0 0.0
    %4463 = vmatprep.subr.mxu0 0.0
    %4464 = vmatpush1.msra.mxu0 0.0
    %4465 = vmatprep.subr.mxu0 0.0
    %4466 = vmatpush1.msra.mxu0 0.0
    %4467 = vmatprep.subr.mxu0 0.0
    %4468 = vmatpush1.msra.mxu0 0.0
    %4469 = vmatprep.subr.mxu0 0.0
    %4470 = vmatpush1.msra.mxu0 0.0
    %4471 = vmatprep.subr.mxu0 0.0
    %4472 = vmatpush1.msra.mxu0 0.0
    %4473 = vmatprep.subr.mxu0 0.0
    %4474 = vmatpush1.msra.mxu0 0.0
    %4475 = vmatprep.subr.mxu0 0.0
    %4476 = vmatpush1.msra.mxu0 0.0
    %4477 = vmatprep.subr.mxu0 0.0
    %4478 = vmatpush1.msra.mxu0 0.0
    %4479 = vmatprep.subr.mxu0 0.0
    %4480 = vmatpush1.msra.mxu0 0.0
    %4481 = vmatprep.subr.mxu0 0.0
    %4482 = vmatpush1.msra.mxu0 0.0
    %4483 = vmatprep.subr.mxu0 0.0
    %4484 = vmatpush1.msra.mxu0 0.0
    %4485 = vmatprep.subr.mxu0 0.0
    %4486 = vmatpush1.msra.mxu0 0.0
    %4487 = vmatprep.subr.mxu0 0.0
    %4488 = vmatpush1.msra.mxu0 0.0
    %4489 = vmatprep.subr.mxu0 0.0
    %4490 = vmatpush1.msra.mxu0 0.0
    %4491 = vmatprep.subr.mxu0 0.0
    %4492 = vmatpush1.msra.mxu0 0.0
    %4493 = vmatprep.subr.mxu0 0.0
    %4494 = vmatpush1.msra.mxu0 0.0
    %4495 = vmatprep.subr.mxu0 0.0
    %4496 = vmatpush1.msra.mxu0 0.0
    %4497 = vmatprep.subr.mxu0 0.0
    %4498 = vmatpush1.msra.mxu0 0.0
    %4499 = vmatprep.subr.mxu0 0.0
    %4500 = vmatpush1.msra.mxu0 0.0
    %4501 = vmatprep.mubr.f32.mxu0 0.0
    %4502 = vmatmul.mubr.f32.gmra.mrb[0].mxu0 %v4015
    %v4503 = vpop.f32.mrb[0].mxu0
    %v4504 = vadd.f32 %v3936, %v4503
    %v4505 = vpop.f32.mrb[0].mxu0
    %4506 = vdwg.mxu0
    %v4511 = vlaneseq
    %v4512 = vshrl.u32 %v4511, 7
    %v4513 = vsub.s32 0, %v4512
    %v4514 = vrot.slane %v3888, %v4513
    %v4515 = vlaneseq
    %v4516 = vshrl.u32 %v4515, 7
    %v4517 = vsub.s32 0, %v4516
    %v4518 = vrot.slane %v3889, %v4517
    %v4519 = vlaneseq
    %v4520 = vshrl.u32 %v4519, 7
    %v4521 = vsub.s32 0, %v4520
    %v4522 = vrot.slane %v3890, %v4521
    %v4523 = vlaneseq
    %v4524 = vshrl.u32 %v4523, 7
    %v4525 = vsub.s32 0, %v4524
    %v4526 = vrot.slane %v3891, %v4525
    %v4532 = vsel %vm183, %v92, 0
    %4534 = vmatprep.subr.mxu0 0.0
    %4535 = vmatpush1.msra.mxu0 %v3872
    %4536 = vmatprep.subr.mxu0 0.0
    %4537 = vmatpush1.msra.mxu0 %v3873
    %4538 = vmatprep.subr.mxu0 0.0
    %4539 = vmatpush1.msra.mxu0 %v3874
    %4540 = vmatprep.subr.mxu0 0.0
    %4541 = vmatpush1.msra.mxu0 %v3875
    %4542 = vmatprep.subr.mxu0 0.0
    %4543 = vmatpush1.msra.mxu0 0.0
    %4544 = vmatprep.subr.mxu0 0.0
    %4545 = vmatpush1.msra.mxu0 0.0
    %4546 = vmatprep.subr.mxu0 0.0
    %4547 = vmatpush1.msra.mxu0 0.0
    %4548 = vmatprep.subr.mxu0 0.0
    %4549 = vmatpush1.msra.mxu0 0.0
    %4550 = vmatprep.subr.mxu0 0.0
    %4551 = vmatpush1.msra.mxu0 0.0
    %4552 = vmatprep.subr.mxu0 0.0
    %4553 = vmatpush1.msra.mxu0 0.0
    %4554 = vmatprep.subr.mxu0 0.0
    %4555 = vmatpush1.msra.mxu0 0.0
    %4556 = vmatprep.subr.mxu0 0.0
    %4557 = vmatpush1.msra.mxu0 0.0
    %4558 = vmatprep.subr.mxu0 0.0
    %4559 = vmatpush1.msra.mxu0 0.0
    %4560 = vmatprep.subr.mxu0 0.0
    %4561 = vmatpush1.msra.mxu0 0.0
    %4562 = vmatprep.subr.mxu0 0.0
    %4563 = vmatpush1.msra.mxu0 0.0
    %4564 = vmatprep.subr.mxu0 0.0
    %4565 = vmatpush1.msra.mxu0 0.0
    %4566 = vmatprep.subr.mxu0 0.0
    %4567 = vmatpush1.msra.mxu0 0.0
    %4568 = vmatprep.subr.mxu0 0.0
    %4569 = vmatpush1.msra.mxu0 0.0
    %4570 = vmatprep.subr.mxu0 0.0
    %4571 = vmatpush1.msra.mxu0 0.0
    %4572 = vmatprep.subr.mxu0 0.0
    %4573 = vmatpush1.msra.mxu0 0.0
    %4574 = vmatprep.subr.mxu0 0.0
    %4575 = vmatpush1.msra.mxu0 0.0
    %4576 = vmatprep.subr.mxu0 0.0
    %4577 = vmatpush1.msra.mxu0 0.0
    %4578 = vmatprep.subr.mxu0 0.0
    %4579 = vmatpush1.msra.mxu0 0.0
    %4580 = vmatprep.subr.mxu0 0.0
    %4581 = vmatpush1.msra.mxu0 0.0
    %4582 = vmatprep.subr.mxu0 0.0
    %4583 = vmatpush1.msra.mxu0 0.0
    %4584 = vmatprep.subr.mxu0 0.0
    %4585 = vmatpush1.msra.mxu0 0.0
    %4586 = vmatprep.subr.mxu0 0.0
    %4587 = vmatpush1.msra.mxu0 0.0
    %4588 = vmatprep.subr.mxu0 0.0
    %4589 = vmatpush1.msra.mxu0 0.0
    %4590 = vmatprep.subr.mxu0 0.0
    %4591 = vmatpush1.msra.mxu0 0.0
    %4592 = vmatprep.subr.mxu0 0.0
    %4593 = vmatpush1.msra.mxu0 0.0
    %4594 = vmatprep.subr.mxu0 0.0
    %4595 = vmatpush1.msra.mxu0 0.0
    %4596 = vmatprep.subr.mxu0 0.0
    %4597 = vmatpush1.msra.mxu0 0.0
    %4598 = vmatprep.mubr.f32.mxu0 0.0
    %4599 = vmatmul.mubr.f32.gmra.mrb[0].mxu0 %v4532
    %v4600 = vpop.f32.mrb[0].mxu0
    %v4601 = vadd.f32 %v4514, %v4600
    %v4602 = vpop.f32.mrb[0].mxu0
    %4603 = vdwg.mxu0
    %v4605 = vsel %vm183, %v93, 0
    %4607 = vmatprep.subr.mxu0 0.0
    %4608 = vmatpush1.msra.mxu0 %v3872
    %4609 = vmatprep.subr.mxu0 0.0
    %4610 = vmatpush1.msra.mxu0 %v3873
    %4611 = vmatprep.subr.mxu0 0.0
    %4612 = vmatpush1.msra.mxu0 %v3874
    %4613 = vmatprep.subr.mxu0 0.0
    %4614 = vmatpush1.msra.mxu0 %v3875
    %4615 = vmatprep.subr.mxu0 0.0
    %4616 = vmatpush1.msra.mxu0 0.0
    %4617 = vmatprep.subr.mxu0 0.0
    %4618 = vmatpush1.msra.mxu0 0.0
    %4619 = vmatprep.subr.mxu0 0.0
    %4620 = vmatpush1.msra.mxu0 0.0
    %4621 = vmatprep.subr.mxu0 0.0
    %4622 = vmatpush1.msra.mxu0 0.0
    %4623 = vmatprep.subr.mxu0 0.0
    %4624 = vmatpush1.msra.mxu0 0.0
    %4625 = vmatprep.subr.mxu0 0.0
    %4626 = vmatpush1.msra.mxu0 0.0
    %4627 = vmatprep.subr.mxu0 0.0
    %4628 = vmatpush1.msra.mxu0 0.0
    %4629 = vmatprep.subr.mxu0 0.0
    %4630 = vmatpush1.msra.mxu0 0.0
    %4631 = vmatprep.subr.mxu0 0.0
    %4632 = vmatpush1.msra.mxu0 0.0
    %4633 = vmatprep.subr.mxu0 0.0
    %4634 = vmatpush1.msra.mxu0 0.0
    %4635 = vmatprep.subr.mxu0 0.0
    %4636 = vmatpush1.msra.mxu0 0.0
    %4637 = vmatprep.subr.mxu0 0.0
    %4638 = vmatpush1.msra.mxu0 0.0
    %4639 = vmatprep.subr.mxu0 0.0
    %4640 = vmatpush1.msra.mxu0 0.0
    %4641 = vmatprep.subr.mxu0 0.0
    %4642 = vmatpush1.msra.mxu0 0.0
    %4643 = vmatprep.subr.mxu0 0.0
    %4644 = vmatpush1.msra.mxu0 0.0
    %4645 = vmatprep.subr.mxu0 0.0
    %4646 = vmatpush1.msra.mxu0 0.0
    %4647 = vmatprep.subr.mxu0 0.0
    %4648 = vmatpush1.msra.mxu0 0.0
    %4649 = vmatprep.subr.mxu0 0.0
    %4650 = vmatpush1.msra.mxu0 0.0
    %4651 = vmatprep.subr.mxu0 0.0
    %4652 = vmatpush1.msra.mxu0 0.0
    %4653 = vmatprep.subr.mxu0 0.0
    %4654 = vmatpush1.msra.mxu0 0.0
    %4655 = vmatprep.subr.mxu0 0.0
    %4656 = vmatpush1.msra.mxu0 0.0
    %4657 = vmatprep.subr.mxu0 0.0
    %4658 = vmatpush1.msra.mxu0 0.0
    %4659 = vmatprep.subr.mxu0 0.0
    %4660 = vmatpush1.msra.mxu0 0.0
    %4661 = vmatprep.subr.mxu0 0.0
    %4662 = vmatpush1.msra.mxu0 0.0
    %4663 = vmatprep.subr.mxu0 0.0
    %4664 = vmatpush1.msra.mxu0 0.0
    %4665 = vmatprep.subr.mxu0 0.0
    %4666 = vmatpush1.msra.mxu0 0.0
    %4667 = vmatprep.subr.mxu0 0.0
    %4668 = vmatpush1.msra.mxu0 0.0
    %4669 = vmatprep.subr.mxu0 0.0
    %4670 = vmatpush1.msra.mxu0 0.0
    %4671 = vmatprep.mubr.f32.mxu0 0.0
    %4672 = vmatmul.mubr.f32.gmra.mrb[0].mxu0 %v4605
    %v4673 = vpop.f32.mrb[0].mxu0
    %v4674 = vadd.f32 %v4514, %v4673
    %v4675 = vpop.f32.mrb[0].mxu0
    %4676 = vdwg.mxu0
    %4677 = vmatprep.subr.mxu0 0.0
    %4678 = vmatpush1.msra.mxu0 %v3876
    %4679 = vmatprep.subr.mxu0 0.0
    %4680 = vmatpush1.msra.mxu0 %v3877
    %4681 = vmatprep.subr.mxu0 0.0
    %4682 = vmatpush1.msra.mxu0 %v3878
    %4683 = vmatprep.subr.mxu0 0.0
    %4684 = vmatpush1.msra.mxu0 %v3879
    %4685 = vmatprep.subr.mxu0 0.0
    %4686 = vmatpush1.msra.mxu0 0.0
    %4687 = vmatprep.subr.mxu0 0.0
    %4688 = vmatpush1.msra.mxu0 0.0
    %4689 = vmatprep.subr.mxu0 0.0
    %4690 = vmatpush1.msra.mxu0 0.0
    %4691 = vmatprep.subr.mxu0 0.0
    %4692 = vmatpush1.msra.mxu0 0.0
    %4693 = vmatprep.subr.mxu0 0.0
    %4694 = vmatpush1.msra.mxu0 0.0
    %4695 = vmatprep.subr.mxu0 0.0
    %4696 = vmatpush1.msra.mxu0 0.0
    %4697 = vmatprep.subr.mxu0 0.0
    %4698 = vmatpush1.msra.mxu0 0.0
    %4699 = vmatprep.subr.mxu0 0.0
    %4700 = vmatpush1.msra.mxu0 0.0
    %4701 = vmatprep.subr.mxu0 0.0
    %4702 = vmatpush1.msra.mxu0 0.0
    %4703 = vmatprep.subr.mxu0 0.0
    %4704 = vmatpush1.msra.mxu0 0.0
    %4705 = vmatprep.subr.mxu0 0.0
    %4706 = vmatpush1.msra.mxu0 0.0
    %4707 = vmatprep.subr.mxu0 0.0
    %4708 = vmatpush1.msra.mxu0 0.0
    %4709 = vmatprep.subr.mxu0 0.0
    %4710 = vmatpush1.msra.mxu0 0.0
    %4711 = vmatprep.subr.mxu0 0.0
    %4712 = vmatpush1.msra.mxu0 0.0
    %4713 = vmatprep.subr.mxu0 0.0
    %4714 = vmatpush1.msra.mxu0 0.0
    %4715 = vmatprep.subr.mxu0 0.0
    %4716 = vmatpush1.msra.mxu0 0.0
    %4717 = vmatprep.subr.mxu0 0.0
    %4718 = vmatpush1.msra.mxu0 0.0
    %4719 = vmatprep.subr.mxu0 0.0
    %4720 = vmatpush1.msra.mxu0 0.0
    %4721 = vmatprep.subr.mxu0 0.0
    %4722 = vmatpush1.msra.mxu0 0.0
    %4723 = vmatprep.subr.mxu0 0.0
    %4724 = vmatpush1.msra.mxu0 0.0
    %4725 = vmatprep.subr.mxu0 0.0
    %4726 = vmatpush1.msra.mxu0 0.0
    %4727 = vmatprep.subr.mxu0 0.0
    %4728 = vmatpush1.msra.mxu0 0.0
    %4729 = vmatprep.subr.mxu0 0.0
    %4730 = vmatpush1.msra.mxu0 0.0
    %4731 = vmatprep.subr.mxu0 0.0
    %4732 = vmatpush1.msra.mxu0 0.0
    %4733 = vmatprep.subr.mxu0 0.0
    %4734 = vmatpush1.msra.mxu0 0.0
    %4735 = vmatprep.subr.mxu0 0.0
    %4736 = vmatpush1.msra.mxu0 0.0
    %4737 = vmatprep.subr.mxu0 0.0
    %4738 = vmatpush1.msra.mxu0 0.0
    %4739 = vmatprep.subr.mxu0 0.0
    %4740 = vmatpush1.msra.mxu0 0.0
    %4741 = vmatprep.mubr.f32.mxu0 0.0
    %4742 = vmatmul.mubr.f32.gmra.mrb[0].mxu0 %v4532
    %v4743 = vpop.f32.mrb[0].mxu0
    %v4744 = vadd.f32 %v4518, %v4743
    %v4745 = vpop.f32.mrb[0].mxu0
    %4746 = vdwg.mxu0
    %4747 = vmatprep.subr.mxu0 0.0
    %4748 = vmatpush1.msra.mxu0 %v3876
    %4749 = vmatprep.subr.mxu0 0.0
    %4750 = vmatpush1.msra.mxu0 %v3877
    %4751 = vmatprep.subr.mxu0 0.0
    %4752 = vmatpush1.msra.mxu0 %v3878
    %4753 = vmatprep.subr.mxu0 0.0
    %4754 = vmatpush1.msra.mxu0 %v3879
    %4755 = vmatprep.subr.mxu0 0.0
    %4756 = vmatpush1.msra.mxu0 0.0
    %4757 = vmatprep.subr.mxu0 0.0
    %4758 = vmatpush1.msra.mxu0 0.0
    %4759 = vmatprep.subr.mxu0 0.0
    %4760 = vmatpush1.msra.mxu0 0.0
    %4761 = vmatprep.subr.mxu0 0.0
    %4762 = vmatpush1.msra.mxu0 0.0
    %4763 = vmatprep.subr.mxu0 0.0
    %4764 = vmatpush1.msra.mxu0 0.0
    %4765 = vmatprep.subr.mxu0 0.0
    %4766 = vmatpush1.msra.mxu0 0.0
    %4767 = vmatprep.subr.mxu0 0.0
    %4768 = vmatpush1.msra.mxu0 0.0
    %4769 = vmatprep.subr.mxu0 0.0
    %4770 = vmatpush1.msra.mxu0 0.0
    %4771 = vmatprep.subr.mxu0 0.0
    %4772 = vmatpush1.msra.mxu0 0.0
    %4773 = vmatprep.subr.mxu0 0.0
    %4774 = vmatpush1.msra.mxu0 0.0
    %4775 = vmatprep.subr.mxu0 0.0
    %4776 = vmatpush1.msra.mxu0 0.0
    %4777 = vmatprep.subr.mxu0 0.0
    %4778 = vmatpush1.msra.mxu0 0.0
    %4779 = vmatprep.subr.mxu0 0.0
    %4780 = vmatpush1.msra.mxu0 0.0
    %4781 = vmatprep.subr.mxu0 0.0
    %4782 = vmatpush1.msra.mxu0 0.0
    %4783 = vmatprep.subr.mxu0 0.0
    %4784 = vmatpush1.msra.mxu0 0.0
    %4785 = vmatprep.subr.mxu0 0.0
    %4786 = vmatpush1.msra.mxu0 0.0
    %4787 = vmatprep.subr.mxu0 0.0
    %4788 = vmatpush1.msra.mxu0 0.0
    %4789 = vmatprep.subr.mxu0 0.0
    %4790 = vmatpush1.msra.mxu0 0.0
    %4791 = vmatprep.subr.mxu0 0.0
    %4792 = vmatpush1.msra.mxu0 0.0
    %4793 = vmatprep.subr.mxu0 0.0
    %4794 = vmatpush1.msra.mxu0 0.0
    %4795 = vmatprep.subr.mxu0 0.0
    %4796 = vmatpush1.msra.mxu0 0.0
    %4797 = vmatprep.subr.mxu0 0.0
    %4798 = vmatpush1.msra.mxu0 0.0
    %4799 = vmatprep.subr.mxu0 0.0
    %4800 = vmatpush1.msra.mxu0 0.0
    %4801 = vmatprep.subr.mxu0 0.0
    %4802 = vmatpush1.msra.mxu0 0.0
    %4803 = vmatprep.subr.mxu0 0.0
    %4804 = vmatpush1.msra.mxu0 0.0
    %4805 = vmatprep.subr.mxu0 0.0
    %4806 = vmatpush1.msra.mxu0 0.0
    %4807 = vmatprep.subr.mxu0 0.0
    %4808 = vmatpush1.msra.mxu0 0.0
    %4809 = vmatprep.subr.mxu0 0.0
    %4810 = vmatpush1.msra.mxu0 0.0
    %4811 = vmatprep.mubr.f32.mxu0 0.0
    %4812 = vmatmul.mubr.f32.gmra.mrb[0].mxu0 %v4605
    %v4813 = vpop.f32.mrb[0].mxu0
    %v4814 = vadd.f32 %v4518, %v4813
    %v4815 = vpop.f32.mrb[0].mxu0
    %4816 = vdwg.mxu0
    %4817 = vmatprep.subr.mxu0 0.0
    %4818 = vmatpush1.msra.mxu0 %v3880
    %4819 = vmatprep.subr.mxu0 0.0
    %4820 = vmatpush1.msra.mxu0 %v3881
    %4821 = vmatprep.subr.mxu0 0.0
    %4822 = vmatpush1.msra.mxu0 %v3882
    %4823 = vmatprep.subr.mxu0 0.0
    %4824 = vmatpush1.msra.mxu0 %v3883
    %4825 = vmatprep.subr.mxu0 0.0
    %4826 = vmatpush1.msra.mxu0 0.0
    %4827 = vmatprep.subr.mxu0 0.0
    %4828 = vmatpush1.msra.mxu0 0.0
    %4829 = vmatprep.subr.mxu0 0.0
    %4830 = vmatpush1.msra.mxu0 0.0
    %4831 = vmatprep.subr.mxu0 0.0
    %4832 = vmatpush1.msra.mxu0 0.0
    %4833 = vmatprep.subr.mxu0 0.0
    %4834 = vmatpush1.msra.mxu0 0.0
    %4835 = vmatprep.subr.mxu0 0.0
    %4836 = vmatpush1.msra.mxu0 0.0
    %4837 = vmatprep.subr.mxu0 0.0
    %4838 = vmatpush1.msra.mxu0 0.0
    %4839 = vmatprep.subr.mxu0 0.0
    %4840 = vmatpush1.msra.mxu0 0.0
    %4841 = vmatprep.subr.mxu0 0.0
    %4842 = vmatpush1.msra.mxu0 0.0
    %4843 = vmatprep.subr.mxu0 0.0
    %4844 = vmatpush1.msra.mxu0 0.0
    %4845 = vmatprep.subr.mxu0 0.0
    %4846 = vmatpush1.msra.mxu0 0.0
    %4847 = vmatprep.subr.mxu0 0.0
    %4848 = vmatpush1.msra.mxu0 0.0
    %4849 = vmatprep.subr.mxu0 0.0
    %4850 = vmatpush1.msra.mxu0 0.0
    %4851 = vmatprep.subr.mxu0 0.0
    %4852 = vmatpush1.msra.mxu0 0.0
    %4853 = vmatprep.subr.mxu0 0.0
    %4854 = vmatpush1.msra.mxu0 0.0
    %4855 = vmatprep.subr.mxu0 0.0
    %4856 = vmatpush1.msra.mxu0 0.0
    %4857 = vmatprep.subr.mxu0 0.0
    %4858 = vmatpush1.msra.mxu0 0.0
    %4859 = vmatprep.subr.mxu0 0.0
    %4860 = vmatpush1.msra.mxu0 0.0
    %4861 = vmatprep.subr.mxu0 0.0
    %4862 = vmatpush1.msra.mxu0 0.0
    %4863 = vmatprep.subr.mxu0 0.0
    %4864 = vmatpush1.msra.mxu0 0.0
    %4865 = vmatprep.subr.mxu0 0.0
    %4866 = vmatpush1.msra.mxu0 0.0
    %4867 = vmatprep.subr.mxu0 0.0
    %4868 = vmatpush1.msra.mxu0 0.0
    %4869 = vmatprep.subr.mxu0 0.0
    %4870 = vmatpush1.msra.mxu0 0.0
    %4871 = vmatprep.subr.mxu0 0.0
    %4872 = vmatpush1.msra.mxu0 0.0
    %4873 = vmatprep.subr.mxu0 0.0
    %4874 = vmatpush1.msra.mxu0 0.0
    %4875 = vmatprep.subr.mxu0 0.0
    %4876 = vmatpush1.msra.mxu0 0.0
    %4877 = vmatprep.subr.mxu0 0.0
    %4878 = vmatpush1.msra.mxu0 0.0
    %4879 = vmatprep.subr.mxu0 0.0
    %4880 = vmatpush1.msra.mxu0 0.0
    %4881 = vmatprep.mubr.f32.mxu0 0.0
    %4882 = vmatmul.mubr.f32.gmra.mrb[0].mxu0 %v4532
    %v4883 = vpop.f32.mrb[0].mxu0
    %v4884 = vadd.f32 %v4522, %v4883
    %v4885 = vpop.f32.mrb[0].mxu0
    %4886 = vdwg.mxu0
    %4887 = vmatprep.subr.mxu0 0.0
    %4888 = vmatpush1.msra.mxu0 %v3880
    %4889 = vmatprep.subr.mxu0 0.0
    %4890 = vmatpush1.msra.mxu0 %v3881
    %4891 = vmatprep.subr.mxu0 0.0
    %4892 = vmatpush1.msra.mxu0 %v3882
    %4893 = vmatprep.subr.mxu0 0.0
    %4894 = vmatpush1.msra.mxu0 %v3883
    %4895 = vmatprep.subr.mxu0 0.0
    %4896 = vmatpush1.msra.mxu0 0.0
    %4897 = vmatprep.subr.mxu0 0.0
    %4898 = vmatpush1.msra.mxu0 0.0
    %4899 = vmatprep.subr.mxu0 0.0
    %4900 = vmatpush1.msra.mxu0 0.0
    %4901 = vmatprep.subr.mxu0 0.0
    %4902 = vmatpush1.msra.mxu0 0.0
    %4903 = vmatprep.subr.mxu0 0.0
    %4904 = vmatpush1.msra.mxu0 0.0
    %4905 = vmatprep.subr.mxu0 0.0
    %4906 = vmatpush1.msra.mxu0 0.0
    %4907 = vmatprep.subr.mxu0 0.0
    %4908 = vmatpush1.msra.mxu0 0.0
    %4909 = vmatprep.subr.mxu0 0.0
    %4910 = vmatpush1.msra.mxu0 0.0
    %4911 = vmatprep.subr.mxu0 0.0
    %4912 = vmatpush1.msra.mxu0 0.0
    %4913 = vmatprep.subr.mxu0 0.0
    %4914 = vmatpush1.msra.mxu0 0.0
    %4915 = vmatprep.subr.mxu0 0.0
    %4916 = vmatpush1.msra.mxu0 0.0
    %4917 = vmatprep.subr.mxu0 0.0
    %4918 = vmatpush1.msra.mxu0 0.0
    %4919 = vmatprep.subr.mxu0 0.0
    %4920 = vmatpush1.msra.mxu0 0.0
    %4921 = vmatprep.subr.mxu0 0.0
    %4922 = vmatpush1.msra.mxu0 0.0
    %4923 = vmatprep.subr.mxu0 0.0
    %4924 = vmatpush1.msra.mxu0 0.0
    %4925 = vmatprep.subr.mxu0 0.0
    %4926 = vmatpush1.msra.mxu0 0.0
    %4927 = vmatprep.subr.mxu0 0.0
    %4928 = vmatpush1.msra.mxu0 0.0
    %4929 = vmatprep.subr.mxu0 0.0
    %4930 = vmatpush1.msra.mxu0 0.0
    %4931 = vmatprep.subr.mxu0 0.0
    %4932 = vmatpush1.msra.mxu0 0.0
    %4933 = vmatprep.subr.mxu0 0.0
    %4934 = vmatpush1.msra.mxu0 0.0
    %4935 = vmatprep.subr.mxu0 0.0
    %4936 = vmatpush1.msra.mxu0 0.0
    %4937 = vmatprep.subr.mxu0 0.0
    %4938 = vmatpush1.msra.mxu0 0.0
    %4939 = vmatprep.subr.mxu0 0.0
    %4940 = vmatpush1.msra.mxu0 0.0
    %4941 = vmatprep.subr.mxu0 0.0
    %4942 = vmatpush1.msra.mxu0 0.0
    %4943 = vmatprep.subr.mxu0 0.0
    %4944 = vmatpush1.msra.mxu0 0.0
    %4945 = vmatprep.subr.mxu0 0.0
    %4946 = vmatpush1.msra.mxu0 0.0
    %4947 = vmatprep.subr.mxu0 0.0
    %4948 = vmatpush1.msra.mxu0 0.0
    %4949 = vmatprep.subr.mxu0 0.0
    %4950 = vmatpush1.msra.mxu0 0.0
    %4951 = vmatprep.mubr.f32.mxu0 0.0
    %4952 = vmatmul.mubr.f32.gmra.mrb[0].mxu0 %v4605
    %v4953 = vpop.f32.mrb[0].mxu0
    %v4954 = vadd.f32 %v4522, %v4953
    %v4955 = vpop.f32.mrb[0].mxu0
    %4956 = vdwg.mxu0
    %4957 = vmatprep.subr.mxu0 0.0
    %4958 = vmatpush1.msra.mxu0 %v3884
    %4959 = vmatprep.subr.mxu0 0.0
    %4960 = vmatpush1.msra.mxu0 %v3885
    %4961 = vmatprep.subr.mxu0 0.0
    %4962 = vmatpush1.msra.mxu0 %v3886
    %4963 = vmatprep.subr.mxu0 0.0
    %4964 = vmatpush1.msra.mxu0 %v3887
    %4965 = vmatprep.subr.mxu0 0.0
    %4966 = vmatpush1.msra.mxu0 0.0
    %4967 = vmatprep.subr.mxu0 0.0
    %4968 = vmatpush1.msra.mxu0 0.0
    %4969 = vmatprep.subr.mxu0 0.0
    %4970 = vmatpush1.msra.mxu0 0.0
    %4971 = vmatprep.subr.mxu0 0.0
    %4972 = vmatpush1.msra.mxu0 0.0
    %4973 = vmatprep.subr.mxu0 0.0
    %4974 = vmatpush1.msra.mxu0 0.0
    %4975 = vmatprep.subr.mxu0 0.0
    %4976 = vmatpush1.msra.mxu0 0.0
    %4977 = vmatprep.subr.mxu0 0.0
    %4978 = vmatpush1.msra.mxu0 0.0
    %4979 = vmatprep.subr.mxu0 0.0
    %4980 = vmatpush1.msra.mxu0 0.0
    %4981 = vmatprep.subr.mxu0 0.0
    %4982 = vmatpush1.msra.mxu0 0.0
    %4983 = vmatprep.subr.mxu0 0.0
    %4984 = vmatpush1.msra.mxu0 0.0
    %4985 = vmatprep.subr.mxu0 0.0
    %4986 = vmatpush1.msra.mxu0 0.0
    %4987 = vmatprep.subr.mxu0 0.0
    %4988 = vmatpush1.msra.mxu0 0.0
    %4989 = vmatprep.subr.mxu0 0.0
    %4990 = vmatpush1.msra.mxu0 0.0
    %4991 = vmatprep.subr.mxu0 0.0
    %4992 = vmatpush1.msra.mxu0 0.0
    %4993 = vmatprep.subr.mxu0 0.0
    %4994 = vmatpush1.msra.mxu0 0.0
    %4995 = vmatprep.subr.mxu0 0.0
    %4996 = vmatpush1.msra.mxu0 0.0
    %4997 = vmatprep.subr.mxu0 0.0
    %4998 = vmatpush1.msra.mxu0 0.0
    %4999 = vmatprep.subr.mxu0 0.0
    %5000 = vmatpush1.msra.mxu0 0.0
    %5001 = vmatprep.subr.mxu0 0.0
    %5002 = vmatpush1.msra.mxu0 0.0
    %5003 = vmatprep.subr.mxu0 0.0
    %5004 = vmatpush1.msra.mxu0 0.0
    %5005 = vmatprep.subr.mxu0 0.0
    %5006 = vmatpush1.msra.mxu0 0.0
    %5007 = vmatprep.subr.mxu0 0.0
    %5008 = vmatpush1.msra.mxu0 0.0
    %5009 = vmatprep.subr.mxu0 0.0
    %5010 = vmatpush1.msra.mxu0 0.0
    %5011 = vmatprep.subr.mxu0 0.0
    %5012 = vmatpush1.msra.mxu0 0.0
    %5013 = vmatprep.subr.mxu0 0.0
    %5014 = vmatpush1.msra.mxu0 0.0
    %5015 = vmatprep.subr.mxu0 0.0
    %5016 = vmatpush1.msra.mxu0 0.0
    %5017 = vmatprep.subr.mxu0 0.0
    %5018 = vmatpush1.msra.mxu0 0.0
    %5019 = vmatprep.subr.mxu0 0.0
    %5020 = vmatpush1.msra.mxu0 0.0
    %5021 = vmatprep.mubr.f32.mxu0 0.0
    %5022 = vmatmul.mubr.f32.gmra.mrb[0].mxu0 %v4532
    %v5023 = vpop.f32.mrb[0].mxu0
    %v5024 = vadd.f32 %v4526, %v5023
    %v5025 = vpop.f32.mrb[0].mxu0
    %5026 = vdwg.mxu0
    %5027 = vmatprep.subr.mxu0 0.0
    %5028 = vmatpush1.msra.mxu0 %v3884
    %5029 = vmatprep.subr.mxu0 0.0
    %5030 = vmatpush1.msra.mxu0 %v3885
    %5031 = vmatprep.subr.mxu0 0.0
    %5032 = vmatpush1.msra.mxu0 %v3886
    %5033 = vmatprep.subr.mxu0 0.0
    %5034 = vmatpush1.msra.mxu0 %v3887
    %5035 = vmatprep.subr.mxu0 0.0
    %5036 = vmatpush1.msra.mxu0 0.0
    %5037 = vmatprep.subr.mxu0 0.0
    %5038 = vmatpush1.msra.mxu0 0.0
    %5039 = vmatprep.subr.mxu0 0.0
    %5040 = vmatpush1.msra.mxu0 0.0
    %5041 = vmatprep.subr.mxu0 0.0
    %5042 = vmatpush1.msra.mxu0 0.0
    %5043 = vmatprep.subr.mxu0 0.0
    %5044 = vmatpush1.msra.mxu0 0.0
    %5045 = vmatprep.subr.mxu0 0.0
    %5046 = vmatpush1.msra.mxu0 0.0
    %5047 = vmatprep.subr.mxu0 0.0
    %5048 = vmatpush1.msra.mxu0 0.0
    %5049 = vmatprep.subr.mxu0 0.0
    %5050 = vmatpush1.msra.mxu0 0.0
    %5051 = vmatprep.subr.mxu0 0.0
    %5052 = vmatpush1.msra.mxu0 0.0
    %5053 = vmatprep.subr.mxu0 0.0
    %5054 = vmatpush1.msra.mxu0 0.0
    %5055 = vmatprep.subr.mxu0 0.0
    %5056 = vmatpush1.msra.mxu0 0.0
    %5057 = vmatprep.subr.mxu0 0.0
    %5058 = vmatpush1.msra.mxu0 0.0
    %5059 = vmatprep.subr.mxu0 0.0
    %5060 = vmatpush1.msra.mxu0 0.0
    %5061 = vmatprep.subr.mxu0 0.0
    %5062 = vmatpush1.msra.mxu0 0.0
    %5063 = vmatprep.subr.mxu0 0.0
    %5064 = vmatpush1.msra.mxu0 0.0
    %5065 = vmatprep.subr.mxu0 0.0
    %5066 = vmatpush1.msra.mxu0 0.0
    %5067 = vmatprep.subr.mxu0 0.0
    %5068 = vmatpush1.msra.mxu0 0.0
    %5069 = vmatprep.subr.mxu0 0.0
    %5070 = vmatpush1.msra.mxu0 0.0
    %5071 = vmatprep.subr.mxu0 0.0
    %5072 = vmatpush1.msra.mxu0 0.0
    %5073 = vmatprep.subr.mxu0 0.0
    %5074 = vmatpush1.msra.mxu0 0.0
    %5075 = vmatprep.subr.mxu0 0.0
    %5076 = vmatpush1.msra.mxu0 0.0
    %5077 = vmatprep.subr.mxu0 0.0
    %5078 = vmatpush1.msra.mxu0 0.0
    %5079 = vmatprep.subr.mxu0 0.0
    %5080 = vmatpush1.msra.mxu0 0.0
    %5081 = vmatprep.subr.mxu0 0.0
    %5082 = vmatpush1.msra.mxu0 0.0
    %5083 = vmatprep.subr.mxu0 0.0
    %5084 = vmatpush1.msra.mxu0 0.0
    %5085 = vmatprep.subr.mxu0 0.0
    %5086 = vmatpush1.msra.mxu0 0.0
    %5087 = vmatprep.subr.mxu0 0.0
    %5088 = vmatpush1.msra.mxu0 0.0
    %5089 = vmatprep.subr.mxu0 0.0
    %5090 = vmatpush1.msra.mxu0 0.0
    %5091 = vmatprep.mubr.f32.mxu0 0.0
    %5092 = vmatmul.mubr.f32.gmra.mrb[0].mxu0 %v4605
    %v5093 = vpop.f32.mrb[0].mxu0
    %v5094 = vadd.f32 %v4526, %v5093
    %v5095 = vpop.f32.mrb[0].mxu0
    %5096 = vdwg.mxu0
    %v5101 = vlaneseq
    %v5102 = vshrl.u32 %v5101, 7
    %v5103 = vsub.s32 0, %v5102
    %v5104 = vrot.slane %v3908, %v5103
    %v5105 = vlaneseq
    %v5106 = vshrl.u32 %v5105, 7
    %v5107 = vsub.s32 0, %v5106
    %v5108 = vrot.slane %v3909, %v5107
    %v5109 = vlaneseq
    %v5110 = vshrl.u32 %v5109, 7
    %v5111 = vsub.s32 0, %v5110
    %v5112 = vrot.slane %v3910, %v5111
    %v5113 = vlaneseq
    %v5114 = vshrl.u32 %v5113, 7
    %v5115 = vsub.s32 0, %v5114
    %v5116 = vrot.slane %v3911, %v5115
    %5121 = vmatprep.subr.mxu0 0.0
    %5122 = vmatpush1.msra.mxu0 %v3892
    %5123 = vmatprep.subr.mxu0 0.0
    %5124 = vmatpush1.msra.mxu0 %v3893
    %5125 = vmatprep.subr.mxu0 0.0
    %5126 = vmatpush1.msra.mxu0 %v3894
    %5127 = vmatprep.subr.mxu0 0.0
    %5128 = vmatpush1.msra.mxu0 %v3895
    %5129 = vmatprep.subr.mxu0 0.0
    %5130 = vmatpush1.msra.mxu0 0.0
    %5131 = vmatprep.subr.mxu0 0.0
    %5132 = vmatpush1.msra.mxu0 0.0
    %5133 = vmatprep.subr.mxu0 0.0
    %5134 = vmatpush1.msra.mxu0 0.0
    %5135 = vmatprep.subr.mxu0 0.0
    %5136 = vmatpush1.msra.mxu0 0.0
    %5137 = vmatprep.subr.mxu0 0.0
    %5138 = vmatpush1.msra.mxu0 0.0
    %5139 = vmatprep.subr.mxu0 0.0
    %5140 = vmatpush1.msra.mxu0 0.0
    %5141 = vmatprep.subr.mxu0 0.0
    %5142 = vmatpush1.msra.mxu0 0.0
    %5143 = vmatprep.subr.mxu0 0.0
    %5144 = vmatpush1.msra.mxu0 0.0
    %5145 = vmatprep.subr.mxu0 0.0
    %5146 = vmatpush1.msra.mxu0 0.0
    %5147 = vmatprep.subr.mxu0 0.0
    %5148 = vmatpush1.msra.mxu0 0.0
    %5149 = vmatprep.subr.mxu0 0.0
    %5150 = vmatpush1.msra.mxu0 0.0
    %5151 = vmatprep.subr.mxu0 0.0
    %5152 = vmatpush1.msra.mxu0 0.0
    %5153 = vmatprep.subr.mxu0 0.0
    %5154 = vmatpush1.msra.mxu0 0.0
    %5155 = vmatprep.subr.mxu0 0.0
    %5156 = vmatpush1.msra.mxu0 0.0
    %5157 = vmatprep.subr.mxu0 0.0
    %5158 = vmatpush1.msra.mxu0 0.0
    %5159 = vmatprep.subr.mxu0 0.0
    %5160 = vmatpush1.msra.mxu0 0.0
    %5161 = vmatprep.subr.mxu0 0.0
    %5162 = vmatpush1.msra.mxu0 0.0
    %5163 = vmatprep.subr.mxu0 0.0
    %5164 = vmatpush1.msra.mxu0 0.0
    %5165 = vmatprep.subr.mxu0 0.0
    %5166 = vmatpush1.msra.mxu0 0.0
    %5167 = vmatprep.subr.mxu0 0.0
    %5168 = vmatpush1.msra.mxu0 0.0
    %5169 = vmatprep.subr.mxu0 0.0
    %5170 = vmatpush1.msra.mxu0 0.0
    %5171 = vmatprep.subr.mxu0 0.0
    %5172 = vmatpush1.msra.mxu0 0.0
    %5173 = vmatprep.subr.mxu0 0.0
    %5174 = vmatpush1.msra.mxu0 0.0
    %5175 = vmatprep.subr.mxu0 0.0
    %5176 = vmatpush1.msra.mxu0 0.0
    %5177 = vmatprep.subr.mxu0 0.0
    %5178 = vmatpush1.msra.mxu0 0.0
    %5179 = vmatprep.subr.mxu0 0.0
    %5180 = vmatpush1.msra.mxu0 0.0
    %5181 = vmatprep.subr.mxu0 0.0
    %5182 = vmatpush1.msra.mxu0 0.0
    %5183 = vmatprep.subr.mxu0 0.0
    %5184 = vmatpush1.msra.mxu0 0.0
    %5185 = vmatprep.mubr.f32.mxu0 0.0
    %5186 = vmatmul.mubr.f32.gmra.mrb[0].mxu0 %v4532
    %v5187 = vpop.f32.mrb[0].mxu0
    %v5188 = vadd.f32 %v5104, %v5187
    %v5189 = vpop.f32.mrb[0].mxu0
    %5190 = vdwg.mxu0
    %5191 = vmatprep.subr.mxu0 0.0
    %5192 = vmatpush1.msra.mxu0 %v3892
    %5193 = vmatprep.subr.mxu0 0.0
    %5194 = vmatpush1.msra.mxu0 %v3893
    %5195 = vmatprep.subr.mxu0 0.0
    %5196 = vmatpush1.msra.mxu0 %v3894
    %5197 = vmatprep.subr.mxu0 0.0
    %5198 = vmatpush1.msra.mxu0 %v3895
    %5199 = vmatprep.subr.mxu0 0.0
    %5200 = vmatpush1.msra.mxu0 0.0
    %5201 = vmatprep.subr.mxu0 0.0
    %5202 = vmatpush1.msra.mxu0 0.0
    %5203 = vmatprep.subr.mxu0 0.0
    %5204 = vmatpush1.msra.mxu0 0.0
    %5205 = vmatprep.subr.mxu0 0.0
    %5206 = vmatpush1.msra.mxu0 0.0
    %5207 = vmatprep.subr.mxu0 0.0
    %5208 = vmatpush1.msra.mxu0 0.0
    %5209 = vmatprep.subr.mxu0 0.0
    %5210 = vmatpush1.msra.mxu0 0.0
    %5211 = vmatprep.subr.mxu0 0.0
    %5212 = vmatpush1.msra.mxu0 0.0
    %5213 = vmatprep.subr.mxu0 0.0
    %5214 = vmatpush1.msra.mxu0 0.0
    %5215 = vmatprep.subr.mxu0 0.0
    %5216 = vmatpush1.msra.mxu0 0.0
    %5217 = vmatprep.subr.mxu0 0.0
    %5218 = vmatpush1.msra.mxu0 0.0
    %5219 = vmatprep.subr.mxu0 0.0
    %5220 = vmatpush1.msra.mxu0 0.0
    %5221 = vmatprep.subr.mxu0 0.0
    %5222 = vmatpush1.msra.mxu0 0.0
    %5223 = vmatprep.subr.mxu0 0.0
    %5224 = vmatpush1.msra.mxu0 0.0
    %5225 = vmatprep.subr.mxu0 0.0
    %5226 = vmatpush1.msra.mxu0 0.0
    %5227 = vmatprep.subr.mxu0 0.0
    %5228 = vmatpush1.msra.mxu0 0.0
    %5229 = vmatprep.subr.mxu0 0.0
    %5230 = vmatpush1.msra.mxu0 0.0
    %5231 = vmatprep.subr.mxu0 0.0
    %5232 = vmatpush1.msra.mxu0 0.0
    %5233 = vmatprep.subr.mxu0 0.0
    %5234 = vmatpush1.msra.mxu0 0.0
    %5235 = vmatprep.subr.mxu0 0.0
    %5236 = vmatpush1.msra.mxu0 0.0
    %5237 = vmatprep.subr.mxu0 0.0
    %5238 = vmatpush1.msra.mxu0 0.0
    %5239 = vmatprep.subr.mxu0 0.0
    %5240 = vmatpush1.msra.mxu0 0.0
    %5241 = vmatprep.subr.mxu0 0.0
    %5242 = vmatpush1.msra.mxu0 0.0
    %5243 = vmatprep.subr.mxu0 0.0
    %5244 = vmatpush1.msra.mxu0 0.0
    %5245 = vmatprep.subr.mxu0 0.0
    %5246 = vmatpush1.msra.mxu0 0.0
    %5247 = vmatprep.subr.mxu0 0.0
    %5248 = vmatpush1.msra.mxu0 0.0
    %5249 = vmatprep.subr.mxu0 0.0
    %5250 = vmatpush1.msra.mxu0 0.0
    %5251 = vmatprep.subr.mxu0 0.0
    %5252 = vmatpush1.msra.mxu0 0.0
    %5253 = vmatprep.subr.mxu0 0.0
    %5254 = vmatpush1.msra.mxu0 0.0
    %5255 = vmatprep.mubr.f32.mxu0 0.0
    %5256 = vmatmul.mubr.f32.gmra.mrb[0].mxu0 %v4605
    %v5257 = vpop.f32.mrb[0].mxu0
    %v5258 = vadd.f32 %v5104, %v5257
    %v5259 = vpop.f32.mrb[0].mxu0
    %5260 = vdwg.mxu0
    %5261 = vmatprep.subr.mxu0 0.0
    %5262 = vmatpush1.msra.mxu0 %v3896
    %5263 = vmatprep.subr.mxu0 0.0
    %5264 = vmatpush1.msra.mxu0 %v3897
    %5265 = vmatprep.subr.mxu0 0.0
    %5266 = vmatpush1.msra.mxu0 %v3898
    %5267 = vmatprep.subr.mxu0 0.0
    %5268 = vmatpush1.msra.mxu0 %v3899
    %5269 = vmatprep.subr.mxu0 0.0
    %5270 = vmatpush1.msra.mxu0 0.0
    %5271 = vmatprep.subr.mxu0 0.0
    %5272 = vmatpush1.msra.mxu0 0.0
    %5273 = vmatprep.subr.mxu0 0.0
    %5274 = vmatpush1.msra.mxu0 0.0
    %5275 = vmatprep.subr.mxu0 0.0
    %5276 = vmatpush1.msra.mxu0 0.0
    %5277 = vmatprep.subr.mxu0 0.0
    %5278 = vmatpush1.msra.mxu0 0.0
    %5279 = vmatprep.subr.mxu0 0.0
    %5280 = vmatpush1.msra.mxu0 0.0
    %5281 = vmatprep.subr.mxu0 0.0
    %5282 = vmatpush1.msra.mxu0 0.0
    %5283 = vmatprep.subr.mxu0 0.0
    %5284 = vmatpush1.msra.mxu0 0.0
    %5285 = vmatprep.subr.mxu0 0.0
    %5286 = vmatpush1.msra.mxu0 0.0
    %5287 = vmatprep.subr.mxu0 0.0
    %5288 = vmatpush1.msra.mxu0 0.0
    %5289 = vmatprep.subr.mxu0 0.0
    %5290 = vmatpush1.msra.mxu0 0.0
    %5291 = vmatprep.subr.mxu0 0.0
    %5292 = vmatpush1.msra.mxu0 0.0
    %5293 = vmatprep.subr.mxu0 0.0
    %5294 = vmatpush1.msra.mxu0 0.0
    %5295 = vmatprep.subr.mxu0 0.0
    %5296 = vmatpush1.msra.mxu0 0.0
    %5297 = vmatprep.subr.mxu0 0.0
    %5298 = vmatpush1.msra.mxu0 0.0
    %5299 = vmatprep.subr.mxu0 0.0
    %5300 = vmatpush1.msra.mxu0 0.0
    %5301 = vmatprep.subr.mxu0 0.0
    %5302 = vmatpush1.msra.mxu0 0.0
    %5303 = vmatprep.subr.mxu0 0.0
    %5304 = vmatpush1.msra.mxu0 0.0
    %5305 = vmatprep.subr.mxu0 0.0
    %5306 = vmatpush1.msra.mxu0 0.0
    %5307 = vmatprep.subr.mxu0 0.0
    %5308 = vmatpush1.msra.mxu0 0.0
    %5309 = vmatprep.subr.mxu0 0.0
    %5310 = vmatpush1.msra.mxu0 0.0
    %5311 = vmatprep.subr.mxu0 0.0
    %5312 = vmatpush1.msra.mxu0 0.0
    %5313 = vmatprep.subr.mxu0 0.0
    %5314 = vmatpush1.msra.mxu0 0.0
    %5315 = vmatprep.subr.mxu0 0.0
    %5316 = vmatpush1.msra.mxu0 0.0
    %5317 = vmatprep.subr.mxu0 0.0
    %5318 = vmatpush1.msra.mxu0 0.0
    %5319 = vmatprep.subr.mxu0 0.0
    %5320 = vmatpush1.msra.mxu0 0.0
    %5321 = vmatprep.subr.mxu0 0.0
    %5322 = vmatpush1.msra.mxu0 0.0
    %5323 = vmatprep.subr.mxu0 0.0
    %5324 = vmatpush1.msra.mxu0 0.0
    %5325 = vmatprep.mubr.f32.mxu0 0.0
    %5326 = vmatmul.mubr.f32.gmra.mrb[0].mxu0 %v4532
    %v5327 = vpop.f32.mrb[0].mxu0
    %v5328 = vadd.f32 %v5108, %v5327
    %v5329 = vpop.f32.mrb[0].mxu0
    %5330 = vdwg.mxu0
    %5331 = vmatprep.subr.mxu0 0.0
    %5332 = vmatpush1.msra.mxu0 %v3896
    %5333 = vmatprep.subr.mxu0 0.0
    %5334 = vmatpush1.msra.mxu0 %v3897
    %5335 = vmatprep.subr.mxu0 0.0
    %5336 = vmatpush1.msra.mxu0 %v3898
    %5337 = vmatprep.subr.mxu0 0.0
    %5338 = vmatpush1.msra.mxu0 %v3899
    %5339 = vmatprep.subr.mxu0 0.0
    %5340 = vmatpush1.msra.mxu0 0.0
    %5341 = vmatprep.subr.mxu0 0.0
    %5342 = vmatpush1.msra.mxu0 0.0
    %5343 = vmatprep.subr.mxu0 0.0
    %5344 = vmatpush1.msra.mxu0 0.0
    %5345 = vmatprep.subr.mxu0 0.0
    %5346 = vmatpush1.msra.mxu0 0.0
    %5347 = vmatprep.subr.mxu0 0.0
    %5348 = vmatpush1.msra.mxu0 0.0
    %5349 = vmatprep.subr.mxu0 0.0
    %5350 = vmatpush1.msra.mxu0 0.0
    %5351 = vmatprep.subr.mxu0 0.0
    %5352 = vmatpush1.msra.mxu0 0.0
    %5353 = vmatprep.subr.mxu0 0.0
    %5354 = vmatpush1.msra.mxu0 0.0
    %5355 = vmatprep.subr.mxu0 0.0
    %5356 = vmatpush1.msra.mxu0 0.0
    %5357 = vmatprep.subr.mxu0 0.0
    %5358 = vmatpush1.msra.mxu0 0.0
    %5359 = vmatprep.subr.mxu0 0.0
    %5360 = vmatpush1.msra.mxu0 0.0
    %5361 = vmatprep.subr.mxu0 0.0
    %5362 = vmatpush1.msra.mxu0 0.0
    %5363 = vmatprep.subr.mxu0 0.0
    %5364 = vmatpush1.msra.mxu0 0.0
    %5365 = vmatprep.subr.mxu0 0.0
    %5366 = vmatpush1.msra.mxu0 0.0
    %5367 = vmatprep.subr.mxu0 0.0
    %5368 = vmatpush1.msra.mxu0 0.0
    %5369 = vmatprep.subr.mxu0 0.0
    %5370 = vmatpush1.msra.mxu0 0.0
    %5371 = vmatprep.subr.mxu0 0.0
    %5372 = vmatpush1.msra.mxu0 0.0
    %5373 = vmatprep.subr.mxu0 0.0
    %5374 = vmatpush1.msra.mxu0 0.0
    %5375 = vmatprep.subr.mxu0 0.0
    %5376 = vmatpush1.msra.mxu0 0.0
    %5377 = vmatprep.subr.mxu0 0.0
    %5378 = vmatpush1.msra.mxu0 0.0
    %5379 = vmatprep.subr.mxu0 0.0
    %5380 = vmatpush1.msra.mxu0 0.0
    %5381 = vmatprep.subr.mxu0 0.0
    %5382 = vmatpush1.msra.mxu0 0.0
    %5383 = vmatprep.subr.mxu0 0.0
    %5384 = vmatpush1.msra.mxu0 0.0
    %5385 = vmatprep.subr.mxu0 0.0
    %5386 = vmatpush1.msra.mxu0 0.0
    %5387 = vmatprep.subr.mxu0 0.0
    %5388 = vmatpush1.msra.mxu0 0.0
    %5389 = vmatprep.subr.mxu0 0.0
    %5390 = vmatpush1.msra.mxu0 0.0
    %5391 = vmatprep.subr.mxu0 0.0
    %5392 = vmatpush1.msra.mxu0 0.0
    %5393 = vmatprep.subr.mxu0 0.0
    %5394 = vmatpush1.msra.mxu0 0.0
    %5395 = vmatprep.mubr.f32.mxu0 0.0
    %5396 = vmatmul.mubr.f32.gmra.mrb[0].mxu0 %v4605
    %v5397 = vpop.f32.mrb[0].mxu0
    %v5398 = vadd.f32 %v5108, %v5397
    %v5399 = vpop.f32.mrb[0].mxu0
    %5400 = vdwg.mxu0
    %5401 = vmatprep.subr.mxu0 0.0
    %5402 = vmatpush1.msra.mxu0 %v3900
    %5403 = vmatprep.subr.mxu0 0.0
    %5404 = vmatpush1.msra.mxu0 %v3901
    %5405 = vmatprep.subr.mxu0 0.0
    %5406 = vmatpush1.msra.mxu0 %v3902
    %5407 = vmatprep.subr.mxu0 0.0
    %5408 = vmatpush1.msra.mxu0 %v3903
    %5409 = vmatprep.subr.mxu0 0.0
    %5410 = vmatpush1.msra.mxu0 0.0
    %5411 = vmatprep.subr.mxu0 0.0
    %5412 = vmatpush1.msra.mxu0 0.0
    %5413 = vmatprep.subr.mxu0 0.0
    %5414 = vmatpush1.msra.mxu0 0.0
    %5415 = vmatprep.subr.mxu0 0.0
    %5416 = vmatpush1.msra.mxu0 0.0
    %5417 = vmatprep.subr.mxu0 0.0
    %5418 = vmatpush1.msra.mxu0 0.0
    %5419 = vmatprep.subr.mxu0 0.0
    %5420 = vmatpush1.msra.mxu0 0.0
    %5421 = vmatprep.subr.mxu0 0.0
    %5422 = vmatpush1.msra.mxu0 0.0
    %5423 = vmatprep.subr.mxu0 0.0
    %5424 = vmatpush1.msra.mxu0 0.0
    %5425 = vmatprep.subr.mxu0 0.0
    %5426 = vmatpush1.msra.mxu0 0.0
    %5427 = vmatprep.subr.mxu0 0.0
    %5428 = vmatpush1.msra.mxu0 0.0
    %5429 = vmatprep.subr.mxu0 0.0
    %5430 = vmatpush1.msra.mxu0 0.0
    %5431 = vmatprep.subr.mxu0 0.0
    %5432 = vmatpush1.msra.mxu0 0.0
    %5433 = vmatprep.subr.mxu0 0.0
    %5434 = vmatpush1.msra.mxu0 0.0
    %5435 = vmatprep.subr.mxu0 0.0
    %5436 = vmatpush1.msra.mxu0 0.0
    %5437 = vmatprep.subr.mxu0 0.0
    %5438 = vmatpush1.msra.mxu0 0.0
    %5439 = vmatprep.subr.mxu0 0.0
    %5440 = vmatpush1.msra.mxu0 0.0
    %5441 = vmatprep.subr.mxu0 0.0
    %5442 = vmatpush1.msra.mxu0 0.0
    %5443 = vmatprep.subr.mxu0 0.0
    %5444 = vmatpush1.msra.mxu0 0.0
    %5445 = vmatprep.subr.mxu0 0.0
    %5446 = vmatpush1.msra.mxu0 0.0
    %5447 = vmatprep.subr.mxu0 0.0
    %5448 = vmatpush1.msra.mxu0 0.0
    %5449 = vmatprep.subr.mxu0 0.0
    %5450 = vmatpush1.msra.mxu0 0.0
    %5451 = vmatprep.subr.mxu0 0.0
    %5452 = vmatpush1.msra.mxu0 0.0
    %5453 = vmatprep.subr.mxu0 0.0
    %5454 = vmatpush1.msra.mxu0 0.0
    %5455 = vmatprep.subr.mxu0 0.0
    %5456 = vmatpush1.msra.mxu0 0.0
    %5457 = vmatprep.subr.mxu0 0.0
    %5458 = vmatpush1.msra.mxu0 0.0
    %5459 = vmatprep.subr.mxu0 0.0
    %5460 = vmatpush1.msra.mxu0 0.0
    %5461 = vmatprep.subr.mxu0 0.0
    %5462 = vmatpush1.msra.mxu0 0.0
    %5463 = vmatprep.subr.mxu0 0.0
    %5464 = vmatpush1.msra.mxu0 0.0
    %5465 = vmatprep.mubr.f32.mxu0 0.0
    %5466 = vmatmul.mubr.f32.gmra.mrb[0].mxu0 %v4532
    %v5467 = vpop.f32.mrb[0].mxu0
    %v5468 = vadd.f32 %v5112, %v5467
    %v5469 = vpop.f32.mrb[0].mxu0
    %5470 = vdwg.mxu0
    %5471 = vmatprep.subr.mxu0 0.0
    %5472 = vmatpush1.msra.mxu0 %v3900
    %5473 = vmatprep.subr.mxu0 0.0
    %5474 = vmatpush1.msra.mxu0 %v3901
    %5475 = vmatprep.subr.mxu0 0.0
    %5476 = vmatpush1.msra.mxu0 %v3902
    %5477 = vmatprep.subr.mxu0 0.0
    %5478 = vmatpush1.msra.mxu0 %v3903
    %5479 = vmatprep.subr.mxu0 0.0
    %5480 = vmatpush1.msra.mxu0 0.0
    %5481 = vmatprep.subr.mxu0 0.0
    %5482 = vmatpush1.msra.mxu0 0.0
    %5483 = vmatprep.subr.mxu0 0.0
    %5484 = vmatpush1.msra.mxu0 0.0
    %5485 = vmatprep.subr.mxu0 0.0
    %5486 = vmatpush1.msra.mxu0 0.0
    %5487 = vmatprep.subr.mxu0 0.0
    %5488 = vmatpush1.msra.mxu0 0.0
    %5489 = vmatprep.subr.mxu0 0.0
    %5490 = vmatpush1.msra.mxu0 0.0
    %5491 = vmatprep.subr.mxu0 0.0
    %5492 = vmatpush1.msra.mxu0 0.0
    %5493 = vmatprep.subr.mxu0 0.0
    %5494 = vmatpush1.msra.mxu0 0.0
    %5495 = vmatprep.subr.mxu0 0.0
    %5496 = vmatpush1.msra.mxu0 0.0
    %5497 = vmatprep.subr.mxu0 0.0
    %5498 = vmatpush1.msra.mxu0 0.0
    %5499 = vmatprep.subr.mxu0 0.0
    %5500 = vmatpush1.msra.mxu0 0.0
    %5501 = vmatprep.subr.mxu0 0.0
    %5502 = vmatpush1.msra.mxu0 0.0
    %5503 = vmatprep.subr.mxu0 0.0
    %5504 = vmatpush1.msra.mxu0 0.0
    %5505 = vmatprep.subr.mxu0 0.0
    %5506 = vmatpush1.msra.mxu0 0.0
    %5507 = vmatprep.subr.mxu0 0.0
    %5508 = vmatpush1.msra.mxu0 0.0
    %5509 = vmatprep.subr.mxu0 0.0
    %5510 = vmatpush1.msra.mxu0 0.0
    %5511 = vmatprep.subr.mxu0 0.0
    %5512 = vmatpush1.msra.mxu0 0.0
    %5513 = vmatprep.subr.mxu0 0.0
    %5514 = vmatpush1.msra.mxu0 0.0
    %5515 = vmatprep.subr.mxu0 0.0
    %5516 = vmatpush1.msra.mxu0 0.0
    %5517 = vmatprep.subr.mxu0 0.0
    %5518 = vmatpush1.msra.mxu0 0.0
    %5519 = vmatprep.subr.mxu0 0.0
    %5520 = vmatpush1.msra.mxu0 0.0
    %5521 = vmatprep.subr.mxu0 0.0
    %5522 = vmatpush1.msra.mxu0 0.0
    %5523 = vmatprep.subr.mxu0 0.0
    %5524 = vmatpush1.msra.mxu0 0.0
    %5525 = vmatprep.subr.mxu0 0.0
    %5526 = vmatpush1.msra.mxu0 0.0
    %5527 = vmatprep.subr.mxu0 0.0
    %5528 = vmatpush1.msra.mxu0 0.0
    %5529 = vmatprep.subr.mxu0 0.0
    %5530 = vmatpush1.msra.mxu0 0.0
    %5531 = vmatprep.subr.mxu0 0.0
    %5532 = vmatpush1.msra.mxu0 0.0
    %5533 = vmatprep.subr.mxu0 0.0
    %5534 = vmatpush1.msra.mxu0 0.0
    %5535 = vmatprep.mubr.f32.mxu0 0.0
    %5536 = vmatmul.mubr.f32.gmra.mrb[0].mxu0 %v4605
    %v5537 = vpop.f32.mrb[0].mxu0
    %v5538 = vadd.f32 %v5112, %v5537
    %v5539 = vpop.f32.mrb[0].mxu0
    %5540 = vdwg.mxu0
    %5541 = vmatprep.subr.mxu0 0.0
    %5542 = vmatpush1.msra.mxu0 %v3904
    %5543 = vmatprep.subr.mxu0 0.0
    %5544 = vmatpush1.msra.mxu0 %v3905
    %5545 = vmatprep.subr.mxu0 0.0
    %5546 = vmatpush1.msra.mxu0 %v3906
    %5547 = vmatprep.subr.mxu0 0.0
    %5548 = vmatpush1.msra.mxu0 %v3907
    %5549 = vmatprep.subr.mxu0 0.0
    %5550 = vmatpush1.msra.mxu0 0.0
    %5551 = vmatprep.subr.mxu0 0.0
    %5552 = vmatpush1.msra.mxu0 0.0
    %5553 = vmatprep.subr.mxu0 0.0
    %5554 = vmatpush1.msra.mxu0 0.0
    %5555 = vmatprep.subr.mxu0 0.0
    %5556 = vmatpush1.msra.mxu0 0.0
    %5557 = vmatprep.subr.mxu0 0.0
    %5558 = vmatpush1.msra.mxu0 0.0
    %5559 = vmatprep.subr.mxu0 0.0
    %5560 = vmatpush1.msra.mxu0 0.0
    %5561 = vmatprep.subr.mxu0 0.0
    %5562 = vmatpush1.msra.mxu0 0.0
    %5563 = vmatprep.subr.mxu0 0.0
    %5564 = vmatpush1.msra.mxu0 0.0
    %5565 = vmatprep.subr.mxu0 0.0
    %5566 = vmatpush1.msra.mxu0 0.0
    %5567 = vmatprep.subr.mxu0 0.0
    %5568 = vmatpush1.msra.mxu0 0.0
    %5569 = vmatprep.subr.mxu0 0.0
    %5570 = vmatpush1.msra.mxu0 0.0
    %5571 = vmatprep.subr.mxu0 0.0
    %5572 = vmatpush1.msra.mxu0 0.0
    %5573 = vmatprep.subr.mxu0 0.0
    %5574 = vmatpush1.msra.mxu0 0.0
    %5575 = vmatprep.subr.mxu0 0.0
    %5576 = vmatpush1.msra.mxu0 0.0
    %5577 = vmatprep.subr.mxu0 0.0
    %5578 = vmatpush1.msra.mxu0 0.0
    %5579 = vmatprep.subr.mxu0 0.0
    %5580 = vmatpush1.msra.mxu0 0.0
    %5581 = vmatprep.subr.mxu0 0.0
    %5582 = vmatpush1.msra.mxu0 0.0
    %5583 = vmatprep.subr.mxu0 0.0
    %5584 = vmatpush1.msra.mxu0 0.0
    %5585 = vmatprep.subr.mxu0 0.0
    %5586 = vmatpush1.msra.mxu0 0.0
    %5587 = vmatprep.subr.mxu0 0.0
    %5588 = vmatpush1.msra.mxu0 0.0
    %5589 = vmatprep.subr.mxu0 0.0
    %5590 = vmatpush1.msra.mxu0 0.0
    %5591 = vmatprep.subr.mxu0 0.0
    %5592 = vmatpush1.msra.mxu0 0.0
    %5593 = vmatprep.subr.mxu0 0.0
    %5594 = vmatpush1.msra.mxu0 0.0
    %5595 = vmatprep.subr.mxu0 0.0
    %5596 = vmatpush1.msra.mxu0 0.0
    %5597 = vmatprep.subr.mxu0 0.0
    %5598 = vmatpush1.msra.mxu0 0.0
    %5599 = vmatprep.subr.mxu0 0.0
    %5600 = vmatpush1.msra.mxu0 0.0
    %5601 = vmatprep.subr.mxu0 0.0
    %5602 = vmatpush1.msra.mxu0 0.0
    %5603 = vmatprep.subr.mxu0 0.0
    %5604 = vmatpush1.msra.mxu0 0.0
    %5605 = vmatprep.mubr.f32.mxu0 0.0
    %5606 = vmatmul.mubr.f32.gmra.mrb[0].mxu0 %v4532
    %v5607 = vpop.f32.mrb[0].mxu0
    %v5608 = vadd.f32 %v5116, %v5607
    %v5609 = vpop.f32.mrb[0].mxu0
    %5610 = vdwg.mxu0
    %5611 = vmatprep.subr.mxu0 0.0
    %5612 = vmatpush1.msra.mxu0 %v3904
    %5613 = vmatprep.subr.mxu0 0.0
    %5614 = vmatpush1.msra.mxu0 %v3905
    %5615 = vmatprep.subr.mxu0 0.0
    %5616 = vmatpush1.msra.mxu0 %v3906
    %5617 = vmatprep.subr.mxu0 0.0
    %5618 = vmatpush1.msra.mxu0 %v3907
    %5619 = vmatprep.subr.mxu0 0.0
    %5620 = vmatpush1.msra.mxu0 0.0
    %5621 = vmatprep.subr.mxu0 0.0
    %5622 = vmatpush1.msra.mxu0 0.0
    %5623 = vmatprep.subr.mxu0 0.0
    %5624 = vmatpush1.msra.mxu0 0.0
    %5625 = vmatprep.subr.mxu0 0.0
    %5626 = vmatpush1.msra.mxu0 0.0
    %5627 = vmatprep.subr.mxu0 0.0
    %5628 = vmatpush1.msra.mxu0 0.0
    %5629 = vmatprep.subr.mxu0 0.0
    %5630 = vmatpush1.msra.mxu0 0.0
    %5631 = vmatprep.subr.mxu0 0.0
    %5632 = vmatpush1.msra.mxu0 0.0
    %5633 = vmatprep.subr.mxu0 0.0
    %5634 = vmatpush1.msra.mxu0 0.0
    %5635 = vmatprep.subr.mxu0 0.0
    %5636 = vmatpush1.msra.mxu0 0.0
    %5637 = vmatprep.subr.mxu0 0.0
    %5638 = vmatpush1.msra.mxu0 0.0
    %5639 = vmatprep.subr.mxu0 0.0
    %5640 = vmatpush1.msra.mxu0 0.0
    %5641 = vmatprep.subr.mxu0 0.0
    %5642 = vmatpush1.msra.mxu0 0.0
    %5643 = vmatprep.subr.mxu0 0.0
    %5644 = vmatpush1.msra.mxu0 0.0
    %5645 = vmatprep.subr.mxu0 0.0
    %5646 = vmatpush1.msra.mxu0 0.0
    %5647 = vmatprep.subr.mxu0 0.0
    %5648 = vmatpush1.msra.mxu0 0.0
    %5649 = vmatprep.subr.mxu0 0.0
    %5650 = vmatpush1.msra.mxu0 0.0
    %5651 = vmatprep.subr.mxu0 0.0
    %5652 = vmatpush1.msra.mxu0 0.0
    %5653 = vmatprep.subr.mxu0 0.0
    %5654 = vmatpush1.msra.mxu0 0.0
    %5655 = vmatprep.subr.mxu0 0.0
    %5656 = vmatpush1.msra.mxu0 0.0
    %5657 = vmatprep.subr.mxu0 0.0
    %5658 = vmatpush1.msra.mxu0 0.0
    %5659 = vmatprep.subr.mxu0 0.0
    %5660 = vmatpush1.msra.mxu0 0.0
    %5661 = vmatprep.subr.mxu0 0.0
    %5662 = vmatpush1.msra.mxu0 0.0
    %5663 = vmatprep.subr.mxu0 0.0
    %5664 = vmatpush1.msra.mxu0 0.0
    %5665 = vmatprep.subr.mxu0 0.0
    %5666 = vmatpush1.msra.mxu0 0.0
    %5667 = vmatprep.subr.mxu0 0.0
    %5668 = vmatpush1.msra.mxu0 0.0
    %5669 = vmatprep.subr.mxu0 0.0
    %5670 = vmatpush1.msra.mxu0 0.0
    %5671 = vmatprep.subr.mxu0 0.0
    %5672 = vmatpush1.msra.mxu0 0.0
    %5673 = vmatprep.subr.mxu0 0.0
    %5674 = vmatpush1.msra.mxu0 0.0
    %5675 = vmatprep.mubr.f32.mxu0 0.0
    %5676 = vmatmul.mubr.f32.gmra.mrb[0].mxu0 %v4605
    %v5677 = vpop.f32.mrb[0].mxu0
    %v5678 = vadd.f32 %v5116, %v5677
    %v5679 = vpop.f32.mrb[0].mxu0
    %5680 = vdwg.mxu0
    %v5682 = vsel %vm1918, %v4011, 0
    %v5685 = vsel %vm1918, %v4601, 0
    %5687 = vmatprep.subr.mxu0 0.0
    %5688 = vmatpush1.xpose.msra.mxu0 %v5685
    %5689 = vmatprep.subr.mxu0 0.0
    %5690 = vmatpush1.xpose.msra.mxu0 0.0
    %5691 = vmatprep.subr.mxu0 0.0
    %5692 = vmatpush1.xpose.msra.mxu0 0.0
    %5693 = vmatprep.subr.mxu0 0.0
    %5694 = vmatpush1.xpose.msra.mxu0 0.0
    %5695 = vmatprep.subr.mxu0 0.0
    %5696 = vmatpush1.xpose.msra.mxu0 0.0
    %5697 = vmatprep.subr.mxu0 0.0
    %5698 = vmatpush1.xpose.msra.mxu0 0.0
    %5699 = vmatprep.subr.mxu0 0.0
    %5700 = vmatpush1.xpose.msra.mxu0 0.0
    %5701 = vmatprep.subr.mxu0 0.0
    %5702 = vmatpush1.xpose.msra.mxu0 0.0
    %5703 = vmatprep.subr.mxu0 0.0
    %5704 = vmatpush1.xpose.msra.mxu0 0.0
    %5705 = vmatprep.subr.mxu0 0.0
    %5706 = vmatpush1.xpose.msra.mxu0 0.0
    %5707 = vmatprep.subr.mxu0 0.0
    %5708 = vmatpush1.xpose.msra.mxu0 0.0
    %5709 = vmatprep.subr.mxu0 0.0
    %5710 = vmatpush1.xpose.msra.mxu0 0.0
    %5711 = vmatprep.subr.mxu0 0.0
    %5712 = vmatpush1.xpose.msra.mxu0 0.0
    %5713 = vmatprep.subr.mxu0 0.0
    %5714 = vmatpush1.xpose.msra.mxu0 0.0
    %5715 = vmatprep.subr.mxu0 0.0
    %5716 = vmatpush1.xpose.msra.mxu0 0.0
    %5717 = vmatprep.subr.mxu0 0.0
    %5718 = vmatpush1.xpose.msra.mxu0 0.0
    %5719 = vmatprep.subr.mxu0 0.0
    %5720 = vmatpush1.xpose.msra.mxu0 0.0
    %5721 = vmatprep.subr.mxu0 0.0
    %5722 = vmatpush1.xpose.msra.mxu0 0.0
    %5723 = vmatprep.subr.mxu0 0.0
    %5724 = vmatpush1.xpose.msra.mxu0 0.0
    %5725 = vmatprep.subr.mxu0 0.0
    %5726 = vmatpush1.xpose.msra.mxu0 0.0
    %5727 = vmatprep.subr.mxu0 0.0
    %5728 = vmatpush1.xpose.msra.mxu0 0.0
    %5729 = vmatprep.subr.mxu0 0.0
    %5730 = vmatpush1.xpose.msra.mxu0 0.0
    %5731 = vmatprep.subr.mxu0 0.0
    %5732 = vmatpush1.xpose.msra.mxu0 0.0
    %5733 = vmatprep.subr.mxu0 0.0
    %5734 = vmatpush1.xpose.msra.mxu0 0.0
    %5735 = vmatprep.subr.mxu0 0.0
    %5736 = vmatpush1.xpose.msra.mxu0 0.0
    %5737 = vmatprep.subr.mxu0 0.0
    %5738 = vmatpush1.xpose.msra.mxu0 0.0
    %5739 = vmatprep.subr.mxu0 0.0
    %5740 = vmatpush1.xpose.msra.mxu0 0.0
    %5741 = vmatprep.subr.mxu0 0.0
    %5742 = vmatpush1.xpose.msra.mxu0 0.0
    %5743 = vmatprep.subr.mxu0 0.0
    %5744 = vmatpush1.xpose.msra.mxu0 0.0
    %5745 = vmatprep.subr.mxu0 0.0
    %5746 = vmatpush1.xpose.msra.mxu0 0.0
    %5747 = vmatprep.subr.mxu0 0.0
    %5748 = vmatpush1.xpose.msra.mxu0 0.0
    %5749 = vmatprep.subr.mxu0 0.0
    %5750 = vmatpush1.xpose.msra.mxu0 0.0
    %5751 = vmatprep.mubr.f32.mxu0 0.0
    %5752 = vmatmul.mubr.f32.gmra.mrb[0].mxu0 %v5682
    %v5753 = vpop.f32.mrb[0].mxu0
    %v5754 = vadd.f32 0.0, %v5753
    %v5755 = vpop.f32.mrb[0].mxu0
    %5756 = vdwg.mxu0
    %v5758 = vsel %vm1918, %v4084, 0
    %v5761 = vsel %vm1918, %v4674, 0
    %5763 = vmatprep.subr.mxu0 0.0
    %5764 = vmatpush1.xpose.msra.mxu0 %v5761
    %5765 = vmatprep.subr.mxu0 0.0
    %5766 = vmatpush1.xpose.msra.mxu0 0.0
    %5767 = vmatprep.subr.mxu0 0.0
    %5768 = vmatpush1.xpose.msra.mxu0 0.0
    %5769 = vmatprep.subr.mxu0 0.0
    %5770 = vmatpush1.xpose.msra.mxu0 0.0
    %5771 = vmatprep.subr.mxu0 0.0
    %5772 = vmatpush1.xpose.msra.mxu0 0.0
    %5773 = vmatprep.subr.mxu0 0.0
    %5774 = vmatpush1.xpose.msra.mxu0 0.0
    %5775 = vmatprep.subr.mxu0 0.0
    %5776 = vmatpush1.xpose.msra.mxu0 0.0
    %5777 = vmatprep.subr.mxu0 0.0
    %5778 = vmatpush1.xpose.msra.mxu0 0.0
    %5779 = vmatprep.subr.mxu0 0.0
    %5780 = vmatpush1.xpose.msra.mxu0 0.0
    %5781 = vmatprep.subr.mxu0 0.0
    %5782 = vmatpush1.xpose.msra.mxu0 0.0
    %5783 = vmatprep.subr.mxu0 0.0
    %5784 = vmatpush1.xpose.msra.mxu0 0.0
    %5785 = vmatprep.subr.mxu0 0.0
    %5786 = vmatpush1.xpose.msra.mxu0 0.0
    %5787 = vmatprep.subr.mxu0 0.0
    %5788 = vmatpush1.xpose.msra.mxu0 0.0
    %5789 = vmatprep.subr.mxu0 0.0
    %5790 = vmatpush1.xpose.msra.mxu0 0.0
    %5791 = vmatprep.subr.mxu0 0.0
    %5792 = vmatpush1.xpose.msra.mxu0 0.0
    %5793 = vmatprep.subr.mxu0 0.0
    %5794 = vmatpush1.xpose.msra.mxu0 0.0
    %5795 = vmatprep.subr.mxu0 0.0
    %5796 = vmatpush1.xpose.msra.mxu0 0.0
    %5797 = vmatprep.subr.mxu0 0.0
    %5798 = vmatpush1.xpose.msra.mxu0 0.0
    %5799 = vmatprep.subr.mxu0 0.0
    %5800 = vmatpush1.xpose.msra.mxu0 0.0
    %5801 = vmatprep.subr.mxu0 0.0
    %5802 = vmatpush1.xpose.msra.mxu0 0.0
    %5803 = vmatprep.subr.mxu0 0.0
    %5804 = vmatpush1.xpose.msra.mxu0 0.0
    %5805 = vmatprep.subr.mxu0 0.0
    %5806 = vmatpush1.xpose.msra.mxu0 0.0
    %5807 = vmatprep.subr.mxu0 0.0
    %5808 = vmatpush1.xpose.msra.mxu0 0.0
    %5809 = vmatprep.subr.mxu0 0.0
    %5810 = vmatpush1.xpose.msra.mxu0 0.0
    %5811 = vmatprep.subr.mxu0 0.0
    %5812 = vmatpush1.xpose.msra.mxu0 0.0
    %5813 = vmatprep.subr.mxu0 0.0
    %5814 = vmatpush1.xpose.msra.mxu0 0.0
    %5815 = vmatprep.subr.mxu0 0.0
    %5816 = vmatpush1.xpose.msra.mxu0 0.0
    %5817 = vmatprep.subr.mxu0 0.0
    %5818 = vmatpush1.xpose.msra.mxu0 0.0
    %5819 = vmatprep.subr.mxu0 0.0
    %5820 = vmatpush1.xpose.msra.mxu0 0.0
    %5821 = vmatprep.subr.mxu0 0.0
    %5822 = vmatpush1.xpose.msra.mxu0 0.0
    %5823 = vmatprep.subr.mxu0 0.0
    %5824 = vmatpush1.xpose.msra.mxu0 0.0
    %5825 = vmatprep.subr.mxu0 0.0
    %5826 = vmatpush1.xpose.msra.mxu0 0.0
    %5827 = vmatprep.mubr.f32.mxu0 0.0
    %5828 = vmatmul.mubr.f32.gmra.mrb[0].mxu0 %v5758
    %v5829 = vpop.f32.mrb[0].mxu0
    %v5830 = vadd.f32 0.0, %v5829
    %v5831 = vpop.f32.mrb[0].mxu0
    %5832 = vdwg.mxu0
    %v5834 = vsel %vm1918, %v4154, 0
    %v5837 = vsel %vm1918, %v4744, 0
    %5839 = vmatprep.subr.mxu0 0.0
    %5840 = vmatpush1.xpose.msra.mxu0 %v5837
    %5841 = vmatprep.subr.mxu0 0.0
    %5842 = vmatpush1.xpose.msra.mxu0 0.0
    %5843 = vmatprep.subr.mxu0 0.0
    %5844 = vmatpush1.xpose.msra.mxu0 0.0
    %5845 = vmatprep.subr.mxu0 0.0
    %5846 = vmatpush1.xpose.msra.mxu0 0.0
    %5847 = vmatprep.subr.mxu0 0.0
    %5848 = vmatpush1.xpose.msra.mxu0 0.0
    %5849 = vmatprep.subr.mxu0 0.0
    %5850 = vmatpush1.xpose.msra.mxu0 0.0
    %5851 = vmatprep.subr.mxu0 0.0
    %5852 = vmatpush1.xpose.msra.mxu0 0.0
    %5853 = vmatprep.subr.mxu0 0.0
    %5854 = vmatpush1.xpose.msra.mxu0 0.0
    %5855 = vmatprep.subr.mxu0 0.0
    %5856 = vmatpush1.xpose.msra.mxu0 0.0
    %5857 = vmatprep.subr.mxu0 0.0
    %5858 = vmatpush1.xpose.msra.mxu0 0.0
    %5859 = vmatprep.subr.mxu0 0.0
    %5860 = vmatpush1.xpose.msra.mxu0 0.0
    %5861 = vmatprep.subr.mxu0 0.0
    %5862 = vmatpush1.xpose.msra.mxu0 0.0
    %5863 = vmatprep.subr.mxu0 0.0
    %5864 = vmatpush1.xpose.msra.mxu0 0.0
    %5865 = vmatprep.subr.mxu0 0.0
    %5866 = vmatpush1.xpose.msra.mxu0 0.0
    %5867 = vmatprep.subr.mxu0 0.0
    %5868 = vmatpush1.xpose.msra.mxu0 0.0
    %5869 = vmatprep.subr.mxu0 0.0
    %5870 = vmatpush1.xpose.msra.mxu0 0.0
    %5871 = vmatprep.subr.mxu0 0.0
    %5872 = vmatpush1.xpose.msra.mxu0 0.0
    %5873 = vmatprep.subr.mxu0 0.0
    %5874 = vmatpush1.xpose.msra.mxu0 0.0
    %5875 = vmatprep.subr.mxu0 0.0
    %5876 = vmatpush1.xpose.msra.mxu0 0.0
    %5877 = vmatprep.subr.mxu0 0.0
    %5878 = vmatpush1.xpose.msra.mxu0 0.0
    %5879 = vmatprep.subr.mxu0 0.0
    %5880 = vmatpush1.xpose.msra.mxu0 0.0
    %5881 = vmatprep.subr.mxu0 0.0
    %5882 = vmatpush1.xpose.msra.mxu0 0.0
    %5883 = vmatprep.subr.mxu0 0.0
    %5884 = vmatpush1.xpose.msra.mxu0 0.0
    %5885 = vmatprep.subr.mxu0 0.0
    %5886 = vmatpush1.xpose.msra.mxu0 0.0
    %5887 = vmatprep.subr.mxu0 0.0
    %5888 = vmatpush1.xpose.msra.mxu0 0.0
    %5889 = vmatprep.subr.mxu0 0.0
    %5890 = vmatpush1.xpose.msra.mxu0 0.0
    %5891 = vmatprep.subr.mxu0 0.0
    %5892 = vmatpush1.xpose.msra.mxu0 0.0
    %5893 = vmatprep.subr.mxu0 0.0
    %5894 = vmatpush1.xpose.msra.mxu0 0.0
    %5895 = vmatprep.subr.mxu0 0.0
    %5896 = vmatpush1.xpose.msra.mxu0 0.0
    %5897 = vmatprep.subr.mxu0 0.0
    %5898 = vmatpush1.xpose.msra.mxu0 0.0
    %5899 = vmatprep.subr.mxu0 0.0
    %5900 = vmatpush1.xpose.msra.mxu0 0.0
    %5901 = vmatprep.subr.mxu0 0.0
    %5902 = vmatpush1.xpose.msra.mxu0 0.0
    %5903 = vmatprep.mubr.f32.mxu0 0.0
    %5904 = vmatmul.mubr.f32.gmra.mrb[0].mxu0 %v5834
    %v5905 = vpop.f32.mrb[0].mxu0
    %v5906 = vadd.f32 0.0, %v5905
    %v5907 = vpop.f32.mrb[0].mxu0
    %5908 = vdwg.mxu0
    %v5910 = vsel %vm1918, %v4224, 0
    %v5913 = vsel %vm1918, %v4814, 0
    %5915 = vmatprep.subr.mxu0 0.0
    %5916 = vmatpush1.xpose.msra.mxu0 %v5913
    %5917 = vmatprep.subr.mxu0 0.0
    %5918 = vmatpush1.xpose.msra.mxu0 0.0
    %5919 = vmatprep.subr.mxu0 0.0
    %5920 = vmatpush1.xpose.msra.mxu0 0.0
    %5921 = vmatprep.subr.mxu0 0.0
    %5922 = vmatpush1.xpose.msra.mxu0 0.0
    %5923 = vmatprep.subr.mxu0 0.0
    %5924 = vmatpush1.xpose.msra.mxu0 0.0
    %5925 = vmatprep.subr.mxu0 0.0
    %5926 = vmatpush1.xpose.msra.mxu0 0.0
    %5927 = vmatprep.subr.mxu0 0.0
    %5928 = vmatpush1.xpose.msra.mxu0 0.0
    %5929 = vmatprep.subr.mxu0 0.0
    %5930 = vmatpush1.xpose.msra.mxu0 0.0
    %5931 = vmatprep.subr.mxu0 0.0
    %5932 = vmatpush1.xpose.msra.mxu0 0.0
    %5933 = vmatprep.subr.mxu0 0.0
    %5934 = vmatpush1.xpose.msra.mxu0 0.0
    %5935 = vmatprep.subr.mxu0 0.0
    %5936 = vmatpush1.xpose.msra.mxu0 0.0
    %5937 = vmatprep.subr.mxu0 0.0
    %5938 = vmatpush1.xpose.msra.mxu0 0.0
    %5939 = vmatprep.subr.mxu0 0.0
    %5940 = vmatpush1.xpose.msra.mxu0 0.0
    %5941 = vmatprep.subr.mxu0 0.0
    %5942 = vmatpush1.xpose.msra.mxu0 0.0
    %5943 = vmatprep.subr.mxu0 0.0
    %5944 = vmatpush1.xpose.msra.mxu0 0.0
    %5945 = vmatprep.subr.mxu0 0.0
    %5946 = vmatpush1.xpose.msra.mxu0 0.0
    %5947 = vmatprep.subr.mxu0 0.0
    %5948 = vmatpush1.xpose.msra.mxu0 0.0
    %5949 = vmatprep.subr.mxu0 0.0
    %5950 = vmatpush1.xpose.msra.mxu0 0.0
    %5951 = vmatprep.subr.mxu0 0.0
    %5952 = vmatpush1.xpose.msra.mxu0 0.0
    %5953 = vmatprep.subr.mxu0 0.0
    %5954 = vmatpush1.xpose.msra.mxu0 0.0
    %5955 = vmatprep.subr.mxu0 0.0
    %5956 = vmatpush1.xpose.msra.mxu0 0.0
    %5957 = vmatprep.subr.mxu0 0.0
    %5958 = vmatpush1.xpose.msra.mxu0 0.0
    %5959 = vmatprep.subr.mxu0 0.0
    %5960 = vmatpush1.xpose.msra.mxu0 0.0
    %5961 = vmatprep.subr.mxu0 0.0
    %5962 = vmatpush1.xpose.msra.mxu0 0.0
    %5963 = vmatprep.subr.mxu0 0.0
    %5964 = vmatpush1.xpose.msra.mxu0 0.0
    %5965 = vmatprep.subr.mxu0 0.0
    %5966 = vmatpush1.xpose.msra.mxu0 0.0
    %5967 = vmatprep.subr.mxu0 0.0
    %5968 = vmatpush1.xpose.msra.mxu0 0.0
    %5969 = vmatprep.subr.mxu0 0.0
    %5970 = vmatpush1.xpose.msra.mxu0 0.0
    %5971 = vmatprep.subr.mxu0 0.0
    %5972 = vmatpush1.xpose.msra.mxu0 0.0
    %5973 = vmatprep.subr.mxu0 0.0
    %5974 = vmatpush1.xpose.msra.mxu0 0.0
    %5975 = vmatprep.subr.mxu0 0.0
    %5976 = vmatpush1.xpose.msra.mxu0 0.0
    %5977 = vmatprep.subr.mxu0 0.0
    %5978 = vmatpush1.xpose.msra.mxu0 0.0
    %5979 = vmatprep.mubr.f32.mxu0 0.0
    %5980 = vmatmul.mubr.f32.gmra.mrb[0].mxu0 %v5910
    %v5981 = vpop.f32.mrb[0].mxu0
    %v5982 = vadd.f32 0.0, %v5981
    %v5983 = vpop.f32.mrb[0].mxu0
    %5984 = vdwg.mxu0
    %v5986 = vsel %vm1918, %v4294, 0
    %v5989 = vsel %vm1918, %v4884, 0
    %5991 = vmatprep.subr.mxu0 0.0
    %5992 = vmatpush1.xpose.msra.mxu0 %v5989
    %5993 = vmatprep.subr.mxu0 0.0
    %5994 = vmatpush1.xpose.msra.mxu0 0.0
    %5995 = vmatprep.subr.mxu0 0.0
    %5996 = vmatpush1.xpose.msra.mxu0 0.0
    %5997 = vmatprep.subr.mxu0 0.0
    %5998 = vmatpush1.xpose.msra.mxu0 0.0
    %5999 = vmatprep.subr.mxu0 0.0
    %6000 = vmatpush1.xpose.msra.mxu0 0.0
    %6001 = vmatprep.subr.mxu0 0.0
    %6002 = vmatpush1.xpose.msra.mxu0 0.0
    %6003 = vmatprep.subr.mxu0 0.0
    %6004 = vmatpush1.xpose.msra.mxu0 0.0
    %6005 = vmatprep.subr.mxu0 0.0
    %6006 = vmatpush1.xpose.msra.mxu0 0.0
    %6007 = vmatprep.subr.mxu0 0.0
    %6008 = vmatpush1.xpose.msra.mxu0 0.0
    %6009 = vmatprep.subr.mxu0 0.0
    %6010 = vmatpush1.xpose.msra.mxu0 0.0
    %6011 = vmatprep.subr.mxu0 0.0
    %6012 = vmatpush1.xpose.msra.mxu0 0.0
    %6013 = vmatprep.subr.mxu0 0.0
    %6014 = vmatpush1.xpose.msra.mxu0 0.0
    %6015 = vmatprep.subr.mxu0 0.0
    %6016 = vmatpush1.xpose.msra.mxu0 0.0
    %6017 = vmatprep.subr.mxu0 0.0
    %6018 = vmatpush1.xpose.msra.mxu0 0.0
    %6019 = vmatprep.subr.mxu0 0.0
    %6020 = vmatpush1.xpose.msra.mxu0 0.0
    %6021 = vmatprep.subr.mxu0 0.0
    %6022 = vmatpush1.xpose.msra.mxu0 0.0
    %6023 = vmatprep.subr.mxu0 0.0
    %6024 = vmatpush1.xpose.msra.mxu0 0.0
    %6025 = vmatprep.subr.mxu0 0.0
    %6026 = vmatpush1.xpose.msra.mxu0 0.0
    %6027 = vmatprep.subr.mxu0 0.0
    %6028 = vmatpush1.xpose.msra.mxu0 0.0
    %6029 = vmatprep.subr.mxu0 0.0
    %6030 = vmatpush1.xpose.msra.mxu0 0.0
    %6031 = vmatprep.subr.mxu0 0.0
    %6032 = vmatpush1.xpose.msra.mxu0 0.0
    %6033 = vmatprep.subr.mxu0 0.0
    %6034 = vmatpush1.xpose.msra.mxu0 0.0
    %6035 = vmatprep.subr.mxu0 0.0
    %6036 = vmatpush1.xpose.msra.mxu0 0.0
    %6037 = vmatprep.subr.mxu0 0.0
    %6038 = vmatpush1.xpose.msra.mxu0 0.0
    %6039 = vmatprep.subr.mxu0 0.0
    %6040 = vmatpush1.xpose.msra.mxu0 0.0
    %6041 = vmatprep.subr.mxu0 0.0
    %6042 = vmatpush1.xpose.msra.mxu0 0.0
    %6043 = vmatprep.subr.mxu0 0.0
    %6044 = vmatpush1.xpose.msra.mxu0 0.0
    %6045 = vmatprep.subr.mxu0 0.0
    %6046 = vmatpush1.xpose.msra.mxu0 0.0
    %6047 = vmatprep.subr.mxu0 0.0
    %6048 = vmatpush1.xpose.msra.mxu0 0.0
    %6049 = vmatprep.subr.mxu0 0.0
    %6050 = vmatpush1.xpose.msra.mxu0 0.0
    %6051 = vmatprep.subr.mxu0 0.0
    %6052 = vmatpush1.xpose.msra.mxu0 0.0
    %6053 = vmatprep.subr.mxu0 0.0
    %6054 = vmatpush1.xpose.msra.mxu0 0.0
    %6055 = vmatprep.mubr.f32.mxu0 0.0
    %6056 = vmatmul.mubr.f32.gmra.mrb[0].mxu0 %v5986
    %v6057 = vpop.f32.mrb[0].mxu0
    %v6058 = vadd.f32 0.0, %v6057
    %v6059 = vpop.f32.mrb[0].mxu0
    %6060 = vdwg.mxu0
    %v6062 = vsel %vm1918, %v4364, 0
    %v6065 = vsel %vm1918, %v4954, 0
    %6067 = vmatprep.subr.mxu0 0.0
    %6068 = vmatpush1.xpose.msra.mxu0 %v6065
    %6069 = vmatprep.subr.mxu0 0.0
    %6070 = vmatpush1.xpose.msra.mxu0 0.0
    %6071 = vmatprep.subr.mxu0 0.0
    %6072 = vmatpush1.xpose.msra.mxu0 0.0
    %6073 = vmatprep.subr.mxu0 0.0
    %6074 = vmatpush1.xpose.msra.mxu0 0.0
    %6075 = vmatprep.subr.mxu0 0.0
    %6076 = vmatpush1.xpose.msra.mxu0 0.0
    %6077 = vmatprep.subr.mxu0 0.0
    %6078 = vmatpush1.xpose.msra.mxu0 0.0
    %6079 = vmatprep.subr.mxu0 0.0
    %6080 = vmatpush1.xpose.msra.mxu0 0.0
    %6081 = vmatprep.subr.mxu0 0.0
    %6082 = vmatpush1.xpose.msra.mxu0 0.0
    %6083 = vmatprep.subr.mxu0 0.0
    %6084 = vmatpush1.xpose.msra.mxu0 0.0
    %6085 = vmatprep.subr.mxu0 0.0
    %6086 = vmatpush1.xpose.msra.mxu0 0.0
    %6087 = vmatprep.subr.mxu0 0.0
    %6088 = vmatpush1.xpose.msra.mxu0 0.0
    %6089 = vmatprep.subr.mxu0 0.0
    %6090 = vmatpush1.xpose.msra.mxu0 0.0
    %6091 = vmatprep.subr.mxu0 0.0
    %6092 = vmatpush1.xpose.msra.mxu0 0.0
    %6093 = vmatprep.subr.mxu0 0.0
    %6094 = vmatpush1.xpose.msra.mxu0 0.0
    %6095 = vmatprep.subr.mxu0 0.0
    %6096 = vmatpush1.xpose.msra.mxu0 0.0
    %6097 = vmatprep.subr.mxu0 0.0
    %6098 = vmatpush1.xpose.msra.mxu0 0.0
    %6099 = vmatprep.subr.mxu0 0.0
    %6100 = vmatpush1.xpose.msra.mxu0 0.0
    %6101 = vmatprep.subr.mxu0 0.0
    %6102 = vmatpush1.xpose.msra.mxu0 0.0
    %6103 = vmatprep.subr.mxu0 0.0
    %6104 = vmatpush1.xpose.msra.mxu0 0.0
    %6105 = vmatprep.subr.mxu0 0.0
    %6106 = vmatpush1.xpose.msra.mxu0 0.0
    %6107 = vmatprep.subr.mxu0 0.0
    %6108 = vmatpush1.xpose.msra.mxu0 0.0
    %6109 = vmatprep.subr.mxu0 0.0
    %6110 = vmatpush1.xpose.msra.mxu0 0.0
    %6111 = vmatprep.subr.mxu0 0.0
    %6112 = vmatpush1.xpose.msra.mxu0 0.0
    %6113 = vmatprep.subr.mxu0 0.0
    %6114 = vmatpush1.xpose.msra.mxu0 0.0
    %6115 = vmatprep.subr.mxu0 0.0
    %6116 = vmatpush1.xpose.msra.mxu0 0.0
    %6117 = vmatprep.subr.mxu0 0.0
    %6118 = vmatpush1.xpose.msra.mxu0 0.0
    %6119 = vmatprep.subr.mxu0 0.0
    %6120 = vmatpush1.xpose.msra.mxu0 0.0
    %6121 = vmatprep.subr.mxu0 0.0
    %6122 = vmatpush1.xpose.msra.mxu0 0.0
    %6123 = vmatprep.subr.mxu0 0.0
    %6124 = vmatpush1.xpose.msra.mxu0 0.0
    %6125 = vmatprep.subr.mxu0 0.0
    %6126 = vmatpush1.xpose.msra.mxu0 0.0
    %6127 = vmatprep.subr.mxu0 0.0
    %6128 = vmatpush1.xpose.msra.mxu0 0.0
    %6129 = vmatprep.subr.mxu0 0.0
    %6130 = vmatpush1.xpose.msra.mxu0 0.0
    %6131 = vmatprep.mubr.f32.mxu0 0.0
    %6132 = vmatmul.mubr.f32.gmra.mrb[0].mxu0 %v6062
    %v6133 = vpop.f32.mrb[0].mxu0
    %v6134 = vadd.f32 0.0, %v6133
    %v6135 = vpop.f32.mrb[0].mxu0
    %6136 = vdwg.mxu0
    %v6138 = vsel %vm1918, %v4434, 0
    %v6141 = vsel %vm1918, %v5024, 0
    %6143 = vmatprep.subr.mxu0 0.0
    %6144 = vmatpush1.xpose.msra.mxu0 %v6141
    %6145 = vmatprep.subr.mxu0 0.0
    %6146 = vmatpush1.xpose.msra.mxu0 0.0
    %6147 = vmatprep.subr.mxu0 0.0
    %6148 = vmatpush1.xpose.msra.mxu0 0.0
    %6149 = vmatprep.subr.mxu0 0.0
    %6150 = vmatpush1.xpose.msra.mxu0 0.0
    %6151 = vmatprep.subr.mxu0 0.0
    %6152 = vmatpush1.xpose.msra.mxu0 0.0
    %6153 = vmatprep.subr.mxu0 0.0
    %6154 = vmatpush1.xpose.msra.mxu0 0.0
    %6155 = vmatprep.subr.mxu0 0.0
    %6156 = vmatpush1.xpose.msra.mxu0 0.0
    %6157 = vmatprep.subr.mxu0 0.0
    %6158 = vmatpush1.xpose.msra.mxu0 0.0
    %6159 = vmatprep.subr.mxu0 0.0
    %6160 = vmatpush1.xpose.msra.mxu0 0.0
    %6161 = vmatprep.subr.mxu0 0.0
    %6162 = vmatpush1.xpose.msra.mxu0 0.0
    %6163 = vmatprep.subr.mxu0 0.0
    %6164 = vmatpush1.xpose.msra.mxu0 0.0
    %6165 = vmatprep.subr.mxu0 0.0
    %6166 = vmatpush1.xpose.msra.mxu0 0.0
    %6167 = vmatprep.subr.mxu0 0.0
    %6168 = vmatpush1.xpose.msra.mxu0 0.0
    %6169 = vmatprep.subr.mxu0 0.0
    %6170 = vmatpush1.xpose.msra.mxu0 0.0
    %6171 = vmatprep.subr.mxu0 0.0
    %6172 = vmatpush1.xpose.msra.mxu0 0.0
    %6173 = vmatprep.subr.mxu0 0.0
    %6174 = vmatpush1.xpose.msra.mxu0 0.0
    %6175 = vmatprep.subr.mxu0 0.0
    %6176 = vmatpush1.xpose.msra.mxu0 0.0
    %6177 = vmatprep.subr.mxu0 0.0
    %6178 = vmatpush1.xpose.msra.mxu0 0.0
    %6179 = vmatprep.subr.mxu0 0.0
    %6180 = vmatpush1.xpose.msra.mxu0 0.0
    %6181 = vmatprep.subr.mxu0 0.0
    %6182 = vmatpush1.xpose.msra.mxu0 0.0
    %6183 = vmatprep.subr.mxu0 0.0
    %6184 = vmatpush1.xpose.msra.mxu0 0.0
    %6185 = vmatprep.subr.mxu0 0.0
    %6186 = vmatpush1.xpose.msra.mxu0 0.0
    %6187 = vmatprep.subr.mxu0 0.0
    %6188 = vmatpush1.xpose.msra.mxu0 0.0
    %6189 = vmatprep.subr.mxu0 0.0
    %6190 = vmatpush1.xpose.msra.mxu0 0.0
    %6191 = vmatprep.subr.mxu0 0.0
    %6192 = vmatpush1.xpose.msra.mxu0 0.0
    %6193 = vmatprep.subr.mxu0 0.0
    %6194 = vmatpush1.xpose.msra.mxu0 0.0
    %6195 = vmatprep.subr.mxu0 0.0
    %6196 = vmatpush1.xpose.msra.mxu0 0.0
    %6197 = vmatprep.subr.mxu0 0.0
    %6198 = vmatpush1.xpose.msra.mxu0 0.0
    %6199 = vmatprep.subr.mxu0 0.0
    %6200 = vmatpush1.xpose.msra.mxu0 0.0
    %6201 = vmatprep.subr.mxu0 0.0
    %6202 = vmatpush1.xpose.msra.mxu0 0.0
    %6203 = vmatprep.subr.mxu0 0.0
    %6204 = vmatpush1.xpose.msra.mxu0 0.0
    %6205 = vmatprep.subr.mxu0 0.0
    %6206 = vmatpush1.xpose.msra.mxu0 0.0
    %6207 = vmatprep.mubr.f32.mxu0 0.0
    %6208 = vmatmul.mubr.f32.gmra.mrb[0].mxu0 %v6138
    %v6209 = vpop.f32.mrb[0].mxu0
    %v6210 = vadd.f32 0.0, %v6209
    %v6211 = vpop.f32.mrb[0].mxu0
    %6212 = vdwg.mxu0
    %v6214 = vsel %vm1918, %v4504, 0
    %v6217 = vsel %vm1918, %v5094, 0
    %6219 = vmatprep.subr.mxu0 0.0
    %6220 = vmatpush1.xpose.msra.mxu0 %v6217
    %6221 = vmatprep.subr.mxu0 0.0
    %6222 = vmatpush1.xpose.msra.mxu0 0.0
    %6223 = vmatprep.subr.mxu0 0.0
    %6224 = vmatpush1.xpose.msra.mxu0 0.0
    %6225 = vmatprep.subr.mxu0 0.0
    %6226 = vmatpush1.xpose.msra.mxu0 0.0
    %6227 = vmatprep.subr.mxu0 0.0
    %6228 = vmatpush1.xpose.msra.mxu0 0.0
    %6229 = vmatprep.subr.mxu0 0.0
    %6230 = vmatpush1.xpose.msra.mxu0 0.0
    %6231 = vmatprep.subr.mxu0 0.0
    %6232 = vmatpush1.xpose.msra.mxu0 0.0
    %6233 = vmatprep.subr.mxu0 0.0
    %6234 = vmatpush1.xpose.msra.mxu0 0.0
    %6235 = vmatprep.subr.mxu0 0.0
    %6236 = vmatpush1.xpose.msra.mxu0 0.0
    %6237 = vmatprep.subr.mxu0 0.0
    %6238 = vmatpush1.xpose.msra.mxu0 0.0
    %6239 = vmatprep.subr.mxu0 0.0
    %6240 = vmatpush1.xpose.msra.mxu0 0.0
    %6241 = vmatprep.subr.mxu0 0.0
    %6242 = vmatpush1.xpose.msra.mxu0 0.0
    %6243 = vmatprep.subr.mxu0 0.0
    %6244 = vmatpush1.xpose.msra.mxu0 0.0
    %6245 = vmatprep.subr.mxu0 0.0
    %6246 = vmatpush1.xpose.msra.mxu0 0.0
    %6247 = vmatprep.subr.mxu0 0.0
    %6248 = vmatpush1.xpose.msra.mxu0 0.0
    %6249 = vmatprep.subr.mxu0 0.0
    %6250 = vmatpush1.xpose.msra.mxu0 0.0
    %6251 = vmatprep.subr.mxu0 0.0
    %6252 = vmatpush1.xpose.msra.mxu0 0.0
    %6253 = vmatprep.subr.mxu0 0.0
    %6254 = vmatpush1.xpose.msra.mxu0 0.0
    %6255 = vmatprep.subr.mxu0 0.0
    %6256 = vmatpush1.xpose.msra.mxu0 0.0
    %6257 = vmatprep.subr.mxu0 0.0
    %6258 = vmatpush1.xpose.msra.mxu0 0.0
    %6259 = vmatprep.subr.mxu0 0.0
    %6260 = vmatpush1.xpose.msra.mxu0 0.0
    %6261 = vmatprep.subr.mxu0 0.0
    %6262 = vmatpush1.xpose.msra.mxu0 0.0
    %6263 = vmatprep.subr.mxu0 0.0
    %6264 = vmatpush1.xpose.msra.mxu0 0.0
    %6265 = vmatprep.subr.mxu0 0.0
    %6266 = vmatpush1.xpose.msra.mxu0 0.0
    %6267 = vmatprep.subr.mxu0 0.0
    %6268 = vmatpush1.xpose.msra.mxu0 0.0
    %6269 = vmatprep.subr.mxu0 0.0
    %6270 = vmatpush1.xpose.msra.mxu0 0.0
    %6271 = vmatprep.subr.mxu0 0.0
    %6272 = vmatpush1.xpose.msra.mxu0 0.0
    %6273 = vmatprep.subr.mxu0 0.0
    %6274 = vmatpush1.xpose.msra.mxu0 0.0
    %6275 = vmatprep.subr.mxu0 0.0
    %6276 = vmatpush1.xpose.msra.mxu0 0.0
    %6277 = vmatprep.subr.mxu0 0.0
    %6278 = vmatpush1.xpose.msra.mxu0 0.0
    %6279 = vmatprep.subr.mxu0 0.0
    %6280 = vmatpush1.xpose.msra.mxu0 0.0
    %6281 = vmatprep.subr.mxu0 0.0
    %6282 = vmatpush1.xpose.msra.mxu0 0.0
    %6283 = vmatprep.mubr.f32.mxu0 0.0
    %6284 = vmatmul.mubr.f32.gmra.mrb[0].mxu0 %v6214
    %v6285 = vpop.f32.mrb[0].mxu0
    %v6286 = vadd.f32 0.0, %v6285
    %v6287 = vpop.f32.mrb[0].mxu0
    %6288 = vdwg.mxu0
    %v6289 = vmul.f32 %v5754, 0.35355338
    %v6290 = vmul.f32 %v5830, 0.35355338
    %v6291 = vmul.f32 %v5906, 0.35355338
    %v6292 = vmul.f32 %v5982, 0.35355338
    %v6293 = vmul.f32 %v6058, 0.35355338
    %v6294 = vmul.f32 %v6134, 0.35355338
    %v6295 = vmul.f32 %v6210, 0.35355338
    %v6296 = vmul.f32 %v6286, 0.35355338
    %v6297 = vsel %vm1918, %v6289, -inf
    %6298 = vmax.xlane.f32.xlu0 %v6297
    %v6299 = vpop.xlane.xlu0 %6298
    %v6300 = vsel %vm1918, %v6290, -inf
    %6301 = vmax.xlane.f32.xlu0 %v6300
    %v6302 = vpop.xlane.xlu0 %6301
    %v6303 = vsel %vm1918, %v6291, -inf
    %6304 = vmax.xlane.f32.xlu0 %v6303
    %v6305 = vpop.xlane.xlu0 %6304
    %v6306 = vsel %vm1918, %v6292, -inf
    %6307 = vmax.xlane.f32.xlu0 %v6306
    %v6308 = vpop.xlane.xlu0 %6307
    %v6309 = vsel %vm1918, %v6293, -inf
    %6310 = vmax.xlane.f32.xlu0 %v6309
    %v6311 = vpop.xlane.xlu0 %6310
    %v6312 = vsel %vm1918, %v6294, -inf
    %6313 = vmax.xlane.f32.xlu0 %v6312
    %v6314 = vpop.xlane.xlu0 %6313
    %v6315 = vsel %vm1918, %v6295, -inf
    %6316 = vmax.xlane.f32.xlu0 %v6315
    %v6317 = vpop.xlane.xlu0 %6316
    %v6318 = vsel %vm1918, %v6296, -inf
    %6319 = vmax.xlane.f32.xlu0 %v6318
    %v6320 = vpop.xlane.xlu0 %6319
    %v6321 = vsub.f32 %v6289, %v6299
    %v6322 = vsub.f32 %v6290, %v6302
    %v6323 = vsub.f32 %v6291, %v6305
    %v6324 = vsub.f32 %v6292, %v6308
    %v6325 = vsub.f32 %v6293, %v6311
    %v6326 = vsub.f32 %v6294, %v6314
    %v6327 = vsub.f32 %v6295, %v6317
    %v6328 = vsub.f32 %v6296, %v6320
    %v6329 = vmul.f32 %v6321, 1.442695
    %v6330 = vpow.pop %v6329
    %v6331 = vmul.f32 %v6322, 1.442695
    %v6332 = vpow.pop %v6331
    %v6333 = vmul.f32 %v6323, 1.442695
    %v6334 = vpow.pop %v6333
    %v6335 = vmul.f32 %v6324, 1.442695
    %v6336 = vpow.pop %v6335
    %v6337 = vmul.f32 %v6325, 1.442695
    %v6338 = vpow.pop %v6337
    %v6339 = vmul.f32 %v6326, 1.442695
    %v6340 = vpow.pop %v6339
    %v6341 = vmul.f32 %v6327, 1.442695
    %v6342 = vpow.pop %v6341
    %v6343 = vmul.f32 %v6328, 1.442695
    %v6344 = vpow.pop %v6343
    %v6345 = vsel %vm1918, %v6330, 0.0
    %6346 = vadd.xlane.f32.xlu0 %v6345
    %v6347 = vpop.xlane.xlu0 %6346
    %v6348 = vsel %vm1918, %v6332, 0.0
    %6349 = vadd.xlane.f32.xlu0 %v6348
    %v6350 = vpop.xlane.xlu0 %6349
    %v6351 = vsel %vm1918, %v6334, 0.0
    %6352 = vadd.xlane.f32.xlu0 %v6351
    %v6353 = vpop.xlane.xlu0 %6352
    %v6354 = vsel %vm1918, %v6336, 0.0
    %6355 = vadd.xlane.f32.xlu0 %v6354
    %v6356 = vpop.xlane.xlu0 %6355
    %v6357 = vsel %vm1918, %v6338, 0.0
    %6358 = vadd.xlane.f32.xlu0 %v6357
    %v6359 = vpop.xlane.xlu0 %6358
    %v6360 = vsel %vm1918, %v6340, 0.0
    %6361 = vadd.xlane.f32.xlu0 %v6360
    %v6362 = vpop.xlane.xlu0 %6361
    %v6363 = vsel %vm1918, %v6342, 0.0
    %6364 = vadd.xlane.f32.xlu0 %v6363
    %v6365 = vpop.xlane.xlu0 %6364
    %v6366 = vsel %vm1918, %v6344, 0.0
    %6367 = vadd.xlane.f32.xlu0 %v6366
    %v6368 = vpop.xlane.xlu0 %6367
    %v6369 = vrcp.pop %v6347
    %v6370 = vrcp.pop %v6350
    %v6371 = vrcp.pop %v6353
    %v6372 = vrcp.pop %v6356
    %v6373 = vrcp.pop %v6359
    %v6374 = vrcp.pop %v6362
    %v6375 = vrcp.pop %v6365
    %v6376 = vrcp.pop %v6368
    %v6377 = vmul.f32 %v6330, %v6369
    %v6378 = vmul.f32 %v6332, %v6370
    %v6379 = vmul.f32 %v6334, %v6371
    %v6380 = vmul.f32 %v6336, %v6372
    %v6381 = vmul.f32 %v6338, %v6373
    %v6382 = vmul.f32 %v6340, %v6374
    %v6383 = vmul.f32 %v6342, %v6375
    %v6384 = vmul.f32 %v6344, %v6376
    %v6386 = vsel %vm1918, %v6377, 0
    %6388 = vmatprep.subr.mxu0 0.0
    %6389 = vmatpush1.msra.mxu0 %v5188
    %6390 = vmatprep.subr.mxu0 0.0
    %6391 = vmatpush1.msra.mxu0 0.0
    %6392 = vmatprep.subr.mxu0 0.0
    %6393 = vmatpush1.msra.mxu0 0.0
    %6394 = vmatprep.subr.mxu0 0.0
    %6395 = vmatpush1.msra.mxu0 0.0
    %6396 = vmatprep.subr.mxu0 0.0
    %6397 = vmatpush1.msra.mxu0 0.0
    %6398 = vmatprep.subr.mxu0 0.0
    %6399 = vmatpush1.msra.mxu0 0.0
    %6400 = vmatprep.subr.mxu0 0.0
    %6401 = vmatpush1.msra.mxu0 0.0
    %6402 = vmatprep.subr.mxu0 0.0
    %6403 = vmatpush1.msra.mxu0 0.0
    %6404 = vmatprep.subr.mxu0 0.0
    %6405 = vmatpush1.msra.mxu0 0.0
    %6406 = vmatprep.subr.mxu0 0.0
    %6407 = vmatpush1.msra.mxu0 0.0
    %6408 = vmatprep.subr.mxu0 0.0
    %6409 = vmatpush1.msra.mxu0 0.0
    %6410 = vmatprep.subr.mxu0 0.0
    %6411 = vmatpush1.msra.mxu0 0.0
    %6412 = vmatprep.subr.mxu0 0.0
    %6413 = vmatpush1.msra.mxu0 0.0
    %6414 = vmatprep.subr.mxu0 0.0
    %6415 = vmatpush1.msra.mxu0 0.0
    %6416 = vmatprep.subr.mxu0 0.0
    %6417 = vmatpush1.msra.mxu0 0.0
    %6418 = vmatprep.subr.mxu0 0.0
    %6419 = vmatpush1.msra.mxu0 0.0
    %6420 = vmatprep.subr.mxu0 0.0
    %6421 = vmatpush1.msra.mxu0 0.0
    %6422 = vmatprep.subr.mxu0 0.0
    %6423 = vmatpush1.msra.mxu0 0.0
    %6424 = vmatprep.subr.mxu0 0.0
    %6425 = vmatpush1.msra.mxu0 0.0
    %6426 = vmatprep.subr.mxu0 0.0
    %6427 = vmatpush1.msra.mxu0 0.0
    %6428 = vmatprep.subr.mxu0 0.0
    %6429 = vmatpush1.msra.mxu0 0.0
    %6430 = vmatprep.subr.mxu0 0.0
    %6431 = vmatpush1.msra.mxu0 0.0
    %6432 = vmatprep.subr.mxu0 0.0
    %6433 = vmatpush1.msra.mxu0 0.0
    %6434 = vmatprep.subr.mxu0 0.0
    %6435 = vmatpush1.msra.mxu0 0.0
    %6436 = vmatprep.subr.mxu0 0.0
    %6437 = vmatpush1.msra.mxu0 0.0
    %6438 = vmatprep.subr.mxu0 0.0
    %6439 = vmatpush1.msra.mxu0 0.0
    %6440 = vmatprep.subr.mxu0 0.0
    %6441 = vmatpush1.msra.mxu0 0.0
    %6442 = vmatprep.subr.mxu0 0.0
    %6443 = vmatpush1.msra.mxu0 0.0
    %6444 = vmatprep.subr.mxu0 0.0
    %6445 = vmatpush1.msra.mxu0 0.0
    %6446 = vmatprep.subr.mxu0 0.0
    %6447 = vmatpush1.msra.mxu0 0.0
    %6448 = vmatprep.subr.mxu0 0.0
    %6449 = vmatpush1.msra.mxu0 0.0
    %6450 = vmatprep.subr.mxu0 0.0
    %6451 = vmatpush1.msra.mxu0 0.0
    %6452 = vmatprep.mubr.f32.mxu0 0.0
    %6453 = vmatmul.mubr.f32.gmra.mrb[0].mxu0 %v6386
    %v6454 = vpop.f32.mrb[0].mxu0
    %v6455 = vadd.f32 0.0, %v6454
    %v6456 = vpop.f32.mrb[0].mxu0
    %6457 = vdwg.mxu0
    %v6459 = vsel %vm1918, %v6378, 0
    %6461 = vmatprep.subr.mxu0 0.0
    %6462 = vmatpush1.msra.mxu0 %v5258
    %6463 = vmatprep.subr.mxu0 0.0
    %6464 = vmatpush1.msra.mxu0 0.0
    %6465 = vmatprep.subr.mxu0 0.0
    %6466 = vmatpush1.msra.mxu0 0.0
    %6467 = vmatprep.subr.mxu0 0.0
    %6468 = vmatpush1.msra.mxu0 0.0
    %6469 = vmatprep.subr.mxu0 0.0
    %6470 = vmatpush1.msra.mxu0 0.0
    %6471 = vmatprep.subr.mxu0 0.0
    %6472 = vmatpush1.msra.mxu0 0.0
    %6473 = vmatprep.subr.mxu0 0.0
    %6474 = vmatpush1.msra.mxu0 0.0
    %6475 = vmatprep.subr.mxu0 0.0
    %6476 = vmatpush1.msra.mxu0 0.0
    %6477 = vmatprep.subr.mxu0 0.0
    %6478 = vmatpush1.msra.mxu0 0.0
    %6479 = vmatprep.subr.mxu0 0.0
    %6480 = vmatpush1.msra.mxu0 0.0
    %6481 = vmatprep.subr.mxu0 0.0
    %6482 = vmatpush1.msra.mxu0 0.0
    %6483 = vmatprep.subr.mxu0 0.0
    %6484 = vmatpush1.msra.mxu0 0.0
    %6485 = vmatprep.subr.mxu0 0.0
    %6486 = vmatpush1.msra.mxu0 0.0
    %6487 = vmatprep.subr.mxu0 0.0
    %6488 = vmatpush1.msra.mxu0 0.0
    %6489 = vmatprep.subr.mxu0 0.0
    %6490 = vmatpush1.msra.mxu0 0.0
    %6491 = vmatprep.subr.mxu0 0.0
    %6492 = vmatpush1.msra.mxu0 0.0
    %6493 = vmatprep.subr.mxu0 0.0
    %6494 = vmatpush1.msra.mxu0 0.0
    %6495 = vmatprep.subr.mxu0 0.0
    %6496 = vmatpush1.msra.mxu0 0.0
    %6497 = vmatprep.subr.mxu0 0.0
    %6498 = vmatpush1.msra.mxu0 0.0
    %6499 = vmatprep.subr.mxu0 0.0
    %6500 = vmatpush1.msra.mxu0 0.0
    %6501 = vmatprep.subr.mxu0 0.0
    %6502 = vmatpush1.msra.mxu0 0.0
    %6503 = vmatprep.subr.mxu0 0.0
    %6504 = vmatpush1.msra.mxu0 0.0
    %6505 = vmatprep.subr.mxu0 0.0
    %6506 = vmatpush1.msra.mxu0 0.0
    %6507 = vmatprep.subr.mxu0 0.0
    %6508 = vmatpush1.msra.mxu0 0.0
    %6509 = vmatprep.subr.mxu0 0.0
    %6510 = vmatpush1.msra.mxu0 0.0
    %6511 = vmatprep.subr.mxu0 0.0
    %6512 = vmatpush1.msra.mxu0 0.0
    %6513 = vmatprep.subr.mxu0 0.0
    %6514 = vmatpush1.msra.mxu0 0.0
    %6515 = vmatprep.subr.mxu0 0.0
    %6516 = vmatpush1.msra.mxu0 0.0
    %6517 = vmatprep.subr.mxu0 0.0
    %6518 = vmatpush1.msra.mxu0 0.0
    %6519 = vmatprep.subr.mxu0 0.0
    %6520 = vmatpush1.msra.mxu0 0.0
    %6521 = vmatprep.subr.mxu0 0.0
    %6522 = vmatpush1.msra.mxu0 0.0
    %6523 = vmatprep.subr.mxu0 0.0
    %6524 = vmatpush1.msra.mxu0 0.0
    %6525 = vmatprep.mubr.f32.mxu0 0.0
    %6526 = vmatmul.mubr.f32.gmra.mrb[0].mxu0 %v6459
    %v6527 = vpop.f32.mrb[0].mxu0
    %v6528 = vadd.f32 0.0, %v6527
    %v6529 = vpop.f32.mrb[0].mxu0
    %6530 = vdwg.mxu0
    %v6532 = vsel %vm1918, %v6379, 0
    %6534 = vmatprep.subr.mxu0 0.0
    %6535 = vmatpush1.msra.mxu0 %v5328
    %6536 = vmatprep.subr.mxu0 0.0
    %6537 = vmatpush1.msra.mxu0 0.0
    %6538 = vmatprep.subr.mxu0 0.0
    %6539 = vmatpush1.msra.mxu0 0.0
    %6540 = vmatprep.subr.mxu0 0.0
    %6541 = vmatpush1.msra.mxu0 0.0
    %6542 = vmatprep.subr.mxu0 0.0
    %6543 = vmatpush1.msra.mxu0 0.0
    %6544 = vmatprep.subr.mxu0 0.0
    %6545 = vmatpush1.msra.mxu0 0.0
    %6546 = vmatprep.subr.mxu0 0.0
    %6547 = vmatpush1.msra.mxu0 0.0
    %6548 = vmatprep.subr.mxu0 0.0
    %6549 = vmatpush1.msra.mxu0 0.0
    %6550 = vmatprep.subr.mxu0 0.0
    %6551 = vmatpush1.msra.mxu0 0.0
    %6552 = vmatprep.subr.mxu0 0.0
    %6553 = vmatpush1.msra.mxu0 0.0
    %6554 = vmatprep.subr.mxu0 0.0
    %6555 = vmatpush1.msra.mxu0 0.0
    %6556 = vmatprep.subr.mxu0 0.0
    %6557 = vmatpush1.msra.mxu0 0.0
    %6558 = vmatprep.subr.mxu0 0.0
    %6559 = vmatpush1.msra.mxu0 0.0
    %6560 = vmatprep.subr.mxu0 0.0
    %6561 = vmatpush1.msra.mxu0 0.0
    %6562 = vmatprep.subr.mxu0 0.0
    %6563 = vmatpush1.msra.mxu0 0.0
    %6564 = vmatprep.subr.mxu0 0.0
    %6565 = vmatpush1.msra.mxu0 0.0
    %6566 = vmatprep.subr.mxu0 0.0
    %6567 = vmatpush1.msra.mxu0 0.0
    %6568 = vmatprep.subr.mxu0 0.0
    %6569 = vmatpush1.msra.mxu0 0.0
    %6570 = vmatprep.subr.mxu0 0.0
    %6571 = vmatpush1.msra.mxu0 0.0
    %6572 = vmatprep.subr.mxu0 0.0
    %6573 = vmatpush1.msra.mxu0 0.0
    %6574 = vmatprep.subr.mxu0 0.0
    %6575 = vmatpush1.msra.mxu0 0.0
    %6576 = vmatprep.subr.mxu0 0.0
    %6577 = vmatpush1.msra.mxu0 0.0
    %6578 = vmatprep.subr.mxu0 0.0
    %6579 = vmatpush1.msra.mxu0 0.0
    %6580 = vmatprep.subr.mxu0 0.0
    %6581 = vmatpush1.msra.mxu0 0.0
    %6582 = vmatprep.subr.mxu0 0.0
    %6583 = vmatpush1.msra.mxu0 0.0
    %6584 = vmatprep.subr.mxu0 0.0
    %6585 = vmatpush1.msra.mxu0 0.0
    %6586 = vmatprep.subr.mxu0 0.0
    %6587 = vmatpush1.msra.mxu0 0.0
    %6588 = vmatprep.subr.mxu0 0.0
    %6589 = vmatpush1.msra.mxu0 0.0
    %6590 = vmatprep.subr.mxu0 0.0
    %6591 = vmatpush1.msra.mxu0 0.0
    %6592 = vmatprep.subr.mxu0 0.0
    %6593 = vmatpush1.msra.mxu0 0.0
    %6594 = vmatprep.subr.mxu0 0.0
    %6595 = vmatpush1.msra.mxu0 0.0
    %6596 = vmatprep.subr.mxu0 0.0
    %6597 = vmatpush1.msra.mxu0 0.0
    %6598 = vmatprep.mubr.f32.mxu0 0.0
    %6599 = vmatmul.mubr.f32.gmra.mrb[0].mxu0 %v6532
    %v6600 = vpop.f32.mrb[0].mxu0
    %v6601 = vadd.f32 0.0, %v6600
    %v6602 = vpop.f32.mrb[0].mxu0
    %6603 = vdwg.mxu0
    %v6605 = vsel %vm1918, %v6380, 0
    %6607 = vmatprep.subr.mxu0 0.0
    %6608 = vmatpush1.msra.mxu0 %v5398
    %6609 = vmatprep.subr.mxu0 0.0
    %6610 = vmatpush1.msra.mxu0 0.0
    %6611 = vmatprep.subr.mxu0 0.0
    %6612 = vmatpush1.msra.mxu0 0.0
    %6613 = vmatprep.subr.mxu0 0.0
    %6614 = vmatpush1.msra.mxu0 0.0
    %6615 = vmatprep.subr.mxu0 0.0
    %6616 = vmatpush1.msra.mxu0 0.0
    %6617 = vmatprep.subr.mxu0 0.0
    %6618 = vmatpush1.msra.mxu0 0.0
    %6619 = vmatprep.subr.mxu0 0.0
    %6620 = vmatpush1.msra.mxu0 0.0
    %6621 = vmatprep.subr.mxu0 0.0
    %6622 = vmatpush1.msra.mxu0 0.0
    %6623 = vmatprep.subr.mxu0 0.0
    %6624 = vmatpush1.msra.mxu0 0.0
    %6625 = vmatprep.subr.mxu0 0.0
    %6626 = vmatpush1.msra.mxu0 0.0
    %6627 = vmatprep.subr.mxu0 0.0
    %6628 = vmatpush1.msra.mxu0 0.0
    %6629 = vmatprep.subr.mxu0 0.0
    %6630 = vmatpush1.msra.mxu0 0.0
    %6631 = vmatprep.subr.mxu0 0.0
    %6632 = vmatpush1.msra.mxu0 0.0
    %6633 = vmatprep.subr.mxu0 0.0
    %6634 = vmatpush1.msra.mxu0 0.0
    %6635 = vmatprep.subr.mxu0 0.0
    %6636 = vmatpush1.msra.mxu0 0.0
    %6637 = vmatprep.subr.mxu0 0.0
    %6638 = vmatpush1.msra.mxu0 0.0
    %6639 = vmatprep.subr.mxu0 0.0
    %6640 = vmatpush1.msra.mxu0 0.0
    %6641 = vmatprep.subr.mxu0 0.0
    %6642 = vmatpush1.msra.mxu0 0.0
    %6643 = vmatprep.subr.mxu0 0.0
    %6644 = vmatpush1.msra.mxu0 0.0
    %6645 = vmatprep.subr.mxu0 0.0
    %6646 = vmatpush1.msra.mxu0 0.0
    %6647 = vmatprep.subr.mxu0 0.0
    %6648 = vmatpush1.msra.mxu0 0.0
    %6649 = vmatprep.subr.mxu0 0.0
    %6650 = vmatpush1.msra.mxu0 0.0
    %6651 = vmatprep.subr.mxu0 0.0
    %6652 = vmatpush1.msra.mxu0 0.0
    %6653 = vmatprep.subr.mxu0 0.0
    %6654 = vmatpush1.msra.mxu0 0.0
    %6655 = vmatprep.subr.mxu0 0.0
    %6656 = vmatpush1.msra.mxu0 0.0
    %6657 = vmatprep.subr.mxu0 0.0
    %6658 = vmatpush1.msra.mxu0 0.0
    %6659 = vmatprep.subr.mxu0 0.0
    %6660 = vmatpush1.msra.mxu0 0.0
    %6661 = vmatprep.subr.mxu0 0.0
    %6662 = vmatpush1.msra.mxu0 0.0
    %6663 = vmatprep.subr.mxu0 0.0
    %6664 = vmatpush1.msra.mxu0 0.0
    %6665 = vmatprep.subr.mxu0 0.0
    %6666 = vmatpush1.msra.mxu0 0.0
    %6667 = vmatprep.subr.mxu0 0.0
    %6668 = vmatpush1.msra.mxu0 0.0
    %6669 = vmatprep.subr.mxu0 0.0
    %6670 = vmatpush1.msra.mxu0 0.0
    %6671 = vmatprep.mubr.f32.mxu0 0.0
    %6672 = vmatmul.mubr.f32.gmra.mrb[0].mxu0 %v6605
    %v6673 = vpop.f32.mrb[0].mxu0
    %v6674 = vadd.f32 0.0, %v6673
    %v6675 = vpop.f32.mrb[0].mxu0
    %6676 = vdwg.mxu0
    %v6678 = vsel %vm1918, %v6381, 0
    %6680 = vmatprep.subr.mxu0 0.0
    %6681 = vmatpush1.msra.mxu0 %v5468
    %6682 = vmatprep.subr.mxu0 0.0
    %6683 = vmatpush1.msra.mxu0 0.0
    %6684 = vmatprep.subr.mxu0 0.0
    %6685 = vmatpush1.msra.mxu0 0.0
    %6686 = vmatprep.subr.mxu0 0.0
    %6687 = vmatpush1.msra.mxu0 0.0
    %6688 = vmatprep.subr.mxu0 0.0
    %6689 = vmatpush1.msra.mxu0 0.0
    %6690 = vmatprep.subr.mxu0 0.0
    %6691 = vmatpush1.msra.mxu0 0.0
    %6692 = vmatprep.subr.mxu0 0.0
    %6693 = vmatpush1.msra.mxu0 0.0
    %6694 = vmatprep.subr.mxu0 0.0
    %6695 = vmatpush1.msra.mxu0 0.0
    %6696 = vmatprep.subr.mxu0 0.0
    %6697 = vmatpush1.msra.mxu0 0.0
    %6698 = vmatprep.subr.mxu0 0.0
    %6699 = vmatpush1.msra.mxu0 0.0
    %6700 = vmatprep.subr.mxu0 0.0
    %6701 = vmatpush1.msra.mxu0 0.0
    %6702 = vmatprep.subr.mxu0 0.0
    %6703 = vmatpush1.msra.mxu0 0.0
    %6704 = vmatprep.subr.mxu0 0.0
    %6705 = vmatpush1.msra.mxu0 0.0
    %6706 = vmatprep.subr.mxu0 0.0
    %6707 = vmatpush1.msra.mxu0 0.0
    %6708 = vmatprep.subr.mxu0 0.0
    %6709 = vmatpush1.msra.mxu0 0.0
    %6710 = vmatprep.subr.mxu0 0.0
    %6711 = vmatpush1.msra.mxu0 0.0
    %6712 = vmatprep.subr.mxu0 0.0
    %6713 = vmatpush1.msra.mxu0 0.0
    %6714 = vmatprep.subr.mxu0 0.0
    %6715 = vmatpush1.msra.mxu0 0.0
    %6716 = vmatprep.subr.mxu0 0.0
    %6717 = vmatpush1.msra.mxu0 0.0
    %6718 = vmatprep.subr.mxu0 0.0
    %6719 = vmatpush1.msra.mxu0 0.0
    %6720 = vmatprep.subr.mxu0 0.0
    %6721 = vmatpush1.msra.mxu0 0.0
    %6722 = vmatprep.subr.mxu0 0.0
    %6723 = vmatpush1.msra.mxu0 0.0
    %6724 = vmatprep.subr.mxu0 0.0
    %6725 = vmatpush1.msra.mxu0 0.0
    %6726 = vmatprep.subr.mxu0 0.0
    %6727 = vmatpush1.msra.mxu0 0.0
    %6728 = vmatprep.subr.mxu0 0.0
    %6729 = vmatpush1.msra.mxu0 0.0
    %6730 = vmatprep.subr.mxu0 0.0
    %6731 = vmatpush1.msra.mxu0 0.0
    %6732 = vmatprep.subr.mxu0 0.0
    %6733 = vmatpush1.msra.mxu0 0.0
    %6734 = vmatprep.subr.mxu0 0.0
    %6735 = vmatpush1.msra.mxu0 0.0
    %6736 = vmatprep.subr.mxu0 0.0
    %6737 = vmatpush1.msra.mxu0 0.0
    %6738 = vmatprep.subr.mxu0 0.0
    %6739 = vmatpush1.msra.mxu0 0.0
    %6740 = vmatprep.subr.mxu0 0.0
    %6741 = vmatpush1.msra.mxu0 0.0
    %6742 = vmatprep.subr.mxu0 0.0
    %6743 = vmatpush1.msra.mxu0 0.0
    %6744 = vmatprep.mubr.f32.mxu0 0.0
    %6745 = vmatmul.mubr.f32.gmra.mrb[0].mxu0 %v6678
    %v6746 = vpop.f32.mrb[0].mxu0
    %v6747 = vadd.f32 0.0, %v6746
    %v6748 = vpop.f32.mrb[0].mxu0
    %6749 = vdwg.mxu0
    %v6751 = vsel %vm1918, %v6382, 0
    %6753 = vmatprep.subr.mxu0 0.0
    %6754 = vmatpush1.msra.mxu0 %v5538
    %6755 = vmatprep.subr.mxu0 0.0
    %6756 = vmatpush1.msra.mxu0 0.0
    %6757 = vmatprep.subr.mxu0 0.0
    %6758 = vmatpush1.msra.mxu0 0.0
    %6759 = vmatprep.subr.mxu0 0.0
    %6760 = vmatpush1.msra.mxu0 0.0
    %6761 = vmatprep.subr.mxu0 0.0
    %6762 = vmatpush1.msra.mxu0 0.0
    %6763 = vmatprep.subr.mxu0 0.0
    %6764 = vmatpush1.msra.mxu0 0.0
    %6765 = vmatprep.subr.mxu0 0.0
    %6766 = vmatpush1.msra.mxu0 0.0
    %6767 = vmatprep.subr.mxu0 0.0
    %6768 = vmatpush1.msra.mxu0 0.0
    %6769 = vmatprep.subr.mxu0 0.0
    %6770 = vmatpush1.msra.mxu0 0.0
    %6771 = vmatprep.subr.mxu0 0.0
    %6772 = vmatpush1.msra.mxu0 0.0
    %6773 = vmatprep.subr.mxu0 0.0
    %6774 = vmatpush1.msra.mxu0 0.0
    %6775 = vmatprep.subr.mxu0 0.0
    %6776 = vmatpush1.msra.mxu0 0.0
    %6777 = vmatprep.subr.mxu0 0.0
    %6778 = vmatpush1.msra.mxu0 0.0
    %6779 = vmatprep.subr.mxu0 0.0
    %6780 = vmatpush1.msra.mxu0 0.0
    %6781 = vmatprep.subr.mxu0 0.0
    %6782 = vmatpush1.msra.mxu0 0.0
    %6783 = vmatprep.subr.mxu0 0.0
    %6784 = vmatpush1.msra.mxu0 0.0
    %6785 = vmatprep.subr.mxu0 0.0
    %6786 = vmatpush1.msra.mxu0 0.0
    %6787 = vmatprep.subr.mxu0 0.0
    %6788 = vmatpush1.msra.mxu0 0.0
    %6789 = vmatprep.subr.mxu0 0.0
    %6790 = vmatpush1.msra.mxu0 0.0
    %6791 = vmatprep.subr.mxu0 0.0
    %6792 = vmatpush1.msra.mxu0 0.0
    %6793 = vmatprep.subr.mxu0 0.0
    %6794 = vmatpush1.msra.mxu0 0.0
    %6795 = vmatprep.subr.mxu0 0.0
    %6796 = vmatpush1.msra.mxu0 0.0
    %6797 = vmatprep.subr.mxu0 0.0
    %6798 = vmatpush1.msra.mxu0 0.0
    %6799 = vmatprep.subr.mxu0 0.0
    %6800 = vmatpush1.msra.mxu0 0.0
    %6801 = vmatprep.subr.mxu0 0.0
    %6802 = vmatpush1.msra.mxu0 0.0
    %6803 = vmatprep.subr.mxu0 0.0
    %6804 = vmatpush1.msra.mxu0 0.0
    %6805 = vmatprep.subr.mxu0 0.0
    %6806 = vmatpush1.msra.mxu0 0.0
    %6807 = vmatprep.subr.mxu0 0.0
    %6808 = vmatpush1.msra.mxu0 0.0
    %6809 = vmatprep.subr.mxu0 0.0
    %6810 = vmatpush1.msra.mxu0 0.0
    %6811 = vmatprep.subr.mxu0 0.0
    %6812 = vmatpush1.msra.mxu0 0.0
    %6813 = vmatprep.subr.mxu0 0.0
    %6814 = vmatpush1.msra.mxu0 0.0
    %6815 = vmatprep.subr.mxu0 0.0
    %6816 = vmatpush1.msra.mxu0 0.0
    %6817 = vmatprep.mubr.f32.mxu0 0.0
    %6818 = vmatmul.mubr.f32.gmra.mrb[0].mxu0 %v6751
    %v6819 = vpop.f32.mrb[0].mxu0
    %v6820 = vadd.f32 0.0, %v6819
    %v6821 = vpop.f32.mrb[0].mxu0
    %6822 = vdwg.mxu0
    %v6824 = vsel %vm1918, %v6383, 0
    %6826 = vmatprep.subr.mxu0 0.0
    %6827 = vmatpush1.msra.mxu0 %v5608
    %6828 = vmatprep.subr.mxu0 0.0
    %6829 = vmatpush1.msra.mxu0 0.0
    %6830 = vmatprep.subr.mxu0 0.0
    %6831 = vmatpush1.msra.mxu0 0.0
    %6832 = vmatprep.subr.mxu0 0.0
    %6833 = vmatpush1.msra.mxu0 0.0
    %6834 = vmatprep.subr.mxu0 0.0
    %6835 = vmatpush1.msra.mxu0 0.0
    %6836 = vmatprep.subr.mxu0 0.0
    %6837 = vmatpush1.msra.mxu0 0.0
    %6838 = vmatprep.subr.mxu0 0.0
    %6839 = vmatpush1.msra.mxu0 0.0
    %6840 = vmatprep.subr.mxu0 0.0
    %6841 = vmatpush1.msra.mxu0 0.0
    %6842 = vmatprep.subr.mxu0 0.0
    %6843 = vmatpush1.msra.mxu0 0.0
    %6844 = vmatprep.subr.mxu0 0.0
    %6845 = vmatpush1.msra.mxu0 0.0
    %6846 = vmatprep.subr.mxu0 0.0
    %6847 = vmatpush1.msra.mxu0 0.0
    %6848 = vmatprep.subr.mxu0 0.0
    %6849 = vmatpush1.msra.mxu0 0.0
    %6850 = vmatprep.subr.mxu0 0.0
    %6851 = vmatpush1.msra.mxu0 0.0
    %6852 = vmatprep.subr.mxu0 0.0
    %6853 = vmatpush1.msra.mxu0 0.0
    %6854 = vmatprep.subr.mxu0 0.0
    %6855 = vmatpush1.msra.mxu0 0.0
    %6856 = vmatprep.subr.mxu0 0.0
    %6857 = vmatpush1.msra.mxu0 0.0
    %6858 = vmatprep.subr.mxu0 0.0
    %6859 = vmatpush1.msra.mxu0 0.0
    %6860 = vmatprep.subr.mxu0 0.0
    %6861 = vmatpush1.msra.mxu0 0.0
    %6862 = vmatprep.subr.mxu0 0.0
    %6863 = vmatpush1.msra.mxu0 0.0
    %6864 = vmatprep.subr.mxu0 0.0
    %6865 = vmatpush1.msra.mxu0 0.0
    %6866 = vmatprep.subr.mxu0 0.0
    %6867 = vmatpush1.msra.mxu0 0.0
    %6868 = vmatprep.subr.mxu0 0.0
    %6869 = vmatpush1.msra.mxu0 0.0
    %6870 = vmatprep.subr.mxu0 0.0
    %6871 = vmatpush1.msra.mxu0 0.0
    %6872 = vmatprep.subr.mxu0 0.0
    %6873 = vmatpush1.msra.mxu0 0.0
    %6874 = vmatprep.subr.mxu0 0.0
    %6875 = vmatpush1.msra.mxu0 0.0
    %6876 = vmatprep.subr.mxu0 0.0
    %6877 = vmatpush1.msra.mxu0 0.0
    %6878 = vmatprep.subr.mxu0 0.0
    %6879 = vmatpush1.msra.mxu0 0.0
    %6880 = vmatprep.subr.mxu0 0.0
    %6881 = vmatpush1.msra.mxu0 0.0
    %6882 = vmatprep.subr.mxu0 0.0
    %6883 = vmatpush1.msra.mxu0 0.0
    %6884 = vmatprep.subr.mxu0 0.0
    %6885 = vmatpush1.msra.mxu0 0.0
    %6886 = vmatprep.subr.mxu0 0.0
    %6887 = vmatpush1.msra.mxu0 0.0
    %6888 = vmatprep.subr.mxu0 0.0
    %6889 = vmatpush1.msra.mxu0 0.0
    %6890 = vmatprep.mubr.f32.mxu0 0.0
    %6891 = vmatmul.mubr.f32.gmra.mrb[0].mxu0 %v6824
    %v6892 = vpop.f32.mrb[0].mxu0
    %v6893 = vadd.f32 0.0, %v6892
    %v6894 = vpop.f32.mrb[0].mxu0
    %6895 = vdwg.mxu0
    %v6897 = vsel %vm1918, %v6384, 0
    %6899 = vmatprep.subr.mxu0 0.0
    %6900 = vmatpush1.msra.mxu0 %v5678
    %6901 = vmatprep.subr.mxu0 0.0
    %6902 = vmatpush1.msra.mxu0 0.0
    %6903 = vmatprep.subr.mxu0 0.0
    %6904 = vmatpush1.msra.mxu0 0.0
    %6905 = vmatprep.subr.mxu0 0.0
    %6906 = vmatpush1.msra.mxu0 0.0
    %6907 = vmatprep.subr.mxu0 0.0
    %6908 = vmatpush1.msra.mxu0 0.0
    %6909 = vmatprep.subr.mxu0 0.0
    %6910 = vmatpush1.msra.mxu0 0.0
    %6911 = vmatprep.subr.mxu0 0.0
    %6912 = vmatpush1.msra.mxu0 0.0
    %6913 = vmatprep.subr.mxu0 0.0
    %6914 = vmatpush1.msra.mxu0 0.0
    %6915 = vmatprep.subr.mxu0 0.0
    %6916 = vmatpush1.msra.mxu0 0.0
    %6917 = vmatprep.subr.mxu0 0.0
    %6918 = vmatpush1.msra.mxu0 0.0
    %6919 = vmatprep.subr.mxu0 0.0
    %6920 = vmatpush1.msra.mxu0 0.0
    %6921 = vmatprep.subr.mxu0 0.0
    %6922 = vmatpush1.msra.mxu0 0.0
    %6923 = vmatprep.subr.mxu0 0.0
    %6924 = vmatpush1.msra.mxu0 0.0
    %6925 = vmatprep.subr.mxu0 0.0
    %6926 = vmatpush1.msra.mxu0 0.0
    %6927 = vmatprep.subr.mxu0 0.0
    %6928 = vmatpush1.msra.mxu0 0.0
    %6929 = vmatprep.subr.mxu0 0.0
    %6930 = vmatpush1.msra.mxu0 0.0
    %6931 = vmatprep.subr.mxu0 0.0
    %6932 = vmatpush1.msra.mxu0 0.0
    %6933 = vmatprep.subr.mxu0 0.0
    %6934 = vmatpush1.msra.mxu0 0.0
    %6935 = vmatprep.subr.mxu0 0.0
    %6936 = vmatpush1.msra.mxu0 0.0
    %6937 = vmatprep.subr.mxu0 0.0
    %6938 = vmatpush1.msra.mxu0 0.0
    %6939 = vmatprep.subr.mxu0 0.0
    %6940 = vmatpush1.msra.mxu0 0.0
    %6941 = vmatprep.subr.mxu0 0.0
    %6942 = vmatpush1.msra.mxu0 0.0
    %6943 = vmatprep.subr.mxu0 0.0
    %6944 = vmatpush1.msra.mxu0 0.0
    %6945 = vmatprep.subr.mxu0 0.0
    %6946 = vmatpush1.msra.mxu0 0.0
    %6947 = vmatprep.subr.mxu0 0.0
    %6948 = vmatpush1.msra.mxu0 0.0
    %6949 = vmatprep.subr.mxu0 0.0
    %6950 = vmatpush1.msra.mxu0 0.0
    %6951 = vmatprep.subr.mxu0 0.0
    %6952 = vmatpush1.msra.mxu0 0.0
    %6953 = vmatprep.subr.mxu0 0.0
    %6954 = vmatpush1.msra.mxu0 0.0
    %6955 = vmatprep.subr.mxu0 0.0
    %6956 = vmatpush1.msra.mxu0 0.0
    %6957 = vmatprep.subr.mxu0 0.0
    %6958 = vmatpush1.msra.mxu0 0.0
    %6959 = vmatprep.subr.mxu0 0.0
    %6960 = vmatpush1.msra.mxu0 0.0
    %6961 = vmatprep.subr.mxu0 0.0
    %6962 = vmatpush1.msra.mxu0 0.0
    %6963 = vmatprep.mubr.f32.mxu0 0.0
    %6964 = vmatmul.mubr.f32.gmra.mrb[0].mxu0 %v6897
    %v6965 = vpop.f32.mrb[0].mxu0
    %v6966 = vadd.f32 0.0, %v6965
    %v6967 = vpop.f32.mrb[0].mxu0
    %6968 = vdwg.mxu0
    %v6970 = vsel %vm1918, %v6455, 0
    %6972 = vmatprep.subr.mxu0 0.0
    %6973 = vmatpush1.msra.mxu0 %v3912
    %6974 = vmatprep.subr.mxu0 0.0
    %6975 = vmatpush1.msra.mxu0 0.0
    %6976 = vmatprep.subr.mxu0 0.0
    %6977 = vmatpush1.msra.mxu0 0.0
    %6978 = vmatprep.subr.mxu0 0.0
    %6979 = vmatpush1.msra.mxu0 0.0
    %6980 = vmatprep.subr.mxu0 0.0
    %6981 = vmatpush1.msra.mxu0 0.0
    %6982 = vmatprep.subr.mxu0 0.0
    %6983 = vmatpush1.msra.mxu0 0.0
    %6984 = vmatprep.subr.mxu0 0.0
    %6985 = vmatpush1.msra.mxu0 0.0
    %6986 = vmatprep.subr.mxu0 0.0
    %6987 = vmatpush1.msra.mxu0 0.0
    %6988 = vmatprep.subr.mxu0 0.0
    %6989 = vmatpush1.msra.mxu0 0.0
    %6990 = vmatprep.subr.mxu0 0.0
    %6991 = vmatpush1.msra.mxu0 0.0
    %6992 = vmatprep.subr.mxu0 0.0
    %6993 = vmatpush1.msra.mxu0 0.0
    %6994 = vmatprep.subr.mxu0 0.0
    %6995 = vmatpush1.msra.mxu0 0.0
    %6996 = vmatprep.subr.mxu0 0.0
    %6997 = vmatpush1.msra.mxu0 0.0
    %6998 = vmatprep.subr.mxu0 0.0
    %6999 = vmatpush1.msra.mxu0 0.0
    %7000 = vmatprep.subr.mxu0 0.0
    %7001 = vmatpush1.msra.mxu0 0.0
    %7002 = vmatprep.subr.mxu0 0.0
    %7003 = vmatpush1.msra.mxu0 0.0
    %7004 = vmatprep.subr.mxu0 0.0
    %7005 = vmatpush1.msra.mxu0 0.0
    %7006 = vmatprep.subr.mxu0 0.0
    %7007 = vmatpush1.msra.mxu0 0.0
    %7008 = vmatprep.subr.mxu0 0.0
    %7009 = vmatpush1.msra.mxu0 0.0
    %7010 = vmatprep.subr.mxu0 0.0
    %7011 = vmatpush1.msra.mxu0 0.0
    %7012 = vmatprep.subr.mxu0 0.0
    %7013 = vmatpush1.msra.mxu0 0.0
    %7014 = vmatprep.subr.mxu0 0.0
    %7015 = vmatpush1.msra.mxu0 0.0
    %7016 = vmatprep.subr.mxu0 0.0
    %7017 = vmatpush1.msra.mxu0 0.0
    %7018 = vmatprep.subr.mxu0 0.0
    %7019 = vmatpush1.msra.mxu0 0.0
    %7020 = vmatprep.subr.mxu0 0.0
    %7021 = vmatpush1.msra.mxu0 0.0
    %7022 = vmatprep.subr.mxu0 0.0
    %7023 = vmatpush1.msra.mxu0 0.0
    %7024 = vmatprep.subr.mxu0 0.0
    %7025 = vmatpush1.msra.mxu0 0.0
    %7026 = vmatprep.subr.mxu0 0.0
    %7027 = vmatpush1.msra.mxu0 0.0
    %7028 = vmatprep.subr.mxu0 0.0
    %7029 = vmatpush1.msra.mxu0 0.0
    %7030 = vmatprep.subr.mxu0 0.0
    %7031 = vmatpush1.msra.mxu0 0.0
    %7032 = vmatprep.subr.mxu0 0.0
    %7033 = vmatpush1.msra.mxu0 0.0
    %7034 = vmatprep.subr.mxu0 0.0
    %7035 = vmatpush1.msra.mxu0 0.0
    %7036 = vmatprep.mubr.f32.mxu0 0.0
    %7037 = vmatmul.mubr.f32.gmra.mrb[0].mxu0 %v6970
    %v7038 = vpop.f32.mrb[0].mxu0
    %v7039 = vadd.f32 0.0, %v7038
    %v7040 = vpop.f32.mrb[0].mxu0
    %7041 = vdwg.mxu0
    %v7043 = vsel %vm1918, %v6528, 0
    %7045 = vmatprep.subr.mxu0 0.0
    %7046 = vmatpush1.msra.mxu0 %v3912
    %7047 = vmatprep.subr.mxu0 0.0
    %7048 = vmatpush1.msra.mxu0 0.0
    %7049 = vmatprep.subr.mxu0 0.0
    %7050 = vmatpush1.msra.mxu0 0.0
    %7051 = vmatprep.subr.mxu0 0.0
    %7052 = vmatpush1.msra.mxu0 0.0
    %7053 = vmatprep.subr.mxu0 0.0
    %7054 = vmatpush1.msra.mxu0 0.0
    %7055 = vmatprep.subr.mxu0 0.0
    %7056 = vmatpush1.msra.mxu0 0.0
    %7057 = vmatprep.subr.mxu0 0.0
    %7058 = vmatpush1.msra.mxu0 0.0
    %7059 = vmatprep.subr.mxu0 0.0
    %7060 = vmatpush1.msra.mxu0 0.0
    %7061 = vmatprep.subr.mxu0 0.0
    %7062 = vmatpush1.msra.mxu0 0.0
    %7063 = vmatprep.subr.mxu0 0.0
    %7064 = vmatpush1.msra.mxu0 0.0
    %7065 = vmatprep.subr.mxu0 0.0
    %7066 = vmatpush1.msra.mxu0 0.0
    %7067 = vmatprep.subr.mxu0 0.0
    %7068 = vmatpush1.msra.mxu0 0.0
    %7069 = vmatprep.subr.mxu0 0.0
    %7070 = vmatpush1.msra.mxu0 0.0
    %7071 = vmatprep.subr.mxu0 0.0
    %7072 = vmatpush1.msra.mxu0 0.0
    %7073 = vmatprep.subr.mxu0 0.0
    %7074 = vmatpush1.msra.mxu0 0.0
    %7075 = vmatprep.subr.mxu0 0.0
    %7076 = vmatpush1.msra.mxu0 0.0
    %7077 = vmatprep.subr.mxu0 0.0
    %7078 = vmatpush1.msra.mxu0 0.0
    %7079 = vmatprep.subr.mxu0 0.0
    %7080 = vmatpush1.msra.mxu0 0.0
    %7081 = vmatprep.subr.mxu0 0.0
    %7082 = vmatpush1.msra.mxu0 0.0
    %7083 = vmatprep.subr.mxu0 0.0
    %7084 = vmatpush1.msra.mxu0 0.0
    %7085 = vmatprep.subr.mxu0 0.0
    %7086 = vmatpush1.msra.mxu0 0.0
    %7087 = vmatprep.subr.mxu0 0.0
    %7088 = vmatpush1.msra.mxu0 0.0
    %7089 = vmatprep.subr.mxu0 0.0
    %7090 = vmatpush1.msra.mxu0 0.0
    %7091 = vmatprep.subr.mxu0 0.0
    %7092 = vmatpush1.msra.mxu0 0.0
    %7093 = vmatprep.subr.mxu0 0.0
    %7094 = vmatpush1.msra.mxu0 0.0
    %7095 = vmatprep.subr.mxu0 0.0
    %7096 = vmatpush1.msra.mxu0 0.0
    %7097 = vmatprep.subr.mxu0 0.0
    %7098 = vmatpush1.msra.mxu0 0.0
    %7099 = vmatprep.subr.mxu0 0.0
    %7100 = vmatpush1.msra.mxu0 0.0
    %7101 = vmatprep.subr.mxu0 0.0
    %7102 = vmatpush1.msra.mxu0 0.0
    %7103 = vmatprep.subr.mxu0 0.0
    %7104 = vmatpush1.msra.mxu0 0.0
    %7105 = vmatprep.subr.mxu0 0.0
    %7106 = vmatpush1.msra.mxu0 0.0
    %7107 = vmatprep.subr.mxu0 0.0
    %7108 = vmatpush1.msra.mxu0 0.0
    %7109 = vmatprep.mubr.f32.mxu0 0.0
    %7110 = vmatmul.mubr.f32.gmra.mrb[0].mxu0 %v7043
    %v7111 = vpop.f32.mrb[0].mxu0
    %v7112 = vadd.f32 0.0, %v7111
    %v7113 = vpop.f32.mrb[0].mxu0
    %7114 = vdwg.mxu0
    %v7116 = vsel %vm1918, %v6601, 0
    %7118 = vmatprep.subr.mxu0 0.0
    %7119 = vmatpush1.msra.mxu0 %v3913
    %7120 = vmatprep.subr.mxu0 0.0
    %7121 = vmatpush1.msra.mxu0 0.0
    %7122 = vmatprep.subr.mxu0 0.0
    %7123 = vmatpush1.msra.mxu0 0.0
    %7124 = vmatprep.subr.mxu0 0.0
    %7125 = vmatpush1.msra.mxu0 0.0
    %7126 = vmatprep.subr.mxu0 0.0
    %7127 = vmatpush1.msra.mxu0 0.0
    %7128 = vmatprep.subr.mxu0 0.0
    %7129 = vmatpush1.msra.mxu0 0.0
    %7130 = vmatprep.subr.mxu0 0.0
    %7131 = vmatpush1.msra.mxu0 0.0
    %7132 = vmatprep.subr.mxu0 0.0
    %7133 = vmatpush1.msra.mxu0 0.0
    %7134 = vmatprep.subr.mxu0 0.0
    %7135 = vmatpush1.msra.mxu0 0.0
    %7136 = vmatprep.subr.mxu0 0.0
    %7137 = vmatpush1.msra.mxu0 0.0
    %7138 = vmatprep.subr.mxu0 0.0
    %7139 = vmatpush1.msra.mxu0 0.0
    %7140 = vmatprep.subr.mxu0 0.0
    %7141 = vmatpush1.msra.mxu0 0.0
    %7142 = vmatprep.subr.mxu0 0.0
    %7143 = vmatpush1.msra.mxu0 0.0
    %7144 = vmatprep.subr.mxu0 0.0
    %7145 = vmatpush1.msra.mxu0 0.0
    %7146 = vmatprep.subr.mxu0 0.0
    %7147 = vmatpush1.msra.mxu0 0.0
    %7148 = vmatprep.subr.mxu0 0.0
    %7149 = vmatpush1.msra.mxu0 0.0
    %7150 = vmatprep.subr.mxu0 0.0
    %7151 = vmatpush1.msra.mxu0 0.0
    %7152 = vmatprep.subr.mxu0 0.0
    %7153 = vmatpush1.msra.mxu0 0.0
    %7154 = vmatprep.subr.mxu0 0.0
    %7155 = vmatpush1.msra.mxu0 0.0
    %7156 = vmatprep.subr.mxu0 0.0
    %7157 = vmatpush1.msra.mxu0 0.0
    %7158 = vmatprep.subr.mxu0 0.0
    %7159 = vmatpush1.msra.mxu0 0.0
    %7160 = vmatprep.subr.mxu0 0.0
    %7161 = vmatpush1.msra.mxu0 0.0
    %7162 = vmatprep.subr.mxu0 0.0
    %7163 = vmatpush1.msra.mxu0 0.0
    %7164 = vmatprep.subr.mxu0 0.0
    %7165 = vmatpush1.msra.mxu0 0.0
    %7166 = vmatprep.subr.mxu0 0.0
    %7167 = vmatpush1.msra.mxu0 0.0
    %7168 = vmatprep.subr.mxu0 0.0
    %7169 = vmatpush1.msra.mxu0 0.0
    %7170 = vmatprep.subr.mxu0 0.0
    %7171 = vmatpush1.msra.mxu0 0.0
    %7172 = vmatprep.subr.mxu0 0.0
    %7173 = vmatpush1.msra.mxu0 0.0
    %7174 = vmatprep.subr.mxu0 0.0
    %7175 = vmatpush1.msra.mxu0 0.0
    %7176 = vmatprep.subr.mxu0 0.0
    %7177 = vmatpush1.msra.mxu0 0.0
    %7178 = vmatprep.subr.mxu0 0.0
    %7179 = vmatpush1.msra.mxu0 0.0
    %7180 = vmatprep.subr.mxu0 0.0
    %7181 = vmatpush1.msra.mxu0 0.0
    %7182 = vmatprep.mubr.f32.mxu0 0.0
    %7183 = vmatmul.mubr.f32.gmra.mrb[0].mxu0 %v7116
    %v7184 = vpop.f32.mrb[0].mxu0
    %v7185 = vadd.f32 0.0, %v7184
    %v7186 = vpop.f32.mrb[0].mxu0
    %7187 = vdwg.mxu0
    %v7189 = vsel %vm1918, %v6674, 0
    %7191 = vmatprep.subr.mxu0 0.0
    %7192 = vmatpush1.msra.mxu0 %v3913
    %7193 = vmatprep.subr.mxu0 0.0
    %7194 = vmatpush1.msra.mxu0 0.0
    %7195 = vmatprep.subr.mxu0 0.0
    %7196 = vmatpush1.msra.mxu0 0.0
    %7197 = vmatprep.subr.mxu0 0.0
    %7198 = vmatpush1.msra.mxu0 0.0
    %7199 = vmatprep.subr.mxu0 0.0
    %7200 = vmatpush1.msra.mxu0 0.0
    %7201 = vmatprep.subr.mxu0 0.0
    %7202 = vmatpush1.msra.mxu0 0.0
    %7203 = vmatprep.subr.mxu0 0.0
    %7204 = vmatpush1.msra.mxu0 0.0
    %7205 = vmatprep.subr.mxu0 0.0
    %7206 = vmatpush1.msra.mxu0 0.0
    %7207 = vmatprep.subr.mxu0 0.0
    %7208 = vmatpush1.msra.mxu0 0.0
    %7209 = vmatprep.subr.mxu0 0.0
    %7210 = vmatpush1.msra.mxu0 0.0
    %7211 = vmatprep.subr.mxu0 0.0
    %7212 = vmatpush1.msra.mxu0 0.0
    %7213 = vmatprep.subr.mxu0 0.0
    %7214 = vmatpush1.msra.mxu0 0.0
    %7215 = vmatprep.subr.mxu0 0.0
    %7216 = vmatpush1.msra.mxu0 0.0
    %7217 = vmatprep.subr.mxu0 0.0
    %7218 = vmatpush1.msra.mxu0 0.0
    %7219 = vmatprep.subr.mxu0 0.0
    %7220 = vmatpush1.msra.mxu0 0.0
    %7221 = vmatprep.subr.mxu0 0.0
    %7222 = vmatpush1.msra.mxu0 0.0
    %7223 = vmatprep.subr.mxu0 0.0
    %7224 = vmatpush1.msra.mxu0 0.0
    %7225 = vmatprep.subr.mxu0 0.0
    %7226 = vmatpush1.msra.mxu0 0.0
    %7227 = vmatprep.subr.mxu0 0.0
    %7228 = vmatpush1.msra.mxu0 0.0
    %7229 = vmatprep.subr.mxu0 0.0
    %7230 = vmatpush1.msra.mxu0 0.0
    %7231 = vmatprep.subr.mxu0 0.0
    %7232 = vmatpush1.msra.mxu0 0.0
    %7233 = vmatprep.subr.mxu0 0.0
    %7234 = vmatpush1.msra.mxu0 0.0
    %7235 = vmatprep.subr.mxu0 0.0
    %7236 = vmatpush1.msra.mxu0 0.0
    %7237 = vmatprep.subr.mxu0 0.0
    %7238 = vmatpush1.msra.mxu0 0.0
    %7239 = vmatprep.subr.mxu0 0.0
    %7240 = vmatpush1.msra.mxu0 0.0
    %7241 = vmatprep.subr.mxu0 0.0
    %7242 = vmatpush1.msra.mxu0 0.0
    %7243 = vmatprep.subr.mxu0 0.0
    %7244 = vmatpush1.msra.mxu0 0.0
    %7245 = vmatprep.subr.mxu0 0.0
    %7246 = vmatpush1.msra.mxu0 0.0
    %7247 = vmatprep.subr.mxu0 0.0
    %7248 = vmatpush1.msra.mxu0 0.0
    %7249 = vmatprep.subr.mxu0 0.0
    %7250 = vmatpush1.msra.mxu0 0.0
    %7251 = vmatprep.subr.mxu0 0.0
    %7252 = vmatpush1.msra.mxu0 0.0
    %7253 = vmatprep.subr.mxu0 0.0
    %7254 = vmatpush1.msra.mxu0 0.0
    %7255 = vmatprep.mubr.f32.mxu0 0.0
    %7256 = vmatmul.mubr.f32.gmra.mrb[0].mxu0 %v7189
    %v7257 = vpop.f32.mrb[0].mxu0
    %v7258 = vadd.f32 0.0, %v7257
    %v7259 = vpop.f32.mrb[0].mxu0
    %7260 = vdwg.mxu0
    %v7262 = vsel %vm1918, %v6747, 0
    %7264 = vmatprep.subr.mxu0 0.0
    %7265 = vmatpush1.msra.mxu0 %v3914
    %7266 = vmatprep.subr.mxu0 0.0
    %7267 = vmatpush1.msra.mxu0 0.0
    %7268 = vmatprep.subr.mxu0 0.0
    %7269 = vmatpush1.msra.mxu0 0.0
    %7270 = vmatprep.subr.mxu0 0.0
    %7271 = vmatpush1.msra.mxu0 0.0
    %7272 = vmatprep.subr.mxu0 0.0
    %7273 = vmatpush1.msra.mxu0 0.0
    %7274 = vmatprep.subr.mxu0 0.0
    %7275 = vmatpush1.msra.mxu0 0.0
    %7276 = vmatprep.subr.mxu0 0.0
    %7277 = vmatpush1.msra.mxu0 0.0
    %7278 = vmatprep.subr.mxu0 0.0
    %7279 = vmatpush1.msra.mxu0 0.0
    %7280 = vmatprep.subr.mxu0 0.0
    %7281 = vmatpush1.msra.mxu0 0.0
    %7282 = vmatprep.subr.mxu0 0.0
    %7283 = vmatpush1.msra.mxu0 0.0
    %7284 = vmatprep.subr.mxu0 0.0
    %7285 = vmatpush1.msra.mxu0 0.0
    %7286 = vmatprep.subr.mxu0 0.0
    %7287 = vmatpush1.msra.mxu0 0.0
    %7288 = vmatprep.subr.mxu0 0.0
    %7289 = vmatpush1.msra.mxu0 0.0
    %7290 = vmatprep.subr.mxu0 0.0
    %7291 = vmatpush1.msra.mxu0 0.0
    %7292 = vmatprep.subr.mxu0 0.0
    %7293 = vmatpush1.msra.mxu0 0.0
    %7294 = vmatprep.subr.mxu0 0.0
    %7295 = vmatpush1.msra.mxu0 0.0
    %7296 = vmatprep.subr.mxu0 0.0
    %7297 = vmatpush1.msra.mxu0 0.0
    %7298 = vmatprep.subr.mxu0 0.0
    %7299 = vmatpush1.msra.mxu0 0.0
    %7300 = vmatprep.subr.mxu0 0.0
    %7301 = vmatpush1.msra.mxu0 0.0
    %7302 = vmatprep.subr.mxu0 0.0
    %7303 = vmatpush1.msra.mxu0 0.0
    %7304 = vmatprep.subr.mxu0 0.0
    %7305 = vmatpush1.msra.mxu0 0.0
    %7306 = vmatprep.subr.mxu0 0.0
    %7307 = vmatpush1.msra.mxu0 0.0
    %7308 = vmatprep.subr.mxu0 0.0
    %7309 = vmatpush1.msra.mxu0 0.0
    %7310 = vmatprep.subr.mxu0 0.0
    %7311 = vmatpush1.msra.mxu0 0.0
    %7312 = vmatprep.subr.mxu0 0.0
    %7313 = vmatpush1.msra.mxu0 0.0
    %7314 = vmatprep.subr.mxu0 0.0
    %7315 = vmatpush1.msra.mxu0 0.0
    %7316 = vmatprep.subr.mxu0 0.0
    %7317 = vmatpush1.msra.mxu0 0.0
    %7318 = vmatprep.subr.mxu0 0.0
    %7319 = vmatpush1.msra.mxu0 0.0
    %7320 = vmatprep.subr.mxu0 0.0
    %7321 = vmatpush1.msra.mxu0 0.0
    %7322 = vmatprep.subr.mxu0 0.0
    %7323 = vmatpush1.msra.mxu0 0.0
    %7324 = vmatprep.subr.mxu0 0.0
    %7325 = vmatpush1.msra.mxu0 0.0
    %7326 = vmatprep.subr.mxu0 0.0
    %7327 = vmatpush1.msra.mxu0 0.0
    %7328 = vmatprep.mubr.f32.mxu0 0.0
    %7329 = vmatmul.mubr.f32.gmra.mrb[0].mxu0 %v7262
    %v7330 = vpop.f32.mrb[0].mxu0
    %v7331 = vadd.f32 0.0, %v7330
    %v7332 = vpop.f32.mrb[0].mxu0
    %7333 = vdwg.mxu0
    %v7335 = vsel %vm1918, %v6820, 0
    %7337 = vmatprep.subr.mxu0 0.0
    %7338 = vmatpush1.msra.mxu0 %v3914
    %7339 = vmatprep.subr.mxu0 0.0
    %7340 = vmatpush1.msra.mxu0 0.0
    %7341 = vmatprep.subr.mxu0 0.0
    %7342 = vmatpush1.msra.mxu0 0.0
    %7343 = vmatprep.subr.mxu0 0.0
    %7344 = vmatpush1.msra.mxu0 0.0
    %7345 = vmatprep.subr.mxu0 0.0
    %7346 = vmatpush1.msra.mxu0 0.0
    %7347 = vmatprep.subr.mxu0 0.0
    %7348 = vmatpush1.msra.mxu0 0.0
    %7349 = vmatprep.subr.mxu0 0.0
    %7350 = vmatpush1.msra.mxu0 0.0
    %7351 = vmatprep.subr.mxu0 0.0
    %7352 = vmatpush1.msra.mxu0 0.0
    %7353 = vmatprep.subr.mxu0 0.0
    %7354 = vmatpush1.msra.mxu0 0.0
    %7355 = vmatprep.subr.mxu0 0.0
    %7356 = vmatpush1.msra.mxu0 0.0
    %7357 = vmatprep.subr.mxu0 0.0
    %7358 = vmatpush1.msra.mxu0 0.0
    %7359 = vmatprep.subr.mxu0 0.0
    %7360 = vmatpush1.msra.mxu0 0.0
    %7361 = vmatprep.subr.mxu0 0.0
    %7362 = vmatpush1.msra.mxu0 0.0
    %7363 = vmatprep.subr.mxu0 0.0
    %7364 = vmatpush1.msra.mxu0 0.0
    %7365 = vmatprep.subr.mxu0 0.0
    %7366 = vmatpush1.msra.mxu0 0.0
    %7367 = vmatprep.subr.mxu0 0.0
    %7368 = vmatpush1.msra.mxu0 0.0
    %7369 = vmatprep.subr.mxu0 0.0
    %7370 = vmatpush1.msra.mxu0 0.0
    %7371 = vmatprep.subr.mxu0 0.0
    %7372 = vmatpush1.msra.mxu0 0.0
    %7373 = vmatprep.subr.mxu0 0.0
    %7374 = vmatpush1.msra.mxu0 0.0
    %7375 = vmatprep.subr.mxu0 0.0
    %7376 = vmatpush1.msra.mxu0 0.0
    %7377 = vmatprep.subr.mxu0 0.0
    %7378 = vmatpush1.msra.mxu0 0.0
    %7379 = vmatprep.subr.mxu0 0.0
    %7380 = vmatpush1.msra.mxu0 0.0
    %7381 = vmatprep.subr.mxu0 0.0
    %7382 = vmatpush1.msra.mxu0 0.0
    %7383 = vmatprep.subr.mxu0 0.0
    %7384 = vmatpush1.msra.mxu0 0.0
    %7385 = vmatprep.subr.mxu0 0.0
    %7386 = vmatpush1.msra.mxu0 0.0
    %7387 = vmatprep.subr.mxu0 0.0
    %7388 = vmatpush1.msra.mxu0 0.0
    %7389 = vmatprep.subr.mxu0 0.0
    %7390 = vmatpush1.msra.mxu0 0.0
    %7391 = vmatprep.subr.mxu0 0.0
    %7392 = vmatpush1.msra.mxu0 0.0
    %7393 = vmatprep.subr.mxu0 0.0
    %7394 = vmatpush1.msra.mxu0 0.0
    %7395 = vmatprep.subr.mxu0 0.0
    %7396 = vmatpush1.msra.mxu0 0.0
    %7397 = vmatprep.subr.mxu0 0.0
    %7398 = vmatpush1.msra.mxu0 0.0
    %7399 = vmatprep.subr.mxu0 0.0
    %7400 = vmatpush1.msra.mxu0 0.0
    %7401 = vmatprep.mubr.f32.mxu0 0.0
    %7402 = vmatmul.mubr.f32.gmra.mrb[0].mxu0 %v7335
    %v7403 = vpop.f32.mrb[0].mxu0
    %v7404 = vadd.f32 0.0, %v7403
    %v7405 = vpop.f32.mrb[0].mxu0
    %7406 = vdwg.mxu0
    %v7408 = vsel %vm1918, %v6893, 0
    %7410 = vmatprep.subr.mxu0 0.0
    %7411 = vmatpush1.msra.mxu0 %v3915
    %7412 = vmatprep.subr.mxu0 0.0
    %7413 = vmatpush1.msra.mxu0 0.0
    %7414 = vmatprep.subr.mxu0 0.0
    %7415 = vmatpush1.msra.mxu0 0.0
    %7416 = vmatprep.subr.mxu0 0.0
    %7417 = vmatpush1.msra.mxu0 0.0
    %7418 = vmatprep.subr.mxu0 0.0
    %7419 = vmatpush1.msra.mxu0 0.0
    %7420 = vmatprep.subr.mxu0 0.0
    %7421 = vmatpush1.msra.mxu0 0.0
    %7422 = vmatprep.subr.mxu0 0.0
    %7423 = vmatpush1.msra.mxu0 0.0
    %7424 = vmatprep.subr.mxu0 0.0
    %7425 = vmatpush1.msra.mxu0 0.0
    %7426 = vmatprep.subr.mxu0 0.0
    %7427 = vmatpush1.msra.mxu0 0.0
    %7428 = vmatprep.subr.mxu0 0.0
    %7429 = vmatpush1.msra.mxu0 0.0
    %7430 = vmatprep.subr.mxu0 0.0
    %7431 = vmatpush1.msra.mxu0 0.0
    %7432 = vmatprep.subr.mxu0 0.0
    %7433 = vmatpush1.msra.mxu0 0.0
    %7434 = vmatprep.subr.mxu0 0.0
    %7435 = vmatpush1.msra.mxu0 0.0
    %7436 = vmatprep.subr.mxu0 0.0
    %7437 = vmatpush1.msra.mxu0 0.0
    %7438 = vmatprep.subr.mxu0 0.0
    %7439 = vmatpush1.msra.mxu0 0.0
    %7440 = vmatprep.subr.mxu0 0.0
    %7441 = vmatpush1.msra.mxu0 0.0
    %7442 = vmatprep.subr.mxu0 0.0
    %7443 = vmatpush1.msra.mxu0 0.0
    %7444 = vmatprep.subr.mxu0 0.0
    %7445 = vmatpush1.msra.mxu0 0.0
    %7446 = vmatprep.subr.mxu0 0.0
    %7447 = vmatpush1.msra.mxu0 0.0
    %7448 = vmatprep.subr.mxu0 0.0
    %7449 = vmatpush1.msra.mxu0 0.0
    %7450 = vmatprep.subr.mxu0 0.0
    %7451 = vmatpush1.msra.mxu0 0.0
    %7452 = vmatprep.subr.mxu0 0.0
    %7453 = vmatpush1.msra.mxu0 0.0
    %7454 = vmatprep.subr.mxu0 0.0
    %7455 = vmatpush1.msra.mxu0 0.0
    %7456 = vmatprep.subr.mxu0 0.0
    %7457 = vmatpush1.msra.mxu0 0.0
    %7458 = vmatprep.subr.mxu0 0.0
    %7459 = vmatpush1.msra.mxu0 0.0
    %7460 = vmatprep.subr.mxu0 0.0
    %7461 = vmatpush1.msra.mxu0 0.0
    %7462 = vmatprep.subr.mxu0 0.0
    %7463 = vmatpush1.msra.mxu0 0.0
    %7464 = vmatprep.subr.mxu0 0.0
    %7465 = vmatpush1.msra.mxu0 0.0
    %7466 = vmatprep.subr.mxu0 0.0
    %7467 = vmatpush1.msra.mxu0 0.0
    %7468 = vmatprep.subr.mxu0 0.0
    %7469 = vmatpush1.msra.mxu0 0.0
    %7470 = vmatprep.subr.mxu0 0.0
    %7471 = vmatpush1.msra.mxu0 0.0
    %7472 = vmatprep.subr.mxu0 0.0
    %7473 = vmatpush1.msra.mxu0 0.0
    %7474 = vmatprep.mubr.f32.mxu0 0.0
    %7475 = vmatmul.mubr.f32.gmra.mrb[0].mxu0 %v7408
    %v7476 = vpop.f32.mrb[0].mxu0
    %v7477 = vadd.f32 0.0, %v7476
    %v7478 = vpop.f32.mrb[0].mxu0
    %7479 = vdwg.mxu0
    %v7481 = vsel %vm1918, %v6966, 0
    %7483 = vmatprep.subr.mxu0 0.0
    %7484 = vmatpush1.msra.mxu0 %v3915
    %7485 = vmatprep.subr.mxu0 0.0
    %7486 = vmatpush1.msra.mxu0 0.0
    %7487 = vmatprep.subr.mxu0 0.0
    %7488 = vmatpush1.msra.mxu0 0.0
    %7489 = vmatprep.subr.mxu0 0.0
    %7490 = vmatpush1.msra.mxu0 0.0
    %7491 = vmatprep.subr.mxu0 0.0
    %7492 = vmatpush1.msra.mxu0 0.0
    %7493 = vmatprep.subr.mxu0 0.0
    %7494 = vmatpush1.msra.mxu0 0.0
    %7495 = vmatprep.subr.mxu0 0.0
    %7496 = vmatpush1.msra.mxu0 0.0
    %7497 = vmatprep.subr.mxu0 0.0
    %7498 = vmatpush1.msra.mxu0 0.0
    %7499 = vmatprep.subr.mxu0 0.0
    %7500 = vmatpush1.msra.mxu0 0.0
    %7501 = vmatprep.subr.mxu0 0.0
    %7502 = vmatpush1.msra.mxu0 0.0
    %7503 = vmatprep.subr.mxu0 0.0
    %7504 = vmatpush1.msra.mxu0 0.0
    %7505 = vmatprep.subr.mxu0 0.0
    %7506 = vmatpush1.msra.mxu0 0.0
    %7507 = vmatprep.subr.mxu0 0.0
    %7508 = vmatpush1.msra.mxu0 0.0
    %7509 = vmatprep.subr.mxu0 0.0
    %7510 = vmatpush1.msra.mxu0 0.0
    %7511 = vmatprep.subr.mxu0 0.0
    %7512 = vmatpush1.msra.mxu0 0.0
    %7513 = vmatprep.subr.mxu0 0.0
    %7514 = vmatpush1.msra.mxu0 0.0
    %7515 = vmatprep.subr.mxu0 0.0
    %7516 = vmatpush1.msra.mxu0 0.0
    %7517 = vmatprep.subr.mxu0 0.0
    %7518 = vmatpush1.msra.mxu0 0.0
    %7519 = vmatprep.subr.mxu0 0.0
    %7520 = vmatpush1.msra.mxu0 0.0
    %7521 = vmatprep.subr.mxu0 0.0
    %7522 = vmatpush1.msra.mxu0 0.0
    %7523 = vmatprep.subr.mxu0 0.0
    %7524 = vmatpush1.msra.mxu0 0.0
    %7525 = vmatprep.subr.mxu0 0.0
    %7526 = vmatpush1.msra.mxu0 0.0
    %7527 = vmatprep.subr.mxu0 0.0
    %7528 = vmatpush1.msra.mxu0 0.0
    %7529 = vmatprep.subr.mxu0 0.0
    %7530 = vmatpush1.msra.mxu0 0.0
    %7531 = vmatprep.subr.mxu0 0.0
    %7532 = vmatpush1.msra.mxu0 0.0
    %7533 = vmatprep.subr.mxu0 0.0
    %7534 = vmatpush1.msra.mxu0 0.0
    %7535 = vmatprep.subr.mxu0 0.0
    %7536 = vmatpush1.msra.mxu0 0.0
    %7537 = vmatprep.subr.mxu0 0.0
    %7538 = vmatpush1.msra.mxu0 0.0
    %7539 = vmatprep.subr.mxu0 0.0
    %7540 = vmatpush1.msra.mxu0 0.0
    %7541 = vmatprep.subr.mxu0 0.0
    %7542 = vmatpush1.msra.mxu0 0.0
    %7543 = vmatprep.subr.mxu0 0.0
    %7544 = vmatpush1.msra.mxu0 0.0
    %7545 = vmatprep.subr.mxu0 0.0
    %7546 = vmatpush1.msra.mxu0 0.0
    %7547 = vmatprep.mubr.f32.mxu0 0.0
    %7548 = vmatmul.mubr.f32.gmra.mrb[0].mxu0 %v7481
    %v7549 = vpop.f32.mrb[0].mxu0
    %v7550 = vadd.f32 0.0, %v7549
    %v7551 = vpop.f32.mrb[0].mxu0
    %7552 = vdwg.mxu0
    %v7553 = vadd.f32 %v7039, %v7185
    %v7554 = vadd.f32 %v7112, %v7258
    %v7555 = vadd.f32 %v7553, %v7331
    %v7556 = vadd.f32 %v7554, %v7404
    %v7557 = vadd.f32 %v7555, %v7477
    %v7558 = vadd.f32 %v7556, %v7550
    %v7560 = vlaneseq
    %v7561 = vshrl.u32 %v7560, 7
    %v7562 = vsub.s32 0, %v7561
    %v7563 = vrot.slane %v3916, %v7562
    %v7565 = vadd.f32 %v7557, %v7563
    %v7566 = vadd.f32 %v7558, %v7563
    %v7567 = vadd.f32 %v3850, %v7565
    %v7568 = vadd.f32 %v3851, %v7566
    %v7569 = vld [vmem:[%s24] sm:$0x1]
    %v7570 = vld [vmem:[%s25] sm:$0x1]
    %v7571 = vsel %vm183, %v7567, 0.0
    %7572 = vadd.xlane.f32.xlu0 %v7571
    %v7573 = vpop.xlane.xlu0 %7572
    %v7574 = vsel %vm183, %v7568, 0.0
    %7575 = vadd.xlane.f32.xlu0 %v7574
    %v7576 = vpop.xlane.xlu0 %7575
    %v7577 = vmul.f32 %v7573, %v3815
    %v7578 = vmul.f32 %v7576, %v3815
    %v7579 = vsub.f32 %v7567, %v7577
    %v7580 = vsub.f32 %v7568, %v7578
    %v7581 = vmul.f32 %v7579, %v7579
    %v7582 = vmul.f32 %v7580, %v7580
    %v7583 = vsel %vm183, %v7581, 0.0
    %7584 = vadd.xlane.f32.xlu0 %v7583
    %v7585 = vpop.xlane.xlu0 %7584
    %v7586 = vsel %vm183, %v7582, 0.0
    %7587 = vadd.xlane.f32.xlu0 %v7586
    %v7588 = vpop.xlane.xlu0 %7587
    %v7589 = vmul.f32 %v7585, %v3815
    %v7590 = vmul.f32 %v7588, %v3815
    %v7591 = vadd.f32 %v7589, 1e-05
    %v7592 = vadd.f32 %v7590, 1e-05
    %v7593 = vrsqrt.pop %v7591
    %v7594 = vrsqrt.pop %v7592
    %v7595 = vmul.f32 %v7579, %v7593
    %v7596 = vmul.f32 %v7580, %v7594
    %v7598 = vlaneseq
    %v7599 = vshrl.u32 %v7598, 7
    %v7600 = vsub.s32 0, %v7599
    %v7601 = vrot.slane %v7569, %v7600
    %v7603 = vmul.f32 %v7595, %v7601
    %v7604 = vmul.f32 %v7596, %v7601
    %v7606 = vlaneseq
    %v7607 = vshrl.u32 %v7606, 7
    %v7608 = vsub.s32 0, %v7607
    %v7609 = vrot.slane %v7570, %v7608
    %v7611 = vadd.f32 %v7603, %v7609
    %v7612 = vadd.f32 %v7604, %v7609
    %v7613 = vld [vmem:[%s18] sm:$0xff]
    %v7614 = vld [vmem:[%s18 + $0x8] sm:$0xff]
    %v7615 = vld [vmem:[%s18 + $0x10] sm:$0xff]
    %v7616 = vld [vmem:[%s18 + $0x18] sm:$0xff]
    %v7617 = vld [vmem:[%s19] sm:$0x1]
    %v7619 = vlaneseq
    %v7620 = vshrl.u32 %v7619, 7
    %v7621 = vsub.s32 0, %v7620
    %v7622 = vrot.slane %v7617, %v7621
    %v7625 = vsel %vm183, %v7611, 0
    %v7628 = vsel %vm183, %v7612, 0
    %7630 = vmatprep.subr.mxu0 0.0
    %7631 = vmatpush1.msra.mxu0 %v7613
    %7632 = vmatprep.subr.mxu0 0.0
    %7633 = vmatpush1.msra.mxu0 %v7614
    %7634 = vmatprep.subr.mxu0 0.0
    %7635 = vmatpush1.msra.mxu0 %v7615
    %7636 = vmatprep.subr.mxu0 0.0
    %7637 = vmatpush1.msra.mxu0 %v7616
    %7638 = vmatprep.subr.mxu0 0.0
    %7639 = vmatpush1.msra.mxu0 0.0
    %7640 = vmatprep.subr.mxu0 0.0
    %7641 = vmatpush1.msra.mxu0 0.0
    %7642 = vmatprep.subr.mxu0 0.0
    %7643 = vmatpush1.msra.mxu0 0.0
    %7644 = vmatprep.subr.mxu0 0.0
    %7645 = vmatpush1.msra.mxu0 0.0
    %7646 = vmatprep.subr.mxu0 0.0
    %7647 = vmatpush1.msra.mxu0 0.0
    %7648 = vmatprep.subr.mxu0 0.0
    %7649 = vmatpush1.msra.mxu0 0.0
    %7650 = vmatprep.subr.mxu0 0.0
    %7651 = vmatpush1.msra.mxu0 0.0
    %7652 = vmatprep.subr.mxu0 0.0
    %7653 = vmatpush1.msra.mxu0 0.0
    %7654 = vmatprep.subr.mxu0 0.0
    %7655 = vmatpush1.msra.mxu0 0.0
    %7656 = vmatprep.subr.mxu0 0.0
    %7657 = vmatpush1.msra.mxu0 0.0
    %7658 = vmatprep.subr.mxu0 0.0
    %7659 = vmatpush1.msra.mxu0 0.0
    %7660 = vmatprep.subr.mxu0 0.0
    %7661 = vmatpush1.msra.mxu0 0.0
    %7662 = vmatprep.subr.mxu0 0.0
    %7663 = vmatpush1.msra.mxu0 0.0
    %7664 = vmatprep.subr.mxu0 0.0
    %7665 = vmatpush1.msra.mxu0 0.0
    %7666 = vmatprep.subr.mxu0 0.0
    %7667 = vmatpush1.msra.mxu0 0.0
    %7668 = vmatprep.subr.mxu0 0.0
    %7669 = vmatpush1.msra.mxu0 0.0
    %7670 = vmatprep.subr.mxu0 0.0
    %7671 = vmatpush1.msra.mxu0 0.0
    %7672 = vmatprep.subr.mxu0 0.0
    %7673 = vmatpush1.msra.mxu0 0.0
    %7674 = vmatprep.subr.mxu0 0.0
    %7675 = vmatpush1.msra.mxu0 0.0
    %7676 = vmatprep.subr.mxu0 0.0
    %7677 = vmatpush1.msra.mxu0 0.0
    %7678 = vmatprep.subr.mxu0 0.0
    %7679 = vmatpush1.msra.mxu0 0.0
    %7680 = vmatprep.subr.mxu0 0.0
    %7681 = vmatpush1.msra.mxu0 0.0
    %7682 = vmatprep.subr.mxu0 0.0
    %7683 = vmatpush1.msra.mxu0 0.0
    %7684 = vmatprep.subr.mxu0 0.0
    %7685 = vmatpush1.msra.mxu0 0.0
    %7686 = vmatprep.subr.mxu0 0.0
    %7687 = vmatpush1.msra.mxu0 0.0
    %7688 = vmatprep.subr.mxu0 0.0
    %7689 = vmatpush1.msra.mxu0 0.0
    %7690 = vmatprep.subr.mxu0 0.0
    %7691 = vmatpush1.msra.mxu0 0.0
    %7692 = vmatprep.subr.mxu0 0.0
    %7693 = vmatpush1.msra.mxu0 0.0
    %7694 = vmatprep.mubr.f32.mxu0 0.0
    %7695 = vmatmul.mubr.f32.gmra.mrb[0].mxu0 %v7625
    %v7696 = vpop.f32.mrb[0].mxu0
    %v7697 = vadd.f32 %v7622, %v7696
    %v7698 = vpop.f32.mrb[0].mxu0
    %7699 = vmatprep.mubr.f32.mxu0 0.0
    %7700 = vmatmul.mubr.f32.gmra.mrb[0].mxu0 %v7628
    %v7701 = vpop.f32.mrb[0].mxu0
    %v7702 = vadd.f32 %v7622, %v7701
    %v7703 = vpop.f32.mrb[0].mxu0
    %7704 = vdwg.mxu0
    %v7705 = vmax.f32 %v7697, 0.0
    %v7706 = vmax.f32 %v7702, 0.0
    %v7707 = vld [vmem:[%s20] sm:$0xff]
    %v7708 = vld [vmem:[%s20 + $0x8] sm:$0xff]
    %v7709 = vld [vmem:[%s20 + $0x10] sm:$0xff]
    %v7710 = vld [vmem:[%s20 + $0x18] sm:$0xff]
    %v7711 = vld [vmem:[%s20 + $0x20] sm:$0xff]
    %v7712 = vld [vmem:[%s20 + $0x28] sm:$0xff]
    %v7713 = vld [vmem:[%s20 + $0x30] sm:$0xff]
    %v7714 = vld [vmem:[%s20 + $0x38] sm:$0xff]
    %v7715 = vld [vmem:[%s21] sm:$0x1]
    %v7717 = vlaneseq
    %v7718 = vshrl.u32 %v7717, 7
    %v7719 = vsub.s32 0, %v7718
    %v7720 = vrot.slane %v7715, %v7719
    %vm7722 = vcmask 523264
    %v7724 = vsel %vm7722, %v7705, 0
    %v7727 = vsel %vm7722, %v7706, 0
    %7729 = vmatprep.subr.mxu0 0.0
    %7730 = vmatpush1.msra.mxu0 %v7707
    %7731 = vmatprep.subr.mxu0 0.0
    %7732 = vmatpush1.msra.mxu0 %v7708
    %7733 = vmatprep.subr.mxu0 0.0
    %7734 = vmatpush1.msra.mxu0 %v7709
    %7735 = vmatprep.subr.mxu0 0.0
    %7736 = vmatpush1.msra.mxu0 %v7710
    %7737 = vmatprep.subr.mxu0 0.0
    %7738 = vmatpush1.msra.mxu0 %v7711
    %7739 = vmatprep.subr.mxu0 0.0
    %7740 = vmatpush1.msra.mxu0 %v7712
    %7741 = vmatprep.subr.mxu0 0.0
    %7742 = vmatpush1.msra.mxu0 %v7713
    %7743 = vmatprep.subr.mxu0 0.0
    %7744 = vmatpush1.msra.mxu0 %v7714
    %7745 = vmatprep.subr.mxu0 0.0
    %7746 = vmatpush1.msra.mxu0 0.0
    %7747 = vmatprep.subr.mxu0 0.0
    %7748 = vmatpush1.msra.mxu0 0.0
    %7749 = vmatprep.subr.mxu0 0.0
    %7750 = vmatpush1.msra.mxu0 0.0
    %7751 = vmatprep.subr.mxu0 0.0
    %7752 = vmatpush1.msra.mxu0 0.0
    %7753 = vmatprep.subr.mxu0 0.0
    %7754 = vmatpush1.msra.mxu0 0.0
    %7755 = vmatprep.subr.mxu0 0.0
    %7756 = vmatpush1.msra.mxu0 0.0
    %7757 = vmatprep.subr.mxu0 0.0
    %7758 = vmatpush1.msra.mxu0 0.0
    %7759 = vmatprep.subr.mxu0 0.0
    %7760 = vmatpush1.msra.mxu0 0.0
    %7761 = vmatprep.subr.mxu0 0.0
    %7762 = vmatpush1.msra.mxu0 0.0
    %7763 = vmatprep.subr.mxu0 0.0
    %7764 = vmatpush1.msra.mxu0 0.0
    %7765 = vmatprep.subr.mxu0 0.0
    %7766 = vmatpush1.msra.mxu0 0.0
    %7767 = vmatprep.subr.mxu0 0.0
    %7768 = vmatpush1.msra.mxu0 0.0
    %7769 = vmatprep.subr.mxu0 0.0
    %7770 = vmatpush1.msra.mxu0 0.0
    %7771 = vmatprep.subr.mxu0 0.0
    %7772 = vmatpush1.msra.mxu0 0.0
    %7773 = vmatprep.subr.mxu0 0.0
    %7774 = vmatpush1.msra.mxu0 0.0
    %7775 = vmatprep.subr.mxu0 0.0
    %7776 = vmatpush1.msra.mxu0 0.0
    %7777 = vmatprep.subr.mxu0 0.0
    %7778 = vmatpush1.msra.mxu0 0.0
    %7779 = vmatprep.subr.mxu0 0.0
    %7780 = vmatpush1.msra.mxu0 0.0
    %7781 = vmatprep.subr.mxu0 0.0
    %7782 = vmatpush1.msra.mxu0 0.0
    %7783 = vmatprep.subr.mxu0 0.0
    %7784 = vmatpush1.msra.mxu0 0.0
    %7785 = vmatprep.subr.mxu0 0.0
    %7786 = vmatpush1.msra.mxu0 0.0
    %7787 = vmatprep.subr.mxu0 0.0
    %7788 = vmatpush1.msra.mxu0 0.0
    %7789 = vmatprep.subr.mxu0 0.0
    %7790 = vmatpush1.msra.mxu0 0.0
    %7791 = vmatprep.subr.mxu0 0.0
    %7792 = vmatpush1.msra.mxu0 0.0
    %7793 = vmatprep.mubr.f32.mxu0 0.0
    %7794 = vmatmul.mubr.f32.gmra.mrb[0].mxu0 %v7724
    %v7795 = vpop.f32.mrb[0].mxu0
    %v7796 = vadd.f32 %v7720, %v7795
    %v7797 = vpop.f32.mrb[0].mxu0
    %7798 = vmatprep.mubr.f32.mxu0 0.0
    %7799 = vmatmul.mubr.f32.gmra.mrb[0].mxu0 %v7727
    %v7800 = vpop.f32.mrb[0].mxu0
    %v7801 = vadd.f32 %v7720, %v7800
    %v7802 = vpop.f32.mrb[0].mxu0
    %7803 = vdwg.mxu0
    %v7804 = vadd.f32 %v7611, %v7796
    %v7805 = vadd.f32 %v7612, %v7801
    %v7806 = vld [vmem:[%s26] sm:$0x1]
    %v7807 = vld [vmem:[%s27] sm:$0x1]
    %v7808 = vsel %vm183, %v7804, 0.0
    %7809 = vadd.xlane.f32.xlu0 %v7808
    %v7810 = vpop.xlane.xlu0 %7809
    %v7811 = vsel %vm183, %v7805, 0.0
    %7812 = vadd.xlane.f32.xlu0 %v7811
    %v7813 = vpop.xlane.xlu0 %7812
    %v7814 = vmul.f32 %v7810, %v3815
    %v7815 = vmul.f32 %v7813, %v3815
    %v7816 = vsub.f32 %v7804, %v7814
    %v7817 = vsub.f32 %v7805, %v7815
    %v7818 = vmul.f32 %v7816, %v7816
    %v7819 = vmul.f32 %v7817, %v7817
    %v7820 = vsel %vm183, %v7818, 0.0
    %7821 = vadd.xlane.f32.xlu0 %v7820
    %v7822 = vpop.xlane.xlu0 %7821
    %v7823 = vsel %vm183, %v7819, 0.0
    %7824 = vadd.xlane.f32.xlu0 %v7823
    %v7825 = vpop.xlane.xlu0 %7824
    %v7826 = vmul.f32 %v7822, %v3815
    %v7827 = vmul.f32 %v7825, %v3815
    %v7828 = vadd.f32 %v7826, 1e-05
    %v7829 = vadd.f32 %v7827, 1e-05
    %v7830 = vrsqrt.pop %v7828
    %v7831 = vrsqrt.pop %v7829
    %v7832 = vmul.f32 %v7816, %v7830
    %v7833 = vmul.f32 %v7817, %v7831
    %v7835 = vlaneseq
    %v7836 = vshrl.u32 %v7835, 7
    %v7837 = vsub.s32 0, %v7836
    %v7838 = vrot.slane %v7806, %v7837
    %v7840 = vmul.f32 %v7832, %v7838
    %v7841 = vmul.f32 %v7833, %v7838
    %v7843 = vlaneseq
    %v7844 = vshrl.u32 %v7843, 7
    %v7845 = vsub.s32 0, %v7844
    %v7846 = vrot.slane %v7807, %v7845
    %v7848 = vadd.f32 %v7840, %v7846
    %v7849 = vadd.f32 %v7841, %v7846
    %7850 = vst.msk [vmem:[#allocation2] sm:$0xff] %vm183, %v7848
    %7851 = vst.msk [vmem:[#allocation2 + $0x8] sm:$0xff] %vm183, %v7849
    // Predicated region
    $region114: #{decoder_layer_forward.1} parent=1 // pred_check
      _
    $region115: #{decoder_layer_forward.1} parent=1 // pred_check_branch
      %7853 = sbr.rel (0) target = $region117
    $region116: #{decoder_layer_forward.1} parent=1 // pred_region
      %s7855 = ssub.s32 256, 256
      %7856 = vsyncadd [#allocation3], %s7855
      %s7857 = sshll.u32 [#allocation2], 4
      %s7858 = int_to_ptr.vmem [resolvable:$true] %s7857
      %7863 = dma.vmem_to_hbm [thread:$0]  %s7858, 256, %s28, [#allocation3], 128, 128, 8
    $region117: #{decoder_layer_forward.1} parent=1 // pred_fallthru
      _
    // Predicated region
    $region118: #{decoder_layer_forward.1} parent=1 // pred_check
      _
    $region119: #{decoder_layer_forward.1} parent=1 // pred_check_branch
      %7865 = sbr.rel (0) target = $region121
    $region120: #{decoder_layer_forward.1} parent=1 // pred_region
      %7866 = dma.done [#allocation3], 256
    $region121: #{decoder_layer_forward.1} parent=1 // pred_fallthru
      _
    %7867 = vsyncpa [#allocation3], 1

</llo_original>
